<compile_context>
chip_gen: v5e
topology: v5e:2x2
jax: 0.10.0
libtpu: 0.0.40
codegen_flags: <defaults>
</compile_context>

<pallas_src>
import functools

import jax
import jax.numpy as jnp
from jax.experimental import pallas as pl
from jax.experimental.pallas import tpu as pltpu


# ---------------------------------------------------------------------------
# In-kernel 3x3 "same" conv on a flattened-padded activation
# ---------------------------------------------------------------------------
def _conv3x3_from_flat(src_ref, w_ref, b_ref, ml, mr, *, W, HW):
    """src_ref: Ref[(H+2)*W + 2, Cin]  (pixel-major rows, channel lanes,
                 one zero row above/below + 1 zero guard element at each end)
       w_ref  : Ref[9, Cin, Cout]      tap-major weights, t = dh*3 + dw
       b_ref  : Ref[1, Cout]
       ml/mr  : (HW, 1) masks zeroing the wrapped column at j==0 / j==W-1
       returns (HW, Cout) float32 = conv + bias (no activation)."""
    cout = w_ref.shape[2]
    acc = jnp.zeros((HW, cout), jnp.float32)
    for t in range(9):
        dh, dw = divmod(t, 3)
        sl = src_ref[pl.ds(dh * W + dw, HW), :]            # (HW, Cin)
        if dw == 0:
            sl = sl * ml                                   # kill wrap at j==0
        elif dw == 2:
            sl = sl * mr                                   # kill wrap at j==W-1
        w_t = w_ref[t]                                     # (Cin, Cout)
        if w_t.shape[0] == 1:
            acc = acc + sl * w_t                           # K==1: VPU outer product
        else:
            acc = acc + jnp.dot(sl, w_t, preferred_element_type=jnp.float32)
    return acc + b_ref[...]


# ---------------------------------------------------------------------------
# Fused kernel: one full TopologyNet iteration for one image
# ---------------------------------------------------------------------------
def _topology_step_kernel(xf_ref, ml_ref, mr_ref,
                          w1u_ref, b1u_ref, w2u_ref, b2u_ref,
                          w1v_ref, b1v_ref, wfc_ref, bfc_ref,
                          y_ref, topo_ref,
                          h_scr, y_scr, *, W):
    HW = y_ref.shape[0]
    ml = ml_ref[...]
    mr = mr_ref[...]
    conv = functools.partial(_conv3x3_from_flat, ml=ml, mr=mr, W=W, HW=HW)

    # ---- unet: conv1 + ReLU (hidden stays in VMEM, never touches HBM) ----
    h = jnp.maximum(conv(xf_ref, w1u_ref, b1u_ref), 0.0)          # (HW, Hu)
    h_scr[...] = jnp.zeros(h_scr.shape, h_scr.dtype)
    h_scr[pl.ds(W + 1, HW), :] = h                                # interior rows

    # ---- unet: conv2 -> y ----
    y = conv(h_scr, w2u_ref, b2u_ref)                             # (HW, Cy)
    y_ref[...] = y.astype(y_ref.dtype)

    # ---- vggnet on cat(y, y, y): channel groups pre-folded into w1v ----
    y_scr[...] = jnp.zeros(y_scr.shape, y_scr.dtype)
    y_scr[pl.ds(W + 1, HW), :] = y
    hv = jnp.maximum(conv(y_scr, w1v_ref, b1v_ref), 0.0)          # (HW, Hv)

    # ---- fused global average pool + linear head ----
    pooled = jnp.sum(hv, axis=0, keepdims=True) * (1.0 / HW)      # (1, Hv)
    topo = jnp.dot(pooled, wfc_ref[...],
                   preferred_element_type=jnp.float32) + bfc_ref[...]
    topo_ref[...] = topo.astype(topo_ref.dtype)


def topology_step(xf_pad, ml, mr, w1u, b1u, w2u, b2u, w1v, b1v, wfc, bfc,
                  *, H, W):
    """xf_pad: (N, (H+2)*W + 2, Cx+Cy) flattened-padded cat(x, y)."""
    N, L, Cin = xf_pad.shape
    HW = H * W
    Hu = w1u.shape[2]
    Cy = w2u.shape[2]
    Hv = w1v.shape[2]
    D = wfc.shape[1]

    def full_spec(shape):
        return pl.BlockSpec(shape, lambda n: (0,) * len(shape))

    y_flat, y_topo = pl.pallas_call(
        functools.partial(_topology_step_kernel, W=W),
        grid=(N,),
        in_specs=[
            pl.BlockSpec((None, L, Cin), lambda n: (n, 0, 0)),   # per-image act
            full_spec((HW, 1)),                                  # left-col mask
            full_spec((HW, 1)),                                  # right-col mask
            full_spec((9, Cin, Hu)), full_spec((1, Hu)),         # unet conv1
            full_spec((9, Hu, Cy)), full_spec((1, Cy)),          # unet conv2
            full_spec((9, Cy, Hv)), full_spec((1, Hv)),          # vgg conv (folded)
            full_spec((Hv, D)), full_spec((1, D)),               # vgg fc head
        ],
        out_specs=[
            pl.BlockSpec((None, HW, Cy), lambda n: (n, 0, 0)),   # y (flat NHWC)
            pl.BlockSpec((None, 1, D), lambda n: (n, 0, 0)),     # y_topo
        ],
        out_shape=[
            jax.ShapeDtypeStruct((N, HW, Cy), jnp.float32),
            jax.ShapeDtypeStruct((N, 1, D), jnp.float32),
        ],
        scratch_shapes=[
            pltpu.VMEM((L, Hu), jnp.float32),   # padded unet hidden
            pltpu.VMEM((L, Cy), jnp.float32),   # padded y for the vgg conv
        ],
        compiler_params=pltpu.CompilerParams(
            dimension_semantics=("parallel",)),  # batch axis -> 2 TCs on v7x
    )(xf_pad, ml, mr, w1u, b1u, w2u, b2u, w1v, b1v, wfc, bfc)
    return y_flat, y_topo.reshape(N, D)


# ---------------------------------------------------------------------------
# Public forward (PyTorch TopologyNet semantics, NCHW at the boundary)
# ---------------------------------------------------------------------------
def _boundary_masks(H, W):
    col = jnp.arange(H * W, dtype=jnp.int32) % W
    ml = (col != 0).astype(jnp.float32).reshape(H * W, 1)
    mr = (col != W - 1).astype(jnp.float32).reshape(H * W, 1)
    return ml, mr


def topology_net_forward(x_nchw, y_nchw, params, K=1):
    N, Cx, H, W = x_nchw.shape
    Cy = y_nchw.shape[1]
    HW = H * W

    # NCHW -> flat (pixel-major, channel-lane) layout once; carried across K.
    xf = jnp.transpose(x_nchw, (0, 2, 3, 1)).reshape(N, HW, Cx)
    yf = jnp.transpose(y_nchw, (0, 2, 3, 1)).reshape(N, HW, Cy)
    ml, mr = _boundary_masks(H, W)

    up, vp = params["unet"], params["vgg"]
    Hu = up["w1"].shape[-1]
    Hv = vp["w1"].shape[-1]
    D = vp["w_fc"].shape[-1]

    # Tap-major weight matrices (t = dh*3 + dw).
    w1u = up["w1"].reshape(9, Cx + Cy, Hu)
    b1u = up["b1"].reshape(1, Hu)
    w2u = up["w2"].reshape(9, Hu, Cy)
    b2u = up["b2"].reshape(1, Cy)
    # Fold cat(y, y, y): sum the three identical in-channel groups once.
    w1v = vp["w1"].reshape(3, 3, 3, Cy, Hv).sum(axis=2).reshape(9, Cy, Hv)
    b1v = vp["b1"].reshape(1, Hv)
    wfc = vp["w_fc"]
    bfc = vp["b_fc"].reshape(1, D)

    results = []
    for _ in range(K):
        inp = jnp.concatenate([xf, yf], axis=-1)                 # cat(x, y, dim=1)
        inp_pad = jnp.pad(inp, ((0, 0), (W + 1, W + 1), (0, 0)))  # zero halo rows
        yf, y_topo = topology_step(inp_pad, ml, mr, w1u, b1u, w2u, b2u,
                                   w1v, b1v, wfc, bfc, H=H, W=W)
        y_out = jnp.transpose(yf.reshape(N, H, W, Cy), (0, 3, 1, 2))  # -> NCHW
        results.append([y_out, y_topo])
    return results


# ---------------------------------------------------------------------------
# Pure-JAX reference (mirrors the PyTorch module exactly, incl. cat(y,y,y))
# ---------------------------------------------------------------------------
def _conv3x3_ref(x_nhwc, w_hwio, b):
    out = jax.lax.conv_general_dilated(
        x_nhwc, w_hwio, window_strides=(1, 1), padding="SAME",
        dimension_numbers=("NHWC", "HWIO", "NHWC"))
    return out + b.reshape(1, 1, 1, -1)


def topology_reference(x_nchw, y_nchw, params, K=1):
    up, vp = params["unet"], params["vgg"]
    x = jnp.transpose(x_nchw, (0, 2, 3, 1))
    y = jnp.transpose(y_nchw, (0, 2, 3, 1))
    results = []
    for _ in range(K):
        inp = jnp.concatenate([x, y], axis=-1)
        h = jax.nn.relu(_conv3x3_ref(inp, up["w1"], up["b1"]))
        y = _conv3x3_ref(h, up["w2"], up["b2"])
        v_in = jnp.concatenate([y, y, y], axis=-1)
        hv = jax.nn.relu(_conv3x3_ref(v_in, vp["w1"], vp["b1"]))
        pooled = jnp.mean(hv, axis=(1, 2))
        y_topo = pooled @ vp["w_fc"] + vp["b_fc"]
        results.append([jnp.transpose(y, (0, 3, 1, 2)), y_topo])
    return results


# ---------------------------------------------------------------------------
# Deterministic parameter init (synthetic unet / vggnet sub-nets)
# ---------------------------------------------------------------------------
def init_params(key, cx=3, cy=1, h_unet=8, h_vgg=8, d_topo=4):
    ks = jax.random.split(key, 8)
    s = 0.1
    return {
        "unet": {
            "w1": s * jax.random.normal(ks[0], (3, 3, cx + cy, h_unet), jnp.float32),
            "b1": s * jax.random.normal(ks[1], (h_unet,), jnp.float32),
            "w2": s * jax.random.normal(ks[2], (3, 3, h_unet, cy), jnp.float32),
            "b2": s * jax.random.normal(ks[3], (cy,), jnp.float32),
        },
        "vgg": {
            "w1": s * jax.random.normal(ks[4], (3, 3, 3 * cy, h_vgg), jnp.float32),
            "b1": s * jax.random.normal(ks[5], (h_vgg,), jnp.float32),
            "w_fc": s * jax.random.normal(ks[6], (h_vgg, d_topo), jnp.float32),
            "b_fc": s * jax.random.normal(ks[7], (d_topo,), jnp.float32),
        },
    }


# ---------------------------------------------------------------------------
if __name__ == "__main__":
    key = jax.random.PRNGKey(0)
    kx, ky, kp = jax.random.split(key, 3)

    N, Cx, Cy, H, W = 2, 3, 1, 16, 16
    K = 2
    x = jax.random.normal(kx, (N, Cx, H, W), jnp.float32)       # NCHW
    y = jax.random.normal(ky, (N, Cy, H, W), jnp.float32)       # NCHW
    params = init_params(kp, cx=Cx, cy=Cy)

    fwd = jax.jit(topology_net_forward, static_argnames=("K",))
    results = fwd(x, y, params, K=K)
    jax.block_until_ready(results)

    D = params["vgg"]["w_fc"].shape[1]
    for y_k, t_k in results:
        assert y_k.shape == (N, Cy, H, W)
        assert t_k.shape == (N, D)

    # Numerical check vs. pure-JAX reference (loose tolerance: both paths use
    # default TPU matmul precision).
    ref = topology_reference(x, y, params, K=K)
    for (y_k, t_k), (y_r, t_r) in zip(results, ref):
        assert float(jnp.max(jnp.abs(y_k - y_r))) < 5e-2, "unet output mismatch"
        assert float(jnp.max(jnp.abs(t_k - t_r))) < 5e-2, "vgg output mismatch"

    print("KERNEL_OK")
</pallas_src>

<mosaic_0001>
module attributes {stable_mosaic.version = 11 : i64} {
  func.func @_topology_step_kernel(%arg0: i32, %arg1: memref<1x290x4xf32, #tpu.memory_space<vmem>>, %arg2: memref<256x1xf32, #tpu.memory_space<vmem>>, %arg3: memref<256x1xf32, #tpu.memory_space<vmem>>, %arg4: memref<9x4x8xf32, #tpu.memory_space<vmem>>, %arg5: memref<1x8xf32, #tpu.memory_space<vmem>>, %arg6: memref<9x8x1xf32, #tpu.memory_space<vmem>>, %arg7: memref<1x1xf32, #tpu.memory_space<vmem>>, %arg8: memref<9x1x8xf32, #tpu.memory_space<vmem>>, %arg9: memref<1x8xf32, #tpu.memory_space<vmem>>, %arg10: memref<8x4xf32, #tpu.memory_space<vmem>>, %arg11: memref<1x4xf32, #tpu.memory_space<vmem>>, %arg12: memref<1x256x1xf32, #tpu.memory_space<vmem>>, %arg13: memref<1x1x4xf32, #tpu.memory_space<vmem>>, %arg14: memref<290x8xf32, #tpu.memory_space<vmem>>, %arg15: memref<290x1xf32, #tpu.memory_space<vmem>>) attributes {dimension_semantics = [#tpu.dimension_semantics<parallel>], iteration_bounds = array<i64: 2>, scalar_prefetch = 0 : i64, scratch_operands = 2 : i64, tpu.core_type = #tpu.core_type<tc>, window_params = [{transform_indices = @transform_0, window_bounds = array<i64: 1, 290, 4>}, {pipeline_mode = #tpu.pipeline_mode<synchronous>, transform_indices = @transform_1, window_bounds = array<i64: 256, 1>}, {pipeline_mode = #tpu.pipeline_mode<synchronous>, transform_indices = @transform_2, window_bounds = array<i64: 256, 1>}, {pipeline_mode = #tpu.pipeline_mode<synchronous>, transform_indices = @transform_3, window_bounds = array<i64: 9, 4, 8>}, {pipeline_mode = #tpu.pipeline_mode<synchronous>, transform_indices = @transform_4, window_bounds = array<i64: 1, 8>}, {pipeline_mode = #tpu.pipeline_mode<synchronous>, transform_indices = @transform_5, window_bounds = array<i64: 9, 8, 1>}, {pipeline_mode = #tpu.pipeline_mode<synchronous>, transform_indices = @transform_6, window_bounds = array<i64: 1, 1>}, {pipeline_mode = #tpu.pipeline_mode<synchronous>, transform_indices = @transform_7, window_bounds = array<i64: 9, 1, 8>}, {pipeline_mode = #tpu.pipeline_mode<synchronous>, transform_indices = @transform_8, window_bounds = array<i64: 1, 8>}, {pipeline_mode = #tpu.pipeline_mode<synchronous>, transform_indices = @transform_9, window_bounds = array<i64: 8, 4>}, {pipeline_mode = #tpu.pipeline_mode<synchronous>, transform_indices = @transform_10, window_bounds = array<i64: 1, 4>}, {transform_indices = @transform_11, window_bounds = array<i64: 1, 256, 1>}, {transform_indices = @transform_12, window_bounds = array<i64: 1, 1, 4>}]} {
    %c0 = arith.constant 0 : index
    %c0_0 = arith.constant 0 : index
    %0 = vector.load %arg2[%c0, %c0_0] : memref<256x1xf32, #tpu.memory_space<vmem>>, vector<256x1xf32>
    %c0_1 = arith.constant 0 : index
    %c0_2 = arith.constant 0 : index
    %1 = vector.load %arg3[%c0_1, %c0_2] : memref<256x1xf32, #tpu.memory_space<vmem>>, vector<256x1xf32>
    %cst = arith.constant 0.000000e+00 : f32
    %2 = vector.broadcast %cst : f32 to vector<256x8xf32>
    %c0_3 = arith.constant 0 : index
    %c0_4 = arith.constant 0 : index
    %c0_5 = arith.constant 0 : index
    %3 = vector.load %arg1[%c0_3, %c0_4, %c0_5] : memref<1x290x4xf32, #tpu.memory_space<vmem>>, vector<1x256x4xf32>
    %4 = vector.shape_cast %3 : vector<1x256x4xf32> to vector<256x4xf32>
    %5 = vector.broadcast %0 : vector<256x1xf32> to vector<256x4xf32>
    %6 = arith.mulf %4, %5 : vector<256x4xf32>
    %c0_6 = arith.constant 0 : index
    %c0_7 = arith.constant 0 : index
    %c0_8 = arith.constant 0 : index
    %7 = vector.load %arg4[%c0_6, %c0_7, %c0_8] : memref<9x4x8xf32, #tpu.memory_space<vmem>>, vector<1x4x8xf32>
    %8 = vector.shape_cast %7 : vector<1x4x8xf32> to vector<4x8xf32>
    %cst_9 = arith.constant dense<0.000000e+00> : vector<256x8xf32>
    %9 = tpu.matmul %6, %8, %cst_9 {dimension_numbers = #tpu.dot_dimension_numbers<[1], [0], [0], [1], [0, 0, 1, 1], [], []>} : vector<256x4xf32>, vector<4x8xf32>, vector<256x8xf32> -> vector<256x8xf32>
    %10 = arith.addf %2, %9 : vector<256x8xf32>
    %c0_10 = arith.constant 0 : index
    %c1 = arith.constant 1 : index
    %c0_11 = arith.constant 0 : index
    %11 = vector.load %arg1[%c0_10, %c1, %c0_11] : memref<1x290x4xf32, #tpu.memory_space<vmem>>, vector<1x256x4xf32>
    %12 = vector.shape_cast %11 : vector<1x256x4xf32> to vector<256x4xf32>
    %c1_12 = arith.constant 1 : index
    %c0_13 = arith.constant 0 : index
    %c0_14 = arith.constant 0 : index
    %13 = vector.load %arg4[%c1_12, %c0_13, %c0_14] : memref<9x4x8xf32, #tpu.memory_space<vmem>>, vector<1x4x8xf32>
    %14 = vector.shape_cast %13 : vector<1x4x8xf32> to vector<4x8xf32>
    %cst_15 = arith.constant dense<0.000000e+00> : vector<256x8xf32>
    %15 = tpu.matmul %12, %14, %cst_15 {dimension_numbers = #tpu.dot_dimension_numbers<[1], [0], [0], [1], [0, 0, 1, 1], [], []>} : vector<256x4xf32>, vector<4x8xf32>, vector<256x8xf32> -> vector<256x8xf32>
    %16 = arith.addf %10, %15 : vector<256x8xf32>
    %c0_16 = arith.constant 0 : index
    %c2 = arith.constant 2 : index
    %c0_17 = arith.constant 0 : index
    %17 = vector.load %arg1[%c0_16, %c2, %c0_17] : memref<1x290x4xf32, #tpu.memory_space<vmem>>, vector<1x256x4xf32>
    %18 = vector.shape_cast %17 : vector<1x256x4xf32> to vector<256x4xf32>
    %19 = vector.broadcast %1 : vector<256x1xf32> to vector<256x4xf32>
    %20 = arith.mulf %18, %19 : vector<256x4xf32>
    %c2_18 = arith.constant 2 : index
    %c0_19 = arith.constant 0 : index
    %c0_20 = arith.constant 0 : index
    %21 = vector.load %arg4[%c2_18, %c0_19, %c0_20] : memref<9x4x8xf32, #tpu.memory_space<vmem>>, vector<1x4x8xf32>
    %22 = vector.shape_cast %21 : vector<1x4x8xf32> to vector<4x8xf32>
    %cst_21 = arith.constant dense<0.000000e+00> : vector<256x8xf32>
    %23 = tpu.matmul %20, %22, %cst_21 {dimension_numbers = #tpu.dot_dimension_numbers<[1], [0], [0], [1], [0, 0, 1, 1], [], []>} : vector<256x4xf32>, vector<4x8xf32>, vector<256x8xf32> -> vector<256x8xf32>
    %24 = arith.addf %16, %23 : vector<256x8xf32>
    %c0_22 = arith.constant 0 : index
    %c16 = arith.constant 16 : index
    %c0_23 = arith.constant 0 : index
    %25 = vector.load %arg1[%c0_22, %c16, %c0_23] : memref<1x290x4xf32, #tpu.memory_space<vmem>>, vector<1x256x4xf32>
    %26 = vector.shape_cast %25 : vector<1x256x4xf32> to vector<256x4xf32>
    %27 = vector.broadcast %0 : vector<256x1xf32> to vector<256x4xf32>
    %28 = arith.mulf %26, %27 : vector<256x4xf32>
    %c3 = arith.constant 3 : index
    %c0_24 = arith.constant 0 : index
    %c0_25 = arith.constant 0 : index
    %29 = vector.load %arg4[%c3, %c0_24, %c0_25] : memref<9x4x8xf32, #tpu.memory_space<vmem>>, vector<1x4x8xf32>
    %30 = vector.shape_cast %29 : vector<1x4x8xf32> to vector<4x8xf32>
    %cst_26 = arith.constant dense<0.000000e+00> : vector<256x8xf32>
    %31 = tpu.matmul %28, %30, %cst_26 {dimension_numbers = #tpu.dot_dimension_numbers<[1], [0], [0], [1], [0, 0, 1, 1], [], []>} : vector<256x4xf32>, vector<4x8xf32>, vector<256x8xf32> -> vector<256x8xf32>
    %32 = arith.addf %24, %31 : vector<256x8xf32>
    %c0_27 = arith.constant 0 : index
    %c17 = arith.constant 17 : index
    %c0_28 = arith.constant 0 : index
    %33 = vector.load %arg1[%c0_27, %c17, %c0_28] : memref<1x290x4xf32, #tpu.memory_space<vmem>>, vector<1x256x4xf32>
    %34 = vector.shape_cast %33 : vector<1x256x4xf32> to vector<256x4xf32>
    %c4 = arith.constant 4 : index
    %c0_29 = arith.constant 0 : index
    %c0_30 = arith.constant 0 : index
    %35 = vector.load %arg4[%c4, %c0_29, %c0_30] : memref<9x4x8xf32, #tpu.memory_space<vmem>>, vector<1x4x8xf32>
    %36 = vector.shape_cast %35 : vector<1x4x8xf32> to vector<4x8xf32>
    %cst_31 = arith.constant dense<0.000000e+00> : vector<256x8xf32>
    %37 = tpu.matmul %34, %36, %cst_31 {dimension_numbers = #tpu.dot_dimension_numbers<[1], [0], [0], [1], [0, 0, 1, 1], [], []>} : vector<256x4xf32>, vector<4x8xf32>, vector<256x8xf32> -> vector<256x8xf32>
    %38 = arith.addf %32, %37 : vector<256x8xf32>
    %c0_32 = arith.constant 0 : index
    %c18 = arith.constant 18 : index
    %c0_33 = arith.constant 0 : index
    %39 = vector.load %arg1[%c0_32, %c18, %c0_33] : memref<1x290x4xf32, #tpu.memory_space<vmem>>, vector<1x256x4xf32>
    %40 = vector.shape_cast %39 : vector<1x256x4xf32> to vector<256x4xf32>
    %41 = vector.broadcast %1 : vector<256x1xf32> to vector<256x4xf32>
    %42 = arith.mulf %40, %41 : vector<256x4xf32>
    %c5 = arith.constant 5 : index
    %c0_34 = arith.constant 0 : index
    %c0_35 = arith.constant 0 : index
    %43 = vector.load %arg4[%c5, %c0_34, %c0_35] : memref<9x4x8xf32, #tpu.memory_space<vmem>>, vector<1x4x8xf32>
    %44 = vector.shape_cast %43 : vector<1x4x8xf32> to vector<4x8xf32>
    %cst_36 = arith.constant dense<0.000000e+00> : vector<256x8xf32>
    %45 = tpu.matmul %42, %44, %cst_36 {dimension_numbers = #tpu.dot_dimension_numbers<[1], [0], [0], [1], [0, 0, 1, 1], [], []>} : vector<256x4xf32>, vector<4x8xf32>, vector<256x8xf32> -> vector<256x8xf32>
    %46 = arith.addf %38, %45 : vector<256x8xf32>
    %c0_37 = arith.constant 0 : index
    %c32 = arith.constant 32 : index
    %c0_38 = arith.constant 0 : index
    %47 = vector.load %arg1[%c0_37, %c32, %c0_38] : memref<1x290x4xf32, #tpu.memory_space<vmem>>, vector<1x256x4xf32>
    %48 = vector.shape_cast %47 : vector<1x256x4xf32> to vector<256x4xf32>
    %49 = vector.broadcast %0 : vector<256x1xf32> to vector<256x4xf32>
    %50 = arith.mulf %48, %49 : vector<256x4xf32>
    %c6 = arith.constant 6 : index
    %c0_39 = arith.constant 0 : index
    %c0_40 = arith.constant 0 : index
    %51 = vector.load %arg4[%c6, %c0_39, %c0_40] : memref<9x4x8xf32, #tpu.memory_space<vmem>>, vector<1x4x8xf32>
    %52 = vector.shape_cast %51 : vector<1x4x8xf32> to vector<4x8xf32>
    %cst_41 = arith.constant dense<0.000000e+00> : vector<256x8xf32>
    %53 = tpu.matmul %50, %52, %cst_41 {dimension_numbers = #tpu.dot_dimension_numbers<[1], [0], [0], [1], [0, 0, 1, 1], [], []>} : vector<256x4xf32>, vector<4x8xf32>, vector<256x8xf32> -> vector<256x8xf32>
    %54 = arith.addf %46, %53 : vector<256x8xf32>
    %c0_42 = arith.constant 0 : index
    %c33 = arith.constant 33 : index
    %c0_43 = arith.constant 0 : index
    %55 = vector.load %arg1[%c0_42, %c33, %c0_43] : memref<1x290x4xf32, #tpu.memory_space<vmem>>, vector<1x256x4xf32>
    %56 = vector.shape_cast %55 : vector<1x256x4xf32> to vector<256x4xf32>
    %c7 = arith.constant 7 : index
    %c0_44 = arith.constant 0 : index
    %c0_45 = arith.constant 0 : index
    %57 = vector.load %arg4[%c7, %c0_44, %c0_45] : memref<9x4x8xf32, #tpu.memory_space<vmem>>, vector<1x4x8xf32>
    %58 = vector.shape_cast %57 : vector<1x4x8xf32> to vector<4x8xf32>
    %cst_46 = arith.constant dense<0.000000e+00> : vector<256x8xf32>
    %59 = tpu.matmul %56, %58, %cst_46 {dimension_numbers = #tpu.dot_dimension_numbers<[1], [0], [0], [1], [0, 0, 1, 1], [], []>} : vector<256x4xf32>, vector<4x8xf32>, vector<256x8xf32> -> vector<256x8xf32>
    %60 = arith.addf %54, %59 : vector<256x8xf32>
    %c0_47 = arith.constant 0 : index
    %c34 = arith.constant 34 : index
    %c0_48 = arith.constant 0 : index
    %61 = vector.load %arg1[%c0_47, %c34, %c0_48] : memref<1x290x4xf32, #tpu.memory_space<vmem>>, vector<1x256x4xf32>
    %62 = vector.shape_cast %61 : vector<1x256x4xf32> to vector<256x4xf32>
    %63 = vector.broadcast %1 : vector<256x1xf32> to vector<256x4xf32>
    %64 = arith.mulf %62, %63 : vector<256x4xf32>
    %c8 = arith.constant 8 : index
    %c0_49 = arith.constant 0 : index
    %c0_50 = arith.constant 0 : index
    %65 = vector.load %arg4[%c8, %c0_49, %c0_50] : memref<9x4x8xf32, #tpu.memory_space<vmem>>, vector<1x4x8xf32>
    %66 = vector.shape_cast %65 : vector<1x4x8xf32> to vector<4x8xf32>
    %cst_51 = arith.constant dense<0.000000e+00> : vector<256x8xf32>
    %67 = tpu.matmul %64, %66, %cst_51 {dimension_numbers = #tpu.dot_dimension_numbers<[1], [0], [0], [1], [0, 0, 1, 1], [], []>} : vector<256x4xf32>, vector<4x8xf32>, vector<256x8xf32> -> vector<256x8xf32>
    %68 = arith.addf %60, %67 : vector<256x8xf32>
    %c0_52 = arith.constant 0 : index
    %c0_53 = arith.constant 0 : index
    %69 = vector.load %arg5[%c0_52, %c0_53] : memref<1x8xf32, #tpu.memory_space<vmem>>, vector<1x8xf32>
    %70 = vector.broadcast %69 : vector<1x8xf32> to vector<256x8xf32>
    %71 = arith.addf %68, %70 : vector<256x8xf32>
    %cst_54 = arith.constant 0.000000e+00 : f32
    %72 = vector.broadcast %cst_54 : f32 to vector<256x8xf32>
    %73 = arith.maximumf %71, %72 : vector<256x8xf32>
    %cst_55 = arith.constant 0.000000e+00 : f32
    %74 = vector.broadcast %cst_55 : f32 to vector<290x8xf32>
    %c0_56 = arith.constant 0 : index
    %c0_57 = arith.constant 0 : index
    %75 = vector.load %arg14[%c0_56, %c0_57] : memref<290x8xf32, #tpu.memory_space<vmem>>, vector<290x8xf32>
    tpu.vector_store %arg14[%c0_56, %c0_57], %74 {strides = array<i32>} : memref<290x8xf32, #tpu.memory_space<vmem>>, vector<290x8xf32>,
    %c17_58 = arith.constant 17 : index
    %c0_59 = arith.constant 0 : index
    %76 = vector.load %arg14[%c17_58, %c0_59] : memref<290x8xf32, #tpu.memory_space<vmem>>, vector<256x8xf32>
    tpu.vector_store %arg14[%c17_58, %c0_59], %73 {strides = array<i32>} : memref<290x8xf32, #tpu.memory_space<vmem>>, vector<256x8xf32>,
    %cst_60 = arith.constant 0.000000e+00 : f32
    %77 = vector.broadcast %cst_60 : f32 to vector<256x1xf32>
    %c0_61 = arith.constant 0 : index
    %c0_62 = arith.constant 0 : index
    %78 = vector.load %arg14[%c0_61, %c0_62] : memref<290x8xf32, #tpu.memory_space<vmem>>, vector<256x8xf32>
    %79 = vector.broadcast %0 : vector<256x1xf32> to vector<256x8xf32>
    %80 = arith.mulf %78, %79 : vector<256x8xf32>
    %c0_63 = arith.constant 0 : index
    %c0_64 = arith.constant 0 : index
    %c0_65 = arith.constant 0 : index
    %81 = vector.load %arg6[%c0_63, %c0_64, %c0_65] : memref<9x8x1xf32, #tpu.memory_space<vmem>>, vector<1x8x1xf32>
    %82 = vector.shape_cast %81 : vector<1x8x1xf32> to vector<8x1xf32>
    %cst_66 = arith.constant dense<0.000000e+00> : vector<256x1xf32>
    %83 = tpu.matmul %80, %82, %cst_66 {dimension_numbers = #tpu.dot_dimension_numbers<[1], [0], [0], [1], [0, 0, 1, 1], [], []>} : vector<256x8xf32>, vector<8x1xf32>, vector<256x1xf32> -> vector<256x1xf32>
    %84 = arith.addf %77, %83 : vector<256x1xf32>
    %c1_67 = arith.constant 1 : index
    %c0_68 = arith.constant 0 : index
    %85 = vector.load %arg14[%c1_67, %c0_68] : memref<290x8xf32, #tpu.memory_space<vmem>>, vector<256x8xf32>
    %c1_69 = arith.constant 1 : index
    %c0_70 = arith.constant 0 : index
    %c0_71 = arith.constant 0 : index
    %86 = vector.load %arg6[%c1_69, %c0_70, %c0_71] : memref<9x8x1xf32, #tpu.memory_space<vmem>>, vector<1x8x1xf32>
    %87 = vector.shape_cast %86 : vector<1x8x1xf32> to vector<8x1xf32>
    %cst_72 = arith.constant dense<0.000000e+00> : vector<256x1xf32>
    %88 = tpu.matmul %85, %87, %cst_72 {dimension_numbers = #tpu.dot_dimension_numbers<[1], [0], [0], [1], [0, 0, 1, 1], [], []>} : vector<256x8xf32>, vector<8x1xf32>, vector<256x1xf32> -> vector<256x1xf32>
    %89 = arith.addf %84, %88 : vector<256x1xf32>
    %c2_73 = arith.constant 2 : index
    %c0_74 = arith.constant 0 : index
    %90 = vector.load %arg14[%c2_73, %c0_74] : memref<290x8xf32, #tpu.memory_space<vmem>>, vector<256x8xf32>
    %91 = vector.broadcast %1 : vector<256x1xf32> to vector<256x8xf32>
    %92 = arith.mulf %90, %91 : vector<256x8xf32>
    %c2_75 = arith.constant 2 : index
    %c0_76 = arith.constant 0 : index
    %c0_77 = arith.constant 0 : index
    %93 = vector.load %arg6[%c2_75, %c0_76, %c0_77] : memref<9x8x1xf32, #tpu.memory_space<vmem>>, vector<1x8x1xf32>
    %94 = vector.shape_cast %93 : vector<1x8x1xf32> to vector<8x1xf32>
    %cst_78 = arith.constant dense<0.000000e+00> : vector<256x1xf32>
    %95 = tpu.matmul %92, %94, %cst_78 {dimension_numbers = #tpu.dot_dimension_numbers<[1], [0], [0], [1], [0, 0, 1, 1], [], []>} : vector<256x8xf32>, vector<8x1xf32>, vector<256x1xf32> -> vector<256x1xf32>
    %96 = arith.addf %89, %95 : vector<256x1xf32>
    %c16_79 = arith.constant 16 : index
    %c0_80 = arith.constant 0 : index
    %97 = vector.load %arg14[%c16_79, %c0_80] : memref<290x8xf32, #tpu.memory_space<vmem>>, vector<256x8xf32>
    %98 = vector.broadcast %0 : vector<256x1xf32> to vector<256x8xf32>
    %99 = arith.mulf %97, %98 : vector<256x8xf32>
    %c3_81 = arith.constant 3 : index
    %c0_82 = arith.constant 0 : index
    %c0_83 = arith.constant 0 : index
    %100 = vector.load %arg6[%c3_81, %c0_82, %c0_83] : memref<9x8x1xf32, #tpu.memory_space<vmem>>, vector<1x8x1xf32>
    %101 = vector.shape_cast %100 : vector<1x8x1xf32> to vector<8x1xf32>
    %cst_84 = arith.constant dense<0.000000e+00> : vector<256x1xf32>
    %102 = tpu.matmul %99, %101, %cst_84 {dimension_numbers = #tpu.dot_dimension_numbers<[1], [0], [0], [1], [0, 0, 1, 1], [], []>} : vector<256x8xf32>, vector<8x1xf32>, vector<256x1xf32> -> vector<256x1xf32>
    %103 = arith.addf %96, %102 : vector<256x1xf32>
    %c17_85 = arith.constant 17 : index
    %c0_86 = arith.constant 0 : index
    %104 = vector.load %arg14[%c17_85, %c0_86] : memref<290x8xf32, #tpu.memory_space<vmem>>, vector<256x8xf32>
    %c4_87 = arith.constant 4 : index
    %c0_88 = arith.constant 0 : index
    %c0_89 = arith.constant 0 : index
    %105 = vector.load %arg6[%c4_87, %c0_88, %c0_89] : memref<9x8x1xf32, #tpu.memory_space<vmem>>, vector<1x8x1xf32>
    %106 = vector.shape_cast %105 : vector<1x8x1xf32> to vector<8x1xf32>
    %cst_90 = arith.constant dense<0.000000e+00> : vector<256x1xf32>
    %107 = tpu.matmul %104, %106, %cst_90 {dimension_numbers = #tpu.dot_dimension_numbers<[1], [0], [0], [1], [0, 0, 1, 1], [], []>} : vector<256x8xf32>, vector<8x1xf32>, vector<256x1xf32> -> vector<256x1xf32>
    %108 = arith.addf %103, %107 : vector<256x1xf32>
    %c18_91 = arith.constant 18 : index
    %c0_92 = arith.constant 0 : index
    %109 = vector.load %arg14[%c18_91, %c0_92] : memref<290x8xf32, #tpu.memory_space<vmem>>, vector<256x8xf32>
    %110 = vector.broadcast %1 : vector<256x1xf32> to vector<256x8xf32>
    %111 = arith.mulf %109, %110 : vector<256x8xf32>
    %c5_93 = arith.constant 5 : index
    %c0_94 = arith.constant 0 : index
    %c0_95 = arith.constant 0 : index
    %112 = vector.load %arg6[%c5_93, %c0_94, %c0_95] : memref<9x8x1xf32, #tpu.memory_space<vmem>>, vector<1x8x1xf32>
    %113 = vector.shape_cast %112 : vector<1x8x1xf32> to vector<8x1xf32>
    %cst_96 = arith.constant dense<0.000000e+00> : vector<256x1xf32>
    %114 = tpu.matmul %111, %113, %cst_96 {dimension_numbers = #tpu.dot_dimension_numbers<[1], [0], [0], [1], [0, 0, 1, 1], [], []>} : vector<256x8xf32>, vector<8x1xf32>, vector<256x1xf32> -> vector<256x1xf32>
    %115 = arith.addf %108, %114 : vector<256x1xf32>
    %c32_97 = arith.constant 32 : index
    %c0_98 = arith.constant 0 : index
    %116 = vector.load %arg14[%c32_97, %c0_98] : memref<290x8xf32, #tpu.memory_space<vmem>>, vector<256x8xf32>
    %117 = vector.broadcast %0 : vector<256x1xf32> to vector<256x8xf32>
    %118 = arith.mulf %116, %117 : vector<256x8xf32>
    %c6_99 = arith.constant 6 : index
    %c0_100 = arith.constant 0 : index
    %c0_101 = arith.constant 0 : index
    %119 = vector.load %arg6[%c6_99, %c0_100, %c0_101] : memref<9x8x1xf32, #tpu.memory_space<vmem>>, vector<1x8x1xf32>
    %120 = vector.shape_cast %119 : vector<1x8x1xf32> to vector<8x1xf32>
    %cst_102 = arith.constant dense<0.000000e+00> : vector<256x1xf32>
    %121 = tpu.matmul %118, %120, %cst_102 {dimension_numbers = #tpu.dot_dimension_numbers<[1], [0], [0], [1], [0, 0, 1, 1], [], []>} : vector<256x8xf32>, vector<8x1xf32>, vector<256x1xf32> -> vector<256x1xf32>
    %122 = arith.addf %115, %121 : vector<256x1xf32>
    %c33_103 = arith.constant 33 : index
    %c0_104 = arith.constant 0 : index
    %123 = vector.load %arg14[%c33_103, %c0_104] : memref<290x8xf32, #tpu.memory_space<vmem>>, vector<256x8xf32>
    %c7_105 = arith.constant 7 : index
    %c0_106 = arith.constant 0 : index
    %c0_107 = arith.constant 0 : index
    %124 = vector.load %arg6[%c7_105, %c0_106, %c0_107] : memref<9x8x1xf32, #tpu.memory_space<vmem>>, vector<1x8x1xf32>
    %125 = vector.shape_cast %124 : vector<1x8x1xf32> to vector<8x1xf32>
    %cst_108 = arith.constant dense<0.000000e+00> : vector<256x1xf32>
    %126 = tpu.matmul %123, %125, %cst_108 {dimension_numbers = #tpu.dot_dimension_numbers<[1], [0], [0], [1], [0, 0, 1, 1], [], []>} : vector<256x8xf32>, vector<8x1xf32>, vector<256x1xf32> -> vector<256x1xf32>
    %127 = arith.addf %122, %126 : vector<256x1xf32>
    %c34_109 = arith.constant 34 : index
    %c0_110 = arith.constant 0 : index
    %128 = vector.load %arg14[%c34_109, %c0_110] : memref<290x8xf32, #tpu.memory_space<vmem>>, vector<256x8xf32>
    %129 = vector.broadcast %1 : vector<256x1xf32> to vector<256x8xf32>
    %130 = arith.mulf %128, %129 : vector<256x8xf32>
    %c8_111 = arith.constant 8 : index
    %c0_112 = arith.constant 0 : index
    %c0_113 = arith.constant 0 : index
    %131 = vector.load %arg6[%c8_111, %c0_112, %c0_113] : memref<9x8x1xf32, #tpu.memory_space<vmem>>, vector<1x8x1xf32>
    %132 = vector.shape_cast %131 : vector<1x8x1xf32> to vector<8x1xf32>
    %cst_114 = arith.constant dense<0.000000e+00> : vector<256x1xf32>
    %133 = tpu.matmul %130, %132, %cst_114 {dimension_numbers = #tpu.dot_dimension_numbers<[1], [0], [0], [1], [0, 0, 1, 1], [], []>} : vector<256x8xf32>, vector<8x1xf32>, vector<256x1xf32> -> vector<256x1xf32>
    %134 = arith.addf %127, %133 : vector<256x1xf32>
    %c0_115 = arith.constant 0 : index
    %c0_116 = arith.constant 0 : index
    %135 = vector.load %arg7[%c0_115, %c0_116] : memref<1x1xf32, #tpu.memory_space<vmem>>, vector<1x1xf32>
    %136 = vector.broadcast %135 : vector<1x1xf32> to vector<256x1xf32>
    %137 = arith.addf %134, %136 : vector<256x1xf32>
    %c0_117 = arith.constant 0 : index
    %c0_118 = arith.constant 0 : index
    %c0_119 = arith.constant 0 : index
    %138 = vector.load %arg12[%c0_117, %c0_118, %c0_119] : memref<1x256x1xf32, #tpu.memory_space<vmem>>, vector<1x256x1xf32>
    %139 = vector.shape_cast %138 : vector<1x256x1xf32> to vector<256x1xf32>
    %140 = vector.shape_cast %137 : vector<256x1xf32> to vector<1x256x1xf32>
    tpu.vector_store %arg12[%c0_117, %c0_118, %c0_119], %140 {strides = array<i32>} : memref<1x256x1xf32, #tpu.memory_space<vmem>>, vector<1x256x1xf32>,
    %cst_120 = arith.constant 0.000000e+00 : f32
    %141 = vector.broadcast %cst_120 : f32 to vector<290x1xf32>
    %c0_121 = arith.constant 0 : index
    %c0_122 = arith.constant 0 : index
    %142 = vector.load %arg15[%c0_121, %c0_122] : memref<290x1xf32, #tpu.memory_space<vmem>>, vector<290x1xf32>
    tpu.vector_store %arg15[%c0_121, %c0_122], %141 {strides = array<i32>} : memref<290x1xf32, #tpu.memory_space<vmem>>, vector<290x1xf32>,
    %c17_123 = arith.constant 17 : index
    %c0_124 = arith.constant 0 : index
    %143 = vector.load %arg15[%c17_123, %c0_124] : memref<290x1xf32, #tpu.memory_space<vmem>>, vector<256x1xf32>
    tpu.vector_store %arg15[%c17_123, %c0_124], %137 {strides = array<i32>} : memref<290x1xf32, #tpu.memory_space<vmem>>, vector<256x1xf32>,
    %cst_125 = arith.constant 0.000000e+00 : f32
    %144 = vector.broadcast %cst_125 : f32 to vector<256x8xf32>
    %c0_126 = arith.constant 0 : index
    %c0_127 = arith.constant 0 : index
    %145 = vector.load %arg15[%c0_126, %c0_127] : memref<290x1xf32, #tpu.memory_space<vmem>>, vector<256x1xf32>
    %146 = arith.mulf %145, %0 : vector<256x1xf32>
    %c0_128 = arith.constant 0 : index
    %c0_129 = arith.constant 0 : index
    %c0_130 = arith.constant 0 : index
    %147 = vector.load %arg8[%c0_128, %c0_129, %c0_130] : memref<9x1x8xf32, #tpu.memory_space<vmem>>, vector<1x1x8xf32>
    %148 = vector.shape_cast %147 : vector<1x1x8xf32> to vector<1x8xf32>
    %149 = vector.broadcast %146 : vector<256x1xf32> to vector<256x8xf32>
    %150 = vector.broadcast %148 : vector<1x8xf32> to vector<256x8xf32>
    %151 = arith.mulf %149, %150 : vector<256x8xf32>
    %152 = arith.addf %144, %151 : vector<256x8xf32>
    %c1_131 = arith.constant 1 : index
    %c0_132 = arith.constant 0 : index
    %153 = vector.load %arg15[%c1_131, %c0_132] : memref<290x1xf32, #tpu.memory_space<vmem>>, vector<256x1xf32>
    %c1_133 = arith.constant 1 : index
    %c0_134 = arith.constant 0 : index
    %c0_135 = arith.constant 0 : index
    %154 = vector.load %arg8[%c1_133, %c0_134, %c0_135] : memref<9x1x8xf32, #tpu.memory_space<vmem>>, vector<1x1x8xf32>
    %155 = vector.shape_cast %154 : vector<1x1x8xf32> to vector<1x8xf32>
    %156 = vector.broadcast %153 : vector<256x1xf32> to vector<256x8xf32>
    %157 = vector.broadcast %155 : vector<1x8xf32> to vector<256x8xf32>
    %158 = arith.mulf %156, %157 : vector<256x8xf32>
    %159 = arith.addf %152, %158 : vector<256x8xf32>
    %c2_136 = arith.constant 2 : index
    %c0_137 = arith.constant 0 : index
    %160 = vector.load %arg15[%c2_136, %c0_137] : memref<290x1xf32, #tpu.memory_space<vmem>>, vector<256x1xf32>
    %161 = arith.mulf %160, %1 : vector<256x1xf32>
    %c2_138 = arith.constant 2 : index
    %c0_139 = arith.constant 0 : index
    %c0_140 = arith.constant 0 : index
    %162 = vector.load %arg8[%c2_138, %c0_139, %c0_140] : memref<9x1x8xf32, #tpu.memory_space<vmem>>, vector<1x1x8xf32>
    %163 = vector.shape_cast %162 : vector<1x1x8xf32> to vector<1x8xf32>
    %164 = vector.broadcast %161 : vector<256x1xf32> to vector<256x8xf32>
    %165 = vector.broadcast %163 : vector<1x8xf32> to vector<256x8xf32>
    %166 = arith.mulf %164, %165 : vector<256x8xf32>
    %167 = arith.addf %159, %166 : vector<256x8xf32>
    %c16_141 = arith.constant 16 : index
    %c0_142 = arith.constant 0 : index
    %168 = vector.load %arg15[%c16_141, %c0_142] : memref<290x1xf32, #tpu.memory_space<vmem>>, vector<256x1xf32>
    %169 = arith.mulf %168, %0 : vector<256x1xf32>
    %c3_143 = arith.constant 3 : index
    %c0_144 = arith.constant 0 : index
    %c0_145 = arith.constant 0 : index
    %170 = vector.load %arg8[%c3_143, %c0_144, %c0_145] : memref<9x1x8xf32, #tpu.memory_space<vmem>>, vector<1x1x8xf32>
    %171 = vector.shape_cast %170 : vector<1x1x8xf32> to vector<1x8xf32>
    %172 = vector.broadcast %169 : vector<256x1xf32> to vector<256x8xf32>
    %173 = vector.broadcast %171 : vector<1x8xf32> to vector<256x8xf32>
    %174 = arith.mulf %172, %173 : vector<256x8xf32>
    %175 = arith.addf %167, %174 : vector<256x8xf32>
    %c17_146 = arith.constant 17 : index
    %c0_147 = arith.constant 0 : index
    %176 = vector.load %arg15[%c17_146, %c0_147] : memref<290x1xf32, #tpu.memory_space<vmem>>, vector<256x1xf32>
    %c4_148 = arith.constant 4 : index
    %c0_149 = arith.constant 0 : index
    %c0_150 = arith.constant 0 : index
    %177 = vector.load %arg8[%c4_148, %c0_149, %c0_150] : memref<9x1x8xf32, #tpu.memory_space<vmem>>, vector<1x1x8xf32>
    %178 = vector.shape_cast %177 : vector<1x1x8xf32> to vector<1x8xf32>
    %179 = vector.broadcast %176 : vector<256x1xf32> to vector<256x8xf32>
    %180 = vector.broadcast %178 : vector<1x8xf32> to vector<256x8xf32>
    %181 = arith.mulf %179, %180 : vector<256x8xf32>
    %182 = arith.addf %175, %181 : vector<256x8xf32>
    %c18_151 = arith.constant 18 : index
    %c0_152 = arith.constant 0 : index
    %183 = vector.load %arg15[%c18_151, %c0_152] : memref<290x1xf32, #tpu.memory_space<vmem>>, vector<256x1xf32>
    %184 = arith.mulf %183, %1 : vector<256x1xf32>
    %c5_153 = arith.constant 5 : index
    %c0_154 = arith.constant 0 : index
    %c0_155 = arith.constant 0 : index
    %185 = vector.load %arg8[%c5_153, %c0_154, %c0_155] : memref<9x1x8xf32, #tpu.memory_space<vmem>>, vector<1x1x8xf32>
    %186 = vector.shape_cast %185 : vector<1x1x8xf32> to vector<1x8xf32>
    %187 = vector.broadcast %184 : vector<256x1xf32> to vector<256x8xf32>
    %188 = vector.broadcast %186 : vector<1x8xf32> to vector<256x8xf32>
    %189 = arith.mulf %187, %188 : vector<256x8xf32>
    %190 = arith.addf %182, %189 : vector<256x8xf32>
    %c32_156 = arith.constant 32 : index
    %c0_157 = arith.constant 0 : index
    %191 = vector.load %arg15[%c32_156, %c0_157] : memref<290x1xf32, #tpu.memory_space<vmem>>, vector<256x1xf32>
    %192 = arith.mulf %191, %0 : vector<256x1xf32>
    %c6_158 = arith.constant 6 : index
    %c0_159 = arith.constant 0 : index
    %c0_160 = arith.constant 0 : index
    %193 = vector.load %arg8[%c6_158, %c0_159, %c0_160] : memref<9x1x8xf32, #tpu.memory_space<vmem>>, vector<1x1x8xf32>
    %194 = vector.shape_cast %193 : vector<1x1x8xf32> to vector<1x8xf32>
    %195 = vector.broadcast %192 : vector<256x1xf32> to vector<256x8xf32>
    %196 = vector.broadcast %194 : vector<1x8xf32> to vector<256x8xf32>
    %197 = arith.mulf %195, %196 : vector<256x8xf32>
    %198 = arith.addf %190, %197 : vector<256x8xf32>
    %c33_161 = arith.constant 33 : index
    %c0_162 = arith.constant 0 : index
    %199 = vector.load %arg15[%c33_161, %c0_162] : memref<290x1xf32, #tpu.memory_space<vmem>>, vector<256x1xf32>
    %c7_163 = arith.constant 7 : index
    %c0_164 = arith.constant 0 : index
    %c0_165 = arith.constant 0 : index
    %200 = vector.load %arg8[%c7_163, %c0_164, %c0_165] : memref<9x1x8xf32, #tpu.memory_space<vmem>>, vector<1x1x8xf32>
    %201 = vector.shape_cast %200 : vector<1x1x8xf32> to vector<1x8xf32>
    %202 = vector.broadcast %199 : vector<256x1xf32> to vector<256x8xf32>
    %203 = vector.broadcast %201 : vector<1x8xf32> to vector<256x8xf32>
    %204 = arith.mulf %202, %203 : vector<256x8xf32>
    %205 = arith.addf %198, %204 : vector<256x8xf32>
    %c34_166 = arith.constant 34 : index
    %c0_167 = arith.constant 0 : index
    %206 = vector.load %arg15[%c34_166, %c0_167] : memref<290x1xf32, #tpu.memory_space<vmem>>, vector<256x1xf32>
    %207 = arith.mulf %206, %1 : vector<256x1xf32>
    %c8_168 = arith.constant 8 : index
    %c0_169 = arith.constant 0 : index
    %c0_170 = arith.constant 0 : index
    %208 = vector.load %arg8[%c8_168, %c0_169, %c0_170] : memref<9x1x8xf32, #tpu.memory_space<vmem>>, vector<1x1x8xf32>
    %209 = vector.shape_cast %208 : vector<1x1x8xf32> to vector<1x8xf32>
    %210 = vector.broadcast %207 : vector<256x1xf32> to vector<256x8xf32>
    %211 = vector.broadcast %209 : vector<1x8xf32> to vector<256x8xf32>
    %212 = arith.mulf %210, %211 : vector<256x8xf32>
    %213 = arith.addf %205, %212 : vector<256x8xf32>
    %c0_171 = arith.constant 0 : index
    %c0_172 = arith.constant 0 : index
    %214 = vector.load %arg9[%c0_171, %c0_172] : memref<1x8xf32, #tpu.memory_space<vmem>>, vector<1x8xf32>
    %215 = vector.broadcast %214 : vector<1x8xf32> to vector<256x8xf32>
    %216 = arith.addf %213, %215 : vector<256x8xf32>
    %cst_173 = arith.constant 0.000000e+00 : f32
    %217 = vector.broadcast %cst_173 : f32 to vector<256x8xf32>
    %218 = arith.maximumf %216, %217 : vector<256x8xf32>
    %cst_174 = arith.constant dense<0.000000e+00> : vector<8xf32>
    %219 = vector.multi_reduction <add>, %218, %cst_174 [0] : vector<256x8xf32> to vector<8xf32>
    %220 = vector.shape_cast %219 : vector<8xf32> to vector<1x8xf32>
    %cst_175 = arith.constant 3.906250e-03 : f32
    %221 = vector.broadcast %cst_175 : f32 to vector<1x8xf32>
    %222 = arith.mulf %220, %221 : vector<1x8xf32>
    %c0_176 = arith.constant 0 : index
    %c0_177 = arith.constant 0 : index
    %223 = vector.load %arg10[%c0_176, %c0_177] : memref<8x4xf32, #tpu.memory_space<vmem>>, vector<8x4xf32>
    %cst_178 = arith.constant dense<0.000000e+00> : vector<1x4xf32>
    %224 = tpu.matmul %222, %223, %cst_178 {dimension_numbers = #tpu.dot_dimension_numbers<[1], [0], [0], [1], [0, 0, 1, 1], [], []>} : vector<1x8xf32>, vector<8x4xf32>, vector<1x4xf32> -> vector<1x4xf32>
    %c0_179 = arith.constant 0 : index
    %c0_180 = arith.constant 0 : index
    %225 = vector.load %arg11[%c0_179, %c0_180] : memref<1x4xf32, #tpu.memory_space<vmem>>, vector<1x4xf32>
    %226 = arith.addf %224, %225 : vector<1x4xf32>
    %c0_181 = arith.constant 0 : index
    %c0_182 = arith.constant 0 : index
    %c0_183 = arith.constant 0 : index
    %227 = vector.load %arg13[%c0_181, %c0_182, %c0_183] : memref<1x1x4xf32, #tpu.memory_space<vmem>>, vector<1x1x4xf32>
    %228 = vector.shape_cast %227 : vector<1x1x4xf32> to vector<1x4xf32>
    %229 = vector.shape_cast %226 : vector<1x4xf32> to vector<1x1x4xf32>
    tpu.vector_store %arg13[%c0_181, %c0_182, %c0_183], %229 {strides = array<i32>} : memref<1x1x4xf32, #tpu.memory_space<vmem>>, vector<1x1x4xf32>,
    return
  }
  func.func @transform_0(%arg0: i32) -> (i32, i32, i32) {
    %c0_i32 = arith.constant 0 : i32
    %c0_i32_0 = arith.constant 0 : i32
    %c0_i32_1 = arith.constant 0 : i32
    return %arg0, %c0_i32, %c0_i32_0 : i32, i32, i32
  }
  func.func @transform_1(%arg0: i32) -> (i32, i32) {
    %c0_i32 = arith.constant 0 : i32
    %c0_i32_0 = arith.constant 0 : i32
    %c0_i32_1 = arith.constant 0 : i32
    return %c0_i32, %c0_i32_0 : i32, i32
  }
  func.func @transform_2(%arg0: i32) -> (i32, i32) {
    %c0_i32 = arith.constant 0 : i32
    %c0_i32_0 = arith.constant 0 : i32
    %c0_i32_1 = arith.constant 0 : i32
    return %c0_i32, %c0_i32_0 : i32, i32
  }
  func.func @transform_3(%arg0: i32) -> (i32, i32, i32) {
    %c0_i32 = arith.constant 0 : i32
    %c0_i32_0 = arith.constant 0 : i32
    %c0_i32_1 = arith.constant 0 : i32
    %c0_i32_2 = arith.constant 0 : i32
    return %c0_i32, %c0_i32_0, %c0_i32_1 : i32, i32, i32
  }
  func.func @transform_4(%arg0: i32) -> (i32, i32) {
    %c0_i32 = arith.constant 0 : i32
    %c0_i32_0 = arith.constant 0 : i32
    %c0_i32_1 = arith.constant 0 : i32
    return %c0_i32, %c0_i32_0 : i32, i32
  }
  func.func @transform_5(%arg0: i32) -> (i32, i32, i32) {
    %c0_i32 = arith.constant 0 : i32
    %c0_i32_0 = arith.constant 0 : i32
    %c0_i32_1 = arith.constant 0 : i32
    %c0_i32_2 = arith.constant 0 : i32
    return %c0_i32, %c0_i32_0, %c0_i32_1 : i32, i32, i32
  }
  func.func @transform_6(%arg0: i32) -> (i32, i32) {
    %c0_i32 = arith.constant 0 : i32
    %c0_i32_0 = arith.constant 0 : i32
    %c0_i32_1 = arith.constant 0 : i32
    return %c0_i32, %c0_i32_0 : i32, i32
  }
  func.func @transform_7(%arg0: i32) -> (i32, i32, i32) {
    %c0_i32 = arith.constant 0 : i32
    %c0_i32_0 = arith.constant 0 : i32
    %c0_i32_1 = arith.constant 0 : i32
    %c0_i32_2 = arith.constant 0 : i32
    return %c0_i32, %c0_i32_0, %c0_i32_1 : i32, i32, i32
  }
  func.func @transform_8(%arg0: i32) -> (i32, i32) {
    %c0_i32 = arith.constant 0 : i32
    %c0_i32_0 = arith.constant 0 : i32
    %c0_i32_1 = arith.constant 0 : i32
    return %c0_i32, %c0_i32_0 : i32, i32
  }
  func.func @transform_9(%arg0: i32) -> (i32, i32) {
    %c0_i32 = arith.constant 0 : i32
    %c0_i32_0 = arith.constant 0 : i32
    %c0_i32_1 = arith.constant 0 : i32
    return %c0_i32, %c0_i32_0 : i32, i32
  }
  func.func @transform_10(%arg0: i32) -> (i32, i32) {
    %c0_i32 = arith.constant 0 : i32
    %c0_i32_0 = arith.constant 0 : i32
    %c0_i32_1 = arith.constant 0 : i32
    return %c0_i32, %c0_i32_0 : i32, i32
  }
  func.func @transform_11(%arg0: i32) -> (i32, i32, i32) {
    %c0_i32 = arith.constant 0 : i32
    %c0_i32_0 = arith.constant 0 : i32
    %c0_i32_1 = arith.constant 0 : i32
    return %arg0, %c0_i32, %c0_i32_0 : i32, i32, i32
  }
  func.func @transform_12(%arg0: i32) -> (i32, i32, i32) {
    %c0_i32 = arith.constant 0 : i32
    %c0_i32_0 = arith.constant 0 : i32
    %c0_i32_1 = arith.constant 0 : i32
    return %arg0, %c0_i32, %c0_i32_0 : i32, i32, i32
  }
}

</mosaic_0001>

<llo_original>
// kernel: topology_net_forward.2
$region0: #{topology_net_forward.2}
  #allocation0 [shape = 'u32[]', space=smem, size = 0x4, offset = 0x4, fixed_abs, tag = 'smem constant byte address 0x4 - core index']
  #allocation1 [shape = 'u32[72,128]{1,0:T(1,128)}', space=vmem, size = 0x9000, scoped, tag = 'internal scratch']
  #allocation2 [shape = 'f32[290,8]{1,0:T(8,128)}', space=vmem, size = 0x25000, scoped, tag = 'scratch operand']
  #allocation3 [shape = 'f32[290,1]{1,0:T(8,128)}', space=vmem, size = 0x25000, scoped, tag = 'scratch operand']
  #allocation4 [shape = 'f32[1,1]{1,0:T(1,128)S(1)}', space=vmem, size = 0x200, scoped, tag = 'scoped memory for topology_net_forward.2']
  %s0 = inlined_call_operand.vmem [shape: f32[2,290,4], index: 0, kind: input, shape index: {}]
  %s1 = inlined_call_operand.vmem [shape: f32[256,1], index: 1, kind: input, shape index: {}]
  %s2 = inlined_call_operand.vmem [shape: f32[256,1], index: 2, kind: input, shape index: {}]
  %s3 = inlined_call_operand.vmem [shape: f32[9,4,8], index: 3, kind: input, shape index: {}]
  %s4 = inlined_call_operand.vmem [shape: f32[1,8], index: 4, kind: input, shape index: {}]
  %s5 = inlined_call_operand.vmem [shape: f32[9,8,1], index: 5, kind: input, shape index: {}]
  %s6 = inlined_call_operand.<no memory space> [shape: f32[1,1], index: 6, kind: input, shape index: {}]
  %s7 = inlined_call_operand.vmem [shape: f32[9,1,8], index: 7, kind: input, shape index: {}]
  %s8 = inlined_call_operand.vmem [shape: f32[1,8], index: 8, kind: input, shape index: {}]
  %s9 = inlined_call_operand.vmem [shape: f32[8,4], index: 9, kind: input, shape index: {}]
  %s10 = inlined_call_operand.vmem [shape: f32[1,4], index: 10, kind: input, shape index: {}]
  %s11 = inlined_call_operand.vmem [shape: f32[2,256,1], index: 11, kind: output, shape index: {0}]
  %s12 = inlined_call_operand.hbm [shape: f32[2,1,4], index: 12, kind: output, shape index: {1}]
  %13 = xla_tuple %s11, %s12
  %s14 = sld [smem:[#allocation0]]
  $region85: #{topology_net_forward.2} parent=0
    _
  %s16 = ssub.s32 1, %s14
  %s17 = scalar_select 0, %s16, %s14
  %v18 = vstv %s6
  %19 = vst [vmem:[#allocation4] sm:$0x1] %v18
  $region1: #{topology_net_forward.2} parent=0
    #allocation5 [shape = 'u8[1024]{0}', space=vmem, size = 0x400, scoped, tag = 'output window, operand 1']
    #allocation6 [shape = 's32[2]{0}', space=sflag, size = 0x8, scoped, tag = 'scoped memory for topology_net_forward.2']
    %20 = vsyncpa [#allocation6], 0
    %s21 = scalar_lea.sflag [#allocation6], 1
    %22 = vsyncpa %s21, 0
    loop: start=0, step=1, limit=4
    $region2: #{topology_net_forward.2} parent=1 // loop_pre_header
      _
    $region3: #{topology_net_forward.2} parent=1 // loop_header
      %s24 = sphi 0, %s28
      %p25 = scmp.ge.s32.totalorder %s24, 4
      %s34 = sphi 0, %s36
      %s37 = sphi 0, %s34
      %s38 = sphi 0, %s37
      %s54 = sphi 0, %s38
      %s58 = sphi 0, %s58
      %s60 = sphi 0, %s58
      %s61 = sphi 0, %s60
      %s75 = sphi 0, %s61
      %s79 = sphi 0, %s79
      %s81 = sphi 0, %s79
      %s82 = sphi 0, %s81
      %s96 = sphi 0, %s82
      %s100 = sphi 0, %s100
      %s102 = sphi 0, %s100
      %s103 = sphi 0, %s102
      %s117 = sphi 0, %s103
      %s121 = sphi 0, %s121
      %s123 = sphi 0, %s121
      %s124 = sphi 0, %s123
      %s138 = sphi 0, %s124
      %s142 = sphi 0, %s142
      %s144 = sphi 0, %s142
      %s145 = sphi 0, %s144
      %s159 = sphi 0, %s145
      %s163 = sphi 0, %s163
      %s165 = sphi 0, %s163
      %s166 = sphi 0, %s165
      %s180 = sphi 0, %s166
      %s184 = sphi 0, %s184
      %s186 = sphi 0, %s184
      %s187 = sphi 0, %s186
      %s201 = sphi 0, %s187
      %s205 = sphi 0, %s205
      %s207 = sphi 0, %s205
      %s208 = sphi 0, %s207
      %s222 = sphi 0, %s208
      %s226 = sphi 0, %s226
      %s228 = sphi 0, %s226
      %s229 = sphi 0, %s228
      %s243 = sphi 0, %s229
      %s247 = sphi 0, %s247
      %s249 = sphi 0, %s247
      %s250 = sphi 0, %s249
      %s264 = sphi 0, %s250
      %s270 = sphi 0, %s272
      %s273 = sphi 0, %s270
      %s274 = sphi 0, %s273
      %s290 = sphi 0, %s274
      %s296 = sphi 0, %s298
      %s299 = sphi 0, %s296
      %s300 = sphi 0, %s299
      %s316 = sphi 0, %s300
    $region4: #{topology_net_forward.2} parent=1 // loop_header_branch
      %27 = sbr.rel (%p25) target = $region8
    $region5: #{topology_net_forward.2} parent=1 // loop_body
      %s29 = ssub.s32 %s24, 1
      %s30 = ssub.s32 %s24, 2
      %s31 = sadd.s32 %s24, 1
      %s32 = ssub.s32 %s24, %s31
      %p33 = scmp.eq.s32.totalorder %s32, 0
      %s35 = sadd.s32 %s34, 1
      %s36 = scalar_select %p33, %s34, %s35
      %p39 = pneg %p33
      %p40 = scmp.eq.s32.totalorder %s24, 1
      %p41 = por %p39, %p40
      %p42 = scmp.ne.s32.totalorder %s34, %s37
      %p43 = scmp.eq.s32.totalorder %s24, 0
      %p44 = por %p42, %p43
      %p45 = scmp.ne.s32.totalorder %s34, %s37
      %p46 = scmp.eq.s32.totalorder %s29, 1
      %p47 = por %p45, %p46
      %p48 = scmp.ne.s32.totalorder %s37, %s38
      %p49 = scmp.eq.s32.totalorder %s29, 0
      %p50 = por %p48, %p49
      %p51 = scmp.ne.s32.totalorder %s37, %s38
      %p52 = scmp.eq.s32.totalorder %s30, 1
      %p53 = por %p51, %p52
      %p55 = scmp.ne.s32.totalorder %s38, %s54
      %p56 = scmp.eq.s32.totalorder %s30, 0
      %p57 = por %p55, %p56
      %s59 = sadd.s32 %s58, 1
      %p62 = scmp.eq.s32.totalorder %s24, 1
      %p63 = scmp.ne.s32.totalorder %s58, %s60
      %p64 = scmp.eq.s32.totalorder %s24, 0
      %p65 = por %p63, %p64
      %p66 = scmp.ne.s32.totalorder %s58, %s60
      %p67 = scmp.eq.s32.totalorder %s29, 1
      %p68 = por %p66, %p67
      %p69 = scmp.ne.s32.totalorder %s60, %s61
      %p70 = scmp.eq.s32.totalorder %s29, 0
      %p71 = por %p69, %p70
      %p72 = scmp.ne.s32.totalorder %s60, %s61
      %p73 = scmp.eq.s32.totalorder %s30, 1
      %p74 = por %p72, %p73
      %p76 = scmp.ne.s32.totalorder %s61, %s75
      %p77 = scmp.eq.s32.totalorder %s30, 0
      %p78 = por %p76, %p77
      %s80 = sadd.s32 %s79, 1
      %p83 = scmp.eq.s32.totalorder %s24, 1
      %p84 = scmp.ne.s32.totalorder %s79, %s81
      %p85 = scmp.eq.s32.totalorder %s24, 0
      %p86 = por %p84, %p85
      %p87 = scmp.ne.s32.totalorder %s79, %s81
      %p88 = scmp.eq.s32.totalorder %s29, 1
      %p89 = por %p87, %p88
      %p90 = scmp.ne.s32.totalorder %s81, %s82
      %p91 = scmp.eq.s32.totalorder %s29, 0
      %p92 = por %p90, %p91
      %p93 = scmp.ne.s32.totalorder %s81, %s82
      %p94 = scmp.eq.s32.totalorder %s30, 1
      %p95 = por %p93, %p94
      %p97 = scmp.ne.s32.totalorder %s82, %s96
      %p98 = scmp.eq.s32.totalorder %s30, 0
      %p99 = por %p97, %p98
      %s101 = sadd.s32 %s100, 1
      %p104 = scmp.eq.s32.totalorder %s24, 1
      %p105 = scmp.ne.s32.totalorder %s100, %s102
      %p106 = scmp.eq.s32.totalorder %s24, 0
      %p107 = por %p105, %p106
      %p108 = scmp.ne.s32.totalorder %s100, %s102
      %p109 = scmp.eq.s32.totalorder %s29, 1
      %p110 = por %p108, %p109
      %p111 = scmp.ne.s32.totalorder %s102, %s103
      %p112 = scmp.eq.s32.totalorder %s29, 0
      %p113 = por %p111, %p112
      %p114 = scmp.ne.s32.totalorder %s102, %s103
      %p115 = scmp.eq.s32.totalorder %s30, 1
      %p116 = por %p114, %p115
      %p118 = scmp.ne.s32.totalorder %s103, %s117
      %p119 = scmp.eq.s32.totalorder %s30, 0
      %p120 = por %p118, %p119
      %s122 = sadd.s32 %s121, 1
      %p125 = scmp.eq.s32.totalorder %s24, 1
      %p126 = scmp.ne.s32.totalorder %s121, %s123
      %p127 = scmp.eq.s32.totalorder %s24, 0
      %p128 = por %p126, %p127
      %p129 = scmp.ne.s32.totalorder %s121, %s123
      %p130 = scmp.eq.s32.totalorder %s29, 1
      %p131 = por %p129, %p130
      %p132 = scmp.ne.s32.totalorder %s123, %s124
      %p133 = scmp.eq.s32.totalorder %s29, 0
      %p134 = por %p132, %p133
      %p135 = scmp.ne.s32.totalorder %s123, %s124
      %p136 = scmp.eq.s32.totalorder %s30, 1
      %p137 = por %p135, %p136
      %p139 = scmp.ne.s32.totalorder %s124, %s138
      %p140 = scmp.eq.s32.totalorder %s30, 0
      %p141 = por %p139, %p140
      %s143 = sadd.s32 %s142, 1
      %p146 = scmp.eq.s32.totalorder %s24, 1
      %p147 = scmp.ne.s32.totalorder %s142, %s144
      %p148 = scmp.eq.s32.totalorder %s24, 0
      %p149 = por %p147, %p148
      %p150 = scmp.ne.s32.totalorder %s142, %s144
      %p151 = scmp.eq.s32.totalorder %s29, 1
      %p152 = por %p150, %p151
      %p153 = scmp.ne.s32.totalorder %s144, %s145
      %p154 = scmp.eq.s32.totalorder %s29, 0
      %p155 = por %p153, %p154
      %p156 = scmp.ne.s32.totalorder %s144, %s145
      %p157 = scmp.eq.s32.totalorder %s30, 1
      %p158 = por %p156, %p157
      %p160 = scmp.ne.s32.totalorder %s145, %s159
      %p161 = scmp.eq.s32.totalorder %s30, 0
      %p162 = por %p160, %p161
      %s164 = sadd.s32 %s163, 1
      %p167 = scmp.eq.s32.totalorder %s24, 1
      %p168 = scmp.ne.s32.totalorder %s163, %s165
      %p169 = scmp.eq.s32.totalorder %s24, 0
      %p170 = por %p168, %p169
      %p171 = scmp.ne.s32.totalorder %s163, %s165
      %p172 = scmp.eq.s32.totalorder %s29, 1
      %p173 = por %p171, %p172
      %p174 = scmp.ne.s32.totalorder %s165, %s166
      %p175 = scmp.eq.s32.totalorder %s29, 0
      %p176 = por %p174, %p175
      %p177 = scmp.ne.s32.totalorder %s165, %s166
      %p178 = scmp.eq.s32.totalorder %s30, 1
      %p179 = por %p177, %p178
      %p181 = scmp.ne.s32.totalorder %s166, %s180
      %p182 = scmp.eq.s32.totalorder %s30, 0
      %p183 = por %p181, %p182
      %s185 = sadd.s32 %s184, 1
      %p188 = scmp.eq.s32.totalorder %s24, 1
      %p189 = scmp.ne.s32.totalorder %s184, %s186
      %p190 = scmp.eq.s32.totalorder %s24, 0
      %p191 = por %p189, %p190
      %p192 = scmp.ne.s32.totalorder %s184, %s186
      %p193 = scmp.eq.s32.totalorder %s29, 1
      %p194 = por %p192, %p193
      %p195 = scmp.ne.s32.totalorder %s186, %s187
      %p196 = scmp.eq.s32.totalorder %s29, 0
      %p197 = por %p195, %p196
      %p198 = scmp.ne.s32.totalorder %s186, %s187
      %p199 = scmp.eq.s32.totalorder %s30, 1
      %p200 = por %p198, %p199
      %p202 = scmp.ne.s32.totalorder %s187, %s201
      %p203 = scmp.eq.s32.totalorder %s30, 0
      %p204 = por %p202, %p203
      %s206 = sadd.s32 %s205, 1
      %p209 = scmp.eq.s32.totalorder %s24, 1
      %p210 = scmp.ne.s32.totalorder %s205, %s207
      %p211 = scmp.eq.s32.totalorder %s24, 0
      %p212 = por %p210, %p211
      %p213 = scmp.ne.s32.totalorder %s205, %s207
      %p214 = scmp.eq.s32.totalorder %s29, 1
      %p215 = por %p213, %p214
      %p216 = scmp.ne.s32.totalorder %s207, %s208
      %p217 = scmp.eq.s32.totalorder %s29, 0
      %p218 = por %p216, %p217
      %p219 = scmp.ne.s32.totalorder %s207, %s208
      %p220 = scmp.eq.s32.totalorder %s30, 1
      %p221 = por %p219, %p220
      %p223 = scmp.ne.s32.totalorder %s208, %s222
      %p224 = scmp.eq.s32.totalorder %s30, 0
      %p225 = por %p223, %p224
      %s227 = sadd.s32 %s226, 1
      %p230 = scmp.eq.s32.totalorder %s24, 1
      %p231 = scmp.ne.s32.totalorder %s226, %s228
      %p232 = scmp.eq.s32.totalorder %s24, 0
      %p233 = por %p231, %p232
      %p234 = scmp.ne.s32.totalorder %s226, %s228
      %p235 = scmp.eq.s32.totalorder %s29, 1
      %p236 = por %p234, %p235
      %p237 = scmp.ne.s32.totalorder %s228, %s229
      %p238 = scmp.eq.s32.totalorder %s29, 0
      %p239 = por %p237, %p238
      %p240 = scmp.ne.s32.totalorder %s228, %s229
      %p241 = scmp.eq.s32.totalorder %s30, 1
      %p242 = por %p240, %p241
      %p244 = scmp.ne.s32.totalorder %s229, %s243
      %p245 = scmp.eq.s32.totalorder %s30, 0
      %p246 = por %p244, %p245
      %s248 = sadd.s32 %s247, 1
      %p251 = scmp.eq.s32.totalorder %s24, 1
      %p252 = scmp.ne.s32.totalorder %s247, %s249
      %p253 = scmp.eq.s32.totalorder %s24, 0
      %p254 = por %p252, %p253
      %p255 = scmp.ne.s32.totalorder %s247, %s249
      %p256 = scmp.eq.s32.totalorder %s29, 1
      %p257 = por %p255, %p256
      %p258 = scmp.ne.s32.totalorder %s249, %s250
      %p259 = scmp.eq.s32.totalorder %s29, 0
      %p260 = por %p258, %p259
      %p261 = scmp.ne.s32.totalorder %s249, %s250
      %p262 = scmp.eq.s32.totalorder %s30, 1
      %p263 = por %p261, %p262
      %p265 = scmp.ne.s32.totalorder %s250, %s264
      %p266 = scmp.eq.s32.totalorder %s30, 0
      %p267 = por %p265, %p266
      %s268 = ssub.s32 %s24, %s31
      %p269 = scmp.eq.s32.totalorder %s268, 0
      %s271 = sadd.s32 %s270, 1
      %s272 = scalar_select %p269, %s270, %s271
      %p275 = pneg %p269
      %p276 = scmp.eq.s32.totalorder %s24, 1
      %p277 = por %p275, %p276
      %p278 = scmp.ne.s32.totalorder %s270, %s273
      %p279 = scmp.eq.s32.totalorder %s24, 0
      %p280 = por %p278, %p279
      %p281 = scmp.ne.s32.totalorder %s270, %s273
      %p282 = scmp.eq.s32.totalorder %s29, 1
      %p283 = por %p281, %p282
      %p284 = scmp.ne.s32.totalorder %s273, %s274
      %p285 = scmp.eq.s32.totalorder %s29, 0
      %p286 = por %p284, %p285
      %p287 = scmp.ne.s32.totalorder %s273, %s274
      %p288 = scmp.eq.s32.totalorder %s30, 1
      %p289 = por %p287, %p288
      %p291 = scmp.ne.s32.totalorder %s274, %s290
      %p292 = scmp.eq.s32.totalorder %s30, 0
      %p293 = por %p291, %p292
      %s294 = ssub.s32 %s24, %s31
      %p295 = scmp.eq.s32.totalorder %s294, 0
      %s297 = sadd.s32 %s296, 1
      %s298 = scalar_select %p295, %s296, %s297
      %p301 = pneg %p295
      %p302 = scmp.eq.s32.totalorder %s24, 1
      %p303 = por %p301, %p302
      %p304 = scmp.ne.s32.totalorder %s296, %s299
      %p305 = scmp.eq.s32.totalorder %s24, 0
      %p306 = por %p304, %p305
      %p307 = scmp.ne.s32.totalorder %s296, %s299
      %p308 = scmp.eq.s32.totalorder %s29, 1
      %p309 = por %p307, %p308
      %p310 = scmp.ne.s32.totalorder %s299, %s300
      %p311 = scmp.eq.s32.totalorder %s29, 0
      %p312 = por %p310, %p311
      %p313 = scmp.ne.s32.totalorder %s299, %s300
      %p314 = scmp.eq.s32.totalorder %s30, 1
      %p315 = por %p313, %p314
      %p317 = scmp.ne.s32.totalorder %s300, %s316
      %p318 = scmp.eq.s32.totalorder %s30, 0
      %p319 = por %p317, %p318
      %p320 = scmp.le.s32.totalorder 1, %s24
      %p321 = scmp.lt.s32.totalorder %s24, 3
      %p322 = pnand %p320, %p321
      %p323 = pneg %p322
      // Predicated region
      $region9: #{topology_net_forward.2} parent=5 // pred_check
        _
      $region10: #{topology_net_forward.2} parent=5 // pred_check_branch
        %325 = sbr.rel (%p322) target = $region12
      $region11: #{topology_net_forward.2} parent=5 // pred_region
        %s326 = ssub.s32 %s24, 1
        // Predicated region
        $region13: #{topology_net_forward.2} parent=11 // pred_check
          %p327 = pneg %p71
        $region14: #{topology_net_forward.2} parent=11 // pred_check_branch
          %329 = sbr.rel (%p327) target = $region16
        $region15: #{topology_net_forward.2} parent=11 // pred_region
          _
        $region16: #{topology_net_forward.2} parent=11 // pred_fallthru
          _
        // Predicated region
        $region17: #{topology_net_forward.2} parent=11 // pred_check
          %p330 = pneg %p92
        $region18: #{topology_net_forward.2} parent=11 // pred_check_branch
          %332 = sbr.rel (%p330) target = $region20
        $region19: #{topology_net_forward.2} parent=11 // pred_region
          _
        $region20: #{topology_net_forward.2} parent=11 // pred_fallthru
          _
        // Predicated region
        $region21: #{topology_net_forward.2} parent=11 // pred_check
          %p333 = pneg %p113
        $region22: #{topology_net_forward.2} parent=11 // pred_check_branch
          %335 = sbr.rel (%p333) target = $region24
        $region23: #{topology_net_forward.2} parent=11 // pred_region
          _
        $region24: #{topology_net_forward.2} parent=11 // pred_fallthru
          _
        // Predicated region
        $region25: #{topology_net_forward.2} parent=11 // pred_check
          %p336 = pneg %p134
        $region26: #{topology_net_forward.2} parent=11 // pred_check_branch
          %338 = sbr.rel (%p336) target = $region28
        $region27: #{topology_net_forward.2} parent=11 // pred_region
          _
        $region28: #{topology_net_forward.2} parent=11 // pred_fallthru
          _
        // Predicated region
        $region29: #{topology_net_forward.2} parent=11 // pred_check
          %p339 = pneg %p155
        $region30: #{topology_net_forward.2} parent=11 // pred_check_branch
          %341 = sbr.rel (%p339) target = $region32
        $region31: #{topology_net_forward.2} parent=11 // pred_region
          _
        $region32: #{topology_net_forward.2} parent=11 // pred_fallthru
          _
        // Predicated region
        $region33: #{topology_net_forward.2} parent=11 // pred_check
          %p342 = pneg %p176
        $region34: #{topology_net_forward.2} parent=11 // pred_check_branch
          %344 = sbr.rel (%p342) target = $region36
        $region35: #{topology_net_forward.2} parent=11 // pred_region
          _
        $region36: #{topology_net_forward.2} parent=11 // pred_fallthru
          _
        // Predicated region
        $region37: #{topology_net_forward.2} parent=11 // pred_check
          %p345 = pneg %p197
        $region38: #{topology_net_forward.2} parent=11 // pred_check_branch
          %347 = sbr.rel (%p345) target = $region40
        $region39: #{topology_net_forward.2} parent=11 // pred_region
          _
        $region40: #{topology_net_forward.2} parent=11 // pred_fallthru
          _
        // Predicated region
        $region41: #{topology_net_forward.2} parent=11 // pred_check
          %p348 = pneg %p218
        $region42: #{topology_net_forward.2} parent=11 // pred_check_branch
          %350 = sbr.rel (%p348) target = $region44
        $region43: #{topology_net_forward.2} parent=11 // pred_region
          _
        $region44: #{topology_net_forward.2} parent=11 // pred_fallthru
          _
        // Predicated region
        $region45: #{topology_net_forward.2} parent=11 // pred_check
          %p351 = pneg %p239
        $region46: #{topology_net_forward.2} parent=11 // pred_check_branch
          %353 = sbr.rel (%p351) target = $region48
        $region47: #{topology_net_forward.2} parent=11 // pred_region
          _
        $region48: #{topology_net_forward.2} parent=11 // pred_fallthru
          _
        // Predicated region
        $region49: #{topology_net_forward.2} parent=11 // pred_check
          %p354 = pneg %p260
        $region50: #{topology_net_forward.2} parent=11 // pred_check_branch
          %356 = sbr.rel (%p354) target = $region52
        $region51: #{topology_net_forward.2} parent=11 // pred_region
          _
        $region52: #{topology_net_forward.2} parent=11 // pred_fallthru
          _
      $region12: #{topology_net_forward.2} parent=5 // pred_fallthru
        _
      %p357 = scmp.lt.s32.totalorder %s24, 2
      // Predicated region
      $region53: #{topology_net_forward.2} parent=5 // pred_check
        %p358 = pneg %p357
      $region54: #{topology_net_forward.2} parent=5 // pred_check_branch
        %360 = sbr.rel (%p358) target = $region56
      $region55: #{topology_net_forward.2} parent=5 // pred_region
        // Predicated region
        $region57: #{topology_net_forward.2} parent=55 // pred_check
          %p361 = pneg %p44
        $region58: #{topology_net_forward.2} parent=55 // pred_check_branch
          %363 = sbr.rel (%p361) target = $region60
        $region59: #{topology_net_forward.2} parent=55 // pred_region
          %p364 = scmp.lt.s32.totalorder %s24, 1
          %s365 = scalar_select %p364, %s24, 1
          %s366 = smul.addr %s365, 37
          %s367 = smul.addr %s366, 8
          %s368 = scalar_lea.vmem %s0, %s367
        $region60: #{topology_net_forward.2} parent=55 // pred_fallthru
          _
      $region56: #{topology_net_forward.2} parent=5 // pred_fallthru
        _
      %p369 = scmp.le.s32.totalorder 1, %s24
      %p370 = scmp.lt.s32.totalorder %s24, 3
      %p371 = pnand %p369, %p370
      %p372 = pneg %p371
      // Predicated region
      $region61: #{topology_net_forward.2} parent=5 // pred_check
        _
      $region62: #{topology_net_forward.2} parent=5 // pred_check_branch
        %374 = sbr.rel (%p371) target = $region64
      $region63: #{topology_net_forward.2} parent=5 // pred_region
        %s375 = ssub.s32 %s24, 1
        %p376 = scmp.lt.s32.totalorder %s29, 1
        %s377 = scalar_select %p376, %s29, 1
        %s378 = smul.addr %s377, 37
        %s379 = smul.addr %s378, 8
        %s380 = scalar_lea.vmem %s0, %s379
        %p381 = pneg %p50
        %p382 = pneg %p47
        %p383 = pneg %p71
        %p384 = pneg %p68
        %p385 = pneg %p92
        %p386 = pneg %p89
        %p387 = pneg %p113
        %p388 = pneg %p110
        %p389 = pneg %p134
        %p390 = pneg %p131
        %p391 = pneg %p155
        %p392 = pneg %p152
        %p393 = pneg %p176
        %p394 = pneg %p173
        %p395 = pneg %p197
        %p396 = pneg %p194
        %p397 = pneg %p218
        %p398 = pneg %p215
        %p399 = pneg %p239
        %p400 = pneg %p236
        %p401 = pneg %p260
        %p402 = pneg %p257
        %p403 = pneg %p286
        %p404 = pneg %p283
        %p405 = scmp.lt.s32.totalorder %s29, 1
        %s406 = scalar_select %p405, %s29, 1
        %s407 = smul.addr %s406, 32
        %s408 = smul.addr %s407, 8
        %s409 = scalar_lea.vmem %s11, %s408
        %p410 = pneg %p312
        %p411 = pneg %p309
        %s412 = sand.u32 %s299, 1
        %s413 = scalar_lea.sflag [#allocation6], %s412
        %s414 = sand.u32 %s299, 1
        %s415 = scalar_lea.vmem [#allocation5], %s414
        %p416 = scmp.lt.s32.totalorder %s29, 1
        %s417 = scalar_select %p416, %s29, 1
        %s418 = smul.addr %s417, 37
        %s419 = smul.addr %s418, 8
        %s420 = scalar_lea.vmem %s0, %s419
        %p421 = scmp.lt.s32.totalorder %s29, 1
        %s422 = scalar_select %p421, %s29, 1
        %s423 = smul.addr %s422, 32
        %s424 = smul.addr %s423, 8
        %s425 = scalar_lea.vmem %s11, %s424
        %v426 = vld [vmem:[%s1] sm:$0xff]
        %v427 = vld [vmem:[%s1 + $0x8] sm:$0xff]
        %v428 = vld [vmem:[%s1 + $0x10] sm:$0xff]
        %v429 = vld [vmem:[%s1 + $0x18] sm:$0xff]
        %v430 = vld [vmem:[%s1 + $0x20] sm:$0xff]
        %v431 = vld [vmem:[%s1 + $0x28] sm:$0xff]
        %v432 = vld [vmem:[%s1 + $0x30] sm:$0xff]
        %v433 = vld [vmem:[%s1 + $0x38] sm:$0xff]
        %v434 = vld [vmem:[%s1 + $0x40] sm:$0xff]
        %v435 = vld [vmem:[%s1 + $0x48] sm:$0xff]
        %v436 = vld [vmem:[%s1 + $0x50] sm:$0xff]
        %v437 = vld [vmem:[%s1 + $0x58] sm:$0xff]
        %v438 = vld [vmem:[%s1 + $0x60] sm:$0xff]
        %v439 = vld [vmem:[%s1 + $0x68] sm:$0xff]
        %v440 = vld [vmem:[%s1 + $0x70] sm:$0xff]
        %v441 = vld [vmem:[%s1 + $0x78] sm:$0xff]
        %v442 = vld [vmem:[%s1 + $0x80] sm:$0xff]
        %v443 = vld [vmem:[%s1 + $0x88] sm:$0xff]
        %v444 = vld [vmem:[%s1 + $0x90] sm:$0xff]
        %v445 = vld [vmem:[%s1 + $0x98] sm:$0xff]
        %v446 = vld [vmem:[%s1 + $0xa0] sm:$0xff]
        %v447 = vld [vmem:[%s1 + $0xa8] sm:$0xff]
        %v448 = vld [vmem:[%s1 + $0xb0] sm:$0xff]
        %v449 = vld [vmem:[%s1 + $0xb8] sm:$0xff]
        %v450 = vld [vmem:[%s1 + $0xc0] sm:$0xff]
        %v451 = vld [vmem:[%s1 + $0xc8] sm:$0xff]
        %v452 = vld [vmem:[%s1 + $0xd0] sm:$0xff]
        %v453 = vld [vmem:[%s1 + $0xd8] sm:$0xff]
        %v454 = vld [vmem:[%s1 + $0xe0] sm:$0xff]
        %v455 = vld [vmem:[%s1 + $0xe8] sm:$0xff]
        %v456 = vld [vmem:[%s1 + $0xf0] sm:$0xff]
        %v457 = vld [vmem:[%s1 + $0xf8] sm:$0xff]
        %v458 = vld [vmem:[%s2] sm:$0xff]
        %v459 = vld [vmem:[%s2 + $0x8] sm:$0xff]
        %v460 = vld [vmem:[%s2 + $0x10] sm:$0xff]
        %v461 = vld [vmem:[%s2 + $0x18] sm:$0xff]
        %v462 = vld [vmem:[%s2 + $0x20] sm:$0xff]
        %v463 = vld [vmem:[%s2 + $0x28] sm:$0xff]
        %v464 = vld [vmem:[%s2 + $0x30] sm:$0xff]
        %v465 = vld [vmem:[%s2 + $0x38] sm:$0xff]
        %v466 = vld [vmem:[%s2 + $0x40] sm:$0xff]
        %v467 = vld [vmem:[%s2 + $0x48] sm:$0xff]
        %v468 = vld [vmem:[%s2 + $0x50] sm:$0xff]
        %v469 = vld [vmem:[%s2 + $0x58] sm:$0xff]
        %v470 = vld [vmem:[%s2 + $0x60] sm:$0xff]
        %v471 = vld [vmem:[%s2 + $0x68] sm:$0xff]
        %v472 = vld [vmem:[%s2 + $0x70] sm:$0xff]
        %v473 = vld [vmem:[%s2 + $0x78] sm:$0xff]
        %v474 = vld [vmem:[%s2 + $0x80] sm:$0xff]
        %v475 = vld [vmem:[%s2 + $0x88] sm:$0xff]
        %v476 = vld [vmem:[%s2 + $0x90] sm:$0xff]
        %v477 = vld [vmem:[%s2 + $0x98] sm:$0xff]
        %v478 = vld [vmem:[%s2 + $0xa0] sm:$0xff]
        %v479 = vld [vmem:[%s2 + $0xa8] sm:$0xff]
        %v480 = vld [vmem:[%s2 + $0xb0] sm:$0xff]
        %v481 = vld [vmem:[%s2 + $0xb8] sm:$0xff]
        %v482 = vld [vmem:[%s2 + $0xc0] sm:$0xff]
        %v483 = vld [vmem:[%s2 + $0xc8] sm:$0xff]
        %v484 = vld [vmem:[%s2 + $0xd0] sm:$0xff]
        %v485 = vld [vmem:[%s2 + $0xd8] sm:$0xff]
        %v486 = vld [vmem:[%s2 + $0xe0] sm:$0xff]
        %v487 = vld [vmem:[%s2 + $0xe8] sm:$0xff]
        %v488 = vld [vmem:[%s2 + $0xf0] sm:$0xff]
        %v489 = vld [vmem:[%s2 + $0xf8] sm:$0xff]
        %v490 = vld [vmem:[%s420] sm:$0xff]
        %v491 = vld [vmem:[%s420 + $0x8] sm:$0xff]
        %v492 = vld [vmem:[%s420 + $0x10] sm:$0xff]
        %v493 = vld [vmem:[%s420 + $0x18] sm:$0xff]
        %v494 = vld [vmem:[%s420 + $0x20] sm:$0xff]
        %v495 = vld [vmem:[%s420 + $0x28] sm:$0xff]
        %v496 = vld [vmem:[%s420 + $0x30] sm:$0xff]
        %v497 = vld [vmem:[%s420 + $0x38] sm:$0xff]
        %v498 = vld [vmem:[%s420 + $0x40] sm:$0xff]
        %v499 = vld [vmem:[%s420 + $0x48] sm:$0xff]
        %v500 = vld [vmem:[%s420 + $0x50] sm:$0xff]
        %v501 = vld [vmem:[%s420 + $0x58] sm:$0xff]
        %v502 = vld [vmem:[%s420 + $0x60] sm:$0xff]
        %v503 = vld [vmem:[%s420 + $0x68] sm:$0xff]
        %v504 = vld [vmem:[%s420 + $0x70] sm:$0xff]
        %v505 = vld [vmem:[%s420 + $0x78] sm:$0xff]
        %v506 = vld [vmem:[%s420 + $0x80] sm:$0xff]
        %v507 = vld [vmem:[%s420 + $0x88] sm:$0xff]
        %v508 = vld [vmem:[%s420 + $0x90] sm:$0xff]
        %v509 = vld [vmem:[%s420 + $0x98] sm:$0xff]
        %v510 = vld [vmem:[%s420 + $0xa0] sm:$0xff]
        %v511 = vld [vmem:[%s420 + $0xa8] sm:$0xff]
        %v512 = vld [vmem:[%s420 + $0xb0] sm:$0xff]
        %v513 = vld [vmem:[%s420 + $0xb8] sm:$0xff]
        %v514 = vld [vmem:[%s420 + $0xc0] sm:$0xff]
        %v515 = vld [vmem:[%s420 + $0xc8] sm:$0xff]
        %v516 = vld [vmem:[%s420 + $0xd0] sm:$0xff]
        %v517 = vld [vmem:[%s420 + $0xd8] sm:$0xff]
        %v518 = vld [vmem:[%s420 + $0xe0] sm:$0xff]
        %v519 = vld [vmem:[%s420 + $0xe8] sm:$0xff]
        %v520 = vld [vmem:[%s420 + $0xf0] sm:$0xff]
        %v521 = vld [vmem:[%s420 + $0xf8] sm:$0xff]
        %523 = vset.pattern.permute.xlu0 0
        %524 = vperm.xlu0 %523, %v426
        %v525 = vpop.permute.xlu0 %524
        %528 = vset.pattern.permute.xlu0 0
        %529 = vperm.xlu0 %528, %v427
        %v530 = vpop.permute.xlu0 %529
        %533 = vset.pattern.permute.xlu0 0
        %534 = vperm.xlu0 %533, %v428
        %v535 = vpop.permute.xlu0 %534
        %538 = vset.pattern.permute.xlu0 0
        %539 = vperm.xlu0 %538, %v429
        %v540 = vpop.permute.xlu0 %539
        %543 = vset.pattern.permute.xlu0 0
        %544 = vperm.xlu0 %543, %v430
        %v545 = vpop.permute.xlu0 %544
        %548 = vset.pattern.permute.xlu0 0
        %549 = vperm.xlu0 %548, %v431
        %v550 = vpop.permute.xlu0 %549
        %553 = vset.pattern.permute.xlu0 0
        %554 = vperm.xlu0 %553, %v432
        %v555 = vpop.permute.xlu0 %554
        %558 = vset.pattern.permute.xlu0 0
        %559 = vperm.xlu0 %558, %v433
        %v560 = vpop.permute.xlu0 %559
        %563 = vset.pattern.permute.xlu0 0
        %564 = vperm.xlu0 %563, %v434
        %v565 = vpop.permute.xlu0 %564
        %568 = vset.pattern.permute.xlu0 0
        %569 = vperm.xlu0 %568, %v435
        %v570 = vpop.permute.xlu0 %569
        %573 = vset.pattern.permute.xlu0 0
        %574 = vperm.xlu0 %573, %v436
        %v575 = vpop.permute.xlu0 %574
        %578 = vset.pattern.permute.xlu0 0
        %579 = vperm.xlu0 %578, %v437
        %v580 = vpop.permute.xlu0 %579
        %583 = vset.pattern.permute.xlu0 0
        %584 = vperm.xlu0 %583, %v438
        %v585 = vpop.permute.xlu0 %584
        %588 = vset.pattern.permute.xlu0 0
        %589 = vperm.xlu0 %588, %v439
        %v590 = vpop.permute.xlu0 %589
        %593 = vset.pattern.permute.xlu0 0
        %594 = vperm.xlu0 %593, %v440
        %v595 = vpop.permute.xlu0 %594
        %598 = vset.pattern.permute.xlu0 0
        %599 = vperm.xlu0 %598, %v441
        %v600 = vpop.permute.xlu0 %599
        %603 = vset.pattern.permute.xlu0 0
        %604 = vperm.xlu0 %603, %v442
        %v605 = vpop.permute.xlu0 %604
        %608 = vset.pattern.permute.xlu0 0
        %609 = vperm.xlu0 %608, %v443
        %v610 = vpop.permute.xlu0 %609
        %613 = vset.pattern.permute.xlu0 0
        %614 = vperm.xlu0 %613, %v444
        %v615 = vpop.permute.xlu0 %614
        %618 = vset.pattern.permute.xlu0 0
        %619 = vperm.xlu0 %618, %v445
        %v620 = vpop.permute.xlu0 %619
        %623 = vset.pattern.permute.xlu0 0
        %624 = vperm.xlu0 %623, %v446
        %v625 = vpop.permute.xlu0 %624
        %628 = vset.pattern.permute.xlu0 0
        %629 = vperm.xlu0 %628, %v447
        %v630 = vpop.permute.xlu0 %629
        %633 = vset.pattern.permute.xlu0 0
        %634 = vperm.xlu0 %633, %v448
        %v635 = vpop.permute.xlu0 %634
        %638 = vset.pattern.permute.xlu0 0
        %639 = vperm.xlu0 %638, %v449
        %v640 = vpop.permute.xlu0 %639
        %643 = vset.pattern.permute.xlu0 0
        %644 = vperm.xlu0 %643, %v450
        %v645 = vpop.permute.xlu0 %644
        %648 = vset.pattern.permute.xlu0 0
        %649 = vperm.xlu0 %648, %v451
        %v650 = vpop.permute.xlu0 %649
        %653 = vset.pattern.permute.xlu0 0
        %654 = vperm.xlu0 %653, %v452
        %v655 = vpop.permute.xlu0 %654
        %658 = vset.pattern.permute.xlu0 0
        %659 = vperm.xlu0 %658, %v453
        %v660 = vpop.permute.xlu0 %659
        %663 = vset.pattern.permute.xlu0 0
        %664 = vperm.xlu0 %663, %v454
        %v665 = vpop.permute.xlu0 %664
        %668 = vset.pattern.permute.xlu0 0
        %669 = vperm.xlu0 %668, %v455
        %v670 = vpop.permute.xlu0 %669
        %673 = vset.pattern.permute.xlu0 0
        %674 = vperm.xlu0 %673, %v456
        %v675 = vpop.permute.xlu0 %674
        %678 = vset.pattern.permute.xlu0 0
        %679 = vperm.xlu0 %678, %v457
        %v680 = vpop.permute.xlu0 %679
        %v682 = vmul.f32 %v490, %v525
        %v683 = vmul.f32 %v491, %v530
        %v684 = vmul.f32 %v492, %v535
        %v685 = vmul.f32 %v493, %v540
        %v686 = vmul.f32 %v494, %v545
        %v687 = vmul.f32 %v495, %v550
        %v688 = vmul.f32 %v496, %v555
        %v689 = vmul.f32 %v497, %v560
        %v690 = vmul.f32 %v498, %v565
        %v691 = vmul.f32 %v499, %v570
        %v692 = vmul.f32 %v500, %v575
        %v693 = vmul.f32 %v501, %v580
        %v694 = vmul.f32 %v502, %v585
        %v695 = vmul.f32 %v503, %v590
        %v696 = vmul.f32 %v504, %v595
        %v697 = vmul.f32 %v505, %v600
        %v698 = vmul.f32 %v506, %v605
        %v699 = vmul.f32 %v507, %v610
        %v700 = vmul.f32 %v508, %v615
        %v701 = vmul.f32 %v509, %v620
        %v702 = vmul.f32 %v510, %v625
        %v703 = vmul.f32 %v511, %v630
        %v704 = vmul.f32 %v512, %v635
        %v705 = vmul.f32 %v513, %v640
        %v706 = vmul.f32 %v514, %v645
        %v707 = vmul.f32 %v515, %v650
        %v708 = vmul.f32 %v516, %v655
        %v709 = vmul.f32 %v517, %v660
        %v710 = vmul.f32 %v518, %v665
        %v711 = vmul.f32 %v519, %v670
        %v712 = vmul.f32 %v520, %v675
        %v713 = vmul.f32 %v521, %v680
        %v714 = vld [vmem:[%s3] sm:$0xf]
        %v715 = vld [vmem:[%s420 + $0x1] sm:$0xff]
        %v716 = vld [vmem:[%s420 + $0x9] sm:$0xff]
        %v717 = vld [vmem:[%s420 + $0x11] sm:$0xff]
        %v718 = vld [vmem:[%s420 + $0x19] sm:$0xff]
        %v719 = vld [vmem:[%s420 + $0x21] sm:$0xff]
        %v720 = vld [vmem:[%s420 + $0x29] sm:$0xff]
        %v721 = vld [vmem:[%s420 + $0x31] sm:$0xff]
        %v722 = vld [vmem:[%s420 + $0x39] sm:$0xff]
        %v723 = vld [vmem:[%s420 + $0x41] sm:$0xff]
        %v724 = vld [vmem:[%s420 + $0x49] sm:$0xff]
        %v725 = vld [vmem:[%s420 + $0x51] sm:$0xff]
        %v726 = vld [vmem:[%s420 + $0x59] sm:$0xff]
        %v727 = vld [vmem:[%s420 + $0x61] sm:$0xff]
        %v728 = vld [vmem:[%s420 + $0x69] sm:$0xff]
        %v729 = vld [vmem:[%s420 + $0x71] sm:$0xff]
        %v730 = vld [vmem:[%s420 + $0x79] sm:$0xff]
        %v731 = vld [vmem:[%s420 + $0x81] sm:$0xff]
        %v732 = vld [vmem:[%s420 + $0x89] sm:$0xff]
        %v733 = vld [vmem:[%s420 + $0x91] sm:$0xff]
        %v734 = vld [vmem:[%s420 + $0x99] sm:$0xff]
        %v735 = vld [vmem:[%s420 + $0xa1] sm:$0xff]
        %v736 = vld [vmem:[%s420 + $0xa9] sm:$0xff]
        %v737 = vld [vmem:[%s420 + $0xb1] sm:$0xff]
        %v738 = vld [vmem:[%s420 + $0xb9] sm:$0xff]
        %v739 = vld [vmem:[%s420 + $0xc1] sm:$0xff]
        %v740 = vld [vmem:[%s420 + $0xc9] sm:$0xff]
        %v741 = vld [vmem:[%s420 + $0xd1] sm:$0xff]
        %v742 = vld [vmem:[%s420 + $0xd9] sm:$0xff]
        %v743 = vld [vmem:[%s420 + $0xe1] sm:$0xff]
        %v744 = vld [vmem:[%s420 + $0xe9] sm:$0xff]
        %v745 = vld [vmem:[%s420 + $0xf1] sm:$0xff]
        %v746 = vld [vmem:[%s420 + $0xf9] sm:$0xff]
        %s747 = scalar_lea.vmem %s3, 4
        %v748 = vld [vmem:[%s747] sm:$0xf]
        %vm749 = vcmask 31744
        %v751 = vsel %vm749, %v715, 0
        %v754 = vsel %vm749, %v716, 0
        %v757 = vsel %vm749, %v717, 0
        %v760 = vsel %vm749, %v718, 0
        %v763 = vsel %vm749, %v719, 0
        %v766 = vsel %vm749, %v720, 0
        %v769 = vsel %vm749, %v721, 0
        %v772 = vsel %vm749, %v722, 0
        %v775 = vsel %vm749, %v723, 0
        %v778 = vsel %vm749, %v724, 0
        %v781 = vsel %vm749, %v725, 0
        %v784 = vsel %vm749, %v726, 0
        %v787 = vsel %vm749, %v727, 0
        %v790 = vsel %vm749, %v728, 0
        %v793 = vsel %vm749, %v729, 0
        %v796 = vsel %vm749, %v730, 0
        %v799 = vsel %vm749, %v731, 0
        %v802 = vsel %vm749, %v732, 0
        %v805 = vsel %vm749, %v733, 0
        %v808 = vsel %vm749, %v734, 0
        %v811 = vsel %vm749, %v735, 0
        %v814 = vsel %vm749, %v736, 0
        %v817 = vsel %vm749, %v737, 0
        %v820 = vsel %vm749, %v738, 0
        %v823 = vsel %vm749, %v739, 0
        %v826 = vsel %vm749, %v740, 0
        %v829 = vsel %vm749, %v741, 0
        %v832 = vsel %vm749, %v742, 0
        %v835 = vsel %vm749, %v743, 0
        %v838 = vsel %vm749, %v744, 0
        %v841 = vsel %vm749, %v745, 0
        %v844 = vsel %vm749, %v746, 0
        %vm846 = vcmask 1043456
        %v848 = vsel %vm846, %v748, 0
        %850 = vmatpush.msra.mxu0 0.0
        %851 = vmatpush.msra.mxu0 0.0
        %852 = vmatpush.msra.mxu0 0.0
        %853 = vmatpush.msra.mxu0 0.0
        %854 = vmatpush.msra.mxu0 0.0
        %855 = vmatpush.msra.mxu0 0.0
        %856 = vmatpush.msra.mxu0 0.0
        %857 = vmatpush.msra.mxu0 0.0
        %858 = vmatpush.msra.mxu0 0.0
        %859 = vmatpush.msra.mxu0 0.0
        %860 = vmatpush.msra.mxu0 0.0
        %861 = vmatpush.msra.mxu0 0.0
        %862 = vmatpush.msra.mxu0 0.0
        %863 = vmatpush.msra.mxu0 0.0
        %864 = vmatpush.msra.mxu0 0.0
        %865 = vmatpush.msra.mxu0 %v848
        %866 = vmatmul.f32.gmra.mxu0 %v751
        %v867 = vpop.f32.mrf.mxu0
        %v868 = vadd.f32 0.0, %v867
        %869 = vmatmul.f32.gmra.mxu0 %v754
        %v870 = vpop.f32.mrf.mxu0
        %v871 = vadd.f32 0.0, %v870
        %872 = vmatmul.f32.gmra.mxu0 %v757
        %v873 = vpop.f32.mrf.mxu0
        %v874 = vadd.f32 0.0, %v873
        %875 = vmatmul.f32.gmra.mxu0 %v760
        %v876 = vpop.f32.mrf.mxu0
        %v877 = vadd.f32 0.0, %v876
        %878 = vmatmul.f32.gmra.mxu0 %v763
        %v879 = vpop.f32.mrf.mxu0
        %v880 = vadd.f32 0.0, %v879
        %881 = vmatmul.f32.gmra.mxu0 %v766
        %v882 = vpop.f32.mrf.mxu0
        %v883 = vadd.f32 0.0, %v882
        %884 = vmatmul.f32.gmra.mxu0 %v769
        %v885 = vpop.f32.mrf.mxu0
        %v886 = vadd.f32 0.0, %v885
        %887 = vmatmul.f32.gmra.mxu0 %v772
        %v888 = vpop.f32.mrf.mxu0
        %v889 = vadd.f32 0.0, %v888
        %890 = vmatmul.f32.gmra.mxu0 %v775
        %v891 = vpop.f32.mrf.mxu0
        %v892 = vadd.f32 0.0, %v891
        %893 = vmatmul.f32.gmra.mxu0 %v778
        %v894 = vpop.f32.mrf.mxu0
        %v895 = vadd.f32 0.0, %v894
        %896 = vmatmul.f32.gmra.mxu0 %v781
        %v897 = vpop.f32.mrf.mxu0
        %v898 = vadd.f32 0.0, %v897
        %899 = vmatmul.f32.gmra.mxu0 %v784
        %v900 = vpop.f32.mrf.mxu0
        %v901 = vadd.f32 0.0, %v900
        %902 = vmatmul.f32.gmra.mxu0 %v787
        %v903 = vpop.f32.mrf.mxu0
        %v904 = vadd.f32 0.0, %v903
        %905 = vmatmul.f32.gmra.mxu0 %v790
        %v906 = vpop.f32.mrf.mxu0
        %v907 = vadd.f32 0.0, %v906
        %908 = vmatmul.f32.gmra.mxu0 %v793
        %v909 = vpop.f32.mrf.mxu0
        %v910 = vadd.f32 0.0, %v909
        %911 = vmatmul.f32.gmra.mxu0 %v796
        %v912 = vpop.f32.mrf.mxu0
        %v913 = vadd.f32 0.0, %v912
        %914 = vmatmul.f32.gmra.mxu0 %v799
        %v915 = vpop.f32.mrf.mxu0
        %v916 = vadd.f32 0.0, %v915
        %917 = vmatmul.f32.gmra.mxu0 %v802
        %v918 = vpop.f32.mrf.mxu0
        %v919 = vadd.f32 0.0, %v918
        %920 = vmatmul.f32.gmra.mxu0 %v805
        %v921 = vpop.f32.mrf.mxu0
        %v922 = vadd.f32 0.0, %v921
        %923 = vmatmul.f32.gmra.mxu0 %v808
        %v924 = vpop.f32.mrf.mxu0
        %v925 = vadd.f32 0.0, %v924
        %926 = vmatmul.f32.gmra.mxu0 %v811
        %v927 = vpop.f32.mrf.mxu0
        %v928 = vadd.f32 0.0, %v927
        %929 = vmatmul.f32.gmra.mxu0 %v814
        %v930 = vpop.f32.mrf.mxu0
        %v931 = vadd.f32 0.0, %v930
        %932 = vmatmul.f32.gmra.mxu0 %v817
        %v933 = vpop.f32.mrf.mxu0
        %v934 = vadd.f32 0.0, %v933
        %935 = vmatmul.f32.gmra.mxu0 %v820
        %v936 = vpop.f32.mrf.mxu0
        %v937 = vadd.f32 0.0, %v936
        %938 = vmatmul.f32.gmra.mxu0 %v823
        %v939 = vpop.f32.mrf.mxu0
        %v940 = vadd.f32 0.0, %v939
        %941 = vmatmul.f32.gmra.mxu0 %v826
        %v942 = vpop.f32.mrf.mxu0
        %v943 = vadd.f32 0.0, %v942
        %944 = vmatmul.f32.gmra.mxu0 %v829
        %v945 = vpop.f32.mrf.mxu0
        %v946 = vadd.f32 0.0, %v945
        %947 = vmatmul.f32.gmra.mxu0 %v832
        %v948 = vpop.f32.mrf.mxu0
        %v949 = vadd.f32 0.0, %v948
        %950 = vmatmul.f32.gmra.mxu0 %v835
        %v951 = vpop.f32.mrf.mxu0
        %v952 = vadd.f32 0.0, %v951
        %953 = vmatmul.f32.gmra.mxu0 %v838
        %v954 = vpop.f32.mrf.mxu0
        %v955 = vadd.f32 0.0, %v954
        %956 = vmatmul.f32.gmra.mxu0 %v841
        %v957 = vpop.f32.mrf.mxu0
        %v958 = vadd.f32 0.0, %v957
        %959 = vmatmul.f32.gmra.mxu0 %v844
        %v960 = vpop.f32.mrf.mxu0
        %v961 = vadd.f32 0.0, %v960
        %962 = vdwg.mxu0
        %v964 = vsel %vm749, %v682, 0
        %v967 = vsel %vm749, %v683, 0
        %v970 = vsel %vm749, %v684, 0
        %v973 = vsel %vm749, %v685, 0
        %v976 = vsel %vm749, %v686, 0
        %v979 = vsel %vm749, %v687, 0
        %v982 = vsel %vm749, %v688, 0
        %v985 = vsel %vm749, %v689, 0
        %v988 = vsel %vm749, %v690, 0
        %v991 = vsel %vm749, %v691, 0
        %v994 = vsel %vm749, %v692, 0
        %v997 = vsel %vm749, %v693, 0
        %v1000 = vsel %vm749, %v694, 0
        %v1003 = vsel %vm749, %v695, 0
        %v1006 = vsel %vm749, %v696, 0
        %v1009 = vsel %vm749, %v697, 0
        %v1012 = vsel %vm749, %v698, 0
        %v1015 = vsel %vm749, %v699, 0
        %v1018 = vsel %vm749, %v700, 0
        %v1021 = vsel %vm749, %v701, 0
        %v1024 = vsel %vm749, %v702, 0
        %v1027 = vsel %vm749, %v703, 0
        %v1030 = vsel %vm749, %v704, 0
        %v1033 = vsel %vm749, %v705, 0
        %v1036 = vsel %vm749, %v706, 0
        %v1039 = vsel %vm749, %v707, 0
        %v1042 = vsel %vm749, %v708, 0
        %v1045 = vsel %vm749, %v709, 0
        %v1048 = vsel %vm749, %v710, 0
        %v1051 = vsel %vm749, %v711, 0
        %v1054 = vsel %vm749, %v712, 0
        %v1057 = vsel %vm749, %v713, 0
        %v1060 = vsel %vm846, %v714, 0
        %1062 = vmatpush.msra.mxu0 0.0
        %1063 = vmatpush.msra.mxu0 0.0
        %1064 = vmatpush.msra.mxu0 0.0
        %1065 = vmatpush.msra.mxu0 0.0
        %1066 = vmatpush.msra.mxu0 0.0
        %1067 = vmatpush.msra.mxu0 0.0
        %1068 = vmatpush.msra.mxu0 0.0
        %1069 = vmatpush.msra.mxu0 0.0
        %1070 = vmatpush.msra.mxu0 0.0
        %1071 = vmatpush.msra.mxu0 0.0
        %1072 = vmatpush.msra.mxu0 0.0
        %1073 = vmatpush.msra.mxu0 0.0
        %1074 = vmatpush.msra.mxu0 0.0
        %1075 = vmatpush.msra.mxu0 0.0
        %1076 = vmatpush.msra.mxu0 0.0
        %1077 = vmatpush.msra.mxu0 %v1060
        %1078 = vmatmul.f32.gmra.mxu0 %v964
        %v1079 = vpop.f32.mrf.mxu0
        %v1080 = vadd.f32 %v868, %v1079
        %1081 = vmatmul.f32.gmra.mxu0 %v967
        %v1082 = vpop.f32.mrf.mxu0
        %v1083 = vadd.f32 %v871, %v1082
        %1084 = vmatmul.f32.gmra.mxu0 %v970
        %v1085 = vpop.f32.mrf.mxu0
        %v1086 = vadd.f32 %v874, %v1085
        %1087 = vmatmul.f32.gmra.mxu0 %v973
        %v1088 = vpop.f32.mrf.mxu0
        %v1089 = vadd.f32 %v877, %v1088
        %1090 = vmatmul.f32.gmra.mxu0 %v976
        %v1091 = vpop.f32.mrf.mxu0
        %v1092 = vadd.f32 %v880, %v1091
        %1093 = vmatmul.f32.gmra.mxu0 %v979
        %v1094 = vpop.f32.mrf.mxu0
        %v1095 = vadd.f32 %v883, %v1094
        %1096 = vmatmul.f32.gmra.mxu0 %v982
        %v1097 = vpop.f32.mrf.mxu0
        %v1098 = vadd.f32 %v886, %v1097
        %1099 = vmatmul.f32.gmra.mxu0 %v985
        %v1100 = vpop.f32.mrf.mxu0
        %v1101 = vadd.f32 %v889, %v1100
        %1102 = vmatmul.f32.gmra.mxu0 %v988
        %v1103 = vpop.f32.mrf.mxu0
        %v1104 = vadd.f32 %v892, %v1103
        %1105 = vmatmul.f32.gmra.mxu0 %v991
        %v1106 = vpop.f32.mrf.mxu0
        %v1107 = vadd.f32 %v895, %v1106
        %1108 = vmatmul.f32.gmra.mxu0 %v994
        %v1109 = vpop.f32.mrf.mxu0
        %v1110 = vadd.f32 %v898, %v1109
        %1111 = vmatmul.f32.gmra.mxu0 %v997
        %v1112 = vpop.f32.mrf.mxu0
        %v1113 = vadd.f32 %v901, %v1112
        %1114 = vmatmul.f32.gmra.mxu0 %v1000
        %v1115 = vpop.f32.mrf.mxu0
        %v1116 = vadd.f32 %v904, %v1115
        %1117 = vmatmul.f32.gmra.mxu0 %v1003
        %v1118 = vpop.f32.mrf.mxu0
        %v1119 = vadd.f32 %v907, %v1118
        %1120 = vmatmul.f32.gmra.mxu0 %v1006
        %v1121 = vpop.f32.mrf.mxu0
        %v1122 = vadd.f32 %v910, %v1121
        %1123 = vmatmul.f32.gmra.mxu0 %v1009
        %v1124 = vpop.f32.mrf.mxu0
        %v1125 = vadd.f32 %v913, %v1124
        %1126 = vmatmul.f32.gmra.mxu0 %v1012
        %v1127 = vpop.f32.mrf.mxu0
        %v1128 = vadd.f32 %v916, %v1127
        %1129 = vmatmul.f32.gmra.mxu0 %v1015
        %v1130 = vpop.f32.mrf.mxu0
        %v1131 = vadd.f32 %v919, %v1130
        %1132 = vmatmul.f32.gmra.mxu0 %v1018
        %v1133 = vpop.f32.mrf.mxu0
        %v1134 = vadd.f32 %v922, %v1133
        %1135 = vmatmul.f32.gmra.mxu0 %v1021
        %v1136 = vpop.f32.mrf.mxu0
        %v1137 = vadd.f32 %v925, %v1136
        %1138 = vmatmul.f32.gmra.mxu0 %v1024
        %v1139 = vpop.f32.mrf.mxu0
        %v1140 = vadd.f32 %v928, %v1139
        %1141 = vmatmul.f32.gmra.mxu0 %v1027
        %v1142 = vpop.f32.mrf.mxu0
        %v1143 = vadd.f32 %v931, %v1142
        %1144 = vmatmul.f32.gmra.mxu0 %v1030
        %v1145 = vpop.f32.mrf.mxu0
        %v1146 = vadd.f32 %v934, %v1145
        %1147 = vmatmul.f32.gmra.mxu0 %v1033
        %v1148 = vpop.f32.mrf.mxu0
        %v1149 = vadd.f32 %v937, %v1148
        %1150 = vmatmul.f32.gmra.mxu0 %v1036
        %v1151 = vpop.f32.mrf.mxu0
        %v1152 = vadd.f32 %v940, %v1151
        %1153 = vmatmul.f32.gmra.mxu0 %v1039
        %v1154 = vpop.f32.mrf.mxu0
        %v1155 = vadd.f32 %v943, %v1154
        %1156 = vmatmul.f32.gmra.mxu0 %v1042
        %v1157 = vpop.f32.mrf.mxu0
        %v1158 = vadd.f32 %v946, %v1157
        %1159 = vmatmul.f32.gmra.mxu0 %v1045
        %v1160 = vpop.f32.mrf.mxu0
        %v1161 = vadd.f32 %v949, %v1160
        %1162 = vmatmul.f32.gmra.mxu0 %v1048
        %v1163 = vpop.f32.mrf.mxu0
        %v1164 = vadd.f32 %v952, %v1163
        %1165 = vmatmul.f32.gmra.mxu0 %v1051
        %v1166 = vpop.f32.mrf.mxu0
        %v1167 = vadd.f32 %v955, %v1166
        %1168 = vmatmul.f32.gmra.mxu0 %v1054
        %v1169 = vpop.f32.mrf.mxu0
        %v1170 = vadd.f32 %v958, %v1169
        %1171 = vmatmul.f32.gmra.mxu0 %v1057
        %v1172 = vpop.f32.mrf.mxu0
        %v1173 = vadd.f32 %v961, %v1172
        %1174 = vdwg.mxu0
        %v1175 = vld [vmem:[%s420 + $0x2] sm:$0xff]
        %v1176 = vld [vmem:[%s420 + $0xa] sm:$0xff]
        %v1177 = vld [vmem:[%s420 + $0x12] sm:$0xff]
        %v1178 = vld [vmem:[%s420 + $0x1a] sm:$0xff]
        %v1179 = vld [vmem:[%s420 + $0x22] sm:$0xff]
        %v1180 = vld [vmem:[%s420 + $0x2a] sm:$0xff]
        %v1181 = vld [vmem:[%s420 + $0x32] sm:$0xff]
        %v1182 = vld [vmem:[%s420 + $0x3a] sm:$0xff]
        %v1183 = vld [vmem:[%s420 + $0x42] sm:$0xff]
        %v1184 = vld [vmem:[%s420 + $0x4a] sm:$0xff]
        %v1185 = vld [vmem:[%s420 + $0x52] sm:$0xff]
        %v1186 = vld [vmem:[%s420 + $0x5a] sm:$0xff]
        %v1187 = vld [vmem:[%s420 + $0x62] sm:$0xff]
        %v1188 = vld [vmem:[%s420 + $0x6a] sm:$0xff]
        %v1189 = vld [vmem:[%s420 + $0x72] sm:$0xff]
        %v1190 = vld [vmem:[%s420 + $0x7a] sm:$0xff]
        %v1191 = vld [vmem:[%s420 + $0x82] sm:$0xff]
        %v1192 = vld [vmem:[%s420 + $0x8a] sm:$0xff]
        %v1193 = vld [vmem:[%s420 + $0x92] sm:$0xff]
        %v1194 = vld [vmem:[%s420 + $0x9a] sm:$0xff]
        %v1195 = vld [vmem:[%s420 + $0xa2] sm:$0xff]
        %v1196 = vld [vmem:[%s420 + $0xaa] sm:$0xff]
        %v1197 = vld [vmem:[%s420 + $0xb2] sm:$0xff]
        %v1198 = vld [vmem:[%s420 + $0xba] sm:$0xff]
        %v1199 = vld [vmem:[%s420 + $0xc2] sm:$0xff]
        %v1200 = vld [vmem:[%s420 + $0xca] sm:$0xff]
        %v1201 = vld [vmem:[%s420 + $0xd2] sm:$0xff]
        %v1202 = vld [vmem:[%s420 + $0xda] sm:$0xff]
        %v1203 = vld [vmem:[%s420 + $0xe2] sm:$0xff]
        %v1204 = vld [vmem:[%s420 + $0xea] sm:$0xff]
        %v1205 = vld [vmem:[%s420 + $0xf2] sm:$0xff]
        %v1206 = vld [vmem:[%s420 + $0xfa] sm:$0xff]
        %1208 = vset.pattern.permute.xlu0 0
        %1209 = vperm.xlu0 %1208, %v458
        %v1210 = vpop.permute.xlu0 %1209
        %1213 = vset.pattern.permute.xlu0 0
        %1214 = vperm.xlu0 %1213, %v459
        %v1215 = vpop.permute.xlu0 %1214
        %1218 = vset.pattern.permute.xlu0 0
        %1219 = vperm.xlu0 %1218, %v460
        %v1220 = vpop.permute.xlu0 %1219
        %1223 = vset.pattern.permute.xlu0 0
        %1224 = vperm.xlu0 %1223, %v461
        %v1225 = vpop.permute.xlu0 %1224
        %1228 = vset.pattern.permute.xlu0 0
        %1229 = vperm.xlu0 %1228, %v462
        %v1230 = vpop.permute.xlu0 %1229
        %1233 = vset.pattern.permute.xlu0 0
        %1234 = vperm.xlu0 %1233, %v463
        %v1235 = vpop.permute.xlu0 %1234
        %1238 = vset.pattern.permute.xlu0 0
        %1239 = vperm.xlu0 %1238, %v464
        %v1240 = vpop.permute.xlu0 %1239
        %1243 = vset.pattern.permute.xlu0 0
        %1244 = vperm.xlu0 %1243, %v465
        %v1245 = vpop.permute.xlu0 %1244
        %1248 = vset.pattern.permute.xlu0 0
        %1249 = vperm.xlu0 %1248, %v466
        %v1250 = vpop.permute.xlu0 %1249
        %1253 = vset.pattern.permute.xlu0 0
        %1254 = vperm.xlu0 %1253, %v467
        %v1255 = vpop.permute.xlu0 %1254
        %1258 = vset.pattern.permute.xlu0 0
        %1259 = vperm.xlu0 %1258, %v468
        %v1260 = vpop.permute.xlu0 %1259
        %1263 = vset.pattern.permute.xlu0 0
        %1264 = vperm.xlu0 %1263, %v469
        %v1265 = vpop.permute.xlu0 %1264
        %1268 = vset.pattern.permute.xlu0 0
        %1269 = vperm.xlu0 %1268, %v470
        %v1270 = vpop.permute.xlu0 %1269
        %1273 = vset.pattern.permute.xlu0 0
        %1274 = vperm.xlu0 %1273, %v471
        %v1275 = vpop.permute.xlu0 %1274
        %1278 = vset.pattern.permute.xlu0 0
        %1279 = vperm.xlu0 %1278, %v472
        %v1280 = vpop.permute.xlu0 %1279
        %1283 = vset.pattern.permute.xlu0 0
        %1284 = vperm.xlu0 %1283, %v473
        %v1285 = vpop.permute.xlu0 %1284
        %1288 = vset.pattern.permute.xlu0 0
        %1289 = vperm.xlu0 %1288, %v474
        %v1290 = vpop.permute.xlu0 %1289
        %1293 = vset.pattern.permute.xlu0 0
        %1294 = vperm.xlu0 %1293, %v475
        %v1295 = vpop.permute.xlu0 %1294
        %1298 = vset.pattern.permute.xlu0 0
        %1299 = vperm.xlu0 %1298, %v476
        %v1300 = vpop.permute.xlu0 %1299
        %1303 = vset.pattern.permute.xlu0 0
        %1304 = vperm.xlu0 %1303, %v477
        %v1305 = vpop.permute.xlu0 %1304
        %1308 = vset.pattern.permute.xlu0 0
        %1309 = vperm.xlu0 %1308, %v478
        %v1310 = vpop.permute.xlu0 %1309
        %1313 = vset.pattern.permute.xlu0 0
        %1314 = vperm.xlu0 %1313, %v479
        %v1315 = vpop.permute.xlu0 %1314
        %1318 = vset.pattern.permute.xlu0 0
        %1319 = vperm.xlu0 %1318, %v480
        %v1320 = vpop.permute.xlu0 %1319
        %1323 = vset.pattern.permute.xlu0 0
        %1324 = vperm.xlu0 %1323, %v481
        %v1325 = vpop.permute.xlu0 %1324
        %1328 = vset.pattern.permute.xlu0 0
        %1329 = vperm.xlu0 %1328, %v482
        %v1330 = vpop.permute.xlu0 %1329
        %1333 = vset.pattern.permute.xlu0 0
        %1334 = vperm.xlu0 %1333, %v483
        %v1335 = vpop.permute.xlu0 %1334
        %1338 = vset.pattern.permute.xlu0 0
        %1339 = vperm.xlu0 %1338, %v484
        %v1340 = vpop.permute.xlu0 %1339
        %1343 = vset.pattern.permute.xlu0 0
        %1344 = vperm.xlu0 %1343, %v485
        %v1345 = vpop.permute.xlu0 %1344
        %1348 = vset.pattern.permute.xlu0 0
        %1349 = vperm.xlu0 %1348, %v486
        %v1350 = vpop.permute.xlu0 %1349
        %1353 = vset.pattern.permute.xlu0 0
        %1354 = vperm.xlu0 %1353, %v487
        %v1355 = vpop.permute.xlu0 %1354
        %1358 = vset.pattern.permute.xlu0 0
        %1359 = vperm.xlu0 %1358, %v488
        %v1360 = vpop.permute.xlu0 %1359
        %1363 = vset.pattern.permute.xlu0 0
        %1364 = vperm.xlu0 %1363, %v489
        %v1365 = vpop.permute.xlu0 %1364
        %v1367 = vmul.f32 %v1175, %v1210
        %v1368 = vmul.f32 %v1176, %v1215
        %v1369 = vmul.f32 %v1177, %v1220
        %v1370 = vmul.f32 %v1178, %v1225
        %v1371 = vmul.f32 %v1179, %v1230
        %v1372 = vmul.f32 %v1180, %v1235
        %v1373 = vmul.f32 %v1181, %v1240
        %v1374 = vmul.f32 %v1182, %v1245
        %v1375 = vmul.f32 %v1183, %v1250
        %v1376 = vmul.f32 %v1184, %v1255
        %v1377 = vmul.f32 %v1185, %v1260
        %v1378 = vmul.f32 %v1186, %v1265
        %v1379 = vmul.f32 %v1187, %v1270
        %v1380 = vmul.f32 %v1188, %v1275
        %v1381 = vmul.f32 %v1189, %v1280
        %v1382 = vmul.f32 %v1190, %v1285
        %v1383 = vmul.f32 %v1191, %v1290
        %v1384 = vmul.f32 %v1192, %v1295
        %v1385 = vmul.f32 %v1193, %v1300
        %v1386 = vmul.f32 %v1194, %v1305
        %v1387 = vmul.f32 %v1195, %v1310
        %v1388 = vmul.f32 %v1196, %v1315
        %v1389 = vmul.f32 %v1197, %v1320
        %v1390 = vmul.f32 %v1198, %v1325
        %v1391 = vmul.f32 %v1199, %v1330
        %v1392 = vmul.f32 %v1200, %v1335
        %v1393 = vmul.f32 %v1201, %v1340
        %v1394 = vmul.f32 %v1202, %v1345
        %v1395 = vmul.f32 %v1203, %v1350
        %v1396 = vmul.f32 %v1204, %v1355
        %v1397 = vmul.f32 %v1205, %v1360
        %v1398 = vmul.f32 %v1206, %v1365
        %s1399 = scalar_lea.vmem %s3, 8
        %v1400 = vld [vmem:[%s1399] sm:$0xf]
        %v1402 = vsel %vm749, %v1367, 0
        %v1405 = vsel %vm749, %v1368, 0
        %v1408 = vsel %vm749, %v1369, 0
        %v1411 = vsel %vm749, %v1370, 0
        %v1414 = vsel %vm749, %v1371, 0
        %v1417 = vsel %vm749, %v1372, 0
        %v1420 = vsel %vm749, %v1373, 0
        %v1423 = vsel %vm749, %v1374, 0
        %v1426 = vsel %vm749, %v1375, 0
        %v1429 = vsel %vm749, %v1376, 0
        %v1432 = vsel %vm749, %v1377, 0
        %v1435 = vsel %vm749, %v1378, 0
        %v1438 = vsel %vm749, %v1379, 0
        %v1441 = vsel %vm749, %v1380, 0
        %v1444 = vsel %vm749, %v1381, 0
        %v1447 = vsel %vm749, %v1382, 0
        %v1450 = vsel %vm749, %v1383, 0
        %v1453 = vsel %vm749, %v1384, 0
        %v1456 = vsel %vm749, %v1385, 0
        %v1459 = vsel %vm749, %v1386, 0
        %v1462 = vsel %vm749, %v1387, 0
        %v1465 = vsel %vm749, %v1388, 0
        %v1468 = vsel %vm749, %v1389, 0
        %v1471 = vsel %vm749, %v1390, 0
        %v1474 = vsel %vm749, %v1391, 0
        %v1477 = vsel %vm749, %v1392, 0
        %v1480 = vsel %vm749, %v1393, 0
        %v1483 = vsel %vm749, %v1394, 0
        %v1486 = vsel %vm749, %v1395, 0
        %v1489 = vsel %vm749, %v1396, 0
        %v1492 = vsel %vm749, %v1397, 0
        %v1495 = vsel %vm749, %v1398, 0
        %v1498 = vsel %vm846, %v1400, 0
        %1500 = vmatpush.msra.mxu0 0.0
        %1501 = vmatpush.msra.mxu0 0.0
        %1502 = vmatpush.msra.mxu0 0.0
        %1503 = vmatpush.msra.mxu0 0.0
        %1504 = vmatpush.msra.mxu0 0.0
        %1505 = vmatpush.msra.mxu0 0.0
        %1506 = vmatpush.msra.mxu0 0.0
        %1507 = vmatpush.msra.mxu0 0.0
        %1508 = vmatpush.msra.mxu0 0.0
        %1509 = vmatpush.msra.mxu0 0.0
        %1510 = vmatpush.msra.mxu0 0.0
        %1511 = vmatpush.msra.mxu0 0.0
        %1512 = vmatpush.msra.mxu0 0.0
        %1513 = vmatpush.msra.mxu0 0.0
        %1514 = vmatpush.msra.mxu0 0.0
        %1515 = vmatpush.msra.mxu0 %v1498
        %1516 = vmatmul.f32.gmra.mxu0 %v1402
        %v1517 = vpop.f32.mrf.mxu0
        %v1518 = vadd.f32 0.0, %v1517
        %1519 = vmatmul.f32.gmra.mxu0 %v1405
        %v1520 = vpop.f32.mrf.mxu0
        %v1521 = vadd.f32 0.0, %v1520
        %1522 = vmatmul.f32.gmra.mxu0 %v1408
        %v1523 = vpop.f32.mrf.mxu0
        %v1524 = vadd.f32 0.0, %v1523
        %1525 = vmatmul.f32.gmra.mxu0 %v1411
        %v1526 = vpop.f32.mrf.mxu0
        %v1527 = vadd.f32 0.0, %v1526
        %1528 = vmatmul.f32.gmra.mxu0 %v1414
        %v1529 = vpop.f32.mrf.mxu0
        %v1530 = vadd.f32 0.0, %v1529
        %1531 = vmatmul.f32.gmra.mxu0 %v1417
        %v1532 = vpop.f32.mrf.mxu0
        %v1533 = vadd.f32 0.0, %v1532
        %1534 = vmatmul.f32.gmra.mxu0 %v1420
        %v1535 = vpop.f32.mrf.mxu0
        %v1536 = vadd.f32 0.0, %v1535
        %1537 = vmatmul.f32.gmra.mxu0 %v1423
        %v1538 = vpop.f32.mrf.mxu0
        %v1539 = vadd.f32 0.0, %v1538
        %1540 = vmatmul.f32.gmra.mxu0 %v1426
        %v1541 = vpop.f32.mrf.mxu0
        %v1542 = vadd.f32 0.0, %v1541
        %1543 = vmatmul.f32.gmra.mxu0 %v1429
        %v1544 = vpop.f32.mrf.mxu0
        %v1545 = vadd.f32 0.0, %v1544
        %1546 = vmatmul.f32.gmra.mxu0 %v1432
        %v1547 = vpop.f32.mrf.mxu0
        %v1548 = vadd.f32 0.0, %v1547
        %1549 = vmatmul.f32.gmra.mxu0 %v1435
        %v1550 = vpop.f32.mrf.mxu0
        %v1551 = vadd.f32 0.0, %v1550
        %1552 = vmatmul.f32.gmra.mxu0 %v1438
        %v1553 = vpop.f32.mrf.mxu0
        %v1554 = vadd.f32 0.0, %v1553
        %1555 = vmatmul.f32.gmra.mxu0 %v1441
        %v1556 = vpop.f32.mrf.mxu0
        %v1557 = vadd.f32 0.0, %v1556
        %1558 = vmatmul.f32.gmra.mxu0 %v1444
        %v1559 = vpop.f32.mrf.mxu0
        %v1560 = vadd.f32 0.0, %v1559
        %1561 = vmatmul.f32.gmra.mxu0 %v1447
        %v1562 = vpop.f32.mrf.mxu0
        %v1563 = vadd.f32 0.0, %v1562
        %1564 = vmatmul.f32.gmra.mxu0 %v1450
        %v1565 = vpop.f32.mrf.mxu0
        %v1566 = vadd.f32 0.0, %v1565
        %1567 = vmatmul.f32.gmra.mxu0 %v1453
        %v1568 = vpop.f32.mrf.mxu0
        %v1569 = vadd.f32 0.0, %v1568
        %1570 = vmatmul.f32.gmra.mxu0 %v1456
        %v1571 = vpop.f32.mrf.mxu0
        %v1572 = vadd.f32 0.0, %v1571
        %1573 = vmatmul.f32.gmra.mxu0 %v1459
        %v1574 = vpop.f32.mrf.mxu0
        %v1575 = vadd.f32 0.0, %v1574
        %1576 = vmatmul.f32.gmra.mxu0 %v1462
        %v1577 = vpop.f32.mrf.mxu0
        %v1578 = vadd.f32 0.0, %v1577
        %1579 = vmatmul.f32.gmra.mxu0 %v1465
        %v1580 = vpop.f32.mrf.mxu0
        %v1581 = vadd.f32 0.0, %v1580
        %1582 = vmatmul.f32.gmra.mxu0 %v1468
        %v1583 = vpop.f32.mrf.mxu0
        %v1584 = vadd.f32 0.0, %v1583
        %1585 = vmatmul.f32.gmra.mxu0 %v1471
        %v1586 = vpop.f32.mrf.mxu0
        %v1587 = vadd.f32 0.0, %v1586
        %1588 = vmatmul.f32.gmra.mxu0 %v1474
        %v1589 = vpop.f32.mrf.mxu0
        %v1590 = vadd.f32 0.0, %v1589
        %1591 = vmatmul.f32.gmra.mxu0 %v1477
        %v1592 = vpop.f32.mrf.mxu0
        %v1593 = vadd.f32 0.0, %v1592
        %1594 = vmatmul.f32.gmra.mxu0 %v1480
        %v1595 = vpop.f32.mrf.mxu0
        %v1596 = vadd.f32 0.0, %v1595
        %1597 = vmatmul.f32.gmra.mxu0 %v1483
        %v1598 = vpop.f32.mrf.mxu0
        %v1599 = vadd.f32 0.0, %v1598
        %1600 = vmatmul.f32.gmra.mxu0 %v1486
        %v1601 = vpop.f32.mrf.mxu0
        %v1602 = vadd.f32 0.0, %v1601
        %1603 = vmatmul.f32.gmra.mxu0 %v1489
        %v1604 = vpop.f32.mrf.mxu0
        %v1605 = vadd.f32 0.0, %v1604
        %1606 = vmatmul.f32.gmra.mxu0 %v1492
        %v1607 = vpop.f32.mrf.mxu0
        %v1608 = vadd.f32 0.0, %v1607
        %1609 = vmatmul.f32.gmra.mxu0 %v1495
        %v1610 = vpop.f32.mrf.mxu0
        %v1611 = vadd.f32 0.0, %v1610
        %1612 = vdwg.mxu0
        %v1613 = vadd.f32 %v1080, %v1518
        %v1614 = vadd.f32 %v1083, %v1521
        %v1615 = vadd.f32 %v1086, %v1524
        %v1616 = vadd.f32 %v1089, %v1527
        %v1617 = vadd.f32 %v1092, %v1530
        %v1618 = vadd.f32 %v1095, %v1533
        %v1619 = vadd.f32 %v1098, %v1536
        %v1620 = vadd.f32 %v1101, %v1539
        %v1621 = vadd.f32 %v1104, %v1542
        %v1622 = vadd.f32 %v1107, %v1545
        %v1623 = vadd.f32 %v1110, %v1548
        %v1624 = vadd.f32 %v1113, %v1551
        %v1625 = vadd.f32 %v1116, %v1554
        %v1626 = vadd.f32 %v1119, %v1557
        %v1627 = vadd.f32 %v1122, %v1560
        %v1628 = vadd.f32 %v1125, %v1563
        %v1629 = vadd.f32 %v1128, %v1566
        %v1630 = vadd.f32 %v1131, %v1569
        %v1631 = vadd.f32 %v1134, %v1572
        %v1632 = vadd.f32 %v1137, %v1575
        %v1633 = vadd.f32 %v1140, %v1578
        %v1634 = vadd.f32 %v1143, %v1581
        %v1635 = vadd.f32 %v1146, %v1584
        %v1636 = vadd.f32 %v1149, %v1587
        %v1637 = vadd.f32 %v1152, %v1590
        %v1638 = vadd.f32 %v1155, %v1593
        %v1639 = vadd.f32 %v1158, %v1596
        %v1640 = vadd.f32 %v1161, %v1599
        %v1641 = vadd.f32 %v1164, %v1602
        %v1642 = vadd.f32 %v1167, %v1605
        %v1643 = vadd.f32 %v1170, %v1608
        %v1644 = vadd.f32 %v1173, %v1611
        %v1645 = vld [vmem:[%s420 + $0x10] sm:$0xff]
        %v1646 = vld [vmem:[%s420 + $0x18] sm:$0xff]
        %v1647 = vld [vmem:[%s420 + $0x20] sm:$0xff]
        %v1648 = vld [vmem:[%s420 + $0x28] sm:$0xff]
        %v1649 = vld [vmem:[%s420 + $0x30] sm:$0xff]
        %v1650 = vld [vmem:[%s420 + $0x38] sm:$0xff]
        %v1651 = vld [vmem:[%s420 + $0x40] sm:$0xff]
        %v1652 = vld [vmem:[%s420 + $0x48] sm:$0xff]
        %v1653 = vld [vmem:[%s420 + $0x50] sm:$0xff]
        %v1654 = vld [vmem:[%s420 + $0x58] sm:$0xff]
        %v1655 = vld [vmem:[%s420 + $0x60] sm:$0xff]
        %v1656 = vld [vmem:[%s420 + $0x68] sm:$0xff]
        %v1657 = vld [vmem:[%s420 + $0x70] sm:$0xff]
        %v1658 = vld [vmem:[%s420 + $0x78] sm:$0xff]
        %v1659 = vld [vmem:[%s420 + $0x80] sm:$0xff]
        %v1660 = vld [vmem:[%s420 + $0x88] sm:$0xff]
        %v1661 = vld [vmem:[%s420 + $0x90] sm:$0xff]
        %v1662 = vld [vmem:[%s420 + $0x98] sm:$0xff]
        %v1663 = vld [vmem:[%s420 + $0xa0] sm:$0xff]
        %v1664 = vld [vmem:[%s420 + $0xa8] sm:$0xff]
        %v1665 = vld [vmem:[%s420 + $0xb0] sm:$0xff]
        %v1666 = vld [vmem:[%s420 + $0xb8] sm:$0xff]
        %v1667 = vld [vmem:[%s420 + $0xc0] sm:$0xff]
        %v1668 = vld [vmem:[%s420 + $0xc8] sm:$0xff]
        %v1669 = vld [vmem:[%s420 + $0xd0] sm:$0xff]
        %v1670 = vld [vmem:[%s420 + $0xd8] sm:$0xff]
        %v1671 = vld [vmem:[%s420 + $0xe0] sm:$0xff]
        %v1672 = vld [vmem:[%s420 + $0xe8] sm:$0xff]
        %v1673 = vld [vmem:[%s420 + $0xf0] sm:$0xff]
        %v1674 = vld [vmem:[%s420 + $0xf8] sm:$0xff]
        %v1675 = vld [vmem:[%s420 + $0x100] sm:$0xff]
        %v1676 = vld [vmem:[%s420 + $0x108] sm:$0xff]
        %v1677 = vmul.f32 %v1645, %v525
        %v1678 = vmul.f32 %v1646, %v530
        %v1679 = vmul.f32 %v1647, %v535
        %v1680 = vmul.f32 %v1648, %v540
        %v1681 = vmul.f32 %v1649, %v545
        %v1682 = vmul.f32 %v1650, %v550
        %v1683 = vmul.f32 %v1651, %v555
        %v1684 = vmul.f32 %v1652, %v560
        %v1685 = vmul.f32 %v1653, %v565
        %v1686 = vmul.f32 %v1654, %v570
        %v1687 = vmul.f32 %v1655, %v575
        %v1688 = vmul.f32 %v1656, %v580
        %v1689 = vmul.f32 %v1657, %v585
        %v1690 = vmul.f32 %v1658, %v590
        %v1691 = vmul.f32 %v1659, %v595
        %v1692 = vmul.f32 %v1660, %v600
        %v1693 = vmul.f32 %v1661, %v605
        %v1694 = vmul.f32 %v1662, %v610
        %v1695 = vmul.f32 %v1663, %v615
        %v1696 = vmul.f32 %v1664, %v620
        %v1697 = vmul.f32 %v1665, %v625
        %v1698 = vmul.f32 %v1666, %v630
        %v1699 = vmul.f32 %v1667, %v635
        %v1700 = vmul.f32 %v1668, %v640
        %v1701 = vmul.f32 %v1669, %v645
        %v1702 = vmul.f32 %v1670, %v650
        %v1703 = vmul.f32 %v1671, %v655
        %v1704 = vmul.f32 %v1672, %v660
        %v1705 = vmul.f32 %v1673, %v665
        %v1706 = vmul.f32 %v1674, %v670
        %v1707 = vmul.f32 %v1675, %v675
        %v1708 = vmul.f32 %v1676, %v680
        %s1709 = scalar_lea.vmem %s3, 12
        %v1710 = vld [vmem:[%s1709] sm:$0xf]
        %v1712 = vsel %vm749, %v1677, 0
        %v1715 = vsel %vm749, %v1678, 0
        %v1718 = vsel %vm749, %v1679, 0
        %v1721 = vsel %vm749, %v1680, 0
        %v1724 = vsel %vm749, %v1681, 0
        %v1727 = vsel %vm749, %v1682, 0
        %v1730 = vsel %vm749, %v1683, 0
        %v1733 = vsel %vm749, %v1684, 0
        %v1736 = vsel %vm749, %v1685, 0
        %v1739 = vsel %vm749, %v1686, 0
        %v1742 = vsel %vm749, %v1687, 0
        %v1745 = vsel %vm749, %v1688, 0
        %v1748 = vsel %vm749, %v1689, 0
        %v1751 = vsel %vm749, %v1690, 0
        %v1754 = vsel %vm749, %v1691, 0
        %v1757 = vsel %vm749, %v1692, 0
        %v1760 = vsel %vm749, %v1693, 0
        %v1763 = vsel %vm749, %v1694, 0
        %v1766 = vsel %vm749, %v1695, 0
        %v1769 = vsel %vm749, %v1696, 0
        %v1772 = vsel %vm749, %v1697, 0
        %v1775 = vsel %vm749, %v1698, 0
        %v1778 = vsel %vm749, %v1699, 0
        %v1781 = vsel %vm749, %v1700, 0
        %v1784 = vsel %vm749, %v1701, 0
        %v1787 = vsel %vm749, %v1702, 0
        %v1790 = vsel %vm749, %v1703, 0
        %v1793 = vsel %vm749, %v1704, 0
        %v1796 = vsel %vm749, %v1705, 0
        %v1799 = vsel %vm749, %v1706, 0
        %v1802 = vsel %vm749, %v1707, 0
        %v1805 = vsel %vm749, %v1708, 0
        %v1808 = vsel %vm846, %v1710, 0
        %1810 = vmatpush.msra.mxu0 0.0
        %1811 = vmatpush.msra.mxu0 0.0
        %1812 = vmatpush.msra.mxu0 0.0
        %1813 = vmatpush.msra.mxu0 0.0
        %1814 = vmatpush.msra.mxu0 0.0
        %1815 = vmatpush.msra.mxu0 0.0
        %1816 = vmatpush.msra.mxu0 0.0
        %1817 = vmatpush.msra.mxu0 0.0
        %1818 = vmatpush.msra.mxu0 0.0
        %1819 = vmatpush.msra.mxu0 0.0
        %1820 = vmatpush.msra.mxu0 0.0
        %1821 = vmatpush.msra.mxu0 0.0
        %1822 = vmatpush.msra.mxu0 0.0
        %1823 = vmatpush.msra.mxu0 0.0
        %1824 = vmatpush.msra.mxu0 0.0
        %1825 = vmatpush.msra.mxu0 %v1808
        %1826 = vmatmul.f32.gmra.mxu0 %v1712
        %v1827 = vpop.f32.mrf.mxu0
        %v1828 = vadd.f32 0.0, %v1827
        %1829 = vmatmul.f32.gmra.mxu0 %v1715
        %v1830 = vpop.f32.mrf.mxu0
        %v1831 = vadd.f32 0.0, %v1830
        %1832 = vmatmul.f32.gmra.mxu0 %v1718
        %v1833 = vpop.f32.mrf.mxu0
        %v1834 = vadd.f32 0.0, %v1833
        %1835 = vmatmul.f32.gmra.mxu0 %v1721
        %v1836 = vpop.f32.mrf.mxu0
        %v1837 = vadd.f32 0.0, %v1836
        %1838 = vmatmul.f32.gmra.mxu0 %v1724
        %v1839 = vpop.f32.mrf.mxu0
        %v1840 = vadd.f32 0.0, %v1839
        %1841 = vmatmul.f32.gmra.mxu0 %v1727
        %v1842 = vpop.f32.mrf.mxu0
        %v1843 = vadd.f32 0.0, %v1842
        %1844 = vmatmul.f32.gmra.mxu0 %v1730
        %v1845 = vpop.f32.mrf.mxu0
        %v1846 = vadd.f32 0.0, %v1845
        %1847 = vmatmul.f32.gmra.mxu0 %v1733
        %v1848 = vpop.f32.mrf.mxu0
        %v1849 = vadd.f32 0.0, %v1848
        %1850 = vmatmul.f32.gmra.mxu0 %v1736
        %v1851 = vpop.f32.mrf.mxu0
        %v1852 = vadd.f32 0.0, %v1851
        %1853 = vmatmul.f32.gmra.mxu0 %v1739
        %v1854 = vpop.f32.mrf.mxu0
        %v1855 = vadd.f32 0.0, %v1854
        %1856 = vmatmul.f32.gmra.mxu0 %v1742
        %v1857 = vpop.f32.mrf.mxu0
        %v1858 = vadd.f32 0.0, %v1857
        %1859 = vmatmul.f32.gmra.mxu0 %v1745
        %v1860 = vpop.f32.mrf.mxu0
        %v1861 = vadd.f32 0.0, %v1860
        %1862 = vmatmul.f32.gmra.mxu0 %v1748
        %v1863 = vpop.f32.mrf.mxu0
        %v1864 = vadd.f32 0.0, %v1863
        %1865 = vmatmul.f32.gmra.mxu0 %v1751
        %v1866 = vpop.f32.mrf.mxu0
        %v1867 = vadd.f32 0.0, %v1866
        %1868 = vmatmul.f32.gmra.mxu0 %v1754
        %v1869 = vpop.f32.mrf.mxu0
        %v1870 = vadd.f32 0.0, %v1869
        %1871 = vmatmul.f32.gmra.mxu0 %v1757
        %v1872 = vpop.f32.mrf.mxu0
        %v1873 = vadd.f32 0.0, %v1872
        %1874 = vmatmul.f32.gmra.mxu0 %v1760
        %v1875 = vpop.f32.mrf.mxu0
        %v1876 = vadd.f32 0.0, %v1875
        %1877 = vmatmul.f32.gmra.mxu0 %v1763
        %v1878 = vpop.f32.mrf.mxu0
        %v1879 = vadd.f32 0.0, %v1878
        %1880 = vmatmul.f32.gmra.mxu0 %v1766
        %v1881 = vpop.f32.mrf.mxu0
        %v1882 = vadd.f32 0.0, %v1881
        %1883 = vmatmul.f32.gmra.mxu0 %v1769
        %v1884 = vpop.f32.mrf.mxu0
        %v1885 = vadd.f32 0.0, %v1884
        %1886 = vmatmul.f32.gmra.mxu0 %v1772
        %v1887 = vpop.f32.mrf.mxu0
        %v1888 = vadd.f32 0.0, %v1887
        %1889 = vmatmul.f32.gmra.mxu0 %v1775
        %v1890 = vpop.f32.mrf.mxu0
        %v1891 = vadd.f32 0.0, %v1890
        %1892 = vmatmul.f32.gmra.mxu0 %v1778
        %v1893 = vpop.f32.mrf.mxu0
        %v1894 = vadd.f32 0.0, %v1893
        %1895 = vmatmul.f32.gmra.mxu0 %v1781
        %v1896 = vpop.f32.mrf.mxu0
        %v1897 = vadd.f32 0.0, %v1896
        %1898 = vmatmul.f32.gmra.mxu0 %v1784
        %v1899 = vpop.f32.mrf.mxu0
        %v1900 = vadd.f32 0.0, %v1899
        %1901 = vmatmul.f32.gmra.mxu0 %v1787
        %v1902 = vpop.f32.mrf.mxu0
        %v1903 = vadd.f32 0.0, %v1902
        %1904 = vmatmul.f32.gmra.mxu0 %v1790
        %v1905 = vpop.f32.mrf.mxu0
        %v1906 = vadd.f32 0.0, %v1905
        %1907 = vmatmul.f32.gmra.mxu0 %v1793
        %v1908 = vpop.f32.mrf.mxu0
        %v1909 = vadd.f32 0.0, %v1908
        %1910 = vmatmul.f32.gmra.mxu0 %v1796
        %v1911 = vpop.f32.mrf.mxu0
        %v1912 = vadd.f32 0.0, %v1911
        %1913 = vmatmul.f32.gmra.mxu0 %v1799
        %v1914 = vpop.f32.mrf.mxu0
        %v1915 = vadd.f32 0.0, %v1914
        %1916 = vmatmul.f32.gmra.mxu0 %v1802
        %v1917 = vpop.f32.mrf.mxu0
        %v1918 = vadd.f32 0.0, %v1917
        %1919 = vmatmul.f32.gmra.mxu0 %v1805
        %v1920 = vpop.f32.mrf.mxu0
        %v1921 = vadd.f32 0.0, %v1920
        %1922 = vdwg.mxu0
        %v1923 = vadd.f32 %v1613, %v1828
        %v1924 = vadd.f32 %v1614, %v1831
        %v1925 = vadd.f32 %v1615, %v1834
        %v1926 = vadd.f32 %v1616, %v1837
        %v1927 = vadd.f32 %v1617, %v1840
        %v1928 = vadd.f32 %v1618, %v1843
        %v1929 = vadd.f32 %v1619, %v1846
        %v1930 = vadd.f32 %v1620, %v1849
        %v1931 = vadd.f32 %v1621, %v1852
        %v1932 = vadd.f32 %v1622, %v1855
        %v1933 = vadd.f32 %v1623, %v1858
        %v1934 = vadd.f32 %v1624, %v1861
        %v1935 = vadd.f32 %v1625, %v1864
        %v1936 = vadd.f32 %v1626, %v1867
        %v1937 = vadd.f32 %v1627, %v1870
        %v1938 = vadd.f32 %v1628, %v1873
        %v1939 = vadd.f32 %v1629, %v1876
        %v1940 = vadd.f32 %v1630, %v1879
        %v1941 = vadd.f32 %v1631, %v1882
        %v1942 = vadd.f32 %v1632, %v1885
        %v1943 = vadd.f32 %v1633, %v1888
        %v1944 = vadd.f32 %v1634, %v1891
        %v1945 = vadd.f32 %v1635, %v1894
        %v1946 = vadd.f32 %v1636, %v1897
        %v1947 = vadd.f32 %v1637, %v1900
        %v1948 = vadd.f32 %v1638, %v1903
        %v1949 = vadd.f32 %v1639, %v1906
        %v1950 = vadd.f32 %v1640, %v1909
        %v1951 = vadd.f32 %v1641, %v1912
        %v1952 = vadd.f32 %v1642, %v1915
        %v1953 = vadd.f32 %v1643, %v1918
        %v1954 = vadd.f32 %v1644, %v1921
        %v1955 = vld [vmem:[%s420 + $0x11] sm:$0xff]
        %v1956 = vld [vmem:[%s420 + $0x19] sm:$0xff]
        %v1957 = vld [vmem:[%s420 + $0x21] sm:$0xff]
        %v1958 = vld [vmem:[%s420 + $0x29] sm:$0xff]
        %v1959 = vld [vmem:[%s420 + $0x31] sm:$0xff]
        %v1960 = vld [vmem:[%s420 + $0x39] sm:$0xff]
        %v1961 = vld [vmem:[%s420 + $0x41] sm:$0xff]
        %v1962 = vld [vmem:[%s420 + $0x49] sm:$0xff]
        %v1963 = vld [vmem:[%s420 + $0x51] sm:$0xff]
        %v1964 = vld [vmem:[%s420 + $0x59] sm:$0xff]
        %v1965 = vld [vmem:[%s420 + $0x61] sm:$0xff]
        %v1966 = vld [vmem:[%s420 + $0x69] sm:$0xff]
        %v1967 = vld [vmem:[%s420 + $0x71] sm:$0xff]
        %v1968 = vld [vmem:[%s420 + $0x79] sm:$0xff]
        %v1969 = vld [vmem:[%s420 + $0x81] sm:$0xff]
        %v1970 = vld [vmem:[%s420 + $0x89] sm:$0xff]
        %v1971 = vld [vmem:[%s420 + $0x91] sm:$0xff]
        %v1972 = vld [vmem:[%s420 + $0x99] sm:$0xff]
        %v1973 = vld [vmem:[%s420 + $0xa1] sm:$0xff]
        %v1974 = vld [vmem:[%s420 + $0xa9] sm:$0xff]
        %v1975 = vld [vmem:[%s420 + $0xb1] sm:$0xff]
        %v1976 = vld [vmem:[%s420 + $0xb9] sm:$0xff]
        %v1977 = vld [vmem:[%s420 + $0xc1] sm:$0xff]
        %v1978 = vld [vmem:[%s420 + $0xc9] sm:$0xff]
        %v1979 = vld [vmem:[%s420 + $0xd1] sm:$0xff]
        %v1980 = vld [vmem:[%s420 + $0xd9] sm:$0xff]
        %v1981 = vld [vmem:[%s420 + $0xe1] sm:$0xff]
        %v1982 = vld [vmem:[%s420 + $0xe9] sm:$0xff]
        %v1983 = vld [vmem:[%s420 + $0xf1] sm:$0xff]
        %v1984 = vld [vmem:[%s420 + $0xf9] sm:$0xff]
        %v1985 = vld [vmem:[%s420 + $0x101] sm:$0xff]
        %v1986 = vld [vmem:[%s420 + $0x109] sm:$0xff]
        %s1987 = scalar_lea.vmem %s3, 16
        %v1988 = vld [vmem:[%s1987] sm:$0xf]
        %v1990 = vsel %vm749, %v1955, 0
        %v1993 = vsel %vm749, %v1956, 0
        %v1996 = vsel %vm749, %v1957, 0
        %v1999 = vsel %vm749, %v1958, 0
        %v2002 = vsel %vm749, %v1959, 0
        %v2005 = vsel %vm749, %v1960, 0
        %v2008 = vsel %vm749, %v1961, 0
        %v2011 = vsel %vm749, %v1962, 0
        %v2014 = vsel %vm749, %v1963, 0
        %v2017 = vsel %vm749, %v1964, 0
        %v2020 = vsel %vm749, %v1965, 0
        %v2023 = vsel %vm749, %v1966, 0
        %v2026 = vsel %vm749, %v1967, 0
        %v2029 = vsel %vm749, %v1968, 0
        %v2032 = vsel %vm749, %v1969, 0
        %v2035 = vsel %vm749, %v1970, 0
        %v2038 = vsel %vm749, %v1971, 0
        %v2041 = vsel %vm749, %v1972, 0
        %v2044 = vsel %vm749, %v1973, 0
        %v2047 = vsel %vm749, %v1974, 0
        %v2050 = vsel %vm749, %v1975, 0
        %v2053 = vsel %vm749, %v1976, 0
        %v2056 = vsel %vm749, %v1977, 0
        %v2059 = vsel %vm749, %v1978, 0
        %v2062 = vsel %vm749, %v1979, 0
        %v2065 = vsel %vm749, %v1980, 0
        %v2068 = vsel %vm749, %v1981, 0
        %v2071 = vsel %vm749, %v1982, 0
        %v2074 = vsel %vm749, %v1983, 0
        %v2077 = vsel %vm749, %v1984, 0
        %v2080 = vsel %vm749, %v1985, 0
        %v2083 = vsel %vm749, %v1986, 0
        %v2086 = vsel %vm846, %v1988, 0
        %2088 = vmatpush.msra.mxu0 0.0
        %2089 = vmatpush.msra.mxu0 0.0
        %2090 = vmatpush.msra.mxu0 0.0
        %2091 = vmatpush.msra.mxu0 0.0
        %2092 = vmatpush.msra.mxu0 0.0
        %2093 = vmatpush.msra.mxu0 0.0
        %2094 = vmatpush.msra.mxu0 0.0
        %2095 = vmatpush.msra.mxu0 0.0
        %2096 = vmatpush.msra.mxu0 0.0
        %2097 = vmatpush.msra.mxu0 0.0
        %2098 = vmatpush.msra.mxu0 0.0
        %2099 = vmatpush.msra.mxu0 0.0
        %2100 = vmatpush.msra.mxu0 0.0
        %2101 = vmatpush.msra.mxu0 0.0
        %2102 = vmatpush.msra.mxu0 0.0
        %2103 = vmatpush.msra.mxu0 %v2086
        %2104 = vmatmul.f32.gmra.mxu0 %v1990
        %v2105 = vpop.f32.mrf.mxu0
        %v2106 = vadd.f32 0.0, %v2105
        %2107 = vmatmul.f32.gmra.mxu0 %v1993
        %v2108 = vpop.f32.mrf.mxu0
        %v2109 = vadd.f32 0.0, %v2108
        %2110 = vmatmul.f32.gmra.mxu0 %v1996
        %v2111 = vpop.f32.mrf.mxu0
        %v2112 = vadd.f32 0.0, %v2111
        %2113 = vmatmul.f32.gmra.mxu0 %v1999
        %v2114 = vpop.f32.mrf.mxu0
        %v2115 = vadd.f32 0.0, %v2114
        %2116 = vmatmul.f32.gmra.mxu0 %v2002
        %v2117 = vpop.f32.mrf.mxu0
        %v2118 = vadd.f32 0.0, %v2117
        %2119 = vmatmul.f32.gmra.mxu0 %v2005
        %v2120 = vpop.f32.mrf.mxu0
        %v2121 = vadd.f32 0.0, %v2120
        %2122 = vmatmul.f32.gmra.mxu0 %v2008
        %v2123 = vpop.f32.mrf.mxu0
        %v2124 = vadd.f32 0.0, %v2123
        %2125 = vmatmul.f32.gmra.mxu0 %v2011
        %v2126 = vpop.f32.mrf.mxu0
        %v2127 = vadd.f32 0.0, %v2126
        %2128 = vmatmul.f32.gmra.mxu0 %v2014
        %v2129 = vpop.f32.mrf.mxu0
        %v2130 = vadd.f32 0.0, %v2129
        %2131 = vmatmul.f32.gmra.mxu0 %v2017
        %v2132 = vpop.f32.mrf.mxu0
        %v2133 = vadd.f32 0.0, %v2132
        %2134 = vmatmul.f32.gmra.mxu0 %v2020
        %v2135 = vpop.f32.mrf.mxu0
        %v2136 = vadd.f32 0.0, %v2135
        %2137 = vmatmul.f32.gmra.mxu0 %v2023
        %v2138 = vpop.f32.mrf.mxu0
        %v2139 = vadd.f32 0.0, %v2138
        %2140 = vmatmul.f32.gmra.mxu0 %v2026
        %v2141 = vpop.f32.mrf.mxu0
        %v2142 = vadd.f32 0.0, %v2141
        %2143 = vmatmul.f32.gmra.mxu0 %v2029
        %v2144 = vpop.f32.mrf.mxu0
        %v2145 = vadd.f32 0.0, %v2144
        %2146 = vmatmul.f32.gmra.mxu0 %v2032
        %v2147 = vpop.f32.mrf.mxu0
        %v2148 = vadd.f32 0.0, %v2147
        %2149 = vmatmul.f32.gmra.mxu0 %v2035
        %v2150 = vpop.f32.mrf.mxu0
        %v2151 = vadd.f32 0.0, %v2150
        %2152 = vmatmul.f32.gmra.mxu0 %v2038
        %v2153 = vpop.f32.mrf.mxu0
        %v2154 = vadd.f32 0.0, %v2153
        %2155 = vmatmul.f32.gmra.mxu0 %v2041
        %v2156 = vpop.f32.mrf.mxu0
        %v2157 = vadd.f32 0.0, %v2156
        %2158 = vmatmul.f32.gmra.mxu0 %v2044
        %v2159 = vpop.f32.mrf.mxu0
        %v2160 = vadd.f32 0.0, %v2159
        %2161 = vmatmul.f32.gmra.mxu0 %v2047
        %v2162 = vpop.f32.mrf.mxu0
        %v2163 = vadd.f32 0.0, %v2162
        %2164 = vmatmul.f32.gmra.mxu0 %v2050
        %v2165 = vpop.f32.mrf.mxu0
        %v2166 = vadd.f32 0.0, %v2165
        %2167 = vmatmul.f32.gmra.mxu0 %v2053
        %v2168 = vpop.f32.mrf.mxu0
        %v2169 = vadd.f32 0.0, %v2168
        %2170 = vmatmul.f32.gmra.mxu0 %v2056
        %v2171 = vpop.f32.mrf.mxu0
        %v2172 = vadd.f32 0.0, %v2171
        %2173 = vmatmul.f32.gmra.mxu0 %v2059
        %v2174 = vpop.f32.mrf.mxu0
        %v2175 = vadd.f32 0.0, %v2174
        %2176 = vmatmul.f32.gmra.mxu0 %v2062
        %v2177 = vpop.f32.mrf.mxu0
        %v2178 = vadd.f32 0.0, %v2177
        %2179 = vmatmul.f32.gmra.mxu0 %v2065
        %v2180 = vpop.f32.mrf.mxu0
        %v2181 = vadd.f32 0.0, %v2180
        %2182 = vmatmul.f32.gmra.mxu0 %v2068
        %v2183 = vpop.f32.mrf.mxu0
        %v2184 = vadd.f32 0.0, %v2183
        %2185 = vmatmul.f32.gmra.mxu0 %v2071
        %v2186 = vpop.f32.mrf.mxu0
        %v2187 = vadd.f32 0.0, %v2186
        %2188 = vmatmul.f32.gmra.mxu0 %v2074
        %v2189 = vpop.f32.mrf.mxu0
        %v2190 = vadd.f32 0.0, %v2189
        %2191 = vmatmul.f32.gmra.mxu0 %v2077
        %v2192 = vpop.f32.mrf.mxu0
        %v2193 = vadd.f32 0.0, %v2192
        %2194 = vmatmul.f32.gmra.mxu0 %v2080
        %v2195 = vpop.f32.mrf.mxu0
        %v2196 = vadd.f32 0.0, %v2195
        %2197 = vmatmul.f32.gmra.mxu0 %v2083
        %v2198 = vpop.f32.mrf.mxu0
        %v2199 = vadd.f32 0.0, %v2198
        %2200 = vdwg.mxu0
        %v2201 = vadd.f32 %v1923, %v2106
        %v2202 = vadd.f32 %v1924, %v2109
        %v2203 = vadd.f32 %v1925, %v2112
        %v2204 = vadd.f32 %v1926, %v2115
        %v2205 = vadd.f32 %v1927, %v2118
        %v2206 = vadd.f32 %v1928, %v2121
        %v2207 = vadd.f32 %v1929, %v2124
        %v2208 = vadd.f32 %v1930, %v2127
        %v2209 = vadd.f32 %v1931, %v2130
        %v2210 = vadd.f32 %v1932, %v2133
        %v2211 = vadd.f32 %v1933, %v2136
        %v2212 = vadd.f32 %v1934, %v2139
        %v2213 = vadd.f32 %v1935, %v2142
        %v2214 = vadd.f32 %v1936, %v2145
        %v2215 = vadd.f32 %v1937, %v2148
        %v2216 = vadd.f32 %v1938, %v2151
        %v2217 = vadd.f32 %v1939, %v2154
        %v2218 = vadd.f32 %v1940, %v2157
        %v2219 = vadd.f32 %v1941, %v2160
        %v2220 = vadd.f32 %v1942, %v2163
        %v2221 = vadd.f32 %v1943, %v2166
        %v2222 = vadd.f32 %v1944, %v2169
        %v2223 = vadd.f32 %v1945, %v2172
        %v2224 = vadd.f32 %v1946, %v2175
        %v2225 = vadd.f32 %v1947, %v2178
        %v2226 = vadd.f32 %v1948, %v2181
        %v2227 = vadd.f32 %v1949, %v2184
        %v2228 = vadd.f32 %v1950, %v2187
        %v2229 = vadd.f32 %v1951, %v2190
        %v2230 = vadd.f32 %v1952, %v2193
        %v2231 = vadd.f32 %v1953, %v2196
        %v2232 = vadd.f32 %v1954, %v2199
        %v2233 = vld [vmem:[%s420 + $0x12] sm:$0xff]
        %v2234 = vld [vmem:[%s420 + $0x1a] sm:$0xff]
        %v2235 = vld [vmem:[%s420 + $0x22] sm:$0xff]
        %v2236 = vld [vmem:[%s420 + $0x2a] sm:$0xff]
        %v2237 = vld [vmem:[%s420 + $0x32] sm:$0xff]
        %v2238 = vld [vmem:[%s420 + $0x3a] sm:$0xff]
        %v2239 = vld [vmem:[%s420 + $0x42] sm:$0xff]
        %v2240 = vld [vmem:[%s420 + $0x4a] sm:$0xff]
        %v2241 = vld [vmem:[%s420 + $0x52] sm:$0xff]
        %v2242 = vld [vmem:[%s420 + $0x5a] sm:$0xff]
        %v2243 = vld [vmem:[%s420 + $0x62] sm:$0xff]
        %v2244 = vld [vmem:[%s420 + $0x6a] sm:$0xff]
        %v2245 = vld [vmem:[%s420 + $0x72] sm:$0xff]
        %v2246 = vld [vmem:[%s420 + $0x7a] sm:$0xff]
        %v2247 = vld [vmem:[%s420 + $0x82] sm:$0xff]
        %v2248 = vld [vmem:[%s420 + $0x8a] sm:$0xff]
        %v2249 = vld [vmem:[%s420 + $0x92] sm:$0xff]
        %v2250 = vld [vmem:[%s420 + $0x9a] sm:$0xff]
        %v2251 = vld [vmem:[%s420 + $0xa2] sm:$0xff]
        %v2252 = vld [vmem:[%s420 + $0xaa] sm:$0xff]
        %v2253 = vld [vmem:[%s420 + $0xb2] sm:$0xff]
        %v2254 = vld [vmem:[%s420 + $0xba] sm:$0xff]
        %v2255 = vld [vmem:[%s420 + $0xc2] sm:$0xff]
        %v2256 = vld [vmem:[%s420 + $0xca] sm:$0xff]
        %v2257 = vld [vmem:[%s420 + $0xd2] sm:$0xff]
        %v2258 = vld [vmem:[%s420 + $0xda] sm:$0xff]
        %v2259 = vld [vmem:[%s420 + $0xe2] sm:$0xff]
        %v2260 = vld [vmem:[%s420 + $0xea] sm:$0xff]
        %v2261 = vld [vmem:[%s420 + $0xf2] sm:$0xff]
        %v2262 = vld [vmem:[%s420 + $0xfa] sm:$0xff]
        %v2263 = vld [vmem:[%s420 + $0x102] sm:$0xff]
        %v2264 = vld [vmem:[%s420 + $0x10a] sm:$0xff]
        %v2265 = vmul.f32 %v2233, %v1210
        %v2266 = vmul.f32 %v2234, %v1215
        %v2267 = vmul.f32 %v2235, %v1220
        %v2268 = vmul.f32 %v2236, %v1225
        %v2269 = vmul.f32 %v2237, %v1230
        %v2270 = vmul.f32 %v2238, %v1235
        %v2271 = vmul.f32 %v2239, %v1240
        %v2272 = vmul.f32 %v2240, %v1245
        %v2273 = vmul.f32 %v2241, %v1250
        %v2274 = vmul.f32 %v2242, %v1255
        %v2275 = vmul.f32 %v2243, %v1260
        %v2276 = vmul.f32 %v2244, %v1265
        %v2277 = vmul.f32 %v2245, %v1270
        %v2278 = vmul.f32 %v2246, %v1275
        %v2279 = vmul.f32 %v2247, %v1280
        %v2280 = vmul.f32 %v2248, %v1285
        %v2281 = vmul.f32 %v2249, %v1290
        %v2282 = vmul.f32 %v2250, %v1295
        %v2283 = vmul.f32 %v2251, %v1300
        %v2284 = vmul.f32 %v2252, %v1305
        %v2285 = vmul.f32 %v2253, %v1310
        %v2286 = vmul.f32 %v2254, %v1315
        %v2287 = vmul.f32 %v2255, %v1320
        %v2288 = vmul.f32 %v2256, %v1325
        %v2289 = vmul.f32 %v2257, %v1330
        %v2290 = vmul.f32 %v2258, %v1335
        %v2291 = vmul.f32 %v2259, %v1340
        %v2292 = vmul.f32 %v2260, %v1345
        %v2293 = vmul.f32 %v2261, %v1350
        %v2294 = vmul.f32 %v2262, %v1355
        %v2295 = vmul.f32 %v2263, %v1360
        %v2296 = vmul.f32 %v2264, %v1365
        %s2297 = scalar_lea.vmem %s3, 20
        %v2298 = vld [vmem:[%s2297] sm:$0xf]
        %v2300 = vsel %vm749, %v2265, 0
        %v2303 = vsel %vm749, %v2266, 0
        %v2306 = vsel %vm749, %v2267, 0
        %v2309 = vsel %vm749, %v2268, 0
        %v2312 = vsel %vm749, %v2269, 0
        %v2315 = vsel %vm749, %v2270, 0
        %v2318 = vsel %vm749, %v2271, 0
        %v2321 = vsel %vm749, %v2272, 0
        %v2324 = vsel %vm749, %v2273, 0
        %v2327 = vsel %vm749, %v2274, 0
        %v2330 = vsel %vm749, %v2275, 0
        %v2333 = vsel %vm749, %v2276, 0
        %v2336 = vsel %vm749, %v2277, 0
        %v2339 = vsel %vm749, %v2278, 0
        %v2342 = vsel %vm749, %v2279, 0
        %v2345 = vsel %vm749, %v2280, 0
        %v2348 = vsel %vm749, %v2281, 0
        %v2351 = vsel %vm749, %v2282, 0
        %v2354 = vsel %vm749, %v2283, 0
        %v2357 = vsel %vm749, %v2284, 0
        %v2360 = vsel %vm749, %v2285, 0
        %v2363 = vsel %vm749, %v2286, 0
        %v2366 = vsel %vm749, %v2287, 0
        %v2369 = vsel %vm749, %v2288, 0
        %v2372 = vsel %vm749, %v2289, 0
        %v2375 = vsel %vm749, %v2290, 0
        %v2378 = vsel %vm749, %v2291, 0
        %v2381 = vsel %vm749, %v2292, 0
        %v2384 = vsel %vm749, %v2293, 0
        %v2387 = vsel %vm749, %v2294, 0
        %v2390 = vsel %vm749, %v2295, 0
        %v2393 = vsel %vm749, %v2296, 0
        %v2396 = vsel %vm846, %v2298, 0
        %2398 = vmatpush.msra.mxu0 0.0
        %2399 = vmatpush.msra.mxu0 0.0
        %2400 = vmatpush.msra.mxu0 0.0
        %2401 = vmatpush.msra.mxu0 0.0
        %2402 = vmatpush.msra.mxu0 0.0
        %2403 = vmatpush.msra.mxu0 0.0
        %2404 = vmatpush.msra.mxu0 0.0
        %2405 = vmatpush.msra.mxu0 0.0
        %2406 = vmatpush.msra.mxu0 0.0
        %2407 = vmatpush.msra.mxu0 0.0
        %2408 = vmatpush.msra.mxu0 0.0
        %2409 = vmatpush.msra.mxu0 0.0
        %2410 = vmatpush.msra.mxu0 0.0
        %2411 = vmatpush.msra.mxu0 0.0
        %2412 = vmatpush.msra.mxu0 0.0
        %2413 = vmatpush.msra.mxu0 %v2396
        %2414 = vmatmul.f32.gmra.mxu0 %v2300
        %v2415 = vpop.f32.mrf.mxu0
        %v2416 = vadd.f32 0.0, %v2415
        %2417 = vmatmul.f32.gmra.mxu0 %v2303
        %v2418 = vpop.f32.mrf.mxu0
        %v2419 = vadd.f32 0.0, %v2418
        %2420 = vmatmul.f32.gmra.mxu0 %v2306
        %v2421 = vpop.f32.mrf.mxu0
        %v2422 = vadd.f32 0.0, %v2421
        %2423 = vmatmul.f32.gmra.mxu0 %v2309
        %v2424 = vpop.f32.mrf.mxu0
        %v2425 = vadd.f32 0.0, %v2424
        %2426 = vmatmul.f32.gmra.mxu0 %v2312
        %v2427 = vpop.f32.mrf.mxu0
        %v2428 = vadd.f32 0.0, %v2427
        %2429 = vmatmul.f32.gmra.mxu0 %v2315
        %v2430 = vpop.f32.mrf.mxu0
        %v2431 = vadd.f32 0.0, %v2430
        %2432 = vmatmul.f32.gmra.mxu0 %v2318
        %v2433 = vpop.f32.mrf.mxu0
        %v2434 = vadd.f32 0.0, %v2433
        %2435 = vmatmul.f32.gmra.mxu0 %v2321
        %v2436 = vpop.f32.mrf.mxu0
        %v2437 = vadd.f32 0.0, %v2436
        %2438 = vmatmul.f32.gmra.mxu0 %v2324
        %v2439 = vpop.f32.mrf.mxu0
        %v2440 = vadd.f32 0.0, %v2439
        %2441 = vmatmul.f32.gmra.mxu0 %v2327
        %v2442 = vpop.f32.mrf.mxu0
        %v2443 = vadd.f32 0.0, %v2442
        %2444 = vmatmul.f32.gmra.mxu0 %v2330
        %v2445 = vpop.f32.mrf.mxu0
        %v2446 = vadd.f32 0.0, %v2445
        %2447 = vmatmul.f32.gmra.mxu0 %v2333
        %v2448 = vpop.f32.mrf.mxu0
        %v2449 = vadd.f32 0.0, %v2448
        %2450 = vmatmul.f32.gmra.mxu0 %v2336
        %v2451 = vpop.f32.mrf.mxu0
        %v2452 = vadd.f32 0.0, %v2451
        %2453 = vmatmul.f32.gmra.mxu0 %v2339
        %v2454 = vpop.f32.mrf.mxu0
        %v2455 = vadd.f32 0.0, %v2454
        %2456 = vmatmul.f32.gmra.mxu0 %v2342
        %v2457 = vpop.f32.mrf.mxu0
        %v2458 = vadd.f32 0.0, %v2457
        %2459 = vmatmul.f32.gmra.mxu0 %v2345
        %v2460 = vpop.f32.mrf.mxu0
        %v2461 = vadd.f32 0.0, %v2460
        %2462 = vmatmul.f32.gmra.mxu0 %v2348
        %v2463 = vpop.f32.mrf.mxu0
        %v2464 = vadd.f32 0.0, %v2463
        %2465 = vmatmul.f32.gmra.mxu0 %v2351
        %v2466 = vpop.f32.mrf.mxu0
        %v2467 = vadd.f32 0.0, %v2466
        %2468 = vmatmul.f32.gmra.mxu0 %v2354
        %v2469 = vpop.f32.mrf.mxu0
        %v2470 = vadd.f32 0.0, %v2469
        %2471 = vmatmul.f32.gmra.mxu0 %v2357
        %v2472 = vpop.f32.mrf.mxu0
        %v2473 = vadd.f32 0.0, %v2472
        %2474 = vmatmul.f32.gmra.mxu0 %v2360
        %v2475 = vpop.f32.mrf.mxu0
        %v2476 = vadd.f32 0.0, %v2475
        %2477 = vmatmul.f32.gmra.mxu0 %v2363
        %v2478 = vpop.f32.mrf.mxu0
        %v2479 = vadd.f32 0.0, %v2478
        %2480 = vmatmul.f32.gmra.mxu0 %v2366
        %v2481 = vpop.f32.mrf.mxu0
        %v2482 = vadd.f32 0.0, %v2481
        %2483 = vmatmul.f32.gmra.mxu0 %v2369
        %v2484 = vpop.f32.mrf.mxu0
        %v2485 = vadd.f32 0.0, %v2484
        %2486 = vmatmul.f32.gmra.mxu0 %v2372
        %v2487 = vpop.f32.mrf.mxu0
        %v2488 = vadd.f32 0.0, %v2487
        %2489 = vmatmul.f32.gmra.mxu0 %v2375
        %v2490 = vpop.f32.mrf.mxu0
        %v2491 = vadd.f32 0.0, %v2490
        %2492 = vmatmul.f32.gmra.mxu0 %v2378
        %v2493 = vpop.f32.mrf.mxu0
        %v2494 = vadd.f32 0.0, %v2493
        %2495 = vmatmul.f32.gmra.mxu0 %v2381
        %v2496 = vpop.f32.mrf.mxu0
        %v2497 = vadd.f32 0.0, %v2496
        %2498 = vmatmul.f32.gmra.mxu0 %v2384
        %v2499 = vpop.f32.mrf.mxu0
        %v2500 = vadd.f32 0.0, %v2499
        %2501 = vmatmul.f32.gmra.mxu0 %v2387
        %v2502 = vpop.f32.mrf.mxu0
        %v2503 = vadd.f32 0.0, %v2502
        %2504 = vmatmul.f32.gmra.mxu0 %v2390
        %v2505 = vpop.f32.mrf.mxu0
        %v2506 = vadd.f32 0.0, %v2505
        %2507 = vmatmul.f32.gmra.mxu0 %v2393
        %v2508 = vpop.f32.mrf.mxu0
        %v2509 = vadd.f32 0.0, %v2508
        %2510 = vdwg.mxu0
        %v2511 = vadd.f32 %v2201, %v2416
        %v2512 = vadd.f32 %v2202, %v2419
        %v2513 = vadd.f32 %v2203, %v2422
        %v2514 = vadd.f32 %v2204, %v2425
        %v2515 = vadd.f32 %v2205, %v2428
        %v2516 = vadd.f32 %v2206, %v2431
        %v2517 = vadd.f32 %v2207, %v2434
        %v2518 = vadd.f32 %v2208, %v2437
        %v2519 = vadd.f32 %v2209, %v2440
        %v2520 = vadd.f32 %v2210, %v2443
        %v2521 = vadd.f32 %v2211, %v2446
        %v2522 = vadd.f32 %v2212, %v2449
        %v2523 = vadd.f32 %v2213, %v2452
        %v2524 = vadd.f32 %v2214, %v2455
        %v2525 = vadd.f32 %v2215, %v2458
        %v2526 = vadd.f32 %v2216, %v2461
        %v2527 = vadd.f32 %v2217, %v2464
        %v2528 = vadd.f32 %v2218, %v2467
        %v2529 = vadd.f32 %v2219, %v2470
        %v2530 = vadd.f32 %v2220, %v2473
        %v2531 = vadd.f32 %v2221, %v2476
        %v2532 = vadd.f32 %v2222, %v2479
        %v2533 = vadd.f32 %v2223, %v2482
        %v2534 = vadd.f32 %v2224, %v2485
        %v2535 = vadd.f32 %v2225, %v2488
        %v2536 = vadd.f32 %v2226, %v2491
        %v2537 = vadd.f32 %v2227, %v2494
        %v2538 = vadd.f32 %v2228, %v2497
        %v2539 = vadd.f32 %v2229, %v2500
        %v2540 = vadd.f32 %v2230, %v2503
        %v2541 = vadd.f32 %v2231, %v2506
        %v2542 = vadd.f32 %v2232, %v2509
        %v2543 = vld [vmem:[%s420 + $0x20] sm:$0xff]
        %v2544 = vld [vmem:[%s420 + $0x28] sm:$0xff]
        %v2545 = vld [vmem:[%s420 + $0x30] sm:$0xff]
        %v2546 = vld [vmem:[%s420 + $0x38] sm:$0xff]
        %v2547 = vld [vmem:[%s420 + $0x40] sm:$0xff]
        %v2548 = vld [vmem:[%s420 + $0x48] sm:$0xff]
        %v2549 = vld [vmem:[%s420 + $0x50] sm:$0xff]
        %v2550 = vld [vmem:[%s420 + $0x58] sm:$0xff]
        %v2551 = vld [vmem:[%s420 + $0x60] sm:$0xff]
        %v2552 = vld [vmem:[%s420 + $0x68] sm:$0xff]
        %v2553 = vld [vmem:[%s420 + $0x70] sm:$0xff]
        %v2554 = vld [vmem:[%s420 + $0x78] sm:$0xff]
        %v2555 = vld [vmem:[%s420 + $0x80] sm:$0xff]
        %v2556 = vld [vmem:[%s420 + $0x88] sm:$0xff]
        %v2557 = vld [vmem:[%s420 + $0x90] sm:$0xff]
        %v2558 = vld [vmem:[%s420 + $0x98] sm:$0xff]
        %v2559 = vld [vmem:[%s420 + $0xa0] sm:$0xff]
        %v2560 = vld [vmem:[%s420 + $0xa8] sm:$0xff]
        %v2561 = vld [vmem:[%s420 + $0xb0] sm:$0xff]
        %v2562 = vld [vmem:[%s420 + $0xb8] sm:$0xff]
        %v2563 = vld [vmem:[%s420 + $0xc0] sm:$0xff]
        %v2564 = vld [vmem:[%s420 + $0xc8] sm:$0xff]
        %v2565 = vld [vmem:[%s420 + $0xd0] sm:$0xff]
        %v2566 = vld [vmem:[%s420 + $0xd8] sm:$0xff]
        %v2567 = vld [vmem:[%s420 + $0xe0] sm:$0xff]
        %v2568 = vld [vmem:[%s420 + $0xe8] sm:$0xff]
        %v2569 = vld [vmem:[%s420 + $0xf0] sm:$0xff]
        %v2570 = vld [vmem:[%s420 + $0xf8] sm:$0xff]
        %v2571 = vld [vmem:[%s420 + $0x100] sm:$0xff]
        %v2572 = vld [vmem:[%s420 + $0x108] sm:$0xff]
        %v2573 = vld [vmem:[%s420 + $0x110] sm:$0xff]
        %v2574 = vld [vmem:[%s420 + $0x118] sm:$0xff]
        %v2575 = vmul.f32 %v2543, %v525
        %v2576 = vmul.f32 %v2544, %v530
        %v2577 = vmul.f32 %v2545, %v535
        %v2578 = vmul.f32 %v2546, %v540
        %v2579 = vmul.f32 %v2547, %v545
        %v2580 = vmul.f32 %v2548, %v550
        %v2581 = vmul.f32 %v2549, %v555
        %v2582 = vmul.f32 %v2550, %v560
        %v2583 = vmul.f32 %v2551, %v565
        %v2584 = vmul.f32 %v2552, %v570
        %v2585 = vmul.f32 %v2553, %v575
        %v2586 = vmul.f32 %v2554, %v580
        %v2587 = vmul.f32 %v2555, %v585
        %v2588 = vmul.f32 %v2556, %v590
        %v2589 = vmul.f32 %v2557, %v595
        %v2590 = vmul.f32 %v2558, %v600
        %v2591 = vmul.f32 %v2559, %v605
        %v2592 = vmul.f32 %v2560, %v610
        %v2593 = vmul.f32 %v2561, %v615
        %v2594 = vmul.f32 %v2562, %v620
        %v2595 = vmul.f32 %v2563, %v625
        %v2596 = vmul.f32 %v2564, %v630
        %v2597 = vmul.f32 %v2565, %v635
        %v2598 = vmul.f32 %v2566, %v640
        %v2599 = vmul.f32 %v2567, %v645
        %v2600 = vmul.f32 %v2568, %v650
        %v2601 = vmul.f32 %v2569, %v655
        %v2602 = vmul.f32 %v2570, %v660
        %v2603 = vmul.f32 %v2571, %v665
        %v2604 = vmul.f32 %v2572, %v670
        %v2605 = vmul.f32 %v2573, %v675
        %v2606 = vmul.f32 %v2574, %v680
        %s2607 = scalar_lea.vmem %s3, 24
        %v2608 = vld [vmem:[%s2607] sm:$0xf]
        %v2610 = vsel %vm749, %v2575, 0
        %v2613 = vsel %vm749, %v2576, 0
        %v2616 = vsel %vm749, %v2577, 0
        %v2619 = vsel %vm749, %v2578, 0
        %v2622 = vsel %vm749, %v2579, 0
        %v2625 = vsel %vm749, %v2580, 0
        %v2628 = vsel %vm749, %v2581, 0
        %v2631 = vsel %vm749, %v2582, 0
        %v2634 = vsel %vm749, %v2583, 0
        %v2637 = vsel %vm749, %v2584, 0
        %v2640 = vsel %vm749, %v2585, 0
        %v2643 = vsel %vm749, %v2586, 0
        %v2646 = vsel %vm749, %v2587, 0
        %v2649 = vsel %vm749, %v2588, 0
        %v2652 = vsel %vm749, %v2589, 0
        %v2655 = vsel %vm749, %v2590, 0
        %v2658 = vsel %vm749, %v2591, 0
        %v2661 = vsel %vm749, %v2592, 0
        %v2664 = vsel %vm749, %v2593, 0
        %v2667 = vsel %vm749, %v2594, 0
        %v2670 = vsel %vm749, %v2595, 0
        %v2673 = vsel %vm749, %v2596, 0
        %v2676 = vsel %vm749, %v2597, 0
        %v2679 = vsel %vm749, %v2598, 0
        %v2682 = vsel %vm749, %v2599, 0
        %v2685 = vsel %vm749, %v2600, 0
        %v2688 = vsel %vm749, %v2601, 0
        %v2691 = vsel %vm749, %v2602, 0
        %v2694 = vsel %vm749, %v2603, 0
        %v2697 = vsel %vm749, %v2604, 0
        %v2700 = vsel %vm749, %v2605, 0
        %v2703 = vsel %vm749, %v2606, 0
        %v2706 = vsel %vm846, %v2608, 0
        %2708 = vmatpush.msra.mxu0 0.0
        %2709 = vmatpush.msra.mxu0 0.0
        %2710 = vmatpush.msra.mxu0 0.0
        %2711 = vmatpush.msra.mxu0 0.0
        %2712 = vmatpush.msra.mxu0 0.0
        %2713 = vmatpush.msra.mxu0 0.0
        %2714 = vmatpush.msra.mxu0 0.0
        %2715 = vmatpush.msra.mxu0 0.0
        %2716 = vmatpush.msra.mxu0 0.0
        %2717 = vmatpush.msra.mxu0 0.0
        %2718 = vmatpush.msra.mxu0 0.0
        %2719 = vmatpush.msra.mxu0 0.0
        %2720 = vmatpush.msra.mxu0 0.0
        %2721 = vmatpush.msra.mxu0 0.0
        %2722 = vmatpush.msra.mxu0 0.0
        %2723 = vmatpush.msra.mxu0 %v2706
        %2724 = vmatmul.f32.gmra.mxu0 %v2610
        %v2725 = vpop.f32.mrf.mxu0
        %v2726 = vadd.f32 0.0, %v2725
        %2727 = vmatmul.f32.gmra.mxu0 %v2613
        %v2728 = vpop.f32.mrf.mxu0
        %v2729 = vadd.f32 0.0, %v2728
        %2730 = vmatmul.f32.gmra.mxu0 %v2616
        %v2731 = vpop.f32.mrf.mxu0
        %v2732 = vadd.f32 0.0, %v2731
        %2733 = vmatmul.f32.gmra.mxu0 %v2619
        %v2734 = vpop.f32.mrf.mxu0
        %v2735 = vadd.f32 0.0, %v2734
        %2736 = vmatmul.f32.gmra.mxu0 %v2622
        %v2737 = vpop.f32.mrf.mxu0
        %v2738 = vadd.f32 0.0, %v2737
        %2739 = vmatmul.f32.gmra.mxu0 %v2625
        %v2740 = vpop.f32.mrf.mxu0
        %v2741 = vadd.f32 0.0, %v2740
        %2742 = vmatmul.f32.gmra.mxu0 %v2628
        %v2743 = vpop.f32.mrf.mxu0
        %v2744 = vadd.f32 0.0, %v2743
        %2745 = vmatmul.f32.gmra.mxu0 %v2631
        %v2746 = vpop.f32.mrf.mxu0
        %v2747 = vadd.f32 0.0, %v2746
        %2748 = vmatmul.f32.gmra.mxu0 %v2634
        %v2749 = vpop.f32.mrf.mxu0
        %v2750 = vadd.f32 0.0, %v2749
        %2751 = vmatmul.f32.gmra.mxu0 %v2637
        %v2752 = vpop.f32.mrf.mxu0
        %v2753 = vadd.f32 0.0, %v2752
        %2754 = vmatmul.f32.gmra.mxu0 %v2640
        %v2755 = vpop.f32.mrf.mxu0
        %v2756 = vadd.f32 0.0, %v2755
        %2757 = vmatmul.f32.gmra.mxu0 %v2643
        %v2758 = vpop.f32.mrf.mxu0
        %v2759 = vadd.f32 0.0, %v2758
        %2760 = vmatmul.f32.gmra.mxu0 %v2646
        %v2761 = vpop.f32.mrf.mxu0
        %v2762 = vadd.f32 0.0, %v2761
        %2763 = vmatmul.f32.gmra.mxu0 %v2649
        %v2764 = vpop.f32.mrf.mxu0
        %v2765 = vadd.f32 0.0, %v2764
        %2766 = vmatmul.f32.gmra.mxu0 %v2652
        %v2767 = vpop.f32.mrf.mxu0
        %v2768 = vadd.f32 0.0, %v2767
        %2769 = vmatmul.f32.gmra.mxu0 %v2655
        %v2770 = vpop.f32.mrf.mxu0
        %v2771 = vadd.f32 0.0, %v2770
        %2772 = vmatmul.f32.gmra.mxu0 %v2658
        %v2773 = vpop.f32.mrf.mxu0
        %v2774 = vadd.f32 0.0, %v2773
        %2775 = vmatmul.f32.gmra.mxu0 %v2661
        %v2776 = vpop.f32.mrf.mxu0
        %v2777 = vadd.f32 0.0, %v2776
        %2778 = vmatmul.f32.gmra.mxu0 %v2664
        %v2779 = vpop.f32.mrf.mxu0
        %v2780 = vadd.f32 0.0, %v2779
        %2781 = vmatmul.f32.gmra.mxu0 %v2667
        %v2782 = vpop.f32.mrf.mxu0
        %v2783 = vadd.f32 0.0, %v2782
        %2784 = vmatmul.f32.gmra.mxu0 %v2670
        %v2785 = vpop.f32.mrf.mxu0
        %v2786 = vadd.f32 0.0, %v2785
        %2787 = vmatmul.f32.gmra.mxu0 %v2673
        %v2788 = vpop.f32.mrf.mxu0
        %v2789 = vadd.f32 0.0, %v2788
        %2790 = vmatmul.f32.gmra.mxu0 %v2676
        %v2791 = vpop.f32.mrf.mxu0
        %v2792 = vadd.f32 0.0, %v2791
        %2793 = vmatmul.f32.gmra.mxu0 %v2679
        %v2794 = vpop.f32.mrf.mxu0
        %v2795 = vadd.f32 0.0, %v2794
        %2796 = vmatmul.f32.gmra.mxu0 %v2682
        %v2797 = vpop.f32.mrf.mxu0
        %v2798 = vadd.f32 0.0, %v2797
        %2799 = vmatmul.f32.gmra.mxu0 %v2685
        %v2800 = vpop.f32.mrf.mxu0
        %v2801 = vadd.f32 0.0, %v2800
        %2802 = vmatmul.f32.gmra.mxu0 %v2688
        %v2803 = vpop.f32.mrf.mxu0
        %v2804 = vadd.f32 0.0, %v2803
        %2805 = vmatmul.f32.gmra.mxu0 %v2691
        %v2806 = vpop.f32.mrf.mxu0
        %v2807 = vadd.f32 0.0, %v2806
        %2808 = vmatmul.f32.gmra.mxu0 %v2694
        %v2809 = vpop.f32.mrf.mxu0
        %v2810 = vadd.f32 0.0, %v2809
        %2811 = vmatmul.f32.gmra.mxu0 %v2697
        %v2812 = vpop.f32.mrf.mxu0
        %v2813 = vadd.f32 0.0, %v2812
        %2814 = vmatmul.f32.gmra.mxu0 %v2700
        %v2815 = vpop.f32.mrf.mxu0
        %v2816 = vadd.f32 0.0, %v2815
        %2817 = vmatmul.f32.gmra.mxu0 %v2703
        %v2818 = vpop.f32.mrf.mxu0
        %v2819 = vadd.f32 0.0, %v2818
        %2820 = vdwg.mxu0
        %v2821 = vadd.f32 %v2511, %v2726
        %v2822 = vadd.f32 %v2512, %v2729
        %v2823 = vadd.f32 %v2513, %v2732
        %v2824 = vadd.f32 %v2514, %v2735
        %v2825 = vadd.f32 %v2515, %v2738
        %v2826 = vadd.f32 %v2516, %v2741
        %v2827 = vadd.f32 %v2517, %v2744
        %v2828 = vadd.f32 %v2518, %v2747
        %v2829 = vadd.f32 %v2519, %v2750
        %v2830 = vadd.f32 %v2520, %v2753
        %v2831 = vadd.f32 %v2521, %v2756
        %v2832 = vadd.f32 %v2522, %v2759
        %v2833 = vadd.f32 %v2523, %v2762
        %v2834 = vadd.f32 %v2524, %v2765
        %v2835 = vadd.f32 %v2525, %v2768
        %v2836 = vadd.f32 %v2526, %v2771
        %v2837 = vadd.f32 %v2527, %v2774
        %v2838 = vadd.f32 %v2528, %v2777
        %v2839 = vadd.f32 %v2529, %v2780
        %v2840 = vadd.f32 %v2530, %v2783
        %v2841 = vadd.f32 %v2531, %v2786
        %v2842 = vadd.f32 %v2532, %v2789
        %v2843 = vadd.f32 %v2533, %v2792
        %v2844 = vadd.f32 %v2534, %v2795
        %v2845 = vadd.f32 %v2535, %v2798
        %v2846 = vadd.f32 %v2536, %v2801
        %v2847 = vadd.f32 %v2537, %v2804
        %v2848 = vadd.f32 %v2538, %v2807
        %v2849 = vadd.f32 %v2539, %v2810
        %v2850 = vadd.f32 %v2540, %v2813
        %v2851 = vadd.f32 %v2541, %v2816
        %v2852 = vadd.f32 %v2542, %v2819
        %v2853 = vld [vmem:[%s420 + $0x21] sm:$0xff]
        %v2854 = vld [vmem:[%s420 + $0x29] sm:$0xff]
        %v2855 = vld [vmem:[%s420 + $0x31] sm:$0xff]
        %v2856 = vld [vmem:[%s420 + $0x39] sm:$0xff]
        %v2857 = vld [vmem:[%s420 + $0x41] sm:$0xff]
        %v2858 = vld [vmem:[%s420 + $0x49] sm:$0xff]
        %v2859 = vld [vmem:[%s420 + $0x51] sm:$0xff]
        %v2860 = vld [vmem:[%s420 + $0x59] sm:$0xff]
        %v2861 = vld [vmem:[%s420 + $0x61] sm:$0xff]
        %v2862 = vld [vmem:[%s420 + $0x69] sm:$0xff]
        %v2863 = vld [vmem:[%s420 + $0x71] sm:$0xff]
        %v2864 = vld [vmem:[%s420 + $0x79] sm:$0xff]
        %v2865 = vld [vmem:[%s420 + $0x81] sm:$0xff]
        %v2866 = vld [vmem:[%s420 + $0x89] sm:$0xff]
        %v2867 = vld [vmem:[%s420 + $0x91] sm:$0xff]
        %v2868 = vld [vmem:[%s420 + $0x99] sm:$0xff]
        %v2869 = vld [vmem:[%s420 + $0xa1] sm:$0xff]
        %v2870 = vld [vmem:[%s420 + $0xa9] sm:$0xff]
        %v2871 = vld [vmem:[%s420 + $0xb1] sm:$0xff]
        %v2872 = vld [vmem:[%s420 + $0xb9] sm:$0xff]
        %v2873 = vld [vmem:[%s420 + $0xc1] sm:$0xff]
        %v2874 = vld [vmem:[%s420 + $0xc9] sm:$0xff]
        %v2875 = vld [vmem:[%s420 + $0xd1] sm:$0xff]
        %v2876 = vld [vmem:[%s420 + $0xd9] sm:$0xff]
        %v2877 = vld [vmem:[%s420 + $0xe1] sm:$0xff]
        %v2878 = vld [vmem:[%s420 + $0xe9] sm:$0xff]
        %v2879 = vld [vmem:[%s420 + $0xf1] sm:$0xff]
        %v2880 = vld [vmem:[%s420 + $0xf9] sm:$0xff]
        %v2881 = vld [vmem:[%s420 + $0x101] sm:$0xff]
        %v2882 = vld [vmem:[%s420 + $0x109] sm:$0xff]
        %v2883 = vld [vmem:[%s420 + $0x111] sm:$0xff]
        %v2884 = vld [vmem:[%s420 + $0x119] sm:$0xff]
        %s2885 = scalar_lea.vmem %s3, 28
        %v2886 = vld [vmem:[%s2885] sm:$0xf]
        %v2888 = vsel %vm749, %v2853, 0
        %v2891 = vsel %vm749, %v2854, 0
        %v2894 = vsel %vm749, %v2855, 0
        %v2897 = vsel %vm749, %v2856, 0
        %v2900 = vsel %vm749, %v2857, 0
        %v2903 = vsel %vm749, %v2858, 0
        %v2906 = vsel %vm749, %v2859, 0
        %v2909 = vsel %vm749, %v2860, 0
        %v2912 = vsel %vm749, %v2861, 0
        %v2915 = vsel %vm749, %v2862, 0
        %v2918 = vsel %vm749, %v2863, 0
        %v2921 = vsel %vm749, %v2864, 0
        %v2924 = vsel %vm749, %v2865, 0
        %v2927 = vsel %vm749, %v2866, 0
        %v2930 = vsel %vm749, %v2867, 0
        %v2933 = vsel %vm749, %v2868, 0
        %v2936 = vsel %vm749, %v2869, 0
        %v2939 = vsel %vm749, %v2870, 0
        %v2942 = vsel %vm749, %v2871, 0
        %v2945 = vsel %vm749, %v2872, 0
        %v2948 = vsel %vm749, %v2873, 0
        %v2951 = vsel %vm749, %v2874, 0
        %v2954 = vsel %vm749, %v2875, 0
        %v2957 = vsel %vm749, %v2876, 0
        %v2960 = vsel %vm749, %v2877, 0
        %v2963 = vsel %vm749, %v2878, 0
        %v2966 = vsel %vm749, %v2879, 0
        %v2969 = vsel %vm749, %v2880, 0
        %v2972 = vsel %vm749, %v2881, 0
        %v2975 = vsel %vm749, %v2882, 0
        %v2978 = vsel %vm749, %v2883, 0
        %v2981 = vsel %vm749, %v2884, 0
        %v2984 = vsel %vm846, %v2886, 0
        %2986 = vmatpush.msra.mxu0 0.0
        %2987 = vmatpush.msra.mxu0 0.0
        %2988 = vmatpush.msra.mxu0 0.0
        %2989 = vmatpush.msra.mxu0 0.0
        %2990 = vmatpush.msra.mxu0 0.0
        %2991 = vmatpush.msra.mxu0 0.0
        %2992 = vmatpush.msra.mxu0 0.0
        %2993 = vmatpush.msra.mxu0 0.0
        %2994 = vmatpush.msra.mxu0 0.0
        %2995 = vmatpush.msra.mxu0 0.0
        %2996 = vmatpush.msra.mxu0 0.0
        %2997 = vmatpush.msra.mxu0 0.0
        %2998 = vmatpush.msra.mxu0 0.0
        %2999 = vmatpush.msra.mxu0 0.0
        %3000 = vmatpush.msra.mxu0 0.0
        %3001 = vmatpush.msra.mxu0 %v2984
        %3002 = vmatmul.f32.gmra.mxu0 %v2888
        %v3003 = vpop.f32.mrf.mxu0
        %v3004 = vadd.f32 0.0, %v3003
        %3005 = vmatmul.f32.gmra.mxu0 %v2891
        %v3006 = vpop.f32.mrf.mxu0
        %v3007 = vadd.f32 0.0, %v3006
        %3008 = vmatmul.f32.gmra.mxu0 %v2894
        %v3009 = vpop.f32.mrf.mxu0
        %v3010 = vadd.f32 0.0, %v3009
        %3011 = vmatmul.f32.gmra.mxu0 %v2897
        %v3012 = vpop.f32.mrf.mxu0
        %v3013 = vadd.f32 0.0, %v3012
        %3014 = vmatmul.f32.gmra.mxu0 %v2900
        %v3015 = vpop.f32.mrf.mxu0
        %v3016 = vadd.f32 0.0, %v3015
        %3017 = vmatmul.f32.gmra.mxu0 %v2903
        %v3018 = vpop.f32.mrf.mxu0
        %v3019 = vadd.f32 0.0, %v3018
        %3020 = vmatmul.f32.gmra.mxu0 %v2906
        %v3021 = vpop.f32.mrf.mxu0
        %v3022 = vadd.f32 0.0, %v3021
        %3023 = vmatmul.f32.gmra.mxu0 %v2909
        %v3024 = vpop.f32.mrf.mxu0
        %v3025 = vadd.f32 0.0, %v3024
        %3026 = vmatmul.f32.gmra.mxu0 %v2912
        %v3027 = vpop.f32.mrf.mxu0
        %v3028 = vadd.f32 0.0, %v3027
        %3029 = vmatmul.f32.gmra.mxu0 %v2915
        %v3030 = vpop.f32.mrf.mxu0
        %v3031 = vadd.f32 0.0, %v3030
        %3032 = vmatmul.f32.gmra.mxu0 %v2918
        %v3033 = vpop.f32.mrf.mxu0
        %v3034 = vadd.f32 0.0, %v3033
        %3035 = vmatmul.f32.gmra.mxu0 %v2921
        %v3036 = vpop.f32.mrf.mxu0
        %v3037 = vadd.f32 0.0, %v3036
        %3038 = vmatmul.f32.gmra.mxu0 %v2924
        %v3039 = vpop.f32.mrf.mxu0
        %v3040 = vadd.f32 0.0, %v3039
        %3041 = vmatmul.f32.gmra.mxu0 %v2927
        %v3042 = vpop.f32.mrf.mxu0
        %v3043 = vadd.f32 0.0, %v3042
        %3044 = vmatmul.f32.gmra.mxu0 %v2930
        %v3045 = vpop.f32.mrf.mxu0
        %v3046 = vadd.f32 0.0, %v3045
        %3047 = vmatmul.f32.gmra.mxu0 %v2933
        %v3048 = vpop.f32.mrf.mxu0
        %v3049 = vadd.f32 0.0, %v3048
        %3050 = vmatmul.f32.gmra.mxu0 %v2936
        %v3051 = vpop.f32.mrf.mxu0
        %v3052 = vadd.f32 0.0, %v3051
        %3053 = vmatmul.f32.gmra.mxu0 %v2939
        %v3054 = vpop.f32.mrf.mxu0
        %v3055 = vadd.f32 0.0, %v3054
        %3056 = vmatmul.f32.gmra.mxu0 %v2942
        %v3057 = vpop.f32.mrf.mxu0
        %v3058 = vadd.f32 0.0, %v3057
        %3059 = vmatmul.f32.gmra.mxu0 %v2945
        %v3060 = vpop.f32.mrf.mxu0
        %v3061 = vadd.f32 0.0, %v3060
        %3062 = vmatmul.f32.gmra.mxu0 %v2948
        %v3063 = vpop.f32.mrf.mxu0
        %v3064 = vadd.f32 0.0, %v3063
        %3065 = vmatmul.f32.gmra.mxu0 %v2951
        %v3066 = vpop.f32.mrf.mxu0
        %v3067 = vadd.f32 0.0, %v3066
        %3068 = vmatmul.f32.gmra.mxu0 %v2954
        %v3069 = vpop.f32.mrf.mxu0
        %v3070 = vadd.f32 0.0, %v3069
        %3071 = vmatmul.f32.gmra.mxu0 %v2957
        %v3072 = vpop.f32.mrf.mxu0
        %v3073 = vadd.f32 0.0, %v3072
        %3074 = vmatmul.f32.gmra.mxu0 %v2960
        %v3075 = vpop.f32.mrf.mxu0
        %v3076 = vadd.f32 0.0, %v3075
        %3077 = vmatmul.f32.gmra.mxu0 %v2963
        %v3078 = vpop.f32.mrf.mxu0
        %v3079 = vadd.f32 0.0, %v3078
        %3080 = vmatmul.f32.gmra.mxu0 %v2966
        %v3081 = vpop.f32.mrf.mxu0
        %v3082 = vadd.f32 0.0, %v3081
        %3083 = vmatmul.f32.gmra.mxu0 %v2969
        %v3084 = vpop.f32.mrf.mxu0
        %v3085 = vadd.f32 0.0, %v3084
        %3086 = vmatmul.f32.gmra.mxu0 %v2972
        %v3087 = vpop.f32.mrf.mxu0
        %v3088 = vadd.f32 0.0, %v3087
        %3089 = vmatmul.f32.gmra.mxu0 %v2975
        %v3090 = vpop.f32.mrf.mxu0
        %v3091 = vadd.f32 0.0, %v3090
        %3092 = vmatmul.f32.gmra.mxu0 %v2978
        %v3093 = vpop.f32.mrf.mxu0
        %v3094 = vadd.f32 0.0, %v3093
        %3095 = vmatmul.f32.gmra.mxu0 %v2981
        %v3096 = vpop.f32.mrf.mxu0
        %v3097 = vadd.f32 0.0, %v3096
        %3098 = vdwg.mxu0
        %v3099 = vadd.f32 %v2821, %v3004
        %v3100 = vadd.f32 %v2822, %v3007
        %v3101 = vadd.f32 %v2823, %v3010
        %v3102 = vadd.f32 %v2824, %v3013
        %v3103 = vadd.f32 %v2825, %v3016
        %v3104 = vadd.f32 %v2826, %v3019
        %v3105 = vadd.f32 %v2827, %v3022
        %v3106 = vadd.f32 %v2828, %v3025
        %v3107 = vadd.f32 %v2829, %v3028
        %v3108 = vadd.f32 %v2830, %v3031
        %v3109 = vadd.f32 %v2831, %v3034
        %v3110 = vadd.f32 %v2832, %v3037
        %v3111 = vadd.f32 %v2833, %v3040
        %v3112 = vadd.f32 %v2834, %v3043
        %v3113 = vadd.f32 %v2835, %v3046
        %v3114 = vadd.f32 %v2836, %v3049
        %v3115 = vadd.f32 %v2837, %v3052
        %v3116 = vadd.f32 %v2838, %v3055
        %v3117 = vadd.f32 %v2839, %v3058
        %v3118 = vadd.f32 %v2840, %v3061
        %v3119 = vadd.f32 %v2841, %v3064
        %v3120 = vadd.f32 %v2842, %v3067
        %v3121 = vadd.f32 %v2843, %v3070
        %v3122 = vadd.f32 %v2844, %v3073
        %v3123 = vadd.f32 %v2845, %v3076
        %v3124 = vadd.f32 %v2846, %v3079
        %v3125 = vadd.f32 %v2847, %v3082
        %v3126 = vadd.f32 %v2848, %v3085
        %v3127 = vadd.f32 %v2849, %v3088
        %v3128 = vadd.f32 %v2850, %v3091
        %v3129 = vadd.f32 %v2851, %v3094
        %v3130 = vadd.f32 %v2852, %v3097
        %v3131 = vld [vmem:[%s420 + $0x22] sm:$0xff]
        %v3132 = vld [vmem:[%s420 + $0x2a] sm:$0xff]
        %v3133 = vld [vmem:[%s420 + $0x32] sm:$0xff]
        %v3134 = vld [vmem:[%s420 + $0x3a] sm:$0xff]
        %v3135 = vld [vmem:[%s420 + $0x42] sm:$0xff]
        %v3136 = vld [vmem:[%s420 + $0x4a] sm:$0xff]
        %v3137 = vld [vmem:[%s420 + $0x52] sm:$0xff]
        %v3138 = vld [vmem:[%s420 + $0x5a] sm:$0xff]
        %v3139 = vld [vmem:[%s420 + $0x62] sm:$0xff]
        %v3140 = vld [vmem:[%s420 + $0x6a] sm:$0xff]
        %v3141 = vld [vmem:[%s420 + $0x72] sm:$0xff]
        %v3142 = vld [vmem:[%s420 + $0x7a] sm:$0xff]
        %v3143 = vld [vmem:[%s420 + $0x82] sm:$0xff]
        %v3144 = vld [vmem:[%s420 + $0x8a] sm:$0xff]
        %v3145 = vld [vmem:[%s420 + $0x92] sm:$0xff]
        %v3146 = vld [vmem:[%s420 + $0x9a] sm:$0xff]
        %v3147 = vld [vmem:[%s420 + $0xa2] sm:$0xff]
        %v3148 = vld [vmem:[%s420 + $0xaa] sm:$0xff]
        %v3149 = vld [vmem:[%s420 + $0xb2] sm:$0xff]
        %v3150 = vld [vmem:[%s420 + $0xba] sm:$0xff]
        %v3151 = vld [vmem:[%s420 + $0xc2] sm:$0xff]
        %v3152 = vld [vmem:[%s420 + $0xca] sm:$0xff]
        %v3153 = vld [vmem:[%s420 + $0xd2] sm:$0xff]
        %v3154 = vld [vmem:[%s420 + $0xda] sm:$0xff]
        %v3155 = vld [vmem:[%s420 + $0xe2] sm:$0xff]
        %v3156 = vld [vmem:[%s420 + $0xea] sm:$0xff]
        %v3157 = vld [vmem:[%s420 + $0xf2] sm:$0xff]
        %v3158 = vld [vmem:[%s420 + $0xfa] sm:$0xff]
        %v3159 = vld [vmem:[%s420 + $0x102] sm:$0xff]
        %v3160 = vld [vmem:[%s420 + $0x10a] sm:$0xff]
        %v3161 = vld [vmem:[%s420 + $0x112] sm:$0xff]
        %v3162 = vld [vmem:[%s420 + $0x11a] sm:$0xff]
        %v3163 = vmul.f32 %v3131, %v1210
        %v3164 = vmul.f32 %v3132, %v1215
        %v3165 = vmul.f32 %v3133, %v1220
        %v3166 = vmul.f32 %v3134, %v1225
        %v3167 = vmul.f32 %v3135, %v1230
        %v3168 = vmul.f32 %v3136, %v1235
        %v3169 = vmul.f32 %v3137, %v1240
        %v3170 = vmul.f32 %v3138, %v1245
        %v3171 = vmul.f32 %v3139, %v1250
        %v3172 = vmul.f32 %v3140, %v1255
        %v3173 = vmul.f32 %v3141, %v1260
        %v3174 = vmul.f32 %v3142, %v1265
        %v3175 = vmul.f32 %v3143, %v1270
        %v3176 = vmul.f32 %v3144, %v1275
        %v3177 = vmul.f32 %v3145, %v1280
        %v3178 = vmul.f32 %v3146, %v1285
        %v3179 = vmul.f32 %v3147, %v1290
        %v3180 = vmul.f32 %v3148, %v1295
        %v3181 = vmul.f32 %v3149, %v1300
        %v3182 = vmul.f32 %v3150, %v1305
        %v3183 = vmul.f32 %v3151, %v1310
        %v3184 = vmul.f32 %v3152, %v1315
        %v3185 = vmul.f32 %v3153, %v1320
        %v3186 = vmul.f32 %v3154, %v1325
        %v3187 = vmul.f32 %v3155, %v1330
        %v3188 = vmul.f32 %v3156, %v1335
        %v3189 = vmul.f32 %v3157, %v1340
        %v3190 = vmul.f32 %v3158, %v1345
        %v3191 = vmul.f32 %v3159, %v1350
        %v3192 = vmul.f32 %v3160, %v1355
        %v3193 = vmul.f32 %v3161, %v1360
        %v3194 = vmul.f32 %v3162, %v1365
        %s3195 = scalar_lea.vmem %s3, 32
        %v3196 = vld [vmem:[%s3195] sm:$0xf]
        %v3198 = vsel %vm749, %v3163, 0
        %v3201 = vsel %vm749, %v3164, 0
        %v3204 = vsel %vm749, %v3165, 0
        %v3207 = vsel %vm749, %v3166, 0
        %v3210 = vsel %vm749, %v3167, 0
        %v3213 = vsel %vm749, %v3168, 0
        %v3216 = vsel %vm749, %v3169, 0
        %v3219 = vsel %vm749, %v3170, 0
        %v3222 = vsel %vm749, %v3171, 0
        %v3225 = vsel %vm749, %v3172, 0
        %v3228 = vsel %vm749, %v3173, 0
        %v3231 = vsel %vm749, %v3174, 0
        %v3234 = vsel %vm749, %v3175, 0
        %v3237 = vsel %vm749, %v3176, 0
        %v3240 = vsel %vm749, %v3177, 0
        %v3243 = vsel %vm749, %v3178, 0
        %v3246 = vsel %vm749, %v3179, 0
        %v3249 = vsel %vm749, %v3180, 0
        %v3252 = vsel %vm749, %v3181, 0
        %v3255 = vsel %vm749, %v3182, 0
        %v3258 = vsel %vm749, %v3183, 0
        %v3261 = vsel %vm749, %v3184, 0
        %v3264 = vsel %vm749, %v3185, 0
        %v3267 = vsel %vm749, %v3186, 0
        %v3270 = vsel %vm749, %v3187, 0
        %v3273 = vsel %vm749, %v3188, 0
        %v3276 = vsel %vm749, %v3189, 0
        %v3279 = vsel %vm749, %v3190, 0
        %v3282 = vsel %vm749, %v3191, 0
        %v3285 = vsel %vm749, %v3192, 0
        %v3288 = vsel %vm749, %v3193, 0
        %v3291 = vsel %vm749, %v3194, 0
        %v3294 = vsel %vm846, %v3196, 0
        %3296 = vmatpush.msra.mxu0 0.0
        %3297 = vmatpush.msra.mxu0 0.0
        %3298 = vmatpush.msra.mxu0 0.0
        %3299 = vmatpush.msra.mxu0 0.0
        %3300 = vmatpush.msra.mxu0 0.0
        %3301 = vmatpush.msra.mxu0 0.0
        %3302 = vmatpush.msra.mxu0 0.0
        %3303 = vmatpush.msra.mxu0 0.0
        %3304 = vmatpush.msra.mxu0 0.0
        %3305 = vmatpush.msra.mxu0 0.0
        %3306 = vmatpush.msra.mxu0 0.0
        %3307 = vmatpush.msra.mxu0 0.0
        %3308 = vmatpush.msra.mxu0 0.0
        %3309 = vmatpush.msra.mxu0 0.0
        %3310 = vmatpush.msra.mxu0 0.0
        %3311 = vmatpush.msra.mxu0 %v3294
        %3312 = vmatmul.f32.gmra.mxu0 %v3198
        %v3313 = vpop.f32.mrf.mxu0
        %v3314 = vadd.f32 0.0, %v3313
        %3315 = vmatmul.f32.gmra.mxu0 %v3201
        %v3316 = vpop.f32.mrf.mxu0
        %v3317 = vadd.f32 0.0, %v3316
        %3318 = vmatmul.f32.gmra.mxu0 %v3204
        %v3319 = vpop.f32.mrf.mxu0
        %v3320 = vadd.f32 0.0, %v3319
        %3321 = vmatmul.f32.gmra.mxu0 %v3207
        %v3322 = vpop.f32.mrf.mxu0
        %v3323 = vadd.f32 0.0, %v3322
        %3324 = vmatmul.f32.gmra.mxu0 %v3210
        %v3325 = vpop.f32.mrf.mxu0
        %v3326 = vadd.f32 0.0, %v3325
        %3327 = vmatmul.f32.gmra.mxu0 %v3213
        %v3328 = vpop.f32.mrf.mxu0
        %v3329 = vadd.f32 0.0, %v3328
        %3330 = vmatmul.f32.gmra.mxu0 %v3216
        %v3331 = vpop.f32.mrf.mxu0
        %v3332 = vadd.f32 0.0, %v3331
        %3333 = vmatmul.f32.gmra.mxu0 %v3219
        %v3334 = vpop.f32.mrf.mxu0
        %v3335 = vadd.f32 0.0, %v3334
        %3336 = vmatmul.f32.gmra.mxu0 %v3222
        %v3337 = vpop.f32.mrf.mxu0
        %v3338 = vadd.f32 0.0, %v3337
        %3339 = vmatmul.f32.gmra.mxu0 %v3225
        %v3340 = vpop.f32.mrf.mxu0
        %v3341 = vadd.f32 0.0, %v3340
        %3342 = vmatmul.f32.gmra.mxu0 %v3228
        %v3343 = vpop.f32.mrf.mxu0
        %v3344 = vadd.f32 0.0, %v3343
        %3345 = vmatmul.f32.gmra.mxu0 %v3231
        %v3346 = vpop.f32.mrf.mxu0
        %v3347 = vadd.f32 0.0, %v3346
        %3348 = vmatmul.f32.gmra.mxu0 %v3234
        %v3349 = vpop.f32.mrf.mxu0
        %v3350 = vadd.f32 0.0, %v3349
        %3351 = vmatmul.f32.gmra.mxu0 %v3237
        %v3352 = vpop.f32.mrf.mxu0
        %v3353 = vadd.f32 0.0, %v3352
        %3354 = vmatmul.f32.gmra.mxu0 %v3240
        %v3355 = vpop.f32.mrf.mxu0
        %v3356 = vadd.f32 0.0, %v3355
        %3357 = vmatmul.f32.gmra.mxu0 %v3243
        %v3358 = vpop.f32.mrf.mxu0
        %v3359 = vadd.f32 0.0, %v3358
        %3360 = vmatmul.f32.gmra.mxu0 %v3246
        %v3361 = vpop.f32.mrf.mxu0
        %v3362 = vadd.f32 0.0, %v3361
        %3363 = vmatmul.f32.gmra.mxu0 %v3249
        %v3364 = vpop.f32.mrf.mxu0
        %v3365 = vadd.f32 0.0, %v3364
        %3366 = vmatmul.f32.gmra.mxu0 %v3252
        %v3367 = vpop.f32.mrf.mxu0
        %v3368 = vadd.f32 0.0, %v3367
        %3369 = vmatmul.f32.gmra.mxu0 %v3255
        %v3370 = vpop.f32.mrf.mxu0
        %v3371 = vadd.f32 0.0, %v3370
        %3372 = vmatmul.f32.gmra.mxu0 %v3258
        %v3373 = vpop.f32.mrf.mxu0
        %v3374 = vadd.f32 0.0, %v3373
        %3375 = vmatmul.f32.gmra.mxu0 %v3261
        %v3376 = vpop.f32.mrf.mxu0
        %v3377 = vadd.f32 0.0, %v3376
        %3378 = vmatmul.f32.gmra.mxu0 %v3264
        %v3379 = vpop.f32.mrf.mxu0
        %v3380 = vadd.f32 0.0, %v3379
        %3381 = vmatmul.f32.gmra.mxu0 %v3267
        %v3382 = vpop.f32.mrf.mxu0
        %v3383 = vadd.f32 0.0, %v3382
        %3384 = vmatmul.f32.gmra.mxu0 %v3270
        %v3385 = vpop.f32.mrf.mxu0
        %v3386 = vadd.f32 0.0, %v3385
        %3387 = vmatmul.f32.gmra.mxu0 %v3273
        %v3388 = vpop.f32.mrf.mxu0
        %v3389 = vadd.f32 0.0, %v3388
        %3390 = vmatmul.f32.gmra.mxu0 %v3276
        %v3391 = vpop.f32.mrf.mxu0
        %v3392 = vadd.f32 0.0, %v3391
        %3393 = vmatmul.f32.gmra.mxu0 %v3279
        %v3394 = vpop.f32.mrf.mxu0
        %v3395 = vadd.f32 0.0, %v3394
        %3396 = vmatmul.f32.gmra.mxu0 %v3282
        %v3397 = vpop.f32.mrf.mxu0
        %v3398 = vadd.f32 0.0, %v3397
        %3399 = vmatmul.f32.gmra.mxu0 %v3285
        %v3400 = vpop.f32.mrf.mxu0
        %v3401 = vadd.f32 0.0, %v3400
        %3402 = vmatmul.f32.gmra.mxu0 %v3288
        %v3403 = vpop.f32.mrf.mxu0
        %v3404 = vadd.f32 0.0, %v3403
        %3405 = vmatmul.f32.gmra.mxu0 %v3291
        %v3406 = vpop.f32.mrf.mxu0
        %v3407 = vadd.f32 0.0, %v3406
        %3408 = vdwg.mxu0
        %v3409 = vadd.f32 %v3099, %v3314
        %v3410 = vadd.f32 %v3100, %v3317
        %v3411 = vadd.f32 %v3101, %v3320
        %v3412 = vadd.f32 %v3102, %v3323
        %v3413 = vadd.f32 %v3103, %v3326
        %v3414 = vadd.f32 %v3104, %v3329
        %v3415 = vadd.f32 %v3105, %v3332
        %v3416 = vadd.f32 %v3106, %v3335
        %v3417 = vadd.f32 %v3107, %v3338
        %v3418 = vadd.f32 %v3108, %v3341
        %v3419 = vadd.f32 %v3109, %v3344
        %v3420 = vadd.f32 %v3110, %v3347
        %v3421 = vadd.f32 %v3111, %v3350
        %v3422 = vadd.f32 %v3112, %v3353
        %v3423 = vadd.f32 %v3113, %v3356
        %v3424 = vadd.f32 %v3114, %v3359
        %v3425 = vadd.f32 %v3115, %v3362
        %v3426 = vadd.f32 %v3116, %v3365
        %v3427 = vadd.f32 %v3117, %v3368
        %v3428 = vadd.f32 %v3118, %v3371
        %v3429 = vadd.f32 %v3119, %v3374
        %v3430 = vadd.f32 %v3120, %v3377
        %v3431 = vadd.f32 %v3121, %v3380
        %v3432 = vadd.f32 %v3122, %v3383
        %v3433 = vadd.f32 %v3123, %v3386
        %v3434 = vadd.f32 %v3124, %v3389
        %v3435 = vadd.f32 %v3125, %v3392
        %v3436 = vadd.f32 %v3126, %v3395
        %v3437 = vadd.f32 %v3127, %v3398
        %v3438 = vadd.f32 %v3128, %v3401
        %v3439 = vadd.f32 %v3129, %v3404
        %v3440 = vadd.f32 %v3130, %v3407
        %v3441 = vld [vmem:[%s4] sm:$0x1]
        %v3443 = vperm.slane %v3441, 0
        %v3445 = vadd.f32 %v3409, %v3443
        %v3446 = vadd.f32 %v3410, %v3443
        %v3447 = vadd.f32 %v3411, %v3443
        %v3448 = vadd.f32 %v3412, %v3443
        %v3449 = vadd.f32 %v3413, %v3443
        %v3450 = vadd.f32 %v3414, %v3443
        %v3451 = vadd.f32 %v3415, %v3443
        %v3452 = vadd.f32 %v3416, %v3443
        %v3453 = vadd.f32 %v3417, %v3443
        %v3454 = vadd.f32 %v3418, %v3443
        %v3455 = vadd.f32 %v3419, %v3443
        %v3456 = vadd.f32 %v3420, %v3443
        %v3457 = vadd.f32 %v3421, %v3443
        %v3458 = vadd.f32 %v3422, %v3443
        %v3459 = vadd.f32 %v3423, %v3443
        %v3460 = vadd.f32 %v3424, %v3443
        %v3461 = vadd.f32 %v3425, %v3443
        %v3462 = vadd.f32 %v3426, %v3443
        %v3463 = vadd.f32 %v3427, %v3443
        %v3464 = vadd.f32 %v3428, %v3443
        %v3465 = vadd.f32 %v3429, %v3443
        %v3466 = vadd.f32 %v3430, %v3443
        %v3467 = vadd.f32 %v3431, %v3443
        %v3468 = vadd.f32 %v3432, %v3443
        %v3469 = vadd.f32 %v3433, %v3443
        %v3470 = vadd.f32 %v3434, %v3443
        %v3471 = vadd.f32 %v3435, %v3443
        %v3472 = vadd.f32 %v3436, %v3443
        %v3473 = vadd.f32 %v3437, %v3443
        %v3474 = vadd.f32 %v3438, %v3443
        %v3475 = vadd.f32 %v3439, %v3443
        %v3476 = vadd.f32 %v3440, %v3443
        %v3477 = vmax.f32 %v3445, 0.0
        %v3478 = vmax.f32 %v3446, 0.0
        %v3479 = vmax.f32 %v3447, 0.0
        %v3480 = vmax.f32 %v3448, 0.0
        %v3481 = vmax.f32 %v3449, 0.0
        %v3482 = vmax.f32 %v3450, 0.0
        %v3483 = vmax.f32 %v3451, 0.0
        %v3484 = vmax.f32 %v3452, 0.0
        %v3485 = vmax.f32 %v3453, 0.0
        %v3486 = vmax.f32 %v3454, 0.0
        %v3487 = vmax.f32 %v3455, 0.0
        %v3488 = vmax.f32 %v3456, 0.0
        %v3489 = vmax.f32 %v3457, 0.0
        %v3490 = vmax.f32 %v3458, 0.0
        %v3491 = vmax.f32 %v3459, 0.0
        %v3492 = vmax.f32 %v3460, 0.0
        %v3493 = vmax.f32 %v3461, 0.0
        %v3494 = vmax.f32 %v3462, 0.0
        %v3495 = vmax.f32 %v3463, 0.0
        %v3496 = vmax.f32 %v3464, 0.0
        %v3497 = vmax.f32 %v3465, 0.0
        %v3498 = vmax.f32 %v3466, 0.0
        %v3499 = vmax.f32 %v3467, 0.0
        %v3500 = vmax.f32 %v3468, 0.0
        %v3501 = vmax.f32 %v3469, 0.0
        %v3502 = vmax.f32 %v3470, 0.0
        %v3503 = vmax.f32 %v3471, 0.0
        %v3504 = vmax.f32 %v3472, 0.0
        %v3505 = vmax.f32 %v3473, 0.0
        %v3506 = vmax.f32 %v3474, 0.0
        %v3507 = vmax.f32 %v3475, 0.0
        %v3508 = vmax.f32 %v3476, 0.0
        %vm3509 = vcmask 64512
        %3510 = vst.msk [vmem:[#allocation2] sm:$0xff] %vm3509, 0.0
        %3511 = vst.msk [vmem:[#allocation2 + $0x8] sm:$0xff] %vm3509, 0.0
        %3512 = vst.msk [vmem:[#allocation2 + $0x10] sm:$0xff] %vm3509, 0.0
        %3513 = vst.msk [vmem:[#allocation2 + $0x18] sm:$0xff] %vm3509, 0.0
        %3514 = vst.msk [vmem:[#allocation2 + $0x20] sm:$0xff] %vm3509, 0.0
        %3515 = vst.msk [vmem:[#allocation2 + $0x28] sm:$0xff] %vm3509, 0.0
        %3516 = vst.msk [vmem:[#allocation2 + $0x30] sm:$0xff] %vm3509, 0.0
        %3517 = vst.msk [vmem:[#allocation2 + $0x38] sm:$0xff] %vm3509, 0.0
        %3518 = vst.msk [vmem:[#allocation2 + $0x40] sm:$0xff] %vm3509, 0.0
        %3519 = vst.msk [vmem:[#allocation2 + $0x48] sm:$0xff] %vm3509, 0.0
        %3520 = vst.msk [vmem:[#allocation2 + $0x50] sm:$0xff] %vm3509, 0.0
        %3521 = vst.msk [vmem:[#allocation2 + $0x58] sm:$0xff] %vm3509, 0.0
        %3522 = vst.msk [vmem:[#allocation2 + $0x60] sm:$0xff] %vm3509, 0.0
        %3523 = vst.msk [vmem:[#allocation2 + $0x68] sm:$0xff] %vm3509, 0.0
        %3524 = vst.msk [vmem:[#allocation2 + $0x70] sm:$0xff] %vm3509, 0.0
        %3525 = vst.msk [vmem:[#allocation2 + $0x78] sm:$0xff] %vm3509, 0.0
        %3526 = vst.msk [vmem:[#allocation2 + $0x80] sm:$0xff] %vm3509, 0.0
        %3527 = vst.msk [vmem:[#allocation2 + $0x88] sm:$0xff] %vm3509, 0.0
        %3528 = vst.msk [vmem:[#allocation2 + $0x90] sm:$0xff] %vm3509, 0.0
        %3529 = vst.msk [vmem:[#allocation2 + $0x98] sm:$0xff] %vm3509, 0.0
        %3530 = vst.msk [vmem:[#allocation2 + $0xa0] sm:$0xff] %vm3509, 0.0
        %3531 = vst.msk [vmem:[#allocation2 + $0xa8] sm:$0xff] %vm3509, 0.0
        %3532 = vst.msk [vmem:[#allocation2 + $0xb0] sm:$0xff] %vm3509, 0.0
        %3533 = vst.msk [vmem:[#allocation2 + $0xb8] sm:$0xff] %vm3509, 0.0
        %3534 = vst.msk [vmem:[#allocation2 + $0xc0] sm:$0xff] %vm3509, 0.0
        %3535 = vst.msk [vmem:[#allocation2 + $0xc8] sm:$0xff] %vm3509, 0.0
        %3536 = vst.msk [vmem:[#allocation2 + $0xd0] sm:$0xff] %vm3509, 0.0
        %3537 = vst.msk [vmem:[#allocation2 + $0xd8] sm:$0xff] %vm3509, 0.0
        %3538 = vst.msk [vmem:[#allocation2 + $0xe0] sm:$0xff] %vm3509, 0.0
        %3539 = vst.msk [vmem:[#allocation2 + $0xe8] sm:$0xff] %vm3509, 0.0
        %3540 = vst.msk [vmem:[#allocation2 + $0xf0] sm:$0xff] %vm3509, 0.0
        %3541 = vst.msk [vmem:[#allocation2 + $0xf8] sm:$0xff] %vm3509, 0.0
        %3542 = vst.msk [vmem:[#allocation2 + $0x100] sm:$0xff] %vm3509, 0.0
        %3543 = vst.msk [vmem:[#allocation2 + $0x108] sm:$0xff] %vm3509, 0.0
        %3544 = vst.msk [vmem:[#allocation2 + $0x110] sm:$0xff] %vm3509, 0.0
        %3545 = vst.msk [vmem:[#allocation2 + $0x118] sm:$0xff] %vm3509, 0.0
        %vm3546 = vcmask 58368
        %3547 = vst.msk [vmem:[#allocation2 + $0x120] sm:$0x3] %vm3546, 0.0
        %3548 = vst.msk [vmem:[#allocation2 + $0x11] sm:$0xff] %vm3509, %v3477
        %3549 = vst.msk [vmem:[#allocation2 + $0x19] sm:$0xff] %vm3509, %v3478
        %3550 = vst.msk [vmem:[#allocation2 + $0x21] sm:$0xff] %vm3509, %v3479
        %3551 = vst.msk [vmem:[#allocation2 + $0x29] sm:$0xff] %vm3509, %v3480
        %3552 = vst.msk [vmem:[#allocation2 + $0x31] sm:$0xff] %vm3509, %v3481
        %3553 = vst.msk [vmem:[#allocation2 + $0x39] sm:$0xff] %vm3509, %v3482
        %3554 = vst.msk [vmem:[#allocation2 + $0x41] sm:$0xff] %vm3509, %v3483
        %3555 = vst.msk [vmem:[#allocation2 + $0x49] sm:$0xff] %vm3509, %v3484
        %3556 = vst.msk [vmem:[#allocation2 + $0x51] sm:$0xff] %vm3509, %v3485
        %3557 = vst.msk [vmem:[#allocation2 + $0x59] sm:$0xff] %vm3509, %v3486
        %3558 = vst.msk [vmem:[#allocation2 + $0x61] sm:$0xff] %vm3509, %v3487
        %3559 = vst.msk [vmem:[#allocation2 + $0x69] sm:$0xff] %vm3509, %v3488
        %3560 = vst.msk [vmem:[#allocation2 + $0x71] sm:$0xff] %vm3509, %v3489
        %3561 = vst.msk [vmem:[#allocation2 + $0x79] sm:$0xff] %vm3509, %v3490
        %3562 = vst.msk [vmem:[#allocation2 + $0x81] sm:$0xff] %vm3509, %v3491
        %3563 = vst.msk [vmem:[#allocation2 + $0x89] sm:$0xff] %vm3509, %v3492
        %3564 = vst.msk [vmem:[#allocation2 + $0x91] sm:$0xff] %vm3509, %v3493
        %3565 = vst.msk [vmem:[#allocation2 + $0x99] sm:$0xff] %vm3509, %v3494
        %3566 = vst.msk [vmem:[#allocation2 + $0xa1] sm:$0xff] %vm3509, %v3495
        %3567 = vst.msk [vmem:[#allocation2 + $0xa9] sm:$0xff] %vm3509, %v3496
        %3568 = vst.msk [vmem:[#allocation2 + $0xb1] sm:$0xff] %vm3509, %v3497
        %3569 = vst.msk [vmem:[#allocation2 + $0xb9] sm:$0xff] %vm3509, %v3498
        %3570 = vst.msk [vmem:[#allocation2 + $0xc1] sm:$0xff] %vm3509, %v3499
        %3571 = vst.msk [vmem:[#allocation2 + $0xc9] sm:$0xff] %vm3509, %v3500
        %3572 = vst.msk [vmem:[#allocation2 + $0xd1] sm:$0xff] %vm3509, %v3501
        %3573 = vst.msk [vmem:[#allocation2 + $0xd9] sm:$0xff] %vm3509, %v3502
        %3574 = vst.msk [vmem:[#allocation2 + $0xe1] sm:$0xff] %vm3509, %v3503
        %3575 = vst.msk [vmem:[#allocation2 + $0xe9] sm:$0xff] %vm3509, %v3504
        %3576 = vst.msk [vmem:[#allocation2 + $0xf1] sm:$0xff] %vm3509, %v3505
        %3577 = vst.msk [vmem:[#allocation2 + $0xf9] sm:$0xff] %vm3509, %v3506
        %3578 = vst.msk [vmem:[#allocation2 + $0x101] sm:$0xff] %vm3509, %v3507
        %3579 = vst.msk [vmem:[#allocation2 + $0x109] sm:$0xff] %vm3509, %v3508
        %v3580 = vld [vmem:[#allocation2] sm:$0xff]
        %v3581 = vld [vmem:[#allocation2 + $0x8] sm:$0xff]
        %v3582 = vld [vmem:[#allocation2 + $0x10] sm:$0xff]
        %v3583 = vld [vmem:[#allocation2 + $0x18] sm:$0xff]
        %v3584 = vld [vmem:[#allocation2 + $0x20] sm:$0xff]
        %v3585 = vld [vmem:[#allocation2 + $0x28] sm:$0xff]
        %v3586 = vld [vmem:[#allocation2 + $0x30] sm:$0xff]
        %v3587 = vld [vmem:[#allocation2 + $0x38] sm:$0xff]
        %v3588 = vld [vmem:[#allocation2 + $0x40] sm:$0xff]
        %v3589 = vld [vmem:[#allocation2 + $0x48] sm:$0xff]
        %v3590 = vld [vmem:[#allocation2 + $0x50] sm:$0xff]
        %v3591 = vld [vmem:[#allocation2 + $0x58] sm:$0xff]
        %v3592 = vld [vmem:[#allocation2 + $0x60] sm:$0xff]
        %v3593 = vld [vmem:[#allocation2 + $0x68] sm:$0xff]
        %v3594 = vld [vmem:[#allocation2 + $0x70] sm:$0xff]
        %v3595 = vld [vmem:[#allocation2 + $0x78] sm:$0xff]
        %v3596 = vld [vmem:[#allocation2 + $0x80] sm:$0xff]
        %v3597 = vld [vmem:[#allocation2 + $0x88] sm:$0xff]
        %v3598 = vld [vmem:[#allocation2 + $0x90] sm:$0xff]
        %v3599 = vld [vmem:[#allocation2 + $0x98] sm:$0xff]
        %v3600 = vld [vmem:[#allocation2 + $0xa0] sm:$0xff]
        %v3601 = vld [vmem:[#allocation2 + $0xa8] sm:$0xff]
        %v3602 = vld [vmem:[#allocation2 + $0xb0] sm:$0xff]
        %v3603 = vld [vmem:[#allocation2 + $0xb8] sm:$0xff]
        %v3604 = vld [vmem:[#allocation2 + $0xc0] sm:$0xff]
        %v3605 = vld [vmem:[#allocation2 + $0xc8] sm:$0xff]
        %v3606 = vld [vmem:[#allocation2 + $0xd0] sm:$0xff]
        %v3607 = vld [vmem:[#allocation2 + $0xd8] sm:$0xff]
        %v3608 = vld [vmem:[#allocation2 + $0xe0] sm:$0xff]
        %v3609 = vld [vmem:[#allocation2 + $0xe8] sm:$0xff]
        %v3610 = vld [vmem:[#allocation2 + $0xf0] sm:$0xff]
        %v3611 = vld [vmem:[#allocation2 + $0xf8] sm:$0xff]
        %v3612 = vmul.f32 %v3580, %v525
        %v3613 = vmul.f32 %v3581, %v530
        %v3614 = vmul.f32 %v3582, %v535
        %v3615 = vmul.f32 %v3583, %v540
        %v3616 = vmul.f32 %v3584, %v545
        %v3617 = vmul.f32 %v3585, %v550
        %v3618 = vmul.f32 %v3586, %v555
        %v3619 = vmul.f32 %v3587, %v560
        %v3620 = vmul.f32 %v3588, %v565
        %v3621 = vmul.f32 %v3589, %v570
        %v3622 = vmul.f32 %v3590, %v575
        %v3623 = vmul.f32 %v3591, %v580
        %v3624 = vmul.f32 %v3592, %v585
        %v3625 = vmul.f32 %v3593, %v590
        %v3626 = vmul.f32 %v3594, %v595
        %v3627 = vmul.f32 %v3595, %v600
        %v3628 = vmul.f32 %v3596, %v605
        %v3629 = vmul.f32 %v3597, %v610
        %v3630 = vmul.f32 %v3598, %v615
        %v3631 = vmul.f32 %v3599, %v620
        %v3632 = vmul.f32 %v3600, %v625
        %v3633 = vmul.f32 %v3601, %v630
        %v3634 = vmul.f32 %v3602, %v635
        %v3635 = vmul.f32 %v3603, %v640
        %v3636 = vmul.f32 %v3604, %v645
        %v3637 = vmul.f32 %v3605, %v650
        %v3638 = vmul.f32 %v3606, %v655
        %v3639 = vmul.f32 %v3607, %v660
        %v3640 = vmul.f32 %v3608, %v665
        %v3641 = vmul.f32 %v3609, %v670
        %v3642 = vmul.f32 %v3610, %v675
        %v3643 = vmul.f32 %v3611, %v680
        %v3644 = vld [vmem:[%s5] sm:$0xff]
        %v3645 = vld [vmem:[#allocation2 + $0x1] sm:$0xff]
        %v3646 = vld [vmem:[#allocation2 + $0x9] sm:$0xff]
        %v3647 = vld [vmem:[#allocation2 + $0x11] sm:$0xff]
        %v3648 = vld [vmem:[#allocation2 + $0x19] sm:$0xff]
        %v3649 = vld [vmem:[#allocation2 + $0x21] sm:$0xff]
        %v3650 = vld [vmem:[#allocation2 + $0x29] sm:$0xff]
        %v3651 = vld [vmem:[#allocation2 + $0x31] sm:$0xff]
        %v3652 = vld [vmem:[#allocation2 + $0x39] sm:$0xff]
        %v3653 = vld [vmem:[#allocation2 + $0x41] sm:$0xff]
        %v3654 = vld [vmem:[#allocation2 + $0x49] sm:$0xff]
        %v3655 = vld [vmem:[#allocation2 + $0x51] sm:$0xff]
        %v3656 = vld [vmem:[#allocation2 + $0x59] sm:$0xff]
        %v3657 = vld [vmem:[#allocation2 + $0x61] sm:$0xff]
        %v3658 = vld [vmem:[#allocation2 + $0x69] sm:$0xff]
        %v3659 = vld [vmem:[#allocation2 + $0x71] sm:$0xff]
        %v3660 = vld [vmem:[#allocation2 + $0x79] sm:$0xff]
        %v3661 = vld [vmem:[#allocation2 + $0x81] sm:$0xff]
        %v3662 = vld [vmem:[#allocation2 + $0x89] sm:$0xff]
        %v3663 = vld [vmem:[#allocation2 + $0x91] sm:$0xff]
        %v3664 = vld [vmem:[#allocation2 + $0x99] sm:$0xff]
        %v3665 = vld [vmem:[#allocation2 + $0xa1] sm:$0xff]
        %v3666 = vld [vmem:[#allocation2 + $0xa9] sm:$0xff]
        %v3667 = vld [vmem:[#allocation2 + $0xb1] sm:$0xff]
        %v3668 = vld [vmem:[#allocation2 + $0xb9] sm:$0xff]
        %v3669 = vld [vmem:[#allocation2 + $0xc1] sm:$0xff]
        %v3670 = vld [vmem:[#allocation2 + $0xc9] sm:$0xff]
        %v3671 = vld [vmem:[#allocation2 + $0xd1] sm:$0xff]
        %v3672 = vld [vmem:[#allocation2 + $0xd9] sm:$0xff]
        %v3673 = vld [vmem:[#allocation2 + $0xe1] sm:$0xff]
        %v3674 = vld [vmem:[#allocation2 + $0xe9] sm:$0xff]
        %v3675 = vld [vmem:[#allocation2 + $0xf1] sm:$0xff]
        %v3676 = vld [vmem:[#allocation2 + $0xf9] sm:$0xff]
        %s3677 = scalar_lea.vmem %s5, 8
        %v3678 = vld [vmem:[%s3677] sm:$0xff]
        %v3680 = vsel %vm3509, %v3645, 0
        %v3683 = vsel %vm3509, %v3646, 0
        %v3686 = vsel %vm3509, %v3647, 0
        %v3689 = vsel %vm3509, %v3648, 0
        %v3692 = vsel %vm3509, %v3649, 0
        %v3695 = vsel %vm3509, %v3650, 0
        %v3698 = vsel %vm3509, %v3651, 0
        %v3701 = vsel %vm3509, %v3652, 0
        %v3704 = vsel %vm3509, %v3653, 0
        %v3707 = vsel %vm3509, %v3654, 0
        %v3710 = vsel %vm3509, %v3655, 0
        %v3713 = vsel %vm3509, %v3656, 0
        %v3716 = vsel %vm3509, %v3657, 0
        %v3719 = vsel %vm3509, %v3658, 0
        %v3722 = vsel %vm3509, %v3659, 0
        %v3725 = vsel %vm3509, %v3660, 0
        %v3728 = vsel %vm3509, %v3661, 0
        %v3731 = vsel %vm3509, %v3662, 0
        %v3734 = vsel %vm3509, %v3663, 0
        %v3737 = vsel %vm3509, %v3664, 0
        %v3740 = vsel %vm3509, %v3665, 0
        %v3743 = vsel %vm3509, %v3666, 0
        %v3746 = vsel %vm3509, %v3667, 0
        %v3749 = vsel %vm3509, %v3668, 0
        %v3752 = vsel %vm3509, %v3669, 0
        %v3755 = vsel %vm3509, %v3670, 0
        %v3758 = vsel %vm3509, %v3671, 0
        %v3761 = vsel %vm3509, %v3672, 0
        %v3764 = vsel %vm3509, %v3673, 0
        %v3767 = vsel %vm3509, %v3674, 0
        %v3770 = vsel %vm3509, %v3675, 0
        %v3773 = vsel %vm3509, %v3676, 0
        %3775 = vmatpush.msra.mxu0 0.0
        %3776 = vmatpush.msra.mxu0 0.0
        %3777 = vmatpush.msra.mxu0 0.0
        %3778 = vmatpush.msra.mxu0 0.0
        %3779 = vmatpush.msra.mxu0 0.0
        %3780 = vmatpush.msra.mxu0 0.0
        %3781 = vmatpush.msra.mxu0 0.0
        %3782 = vmatpush.msra.mxu0 0.0
        %3783 = vmatpush.msra.mxu0 0.0
        %3784 = vmatpush.msra.mxu0 0.0
        %3785 = vmatpush.msra.mxu0 0.0
        %3786 = vmatpush.msra.mxu0 0.0
        %3787 = vmatpush.msra.mxu0 0.0
        %3788 = vmatpush.msra.mxu0 0.0
        %3789 = vmatpush.msra.mxu0 0.0
        %3790 = vmatpush.msra.mxu0 %v3678
        %3791 = vmatmul.f32.gmra.mxu0 %v3680
        %v3792 = vpop.f32.mrf.mxu0
        %v3793 = vadd.f32 0.0, %v3792
        %3794 = vmatmul.f32.gmra.mxu0 %v3683
        %v3795 = vpop.f32.mrf.mxu0
        %v3796 = vadd.f32 0.0, %v3795
        %3797 = vmatmul.f32.gmra.mxu0 %v3686
        %v3798 = vpop.f32.mrf.mxu0
        %v3799 = vadd.f32 0.0, %v3798
        %3800 = vmatmul.f32.gmra.mxu0 %v3689
        %v3801 = vpop.f32.mrf.mxu0
        %v3802 = vadd.f32 0.0, %v3801
        %3803 = vmatmul.f32.gmra.mxu0 %v3692
        %v3804 = vpop.f32.mrf.mxu0
        %v3805 = vadd.f32 0.0, %v3804
        %3806 = vmatmul.f32.gmra.mxu0 %v3695
        %v3807 = vpop.f32.mrf.mxu0
        %v3808 = vadd.f32 0.0, %v3807
        %3809 = vmatmul.f32.gmra.mxu0 %v3698
        %v3810 = vpop.f32.mrf.mxu0
        %v3811 = vadd.f32 0.0, %v3810
        %3812 = vmatmul.f32.gmra.mxu0 %v3701
        %v3813 = vpop.f32.mrf.mxu0
        %v3814 = vadd.f32 0.0, %v3813
        %3815 = vmatmul.f32.gmra.mxu0 %v3704
        %v3816 = vpop.f32.mrf.mxu0
        %v3817 = vadd.f32 0.0, %v3816
        %3818 = vmatmul.f32.gmra.mxu0 %v3707
        %v3819 = vpop.f32.mrf.mxu0
        %v3820 = vadd.f32 0.0, %v3819
        %3821 = vmatmul.f32.gmra.mxu0 %v3710
        %v3822 = vpop.f32.mrf.mxu0
        %v3823 = vadd.f32 0.0, %v3822
        %3824 = vmatmul.f32.gmra.mxu0 %v3713
        %v3825 = vpop.f32.mrf.mxu0
        %v3826 = vadd.f32 0.0, %v3825
        %3827 = vmatmul.f32.gmra.mxu0 %v3716
        %v3828 = vpop.f32.mrf.mxu0
        %v3829 = vadd.f32 0.0, %v3828
        %3830 = vmatmul.f32.gmra.mxu0 %v3719
        %v3831 = vpop.f32.mrf.mxu0
        %v3832 = vadd.f32 0.0, %v3831
        %3833 = vmatmul.f32.gmra.mxu0 %v3722
        %v3834 = vpop.f32.mrf.mxu0
        %v3835 = vadd.f32 0.0, %v3834
        %3836 = vmatmul.f32.gmra.mxu0 %v3725
        %v3837 = vpop.f32.mrf.mxu0
        %v3838 = vadd.f32 0.0, %v3837
        %3839 = vmatmul.f32.gmra.mxu0 %v3728
        %v3840 = vpop.f32.mrf.mxu0
        %v3841 = vadd.f32 0.0, %v3840
        %3842 = vmatmul.f32.gmra.mxu0 %v3731
        %v3843 = vpop.f32.mrf.mxu0
        %v3844 = vadd.f32 0.0, %v3843
        %3845 = vmatmul.f32.gmra.mxu0 %v3734
        %v3846 = vpop.f32.mrf.mxu0
        %v3847 = vadd.f32 0.0, %v3846
        %3848 = vmatmul.f32.gmra.mxu0 %v3737
        %v3849 = vpop.f32.mrf.mxu0
        %v3850 = vadd.f32 0.0, %v3849
        %3851 = vmatmul.f32.gmra.mxu0 %v3740
        %v3852 = vpop.f32.mrf.mxu0
        %v3853 = vadd.f32 0.0, %v3852
        %3854 = vmatmul.f32.gmra.mxu0 %v3743
        %v3855 = vpop.f32.mrf.mxu0
        %v3856 = vadd.f32 0.0, %v3855
        %3857 = vmatmul.f32.gmra.mxu0 %v3746
        %v3858 = vpop.f32.mrf.mxu0
        %v3859 = vadd.f32 0.0, %v3858
        %3860 = vmatmul.f32.gmra.mxu0 %v3749
        %v3861 = vpop.f32.mrf.mxu0
        %v3862 = vadd.f32 0.0, %v3861
        %3863 = vmatmul.f32.gmra.mxu0 %v3752
        %v3864 = vpop.f32.mrf.mxu0
        %v3865 = vadd.f32 0.0, %v3864
        %3866 = vmatmul.f32.gmra.mxu0 %v3755
        %v3867 = vpop.f32.mrf.mxu0
        %v3868 = vadd.f32 0.0, %v3867
        %3869 = vmatmul.f32.gmra.mxu0 %v3758
        %v3870 = vpop.f32.mrf.mxu0
        %v3871 = vadd.f32 0.0, %v3870
        %3872 = vmatmul.f32.gmra.mxu0 %v3761
        %v3873 = vpop.f32.mrf.mxu0
        %v3874 = vadd.f32 0.0, %v3873
        %3875 = vmatmul.f32.gmra.mxu0 %v3764
        %v3876 = vpop.f32.mrf.mxu0
        %v3877 = vadd.f32 0.0, %v3876
        %3878 = vmatmul.f32.gmra.mxu0 %v3767
        %v3879 = vpop.f32.mrf.mxu0
        %v3880 = vadd.f32 0.0, %v3879
        %3881 = vmatmul.f32.gmra.mxu0 %v3770
        %v3882 = vpop.f32.mrf.mxu0
        %v3883 = vadd.f32 0.0, %v3882
        %3884 = vmatmul.f32.gmra.mxu0 %v3773
        %v3885 = vpop.f32.mrf.mxu0
        %v3886 = vadd.f32 0.0, %v3885
        %3887 = vdwg.mxu0
        %v3889 = vsel %vm3509, %v3612, 0
        %v3892 = vsel %vm3509, %v3613, 0
        %v3895 = vsel %vm3509, %v3614, 0
        %v3898 = vsel %vm3509, %v3615, 0
        %v3901 = vsel %vm3509, %v3616, 0
        %v3904 = vsel %vm3509, %v3617, 0
        %v3907 = vsel %vm3509, %v3618, 0
        %v3910 = vsel %vm3509, %v3619, 0
        %v3913 = vsel %vm3509, %v3620, 0
        %v3916 = vsel %vm3509, %v3621, 0
        %v3919 = vsel %vm3509, %v3622, 0
        %v3922 = vsel %vm3509, %v3623, 0
        %v3925 = vsel %vm3509, %v3624, 0
        %v3928 = vsel %vm3509, %v3625, 0
        %v3931 = vsel %vm3509, %v3626, 0
        %v3934 = vsel %vm3509, %v3627, 0
        %v3937 = vsel %vm3509, %v3628, 0
        %v3940 = vsel %vm3509, %v3629, 0
        %v3943 = vsel %vm3509, %v3630, 0
        %v3946 = vsel %vm3509, %v3631, 0
        %v3949 = vsel %vm3509, %v3632, 0
        %v3952 = vsel %vm3509, %v3633, 0
        %v3955 = vsel %vm3509, %v3634, 0
        %v3958 = vsel %vm3509, %v3635, 0
        %v3961 = vsel %vm3509, %v3636, 0
        %v3964 = vsel %vm3509, %v3637, 0
        %v3967 = vsel %vm3509, %v3638, 0
        %v3970 = vsel %vm3509, %v3639, 0
        %v3973 = vsel %vm3509, %v3640, 0
        %v3976 = vsel %vm3509, %v3641, 0
        %v3979 = vsel %vm3509, %v3642, 0
        %v3982 = vsel %vm3509, %v3643, 0
        %3984 = vmatpush.msra.mxu0 0.0
        %3985 = vmatpush.msra.mxu0 0.0
        %3986 = vmatpush.msra.mxu0 0.0
        %3987 = vmatpush.msra.mxu0 0.0
        %3988 = vmatpush.msra.mxu0 0.0
        %3989 = vmatpush.msra.mxu0 0.0
        %3990 = vmatpush.msra.mxu0 0.0
        %3991 = vmatpush.msra.mxu0 0.0
        %3992 = vmatpush.msra.mxu0 0.0
        %3993 = vmatpush.msra.mxu0 0.0
        %3994 = vmatpush.msra.mxu0 0.0
        %3995 = vmatpush.msra.mxu0 0.0
        %3996 = vmatpush.msra.mxu0 0.0
        %3997 = vmatpush.msra.mxu0 0.0
        %3998 = vmatpush.msra.mxu0 0.0
        %3999 = vmatpush.msra.mxu0 %v3644
        %4000 = vmatmul.f32.gmra.mxu0 %v3889
        %v4001 = vpop.f32.mrf.mxu0
        %v4002 = vadd.f32 %v3793, %v4001
        %4003 = vmatmul.f32.gmra.mxu0 %v3892
        %v4004 = vpop.f32.mrf.mxu0
        %v4005 = vadd.f32 %v3796, %v4004
        %4006 = vmatmul.f32.gmra.mxu0 %v3895
        %v4007 = vpop.f32.mrf.mxu0
        %v4008 = vadd.f32 %v3799, %v4007
        %4009 = vmatmul.f32.gmra.mxu0 %v3898
        %v4010 = vpop.f32.mrf.mxu0
        %v4011 = vadd.f32 %v3802, %v4010
        %4012 = vmatmul.f32.gmra.mxu0 %v3901
        %v4013 = vpop.f32.mrf.mxu0
        %v4014 = vadd.f32 %v3805, %v4013
        %4015 = vmatmul.f32.gmra.mxu0 %v3904
        %v4016 = vpop.f32.mrf.mxu0
        %v4017 = vadd.f32 %v3808, %v4016
        %4018 = vmatmul.f32.gmra.mxu0 %v3907
        %v4019 = vpop.f32.mrf.mxu0
        %v4020 = vadd.f32 %v3811, %v4019
        %4021 = vmatmul.f32.gmra.mxu0 %v3910
        %v4022 = vpop.f32.mrf.mxu0
        %v4023 = vadd.f32 %v3814, %v4022
        %4024 = vmatmul.f32.gmra.mxu0 %v3913
        %v4025 = vpop.f32.mrf.mxu0
        %v4026 = vadd.f32 %v3817, %v4025
        %4027 = vmatmul.f32.gmra.mxu0 %v3916
        %v4028 = vpop.f32.mrf.mxu0
        %v4029 = vadd.f32 %v3820, %v4028
        %4030 = vmatmul.f32.gmra.mxu0 %v3919
        %v4031 = vpop.f32.mrf.mxu0
        %v4032 = vadd.f32 %v3823, %v4031
        %4033 = vmatmul.f32.gmra.mxu0 %v3922
        %v4034 = vpop.f32.mrf.mxu0
        %v4035 = vadd.f32 %v3826, %v4034
        %4036 = vmatmul.f32.gmra.mxu0 %v3925
        %v4037 = vpop.f32.mrf.mxu0
        %v4038 = vadd.f32 %v3829, %v4037
        %4039 = vmatmul.f32.gmra.mxu0 %v3928
        %v4040 = vpop.f32.mrf.mxu0
        %v4041 = vadd.f32 %v3832, %v4040
        %4042 = vmatmul.f32.gmra.mxu0 %v3931
        %v4043 = vpop.f32.mrf.mxu0
        %v4044 = vadd.f32 %v3835, %v4043
        %4045 = vmatmul.f32.gmra.mxu0 %v3934
        %v4046 = vpop.f32.mrf.mxu0
        %v4047 = vadd.f32 %v3838, %v4046
        %4048 = vmatmul.f32.gmra.mxu0 %v3937
        %v4049 = vpop.f32.mrf.mxu0
        %v4050 = vadd.f32 %v3841, %v4049
        %4051 = vmatmul.f32.gmra.mxu0 %v3940
        %v4052 = vpop.f32.mrf.mxu0
        %v4053 = vadd.f32 %v3844, %v4052
        %4054 = vmatmul.f32.gmra.mxu0 %v3943
        %v4055 = vpop.f32.mrf.mxu0
        %v4056 = vadd.f32 %v3847, %v4055
        %4057 = vmatmul.f32.gmra.mxu0 %v3946
        %v4058 = vpop.f32.mrf.mxu0
        %v4059 = vadd.f32 %v3850, %v4058
        %4060 = vmatmul.f32.gmra.mxu0 %v3949
        %v4061 = vpop.f32.mrf.mxu0
        %v4062 = vadd.f32 %v3853, %v4061
        %4063 = vmatmul.f32.gmra.mxu0 %v3952
        %v4064 = vpop.f32.mrf.mxu0
        %v4065 = vadd.f32 %v3856, %v4064
        %4066 = vmatmul.f32.gmra.mxu0 %v3955
        %v4067 = vpop.f32.mrf.mxu0
        %v4068 = vadd.f32 %v3859, %v4067
        %4069 = vmatmul.f32.gmra.mxu0 %v3958
        %v4070 = vpop.f32.mrf.mxu0
        %v4071 = vadd.f32 %v3862, %v4070
        %4072 = vmatmul.f32.gmra.mxu0 %v3961
        %v4073 = vpop.f32.mrf.mxu0
        %v4074 = vadd.f32 %v3865, %v4073
        %4075 = vmatmul.f32.gmra.mxu0 %v3964
        %v4076 = vpop.f32.mrf.mxu0
        %v4077 = vadd.f32 %v3868, %v4076
        %4078 = vmatmul.f32.gmra.mxu0 %v3967
        %v4079 = vpop.f32.mrf.mxu0
        %v4080 = vadd.f32 %v3871, %v4079
        %4081 = vmatmul.f32.gmra.mxu0 %v3970
        %v4082 = vpop.f32.mrf.mxu0
        %v4083 = vadd.f32 %v3874, %v4082
        %4084 = vmatmul.f32.gmra.mxu0 %v3973
        %v4085 = vpop.f32.mrf.mxu0
        %v4086 = vadd.f32 %v3877, %v4085
        %4087 = vmatmul.f32.gmra.mxu0 %v3976
        %v4088 = vpop.f32.mrf.mxu0
        %v4089 = vadd.f32 %v3880, %v4088
        %4090 = vmatmul.f32.gmra.mxu0 %v3979
        %v4091 = vpop.f32.mrf.mxu0
        %v4092 = vadd.f32 %v3883, %v4091
        %4093 = vmatmul.f32.gmra.mxu0 %v3982
        %v4094 = vpop.f32.mrf.mxu0
        %v4095 = vadd.f32 %v3886, %v4094
        %4096 = vdwg.mxu0
        %v4097 = vld [vmem:[#allocation2 + $0x2] sm:$0xff]
        %v4098 = vld [vmem:[#allocation2 + $0xa] sm:$0xff]
        %v4099 = vld [vmem:[#allocation2 + $0x12] sm:$0xff]
        %v4100 = vld [vmem:[#allocation2 + $0x1a] sm:$0xff]
        %v4101 = vld [vmem:[#allocation2 + $0x22] sm:$0xff]
        %v4102 = vld [vmem:[#allocation2 + $0x2a] sm:$0xff]
        %v4103 = vld [vmem:[#allocation2 + $0x32] sm:$0xff]
        %v4104 = vld [vmem:[#allocation2 + $0x3a] sm:$0xff]
        %v4105 = vld [vmem:[#allocation2 + $0x42] sm:$0xff]
        %v4106 = vld [vmem:[#allocation2 + $0x4a] sm:$0xff]
        %v4107 = vld [vmem:[#allocation2 + $0x52] sm:$0xff]
        %v4108 = vld [vmem:[#allocation2 + $0x5a] sm:$0xff]
        %v4109 = vld [vmem:[#allocation2 + $0x62] sm:$0xff]
        %v4110 = vld [vmem:[#allocation2 + $0x6a] sm:$0xff]
        %v4111 = vld [vmem:[#allocation2 + $0x72] sm:$0xff]
        %v4112 = vld [vmem:[#allocation2 + $0x7a] sm:$0xff]
        %v4113 = vld [vmem:[#allocation2 + $0x82] sm:$0xff]
        %v4114 = vld [vmem:[#allocation2 + $0x8a] sm:$0xff]
        %v4115 = vld [vmem:[#allocation2 + $0x92] sm:$0xff]
        %v4116 = vld [vmem:[#allocation2 + $0x9a] sm:$0xff]
        %v4117 = vld [vmem:[#allocation2 + $0xa2] sm:$0xff]
        %v4118 = vld [vmem:[#allocation2 + $0xaa] sm:$0xff]
        %v4119 = vld [vmem:[#allocation2 + $0xb2] sm:$0xff]
        %v4120 = vld [vmem:[#allocation2 + $0xba] sm:$0xff]
        %v4121 = vld [vmem:[#allocation2 + $0xc2] sm:$0xff]
        %v4122 = vld [vmem:[#allocation2 + $0xca] sm:$0xff]
        %v4123 = vld [vmem:[#allocation2 + $0xd2] sm:$0xff]
        %v4124 = vld [vmem:[#allocation2 + $0xda] sm:$0xff]
        %v4125 = vld [vmem:[#allocation2 + $0xe2] sm:$0xff]
        %v4126 = vld [vmem:[#allocation2 + $0xea] sm:$0xff]
        %v4127 = vld [vmem:[#allocation2 + $0xf2] sm:$0xff]
        %v4128 = vld [vmem:[#allocation2 + $0xfa] sm:$0xff]
        %v4129 = vmul.f32 %v4097, %v1210
        %v4130 = vmul.f32 %v4098, %v1215
        %v4131 = vmul.f32 %v4099, %v1220
        %v4132 = vmul.f32 %v4100, %v1225
        %v4133 = vmul.f32 %v4101, %v1230
        %v4134 = vmul.f32 %v4102, %v1235
        %v4135 = vmul.f32 %v4103, %v1240
        %v4136 = vmul.f32 %v4104, %v1245
        %v4137 = vmul.f32 %v4105, %v1250
        %v4138 = vmul.f32 %v4106, %v1255
        %v4139 = vmul.f32 %v4107, %v1260
        %v4140 = vmul.f32 %v4108, %v1265
        %v4141 = vmul.f32 %v4109, %v1270
        %v4142 = vmul.f32 %v4110, %v1275
        %v4143 = vmul.f32 %v4111, %v1280
        %v4144 = vmul.f32 %v4112, %v1285
        %v4145 = vmul.f32 %v4113, %v1290
        %v4146 = vmul.f32 %v4114, %v1295
        %v4147 = vmul.f32 %v4115, %v1300
        %v4148 = vmul.f32 %v4116, %v1305
        %v4149 = vmul.f32 %v4117, %v1310
        %v4150 = vmul.f32 %v4118, %v1315
        %v4151 = vmul.f32 %v4119, %v1320
        %v4152 = vmul.f32 %v4120, %v1325
        %v4153 = vmul.f32 %v4121, %v1330
        %v4154 = vmul.f32 %v4122, %v1335
        %v4155 = vmul.f32 %v4123, %v1340
        %v4156 = vmul.f32 %v4124, %v1345
        %v4157 = vmul.f32 %v4125, %v1350
        %v4158 = vmul.f32 %v4126, %v1355
        %v4159 = vmul.f32 %v4127, %v1360
        %v4160 = vmul.f32 %v4128, %v1365
        %s4161 = scalar_lea.vmem %s5, 16
        %v4162 = vld [vmem:[%s4161] sm:$0xff]
        %v4164 = vsel %vm3509, %v4129, 0
        %v4167 = vsel %vm3509, %v4130, 0
        %v4170 = vsel %vm3509, %v4131, 0
        %v4173 = vsel %vm3509, %v4132, 0
        %v4176 = vsel %vm3509, %v4133, 0
        %v4179 = vsel %vm3509, %v4134, 0
        %v4182 = vsel %vm3509, %v4135, 0
        %v4185 = vsel %vm3509, %v4136, 0
        %v4188 = vsel %vm3509, %v4137, 0
        %v4191 = vsel %vm3509, %v4138, 0
        %v4194 = vsel %vm3509, %v4139, 0
        %v4197 = vsel %vm3509, %v4140, 0
        %v4200 = vsel %vm3509, %v4141, 0
        %v4203 = vsel %vm3509, %v4142, 0
        %v4206 = vsel %vm3509, %v4143, 0
        %v4209 = vsel %vm3509, %v4144, 0
        %v4212 = vsel %vm3509, %v4145, 0
        %v4215 = vsel %vm3509, %v4146, 0
        %v4218 = vsel %vm3509, %v4147, 0
        %v4221 = vsel %vm3509, %v4148, 0
        %v4224 = vsel %vm3509, %v4149, 0
        %v4227 = vsel %vm3509, %v4150, 0
        %v4230 = vsel %vm3509, %v4151, 0
        %v4233 = vsel %vm3509, %v4152, 0
        %v4236 = vsel %vm3509, %v4153, 0
        %v4239 = vsel %vm3509, %v4154, 0
        %v4242 = vsel %vm3509, %v4155, 0
        %v4245 = vsel %vm3509, %v4156, 0
        %v4248 = vsel %vm3509, %v4157, 0
        %v4251 = vsel %vm3509, %v4158, 0
        %v4254 = vsel %vm3509, %v4159, 0
        %v4257 = vsel %vm3509, %v4160, 0
        %4259 = vmatpush.msra.mxu0 0.0
        %4260 = vmatpush.msra.mxu0 0.0
        %4261 = vmatpush.msra.mxu0 0.0
        %4262 = vmatpush.msra.mxu0 0.0
        %4263 = vmatpush.msra.mxu0 0.0
        %4264 = vmatpush.msra.mxu0 0.0
        %4265 = vmatpush.msra.mxu0 0.0
        %4266 = vmatpush.msra.mxu0 0.0
        %4267 = vmatpush.msra.mxu0 0.0
        %4268 = vmatpush.msra.mxu0 0.0
        %4269 = vmatpush.msra.mxu0 0.0
        %4270 = vmatpush.msra.mxu0 0.0
        %4271 = vmatpush.msra.mxu0 0.0
        %4272 = vmatpush.msra.mxu0 0.0
        %4273 = vmatpush.msra.mxu0 0.0
        %4274 = vmatpush.msra.mxu0 %v4162
        %4275 = vmatmul.f32.gmra.mxu0 %v4164
        %v4276 = vpop.f32.mrf.mxu0
        %v4277 = vadd.f32 0.0, %v4276
        %4278 = vmatmul.f32.gmra.mxu0 %v4167
        %v4279 = vpop.f32.mrf.mxu0
        %v4280 = vadd.f32 0.0, %v4279
        %4281 = vmatmul.f32.gmra.mxu0 %v4170
        %v4282 = vpop.f32.mrf.mxu0
        %v4283 = vadd.f32 0.0, %v4282
        %4284 = vmatmul.f32.gmra.mxu0 %v4173
        %v4285 = vpop.f32.mrf.mxu0
        %v4286 = vadd.f32 0.0, %v4285
        %4287 = vmatmul.f32.gmra.mxu0 %v4176
        %v4288 = vpop.f32.mrf.mxu0
        %v4289 = vadd.f32 0.0, %v4288
        %4290 = vmatmul.f32.gmra.mxu0 %v4179
        %v4291 = vpop.f32.mrf.mxu0
        %v4292 = vadd.f32 0.0, %v4291
        %4293 = vmatmul.f32.gmra.mxu0 %v4182
        %v4294 = vpop.f32.mrf.mxu0
        %v4295 = vadd.f32 0.0, %v4294
        %4296 = vmatmul.f32.gmra.mxu0 %v4185
        %v4297 = vpop.f32.mrf.mxu0
        %v4298 = vadd.f32 0.0, %v4297
        %4299 = vmatmul.f32.gmra.mxu0 %v4188
        %v4300 = vpop.f32.mrf.mxu0
        %v4301 = vadd.f32 0.0, %v4300
        %4302 = vmatmul.f32.gmra.mxu0 %v4191
        %v4303 = vpop.f32.mrf.mxu0
        %v4304 = vadd.f32 0.0, %v4303
        %4305 = vmatmul.f32.gmra.mxu0 %v4194
        %v4306 = vpop.f32.mrf.mxu0
        %v4307 = vadd.f32 0.0, %v4306
        %4308 = vmatmul.f32.gmra.mxu0 %v4197
        %v4309 = vpop.f32.mrf.mxu0
        %v4310 = vadd.f32 0.0, %v4309
        %4311 = vmatmul.f32.gmra.mxu0 %v4200
        %v4312 = vpop.f32.mrf.mxu0
        %v4313 = vadd.f32 0.0, %v4312
        %4314 = vmatmul.f32.gmra.mxu0 %v4203
        %v4315 = vpop.f32.mrf.mxu0
        %v4316 = vadd.f32 0.0, %v4315
        %4317 = vmatmul.f32.gmra.mxu0 %v4206
        %v4318 = vpop.f32.mrf.mxu0
        %v4319 = vadd.f32 0.0, %v4318
        %4320 = vmatmul.f32.gmra.mxu0 %v4209
        %v4321 = vpop.f32.mrf.mxu0
        %v4322 = vadd.f32 0.0, %v4321
        %4323 = vmatmul.f32.gmra.mxu0 %v4212
        %v4324 = vpop.f32.mrf.mxu0
        %v4325 = vadd.f32 0.0, %v4324
        %4326 = vmatmul.f32.gmra.mxu0 %v4215
        %v4327 = vpop.f32.mrf.mxu0
        %v4328 = vadd.f32 0.0, %v4327
        %4329 = vmatmul.f32.gmra.mxu0 %v4218
        %v4330 = vpop.f32.mrf.mxu0
        %v4331 = vadd.f32 0.0, %v4330
        %4332 = vmatmul.f32.gmra.mxu0 %v4221
        %v4333 = vpop.f32.mrf.mxu0
        %v4334 = vadd.f32 0.0, %v4333
        %4335 = vmatmul.f32.gmra.mxu0 %v4224
        %v4336 = vpop.f32.mrf.mxu0
        %v4337 = vadd.f32 0.0, %v4336
        %4338 = vmatmul.f32.gmra.mxu0 %v4227
        %v4339 = vpop.f32.mrf.mxu0
        %v4340 = vadd.f32 0.0, %v4339
        %4341 = vmatmul.f32.gmra.mxu0 %v4230
        %v4342 = vpop.f32.mrf.mxu0
        %v4343 = vadd.f32 0.0, %v4342
        %4344 = vmatmul.f32.gmra.mxu0 %v4233
        %v4345 = vpop.f32.mrf.mxu0
        %v4346 = vadd.f32 0.0, %v4345
        %4347 = vmatmul.f32.gmra.mxu0 %v4236
        %v4348 = vpop.f32.mrf.mxu0
        %v4349 = vadd.f32 0.0, %v4348
        %4350 = vmatmul.f32.gmra.mxu0 %v4239
        %v4351 = vpop.f32.mrf.mxu0
        %v4352 = vadd.f32 0.0, %v4351
        %4353 = vmatmul.f32.gmra.mxu0 %v4242
        %v4354 = vpop.f32.mrf.mxu0
        %v4355 = vadd.f32 0.0, %v4354
        %4356 = vmatmul.f32.gmra.mxu0 %v4245
        %v4357 = vpop.f32.mrf.mxu0
        %v4358 = vadd.f32 0.0, %v4357
        %4359 = vmatmul.f32.gmra.mxu0 %v4248
        %v4360 = vpop.f32.mrf.mxu0
        %v4361 = vadd.f32 0.0, %v4360
        %4362 = vmatmul.f32.gmra.mxu0 %v4251
        %v4363 = vpop.f32.mrf.mxu0
        %v4364 = vadd.f32 0.0, %v4363
        %4365 = vmatmul.f32.gmra.mxu0 %v4254
        %v4366 = vpop.f32.mrf.mxu0
        %v4367 = vadd.f32 0.0, %v4366
        %4368 = vmatmul.f32.gmra.mxu0 %v4257
        %v4369 = vpop.f32.mrf.mxu0
        %v4370 = vadd.f32 0.0, %v4369
        %4371 = vdwg.mxu0
        %v4372 = vadd.f32 %v4002, %v4277
        %v4373 = vadd.f32 %v4005, %v4280
        %v4374 = vadd.f32 %v4008, %v4283
        %v4375 = vadd.f32 %v4011, %v4286
        %v4376 = vadd.f32 %v4014, %v4289
        %v4377 = vadd.f32 %v4017, %v4292
        %v4378 = vadd.f32 %v4020, %v4295
        %v4379 = vadd.f32 %v4023, %v4298
        %v4380 = vadd.f32 %v4026, %v4301
        %v4381 = vadd.f32 %v4029, %v4304
        %v4382 = vadd.f32 %v4032, %v4307
        %v4383 = vadd.f32 %v4035, %v4310
        %v4384 = vadd.f32 %v4038, %v4313
        %v4385 = vadd.f32 %v4041, %v4316
        %v4386 = vadd.f32 %v4044, %v4319
        %v4387 = vadd.f32 %v4047, %v4322
        %v4388 = vadd.f32 %v4050, %v4325
        %v4389 = vadd.f32 %v4053, %v4328
        %v4390 = vadd.f32 %v4056, %v4331
        %v4391 = vadd.f32 %v4059, %v4334
        %v4392 = vadd.f32 %v4062, %v4337
        %v4393 = vadd.f32 %v4065, %v4340
        %v4394 = vadd.f32 %v4068, %v4343
        %v4395 = vadd.f32 %v4071, %v4346
        %v4396 = vadd.f32 %v4074, %v4349
        %v4397 = vadd.f32 %v4077, %v4352
        %v4398 = vadd.f32 %v4080, %v4355
        %v4399 = vadd.f32 %v4083, %v4358
        %v4400 = vadd.f32 %v4086, %v4361
        %v4401 = vadd.f32 %v4089, %v4364
        %v4402 = vadd.f32 %v4092, %v4367
        %v4403 = vadd.f32 %v4095, %v4370
        %v4404 = vld [vmem:[#allocation2 + $0x10] sm:$0xff]
        %v4405 = vld [vmem:[#allocation2 + $0x18] sm:$0xff]
        %v4406 = vld [vmem:[#allocation2 + $0x20] sm:$0xff]
        %v4407 = vld [vmem:[#allocation2 + $0x28] sm:$0xff]
        %v4408 = vld [vmem:[#allocation2 + $0x30] sm:$0xff]
        %v4409 = vld [vmem:[#allocation2 + $0x38] sm:$0xff]
        %v4410 = vld [vmem:[#allocation2 + $0x40] sm:$0xff]
        %v4411 = vld [vmem:[#allocation2 + $0x48] sm:$0xff]
        %v4412 = vld [vmem:[#allocation2 + $0x50] sm:$0xff]
        %v4413 = vld [vmem:[#allocation2 + $0x58] sm:$0xff]
        %v4414 = vld [vmem:[#allocation2 + $0x60] sm:$0xff]
        %v4415 = vld [vmem:[#allocation2 + $0x68] sm:$0xff]
        %v4416 = vld [vmem:[#allocation2 + $0x70] sm:$0xff]
        %v4417 = vld [vmem:[#allocation2 + $0x78] sm:$0xff]
        %v4418 = vld [vmem:[#allocation2 + $0x80] sm:$0xff]
        %v4419 = vld [vmem:[#allocation2 + $0x88] sm:$0xff]
        %v4420 = vld [vmem:[#allocation2 + $0x90] sm:$0xff]
        %v4421 = vld [vmem:[#allocation2 + $0x98] sm:$0xff]
        %v4422 = vld [vmem:[#allocation2 + $0xa0] sm:$0xff]
        %v4423 = vld [vmem:[#allocation2 + $0xa8] sm:$0xff]
        %v4424 = vld [vmem:[#allocation2 + $0xb0] sm:$0xff]
        %v4425 = vld [vmem:[#allocation2 + $0xb8] sm:$0xff]
        %v4426 = vld [vmem:[#allocation2 + $0xc0] sm:$0xff]
        %v4427 = vld [vmem:[#allocation2 + $0xc8] sm:$0xff]
        %v4428 = vld [vmem:[#allocation2 + $0xd0] sm:$0xff]
        %v4429 = vld [vmem:[#allocation2 + $0xd8] sm:$0xff]
        %v4430 = vld [vmem:[#allocation2 + $0xe0] sm:$0xff]
        %v4431 = vld [vmem:[#allocation2 + $0xe8] sm:$0xff]
        %v4432 = vld [vmem:[#allocation2 + $0xf0] sm:$0xff]
        %v4433 = vld [vmem:[#allocation2 + $0xf8] sm:$0xff]
        %v4434 = vld [vmem:[#allocation2 + $0x100] sm:$0xff]
        %v4435 = vld [vmem:[#allocation2 + $0x108] sm:$0xff]
        %v4436 = vmul.f32 %v4404, %v525
        %v4437 = vmul.f32 %v4405, %v530
        %v4438 = vmul.f32 %v4406, %v535
        %v4439 = vmul.f32 %v4407, %v540
        %v4440 = vmul.f32 %v4408, %v545
        %v4441 = vmul.f32 %v4409, %v550
        %v4442 = vmul.f32 %v4410, %v555
        %v4443 = vmul.f32 %v4411, %v560
        %v4444 = vmul.f32 %v4412, %v565
        %v4445 = vmul.f32 %v4413, %v570
        %v4446 = vmul.f32 %v4414, %v575
        %v4447 = vmul.f32 %v4415, %v580
        %v4448 = vmul.f32 %v4416, %v585
        %v4449 = vmul.f32 %v4417, %v590
        %v4450 = vmul.f32 %v4418, %v595
        %v4451 = vmul.f32 %v4419, %v600
        %v4452 = vmul.f32 %v4420, %v605
        %v4453 = vmul.f32 %v4421, %v610
        %v4454 = vmul.f32 %v4422, %v615
        %v4455 = vmul.f32 %v4423, %v620
        %v4456 = vmul.f32 %v4424, %v625
        %v4457 = vmul.f32 %v4425, %v630
        %v4458 = vmul.f32 %v4426, %v635
        %v4459 = vmul.f32 %v4427, %v640
        %v4460 = vmul.f32 %v4428, %v645
        %v4461 = vmul.f32 %v4429, %v650
        %v4462 = vmul.f32 %v4430, %v655
        %v4463 = vmul.f32 %v4431, %v660
        %v4464 = vmul.f32 %v4432, %v665
        %v4465 = vmul.f32 %v4433, %v670
        %v4466 = vmul.f32 %v4434, %v675
        %v4467 = vmul.f32 %v4435, %v680
        %s4468 = scalar_lea.vmem %s5, 24
        %v4469 = vld [vmem:[%s4468] sm:$0xff]
        %v4471 = vsel %vm3509, %v4436, 0
        %v4474 = vsel %vm3509, %v4437, 0
        %v4477 = vsel %vm3509, %v4438, 0
        %v4480 = vsel %vm3509, %v4439, 0
        %v4483 = vsel %vm3509, %v4440, 0
        %v4486 = vsel %vm3509, %v4441, 0
        %v4489 = vsel %vm3509, %v4442, 0
        %v4492 = vsel %vm3509, %v4443, 0
        %v4495 = vsel %vm3509, %v4444, 0
        %v4498 = vsel %vm3509, %v4445, 0
        %v4501 = vsel %vm3509, %v4446, 0
        %v4504 = vsel %vm3509, %v4447, 0
        %v4507 = vsel %vm3509, %v4448, 0
        %v4510 = vsel %vm3509, %v4449, 0
        %v4513 = vsel %vm3509, %v4450, 0
        %v4516 = vsel %vm3509, %v4451, 0
        %v4519 = vsel %vm3509, %v4452, 0
        %v4522 = vsel %vm3509, %v4453, 0
        %v4525 = vsel %vm3509, %v4454, 0
        %v4528 = vsel %vm3509, %v4455, 0
        %v4531 = vsel %vm3509, %v4456, 0
        %v4534 = vsel %vm3509, %v4457, 0
        %v4537 = vsel %vm3509, %v4458, 0
        %v4540 = vsel %vm3509, %v4459, 0
        %v4543 = vsel %vm3509, %v4460, 0
        %v4546 = vsel %vm3509, %v4461, 0
        %v4549 = vsel %vm3509, %v4462, 0
        %v4552 = vsel %vm3509, %v4463, 0
        %v4555 = vsel %vm3509, %v4464, 0
        %v4558 = vsel %vm3509, %v4465, 0
        %v4561 = vsel %vm3509, %v4466, 0
        %v4564 = vsel %vm3509, %v4467, 0
        %4566 = vmatpush.msra.mxu0 0.0
        %4567 = vmatpush.msra.mxu0 0.0
        %4568 = vmatpush.msra.mxu0 0.0
        %4569 = vmatpush.msra.mxu0 0.0
        %4570 = vmatpush.msra.mxu0 0.0
        %4571 = vmatpush.msra.mxu0 0.0
        %4572 = vmatpush.msra.mxu0 0.0
        %4573 = vmatpush.msra.mxu0 0.0
        %4574 = vmatpush.msra.mxu0 0.0
        %4575 = vmatpush.msra.mxu0 0.0
        %4576 = vmatpush.msra.mxu0 0.0
        %4577 = vmatpush.msra.mxu0 0.0
        %4578 = vmatpush.msra.mxu0 0.0
        %4579 = vmatpush.msra.mxu0 0.0
        %4580 = vmatpush.msra.mxu0 0.0
        %4581 = vmatpush.msra.mxu0 %v4469
        %4582 = vmatmul.f32.gmra.mxu0 %v4471
        %v4583 = vpop.f32.mrf.mxu0
        %v4584 = vadd.f32 0.0, %v4583
        %4585 = vmatmul.f32.gmra.mxu0 %v4474
        %v4586 = vpop.f32.mrf.mxu0
        %v4587 = vadd.f32 0.0, %v4586
        %4588 = vmatmul.f32.gmra.mxu0 %v4477
        %v4589 = vpop.f32.mrf.mxu0
        %v4590 = vadd.f32 0.0, %v4589
        %4591 = vmatmul.f32.gmra.mxu0 %v4480
        %v4592 = vpop.f32.mrf.mxu0
        %v4593 = vadd.f32 0.0, %v4592
        %4594 = vmatmul.f32.gmra.mxu0 %v4483
        %v4595 = vpop.f32.mrf.mxu0
        %v4596 = vadd.f32 0.0, %v4595
        %4597 = vmatmul.f32.gmra.mxu0 %v4486
        %v4598 = vpop.f32.mrf.mxu0
        %v4599 = vadd.f32 0.0, %v4598
        %4600 = vmatmul.f32.gmra.mxu0 %v4489
        %v4601 = vpop.f32.mrf.mxu0
        %v4602 = vadd.f32 0.0, %v4601
        %4603 = vmatmul.f32.gmra.mxu0 %v4492
        %v4604 = vpop.f32.mrf.mxu0
        %v4605 = vadd.f32 0.0, %v4604
        %4606 = vmatmul.f32.gmra.mxu0 %v4495
        %v4607 = vpop.f32.mrf.mxu0
        %v4608 = vadd.f32 0.0, %v4607
        %4609 = vmatmul.f32.gmra.mxu0 %v4498
        %v4610 = vpop.f32.mrf.mxu0
        %v4611 = vadd.f32 0.0, %v4610
        %4612 = vmatmul.f32.gmra.mxu0 %v4501
        %v4613 = vpop.f32.mrf.mxu0
        %v4614 = vadd.f32 0.0, %v4613
        %4615 = vmatmul.f32.gmra.mxu0 %v4504
        %v4616 = vpop.f32.mrf.mxu0
        %v4617 = vadd.f32 0.0, %v4616
        %4618 = vmatmul.f32.gmra.mxu0 %v4507
        %v4619 = vpop.f32.mrf.mxu0
        %v4620 = vadd.f32 0.0, %v4619
        %4621 = vmatmul.f32.gmra.mxu0 %v4510
        %v4622 = vpop.f32.mrf.mxu0
        %v4623 = vadd.f32 0.0, %v4622
        %4624 = vmatmul.f32.gmra.mxu0 %v4513
        %v4625 = vpop.f32.mrf.mxu0
        %v4626 = vadd.f32 0.0, %v4625
        %4627 = vmatmul.f32.gmra.mxu0 %v4516
        %v4628 = vpop.f32.mrf.mxu0
        %v4629 = vadd.f32 0.0, %v4628
        %4630 = vmatmul.f32.gmra.mxu0 %v4519
        %v4631 = vpop.f32.mrf.mxu0
        %v4632 = vadd.f32 0.0, %v4631
        %4633 = vmatmul.f32.gmra.mxu0 %v4522
        %v4634 = vpop.f32.mrf.mxu0
        %v4635 = vadd.f32 0.0, %v4634
        %4636 = vmatmul.f32.gmra.mxu0 %v4525
        %v4637 = vpop.f32.mrf.mxu0
        %v4638 = vadd.f32 0.0, %v4637
        %4639 = vmatmul.f32.gmra.mxu0 %v4528
        %v4640 = vpop.f32.mrf.mxu0
        %v4641 = vadd.f32 0.0, %v4640
        %4642 = vmatmul.f32.gmra.mxu0 %v4531
        %v4643 = vpop.f32.mrf.mxu0
        %v4644 = vadd.f32 0.0, %v4643
        %4645 = vmatmul.f32.gmra.mxu0 %v4534
        %v4646 = vpop.f32.mrf.mxu0
        %v4647 = vadd.f32 0.0, %v4646
        %4648 = vmatmul.f32.gmra.mxu0 %v4537
        %v4649 = vpop.f32.mrf.mxu0
        %v4650 = vadd.f32 0.0, %v4649
        %4651 = vmatmul.f32.gmra.mxu0 %v4540
        %v4652 = vpop.f32.mrf.mxu0
        %v4653 = vadd.f32 0.0, %v4652
        %4654 = vmatmul.f32.gmra.mxu0 %v4543
        %v4655 = vpop.f32.mrf.mxu0
        %v4656 = vadd.f32 0.0, %v4655
        %4657 = vmatmul.f32.gmra.mxu0 %v4546
        %v4658 = vpop.f32.mrf.mxu0
        %v4659 = vadd.f32 0.0, %v4658
        %4660 = vmatmul.f32.gmra.mxu0 %v4549
        %v4661 = vpop.f32.mrf.mxu0
        %v4662 = vadd.f32 0.0, %v4661
        %4663 = vmatmul.f32.gmra.mxu0 %v4552
        %v4664 = vpop.f32.mrf.mxu0
        %v4665 = vadd.f32 0.0, %v4664
        %4666 = vmatmul.f32.gmra.mxu0 %v4555
        %v4667 = vpop.f32.mrf.mxu0
        %v4668 = vadd.f32 0.0, %v4667
        %4669 = vmatmul.f32.gmra.mxu0 %v4558
        %v4670 = vpop.f32.mrf.mxu0
        %v4671 = vadd.f32 0.0, %v4670
        %4672 = vmatmul.f32.gmra.mxu0 %v4561
        %v4673 = vpop.f32.mrf.mxu0
        %v4674 = vadd.f32 0.0, %v4673
        %4675 = vmatmul.f32.gmra.mxu0 %v4564
        %v4676 = vpop.f32.mrf.mxu0
        %v4677 = vadd.f32 0.0, %v4676
        %4678 = vdwg.mxu0
        %v4679 = vadd.f32 %v4372, %v4584
        %v4680 = vadd.f32 %v4373, %v4587
        %v4681 = vadd.f32 %v4374, %v4590
        %v4682 = vadd.f32 %v4375, %v4593
        %v4683 = vadd.f32 %v4376, %v4596
        %v4684 = vadd.f32 %v4377, %v4599
        %v4685 = vadd.f32 %v4378, %v4602
        %v4686 = vadd.f32 %v4379, %v4605
        %v4687 = vadd.f32 %v4380, %v4608
        %v4688 = vadd.f32 %v4381, %v4611
        %v4689 = vadd.f32 %v4382, %v4614
        %v4690 = vadd.f32 %v4383, %v4617
        %v4691 = vadd.f32 %v4384, %v4620
        %v4692 = vadd.f32 %v4385, %v4623
        %v4693 = vadd.f32 %v4386, %v4626
        %v4694 = vadd.f32 %v4387, %v4629
        %v4695 = vadd.f32 %v4388, %v4632
        %v4696 = vadd.f32 %v4389, %v4635
        %v4697 = vadd.f32 %v4390, %v4638
        %v4698 = vadd.f32 %v4391, %v4641
        %v4699 = vadd.f32 %v4392, %v4644
        %v4700 = vadd.f32 %v4393, %v4647
        %v4701 = vadd.f32 %v4394, %v4650
        %v4702 = vadd.f32 %v4395, %v4653
        %v4703 = vadd.f32 %v4396, %v4656
        %v4704 = vadd.f32 %v4397, %v4659
        %v4705 = vadd.f32 %v4398, %v4662
        %v4706 = vadd.f32 %v4399, %v4665
        %v4707 = vadd.f32 %v4400, %v4668
        %v4708 = vadd.f32 %v4401, %v4671
        %v4709 = vadd.f32 %v4402, %v4674
        %v4710 = vadd.f32 %v4403, %v4677
        %v4711 = vld [vmem:[#allocation2 + $0x11] sm:$0xff]
        %v4712 = vld [vmem:[#allocation2 + $0x19] sm:$0xff]
        %v4713 = vld [vmem:[#allocation2 + $0x21] sm:$0xff]
        %v4714 = vld [vmem:[#allocation2 + $0x29] sm:$0xff]
        %v4715 = vld [vmem:[#allocation2 + $0x31] sm:$0xff]
        %v4716 = vld [vmem:[#allocation2 + $0x39] sm:$0xff]
        %v4717 = vld [vmem:[#allocation2 + $0x41] sm:$0xff]
        %v4718 = vld [vmem:[#allocation2 + $0x49] sm:$0xff]
        %v4719 = vld [vmem:[#allocation2 + $0x51] sm:$0xff]
        %v4720 = vld [vmem:[#allocation2 + $0x59] sm:$0xff]
        %v4721 = vld [vmem:[#allocation2 + $0x61] sm:$0xff]
        %v4722 = vld [vmem:[#allocation2 + $0x69] sm:$0xff]
        %v4723 = vld [vmem:[#allocation2 + $0x71] sm:$0xff]
        %v4724 = vld [vmem:[#allocation2 + $0x79] sm:$0xff]
        %v4725 = vld [vmem:[#allocation2 + $0x81] sm:$0xff]
        %v4726 = vld [vmem:[#allocation2 + $0x89] sm:$0xff]
        %v4727 = vld [vmem:[#allocation2 + $0x91] sm:$0xff]
        %v4728 = vld [vmem:[#allocation2 + $0x99] sm:$0xff]
        %v4729 = vld [vmem:[#allocation2 + $0xa1] sm:$0xff]
        %v4730 = vld [vmem:[#allocation2 + $0xa9] sm:$0xff]
        %v4731 = vld [vmem:[#allocation2 + $0xb1] sm:$0xff]
        %v4732 = vld [vmem:[#allocation2 + $0xb9] sm:$0xff]
        %v4733 = vld [vmem:[#allocation2 + $0xc1] sm:$0xff]
        %v4734 = vld [vmem:[#allocation2 + $0xc9] sm:$0xff]
        %v4735 = vld [vmem:[#allocation2 + $0xd1] sm:$0xff]
        %v4736 = vld [vmem:[#allocation2 + $0xd9] sm:$0xff]
        %v4737 = vld [vmem:[#allocation2 + $0xe1] sm:$0xff]
        %v4738 = vld [vmem:[#allocation2 + $0xe9] sm:$0xff]
        %v4739 = vld [vmem:[#allocation2 + $0xf1] sm:$0xff]
        %v4740 = vld [vmem:[#allocation2 + $0xf9] sm:$0xff]
        %v4741 = vld [vmem:[#allocation2 + $0x101] sm:$0xff]
        %v4742 = vld [vmem:[#allocation2 + $0x109] sm:$0xff]
        %s4743 = scalar_lea.vmem %s5, 32
        %v4744 = vld [vmem:[%s4743] sm:$0xff]
        %v4746 = vsel %vm3509, %v4711, 0
        %v4749 = vsel %vm3509, %v4712, 0
        %v4752 = vsel %vm3509, %v4713, 0
        %v4755 = vsel %vm3509, %v4714, 0
        %v4758 = vsel %vm3509, %v4715, 0
        %v4761 = vsel %vm3509, %v4716, 0
        %v4764 = vsel %vm3509, %v4717, 0
        %v4767 = vsel %vm3509, %v4718, 0
        %v4770 = vsel %vm3509, %v4719, 0
        %v4773 = vsel %vm3509, %v4720, 0
        %v4776 = vsel %vm3509, %v4721, 0
        %v4779 = vsel %vm3509, %v4722, 0
        %v4782 = vsel %vm3509, %v4723, 0
        %v4785 = vsel %vm3509, %v4724, 0
        %v4788 = vsel %vm3509, %v4725, 0
        %v4791 = vsel %vm3509, %v4726, 0
        %v4794 = vsel %vm3509, %v4727, 0
        %v4797 = vsel %vm3509, %v4728, 0
        %v4800 = vsel %vm3509, %v4729, 0
        %v4803 = vsel %vm3509, %v4730, 0
        %v4806 = vsel %vm3509, %v4731, 0
        %v4809 = vsel %vm3509, %v4732, 0
        %v4812 = vsel %vm3509, %v4733, 0
        %v4815 = vsel %vm3509, %v4734, 0
        %v4818 = vsel %vm3509, %v4735, 0
        %v4821 = vsel %vm3509, %v4736, 0
        %v4824 = vsel %vm3509, %v4737, 0
        %v4827 = vsel %vm3509, %v4738, 0
        %v4830 = vsel %vm3509, %v4739, 0
        %v4833 = vsel %vm3509, %v4740, 0
        %v4836 = vsel %vm3509, %v4741, 0
        %v4839 = vsel %vm3509, %v4742, 0
        %4841 = vmatpush.msra.mxu0 0.0
        %4842 = vmatpush.msra.mxu0 0.0
        %4843 = vmatpush.msra.mxu0 0.0
        %4844 = vmatpush.msra.mxu0 0.0
        %4845 = vmatpush.msra.mxu0 0.0
        %4846 = vmatpush.msra.mxu0 0.0
        %4847 = vmatpush.msra.mxu0 0.0
        %4848 = vmatpush.msra.mxu0 0.0
        %4849 = vmatpush.msra.mxu0 0.0
        %4850 = vmatpush.msra.mxu0 0.0
        %4851 = vmatpush.msra.mxu0 0.0
        %4852 = vmatpush.msra.mxu0 0.0
        %4853 = vmatpush.msra.mxu0 0.0
        %4854 = vmatpush.msra.mxu0 0.0
        %4855 = vmatpush.msra.mxu0 0.0
        %4856 = vmatpush.msra.mxu0 %v4744
        %4857 = vmatmul.f32.gmra.mxu0 %v4746
        %v4858 = vpop.f32.mrf.mxu0
        %v4859 = vadd.f32 0.0, %v4858
        %4860 = vmatmul.f32.gmra.mxu0 %v4749
        %v4861 = vpop.f32.mrf.mxu0
        %v4862 = vadd.f32 0.0, %v4861
        %4863 = vmatmul.f32.gmra.mxu0 %v4752
        %v4864 = vpop.f32.mrf.mxu0
        %v4865 = vadd.f32 0.0, %v4864
        %4866 = vmatmul.f32.gmra.mxu0 %v4755
        %v4867 = vpop.f32.mrf.mxu0
        %v4868 = vadd.f32 0.0, %v4867
        %4869 = vmatmul.f32.gmra.mxu0 %v4758
        %v4870 = vpop.f32.mrf.mxu0
        %v4871 = vadd.f32 0.0, %v4870
        %4872 = vmatmul.f32.gmra.mxu0 %v4761
        %v4873 = vpop.f32.mrf.mxu0
        %v4874 = vadd.f32 0.0, %v4873
        %4875 = vmatmul.f32.gmra.mxu0 %v4764
        %v4876 = vpop.f32.mrf.mxu0
        %v4877 = vadd.f32 0.0, %v4876
        %4878 = vmatmul.f32.gmra.mxu0 %v4767
        %v4879 = vpop.f32.mrf.mxu0
        %v4880 = vadd.f32 0.0, %v4879
        %4881 = vmatmul.f32.gmra.mxu0 %v4770
        %v4882 = vpop.f32.mrf.mxu0
        %v4883 = vadd.f32 0.0, %v4882
        %4884 = vmatmul.f32.gmra.mxu0 %v4773
        %v4885 = vpop.f32.mrf.mxu0
        %v4886 = vadd.f32 0.0, %v4885
        %4887 = vmatmul.f32.gmra.mxu0 %v4776
        %v4888 = vpop.f32.mrf.mxu0
        %v4889 = vadd.f32 0.0, %v4888
        %4890 = vmatmul.f32.gmra.mxu0 %v4779
        %v4891 = vpop.f32.mrf.mxu0
        %v4892 = vadd.f32 0.0, %v4891
        %4893 = vmatmul.f32.gmra.mxu0 %v4782
        %v4894 = vpop.f32.mrf.mxu0
        %v4895 = vadd.f32 0.0, %v4894
        %4896 = vmatmul.f32.gmra.mxu0 %v4785
        %v4897 = vpop.f32.mrf.mxu0
        %v4898 = vadd.f32 0.0, %v4897
        %4899 = vmatmul.f32.gmra.mxu0 %v4788
        %v4900 = vpop.f32.mrf.mxu0
        %v4901 = vadd.f32 0.0, %v4900
        %4902 = vmatmul.f32.gmra.mxu0 %v4791
        %v4903 = vpop.f32.mrf.mxu0
        %v4904 = vadd.f32 0.0, %v4903
        %4905 = vmatmul.f32.gmra.mxu0 %v4794
        %v4906 = vpop.f32.mrf.mxu0
        %v4907 = vadd.f32 0.0, %v4906
        %4908 = vmatmul.f32.gmra.mxu0 %v4797
        %v4909 = vpop.f32.mrf.mxu0
        %v4910 = vadd.f32 0.0, %v4909
        %4911 = vmatmul.f32.gmra.mxu0 %v4800
        %v4912 = vpop.f32.mrf.mxu0
        %v4913 = vadd.f32 0.0, %v4912
        %4914 = vmatmul.f32.gmra.mxu0 %v4803
        %v4915 = vpop.f32.mrf.mxu0
        %v4916 = vadd.f32 0.0, %v4915
        %4917 = vmatmul.f32.gmra.mxu0 %v4806
        %v4918 = vpop.f32.mrf.mxu0
        %v4919 = vadd.f32 0.0, %v4918
        %4920 = vmatmul.f32.gmra.mxu0 %v4809
        %v4921 = vpop.f32.mrf.mxu0
        %v4922 = vadd.f32 0.0, %v4921
        %4923 = vmatmul.f32.gmra.mxu0 %v4812
        %v4924 = vpop.f32.mrf.mxu0
        %v4925 = vadd.f32 0.0, %v4924
        %4926 = vmatmul.f32.gmra.mxu0 %v4815
        %v4927 = vpop.f32.mrf.mxu0
        %v4928 = vadd.f32 0.0, %v4927
        %4929 = vmatmul.f32.gmra.mxu0 %v4818
        %v4930 = vpop.f32.mrf.mxu0
        %v4931 = vadd.f32 0.0, %v4930
        %4932 = vmatmul.f32.gmra.mxu0 %v4821
        %v4933 = vpop.f32.mrf.mxu0
        %v4934 = vadd.f32 0.0, %v4933
        %4935 = vmatmul.f32.gmra.mxu0 %v4824
        %v4936 = vpop.f32.mrf.mxu0
        %v4937 = vadd.f32 0.0, %v4936
        %4938 = vmatmul.f32.gmra.mxu0 %v4827
        %v4939 = vpop.f32.mrf.mxu0
        %v4940 = vadd.f32 0.0, %v4939
        %4941 = vmatmul.f32.gmra.mxu0 %v4830
        %v4942 = vpop.f32.mrf.mxu0
        %v4943 = vadd.f32 0.0, %v4942
        %4944 = vmatmul.f32.gmra.mxu0 %v4833
        %v4945 = vpop.f32.mrf.mxu0
        %v4946 = vadd.f32 0.0, %v4945
        %4947 = vmatmul.f32.gmra.mxu0 %v4836
        %v4948 = vpop.f32.mrf.mxu0
        %v4949 = vadd.f32 0.0, %v4948
        %4950 = vmatmul.f32.gmra.mxu0 %v4839
        %v4951 = vpop.f32.mrf.mxu0
        %v4952 = vadd.f32 0.0, %v4951
        %4953 = vdwg.mxu0
        %v4954 = vadd.f32 %v4679, %v4859
        %v4955 = vadd.f32 %v4680, %v4862
        %v4956 = vadd.f32 %v4681, %v4865
        %v4957 = vadd.f32 %v4682, %v4868
        %v4958 = vadd.f32 %v4683, %v4871
        %v4959 = vadd.f32 %v4684, %v4874
        %v4960 = vadd.f32 %v4685, %v4877
        %v4961 = vadd.f32 %v4686, %v4880
        %v4962 = vadd.f32 %v4687, %v4883
        %v4963 = vadd.f32 %v4688, %v4886
        %v4964 = vadd.f32 %v4689, %v4889
        %v4965 = vadd.f32 %v4690, %v4892
        %v4966 = vadd.f32 %v4691, %v4895
        %v4967 = vadd.f32 %v4692, %v4898
        %v4968 = vadd.f32 %v4693, %v4901
        %v4969 = vadd.f32 %v4694, %v4904
        %v4970 = vadd.f32 %v4695, %v4907
        %v4971 = vadd.f32 %v4696, %v4910
        %v4972 = vadd.f32 %v4697, %v4913
        %v4973 = vadd.f32 %v4698, %v4916
        %v4974 = vadd.f32 %v4699, %v4919
        %v4975 = vadd.f32 %v4700, %v4922
        %v4976 = vadd.f32 %v4701, %v4925
        %v4977 = vadd.f32 %v4702, %v4928
        %v4978 = vadd.f32 %v4703, %v4931
        %v4979 = vadd.f32 %v4704, %v4934
        %v4980 = vadd.f32 %v4705, %v4937
        %v4981 = vadd.f32 %v4706, %v4940
        %v4982 = vadd.f32 %v4707, %v4943
        %v4983 = vadd.f32 %v4708, %v4946
        %v4984 = vadd.f32 %v4709, %v4949
        %v4985 = vadd.f32 %v4710, %v4952
        %v4986 = vld [vmem:[#allocation2 + $0x12] sm:$0xff]
        %v4987 = vld [vmem:[#allocation2 + $0x1a] sm:$0xff]
        %v4988 = vld [vmem:[#allocation2 + $0x22] sm:$0xff]
        %v4989 = vld [vmem:[#allocation2 + $0x2a] sm:$0xff]
        %v4990 = vld [vmem:[#allocation2 + $0x32] sm:$0xff]
        %v4991 = vld [vmem:[#allocation2 + $0x3a] sm:$0xff]
        %v4992 = vld [vmem:[#allocation2 + $0x42] sm:$0xff]
        %v4993 = vld [vmem:[#allocation2 + $0x4a] sm:$0xff]
        %v4994 = vld [vmem:[#allocation2 + $0x52] sm:$0xff]
        %v4995 = vld [vmem:[#allocation2 + $0x5a] sm:$0xff]
        %v4996 = vld [vmem:[#allocation2 + $0x62] sm:$0xff]
        %v4997 = vld [vmem:[#allocation2 + $0x6a] sm:$0xff]
        %v4998 = vld [vmem:[#allocation2 + $0x72] sm:$0xff]
        %v4999 = vld [vmem:[#allocation2 + $0x7a] sm:$0xff]
        %v5000 = vld [vmem:[#allocation2 + $0x82] sm:$0xff]
        %v5001 = vld [vmem:[#allocation2 + $0x8a] sm:$0xff]
        %v5002 = vld [vmem:[#allocation2 + $0x92] sm:$0xff]
        %v5003 = vld [vmem:[#allocation2 + $0x9a] sm:$0xff]
        %v5004 = vld [vmem:[#allocation2 + $0xa2] sm:$0xff]
        %v5005 = vld [vmem:[#allocation2 + $0xaa] sm:$0xff]
        %v5006 = vld [vmem:[#allocation2 + $0xb2] sm:$0xff]
        %v5007 = vld [vmem:[#allocation2 + $0xba] sm:$0xff]
        %v5008 = vld [vmem:[#allocation2 + $0xc2] sm:$0xff]
        %v5009 = vld [vmem:[#allocation2 + $0xca] sm:$0xff]
        %v5010 = vld [vmem:[#allocation2 + $0xd2] sm:$0xff]
        %v5011 = vld [vmem:[#allocation2 + $0xda] sm:$0xff]
        %v5012 = vld [vmem:[#allocation2 + $0xe2] sm:$0xff]
        %v5013 = vld [vmem:[#allocation2 + $0xea] sm:$0xff]
        %v5014 = vld [vmem:[#allocation2 + $0xf2] sm:$0xff]
        %v5015 = vld [vmem:[#allocation2 + $0xfa] sm:$0xff]
        %v5016 = vld [vmem:[#allocation2 + $0x102] sm:$0xff]
        %v5017 = vld [vmem:[#allocation2 + $0x10a] sm:$0xff]
        %v5018 = vmul.f32 %v4986, %v1210
        %v5019 = vmul.f32 %v4987, %v1215
        %v5020 = vmul.f32 %v4988, %v1220
        %v5021 = vmul.f32 %v4989, %v1225
        %v5022 = vmul.f32 %v4990, %v1230
        %v5023 = vmul.f32 %v4991, %v1235
        %v5024 = vmul.f32 %v4992, %v1240
        %v5025 = vmul.f32 %v4993, %v1245
        %v5026 = vmul.f32 %v4994, %v1250
        %v5027 = vmul.f32 %v4995, %v1255
        %v5028 = vmul.f32 %v4996, %v1260
        %v5029 = vmul.f32 %v4997, %v1265
        %v5030 = vmul.f32 %v4998, %v1270
        %v5031 = vmul.f32 %v4999, %v1275
        %v5032 = vmul.f32 %v5000, %v1280
        %v5033 = vmul.f32 %v5001, %v1285
        %v5034 = vmul.f32 %v5002, %v1290
        %v5035 = vmul.f32 %v5003, %v1295
        %v5036 = vmul.f32 %v5004, %v1300
        %v5037 = vmul.f32 %v5005, %v1305
        %v5038 = vmul.f32 %v5006, %v1310
        %v5039 = vmul.f32 %v5007, %v1315
        %v5040 = vmul.f32 %v5008, %v1320
        %v5041 = vmul.f32 %v5009, %v1325
        %v5042 = vmul.f32 %v5010, %v1330
        %v5043 = vmul.f32 %v5011, %v1335
        %v5044 = vmul.f32 %v5012, %v1340
        %v5045 = vmul.f32 %v5013, %v1345
        %v5046 = vmul.f32 %v5014, %v1350
        %v5047 = vmul.f32 %v5015, %v1355
        %v5048 = vmul.f32 %v5016, %v1360
        %v5049 = vmul.f32 %v5017, %v1365
        %s5050 = scalar_lea.vmem %s5, 40
        %v5051 = vld [vmem:[%s5050] sm:$0xff]
        %v5053 = vsel %vm3509, %v5018, 0
        %v5056 = vsel %vm3509, %v5019, 0
        %v5059 = vsel %vm3509, %v5020, 0
        %v5062 = vsel %vm3509, %v5021, 0
        %v5065 = vsel %vm3509, %v5022, 0
        %v5068 = vsel %vm3509, %v5023, 0
        %v5071 = vsel %vm3509, %v5024, 0
        %v5074 = vsel %vm3509, %v5025, 0
        %v5077 = vsel %vm3509, %v5026, 0
        %v5080 = vsel %vm3509, %v5027, 0
        %v5083 = vsel %vm3509, %v5028, 0
        %v5086 = vsel %vm3509, %v5029, 0
        %v5089 = vsel %vm3509, %v5030, 0
        %v5092 = vsel %vm3509, %v5031, 0
        %v5095 = vsel %vm3509, %v5032, 0
        %v5098 = vsel %vm3509, %v5033, 0
        %v5101 = vsel %vm3509, %v5034, 0
        %v5104 = vsel %vm3509, %v5035, 0
        %v5107 = vsel %vm3509, %v5036, 0
        %v5110 = vsel %vm3509, %v5037, 0
        %v5113 = vsel %vm3509, %v5038, 0
        %v5116 = vsel %vm3509, %v5039, 0
        %v5119 = vsel %vm3509, %v5040, 0
        %v5122 = vsel %vm3509, %v5041, 0
        %v5125 = vsel %vm3509, %v5042, 0
        %v5128 = vsel %vm3509, %v5043, 0
        %v5131 = vsel %vm3509, %v5044, 0
        %v5134 = vsel %vm3509, %v5045, 0
        %v5137 = vsel %vm3509, %v5046, 0
        %v5140 = vsel %vm3509, %v5047, 0
        %v5143 = vsel %vm3509, %v5048, 0
        %v5146 = vsel %vm3509, %v5049, 0
        %5148 = vmatpush.msra.mxu0 0.0
        %5149 = vmatpush.msra.mxu0 0.0
        %5150 = vmatpush.msra.mxu0 0.0
        %5151 = vmatpush.msra.mxu0 0.0
        %5152 = vmatpush.msra.mxu0 0.0
        %5153 = vmatpush.msra.mxu0 0.0
        %5154 = vmatpush.msra.mxu0 0.0
        %5155 = vmatpush.msra.mxu0 0.0
        %5156 = vmatpush.msra.mxu0 0.0
        %5157 = vmatpush.msra.mxu0 0.0
        %5158 = vmatpush.msra.mxu0 0.0
        %5159 = vmatpush.msra.mxu0 0.0
        %5160 = vmatpush.msra.mxu0 0.0
        %5161 = vmatpush.msra.mxu0 0.0
        %5162 = vmatpush.msra.mxu0 0.0
        %5163 = vmatpush.msra.mxu0 %v5051
        %5164 = vmatmul.f32.gmra.mxu0 %v5053
        %v5165 = vpop.f32.mrf.mxu0
        %v5166 = vadd.f32 0.0, %v5165
        %5167 = vmatmul.f32.gmra.mxu0 %v5056
        %v5168 = vpop.f32.mrf.mxu0
        %v5169 = vadd.f32 0.0, %v5168
        %5170 = vmatmul.f32.gmra.mxu0 %v5059
        %v5171 = vpop.f32.mrf.mxu0
        %v5172 = vadd.f32 0.0, %v5171
        %5173 = vmatmul.f32.gmra.mxu0 %v5062
        %v5174 = vpop.f32.mrf.mxu0
        %v5175 = vadd.f32 0.0, %v5174
        %5176 = vmatmul.f32.gmra.mxu0 %v5065
        %v5177 = vpop.f32.mrf.mxu0
        %v5178 = vadd.f32 0.0, %v5177
        %5179 = vmatmul.f32.gmra.mxu0 %v5068
        %v5180 = vpop.f32.mrf.mxu0
        %v5181 = vadd.f32 0.0, %v5180
        %5182 = vmatmul.f32.gmra.mxu0 %v5071
        %v5183 = vpop.f32.mrf.mxu0
        %v5184 = vadd.f32 0.0, %v5183
        %5185 = vmatmul.f32.gmra.mxu0 %v5074
        %v5186 = vpop.f32.mrf.mxu0
        %v5187 = vadd.f32 0.0, %v5186
        %5188 = vmatmul.f32.gmra.mxu0 %v5077
        %v5189 = vpop.f32.mrf.mxu0
        %v5190 = vadd.f32 0.0, %v5189
        %5191 = vmatmul.f32.gmra.mxu0 %v5080
        %v5192 = vpop.f32.mrf.mxu0
        %v5193 = vadd.f32 0.0, %v5192
        %5194 = vmatmul.f32.gmra.mxu0 %v5083
        %v5195 = vpop.f32.mrf.mxu0
        %v5196 = vadd.f32 0.0, %v5195
        %5197 = vmatmul.f32.gmra.mxu0 %v5086
        %v5198 = vpop.f32.mrf.mxu0
        %v5199 = vadd.f32 0.0, %v5198
        %5200 = vmatmul.f32.gmra.mxu0 %v5089
        %v5201 = vpop.f32.mrf.mxu0
        %v5202 = vadd.f32 0.0, %v5201
        %5203 = vmatmul.f32.gmra.mxu0 %v5092
        %v5204 = vpop.f32.mrf.mxu0
        %v5205 = vadd.f32 0.0, %v5204
        %5206 = vmatmul.f32.gmra.mxu0 %v5095
        %v5207 = vpop.f32.mrf.mxu0
        %v5208 = vadd.f32 0.0, %v5207
        %5209 = vmatmul.f32.gmra.mxu0 %v5098
        %v5210 = vpop.f32.mrf.mxu0
        %v5211 = vadd.f32 0.0, %v5210
        %5212 = vmatmul.f32.gmra.mxu0 %v5101
        %v5213 = vpop.f32.mrf.mxu0
        %v5214 = vadd.f32 0.0, %v5213
        %5215 = vmatmul.f32.gmra.mxu0 %v5104
        %v5216 = vpop.f32.mrf.mxu0
        %v5217 = vadd.f32 0.0, %v5216
        %5218 = vmatmul.f32.gmra.mxu0 %v5107
        %v5219 = vpop.f32.mrf.mxu0
        %v5220 = vadd.f32 0.0, %v5219
        %5221 = vmatmul.f32.gmra.mxu0 %v5110
        %v5222 = vpop.f32.mrf.mxu0
        %v5223 = vadd.f32 0.0, %v5222
        %5224 = vmatmul.f32.gmra.mxu0 %v5113
        %v5225 = vpop.f32.mrf.mxu0
        %v5226 = vadd.f32 0.0, %v5225
        %5227 = vmatmul.f32.gmra.mxu0 %v5116
        %v5228 = vpop.f32.mrf.mxu0
        %v5229 = vadd.f32 0.0, %v5228
        %5230 = vmatmul.f32.gmra.mxu0 %v5119
        %v5231 = vpop.f32.mrf.mxu0
        %v5232 = vadd.f32 0.0, %v5231
        %5233 = vmatmul.f32.gmra.mxu0 %v5122
        %v5234 = vpop.f32.mrf.mxu0
        %v5235 = vadd.f32 0.0, %v5234
        %5236 = vmatmul.f32.gmra.mxu0 %v5125
        %v5237 = vpop.f32.mrf.mxu0
        %v5238 = vadd.f32 0.0, %v5237
        %5239 = vmatmul.f32.gmra.mxu0 %v5128
        %v5240 = vpop.f32.mrf.mxu0
        %v5241 = vadd.f32 0.0, %v5240
        %5242 = vmatmul.f32.gmra.mxu0 %v5131
        %v5243 = vpop.f32.mrf.mxu0
        %v5244 = vadd.f32 0.0, %v5243
        %5245 = vmatmul.f32.gmra.mxu0 %v5134
        %v5246 = vpop.f32.mrf.mxu0
        %v5247 = vadd.f32 0.0, %v5246
        %5248 = vmatmul.f32.gmra.mxu0 %v5137
        %v5249 = vpop.f32.mrf.mxu0
        %v5250 = vadd.f32 0.0, %v5249
        %5251 = vmatmul.f32.gmra.mxu0 %v5140
        %v5252 = vpop.f32.mrf.mxu0
        %v5253 = vadd.f32 0.0, %v5252
        %5254 = vmatmul.f32.gmra.mxu0 %v5143
        %v5255 = vpop.f32.mrf.mxu0
        %v5256 = vadd.f32 0.0, %v5255
        %5257 = vmatmul.f32.gmra.mxu0 %v5146
        %v5258 = vpop.f32.mrf.mxu0
        %v5259 = vadd.f32 0.0, %v5258
        %5260 = vdwg.mxu0
        %v5261 = vadd.f32 %v4954, %v5166
        %v5262 = vadd.f32 %v4955, %v5169
        %v5263 = vadd.f32 %v4956, %v5172
        %v5264 = vadd.f32 %v4957, %v5175
        %v5265 = vadd.f32 %v4958, %v5178
        %v5266 = vadd.f32 %v4959, %v5181
        %v5267 = vadd.f32 %v4960, %v5184
        %v5268 = vadd.f32 %v4961, %v5187
        %v5269 = vadd.f32 %v4962, %v5190
        %v5270 = vadd.f32 %v4963, %v5193
        %v5271 = vadd.f32 %v4964, %v5196
        %v5272 = vadd.f32 %v4965, %v5199
        %v5273 = vadd.f32 %v4966, %v5202
        %v5274 = vadd.f32 %v4967, %v5205
        %v5275 = vadd.f32 %v4968, %v5208
        %v5276 = vadd.f32 %v4969, %v5211
        %v5277 = vadd.f32 %v4970, %v5214
        %v5278 = vadd.f32 %v4971, %v5217
        %v5279 = vadd.f32 %v4972, %v5220
        %v5280 = vadd.f32 %v4973, %v5223
        %v5281 = vadd.f32 %v4974, %v5226
        %v5282 = vadd.f32 %v4975, %v5229
        %v5283 = vadd.f32 %v4976, %v5232
        %v5284 = vadd.f32 %v4977, %v5235
        %v5285 = vadd.f32 %v4978, %v5238
        %v5286 = vadd.f32 %v4979, %v5241
        %v5287 = vadd.f32 %v4980, %v5244
        %v5288 = vadd.f32 %v4981, %v5247
        %v5289 = vadd.f32 %v4982, %v5250
        %v5290 = vadd.f32 %v4983, %v5253
        %v5291 = vadd.f32 %v4984, %v5256
        %v5292 = vadd.f32 %v4985, %v5259
        %v5293 = vld [vmem:[#allocation2 + $0x20] sm:$0xff]
        %v5294 = vld [vmem:[#allocation2 + $0x28] sm:$0xff]
        %v5295 = vld [vmem:[#allocation2 + $0x30] sm:$0xff]
        %v5296 = vld [vmem:[#allocation2 + $0x38] sm:$0xff]
        %v5297 = vld [vmem:[#allocation2 + $0x40] sm:$0xff]
        %v5298 = vld [vmem:[#allocation2 + $0x48] sm:$0xff]
        %v5299 = vld [vmem:[#allocation2 + $0x50] sm:$0xff]
        %v5300 = vld [vmem:[#allocation2 + $0x58] sm:$0xff]
        %v5301 = vld [vmem:[#allocation2 + $0x60] sm:$0xff]
        %v5302 = vld [vmem:[#allocation2 + $0x68] sm:$0xff]
        %v5303 = vld [vmem:[#allocation2 + $0x70] sm:$0xff]
        %v5304 = vld [vmem:[#allocation2 + $0x78] sm:$0xff]
        %v5305 = vld [vmem:[#allocation2 + $0x80] sm:$0xff]
        %v5306 = vld [vmem:[#allocation2 + $0x88] sm:$0xff]
        %v5307 = vld [vmem:[#allocation2 + $0x90] sm:$0xff]
        %v5308 = vld [vmem:[#allocation2 + $0x98] sm:$0xff]
        %v5309 = vld [vmem:[#allocation2 + $0xa0] sm:$0xff]
        %v5310 = vld [vmem:[#allocation2 + $0xa8] sm:$0xff]
        %v5311 = vld [vmem:[#allocation2 + $0xb0] sm:$0xff]
        %v5312 = vld [vmem:[#allocation2 + $0xb8] sm:$0xff]
        %v5313 = vld [vmem:[#allocation2 + $0xc0] sm:$0xff]
        %v5314 = vld [vmem:[#allocation2 + $0xc8] sm:$0xff]
        %v5315 = vld [vmem:[#allocation2 + $0xd0] sm:$0xff]
        %v5316 = vld [vmem:[#allocation2 + $0xd8] sm:$0xff]
        %v5317 = vld [vmem:[#allocation2 + $0xe0] sm:$0xff]
        %v5318 = vld [vmem:[#allocation2 + $0xe8] sm:$0xff]
        %v5319 = vld [vmem:[#allocation2 + $0xf0] sm:$0xff]
        %v5320 = vld [vmem:[#allocation2 + $0xf8] sm:$0xff]
        %v5321 = vld [vmem:[#allocation2 + $0x100] sm:$0xff]
        %v5322 = vld [vmem:[#allocation2 + $0x108] sm:$0xff]
        %v5323 = vld [vmem:[#allocation2 + $0x110] sm:$0xff]
        %v5324 = vld [vmem:[#allocation2 + $0x118] sm:$0xff]
        %v5325 = vmul.f32 %v5293, %v525
        %v5326 = vmul.f32 %v5294, %v530
        %v5327 = vmul.f32 %v5295, %v535
        %v5328 = vmul.f32 %v5296, %v540
        %v5329 = vmul.f32 %v5297, %v545
        %v5330 = vmul.f32 %v5298, %v550
        %v5331 = vmul.f32 %v5299, %v555
        %v5332 = vmul.f32 %v5300, %v560
        %v5333 = vmul.f32 %v5301, %v565
        %v5334 = vmul.f32 %v5302, %v570
        %v5335 = vmul.f32 %v5303, %v575
        %v5336 = vmul.f32 %v5304, %v580
        %v5337 = vmul.f32 %v5305, %v585
        %v5338 = vmul.f32 %v5306, %v590
        %v5339 = vmul.f32 %v5307, %v595
        %v5340 = vmul.f32 %v5308, %v600
        %v5341 = vmul.f32 %v5309, %v605
        %v5342 = vmul.f32 %v5310, %v610
        %v5343 = vmul.f32 %v5311, %v615
        %v5344 = vmul.f32 %v5312, %v620
        %v5345 = vmul.f32 %v5313, %v625
        %v5346 = vmul.f32 %v5314, %v630
        %v5347 = vmul.f32 %v5315, %v635
        %v5348 = vmul.f32 %v5316, %v640
        %v5349 = vmul.f32 %v5317, %v645
        %v5350 = vmul.f32 %v5318, %v650
        %v5351 = vmul.f32 %v5319, %v655
        %v5352 = vmul.f32 %v5320, %v660
        %v5353 = vmul.f32 %v5321, %v665
        %v5354 = vmul.f32 %v5322, %v670
        %v5355 = vmul.f32 %v5323, %v675
        %v5356 = vmul.f32 %v5324, %v680
        %s5357 = scalar_lea.vmem %s5, 48
        %v5358 = vld [vmem:[%s5357] sm:$0xff]
        %v5360 = vsel %vm3509, %v5325, 0
        %v5363 = vsel %vm3509, %v5326, 0
        %v5366 = vsel %vm3509, %v5327, 0
        %v5369 = vsel %vm3509, %v5328, 0
        %v5372 = vsel %vm3509, %v5329, 0
        %v5375 = vsel %vm3509, %v5330, 0
        %v5378 = vsel %vm3509, %v5331, 0
        %v5381 = vsel %vm3509, %v5332, 0
        %v5384 = vsel %vm3509, %v5333, 0
        %v5387 = vsel %vm3509, %v5334, 0
        %v5390 = vsel %vm3509, %v5335, 0
        %v5393 = vsel %vm3509, %v5336, 0
        %v5396 = vsel %vm3509, %v5337, 0
        %v5399 = vsel %vm3509, %v5338, 0
        %v5402 = vsel %vm3509, %v5339, 0
        %v5405 = vsel %vm3509, %v5340, 0
        %v5408 = vsel %vm3509, %v5341, 0
        %v5411 = vsel %vm3509, %v5342, 0
        %v5414 = vsel %vm3509, %v5343, 0
        %v5417 = vsel %vm3509, %v5344, 0
        %v5420 = vsel %vm3509, %v5345, 0
        %v5423 = vsel %vm3509, %v5346, 0
        %v5426 = vsel %vm3509, %v5347, 0
        %v5429 = vsel %vm3509, %v5348, 0
        %v5432 = vsel %vm3509, %v5349, 0
        %v5435 = vsel %vm3509, %v5350, 0
        %v5438 = vsel %vm3509, %v5351, 0
        %v5441 = vsel %vm3509, %v5352, 0
        %v5444 = vsel %vm3509, %v5353, 0
        %v5447 = vsel %vm3509, %v5354, 0
        %v5450 = vsel %vm3509, %v5355, 0
        %v5453 = vsel %vm3509, %v5356, 0
        %5455 = vmatpush.msra.mxu0 0.0
        %5456 = vmatpush.msra.mxu0 0.0
        %5457 = vmatpush.msra.mxu0 0.0
        %5458 = vmatpush.msra.mxu0 0.0
        %5459 = vmatpush.msra.mxu0 0.0
        %5460 = vmatpush.msra.mxu0 0.0
        %5461 = vmatpush.msra.mxu0 0.0
        %5462 = vmatpush.msra.mxu0 0.0
        %5463 = vmatpush.msra.mxu0 0.0
        %5464 = vmatpush.msra.mxu0 0.0
        %5465 = vmatpush.msra.mxu0 0.0
        %5466 = vmatpush.msra.mxu0 0.0
        %5467 = vmatpush.msra.mxu0 0.0
        %5468 = vmatpush.msra.mxu0 0.0
        %5469 = vmatpush.msra.mxu0 0.0
        %5470 = vmatpush.msra.mxu0 %v5358
        %5471 = vmatmul.f32.gmra.mxu0 %v5360
        %v5472 = vpop.f32.mrf.mxu0
        %v5473 = vadd.f32 0.0, %v5472
        %5474 = vmatmul.f32.gmra.mxu0 %v5363
        %v5475 = vpop.f32.mrf.mxu0
        %v5476 = vadd.f32 0.0, %v5475
        %5477 = vmatmul.f32.gmra.mxu0 %v5366
        %v5478 = vpop.f32.mrf.mxu0
        %v5479 = vadd.f32 0.0, %v5478
        %5480 = vmatmul.f32.gmra.mxu0 %v5369
        %v5481 = vpop.f32.mrf.mxu0
        %v5482 = vadd.f32 0.0, %v5481
        %5483 = vmatmul.f32.gmra.mxu0 %v5372
        %v5484 = vpop.f32.mrf.mxu0
        %v5485 = vadd.f32 0.0, %v5484
        %5486 = vmatmul.f32.gmra.mxu0 %v5375
        %v5487 = vpop.f32.mrf.mxu0
        %v5488 = vadd.f32 0.0, %v5487
        %5489 = vmatmul.f32.gmra.mxu0 %v5378
        %v5490 = vpop.f32.mrf.mxu0
        %v5491 = vadd.f32 0.0, %v5490
        %5492 = vmatmul.f32.gmra.mxu0 %v5381
        %v5493 = vpop.f32.mrf.mxu0
        %v5494 = vadd.f32 0.0, %v5493
        %5495 = vmatmul.f32.gmra.mxu0 %v5384
        %v5496 = vpop.f32.mrf.mxu0
        %v5497 = vadd.f32 0.0, %v5496
        %5498 = vmatmul.f32.gmra.mxu0 %v5387
        %v5499 = vpop.f32.mrf.mxu0
        %v5500 = vadd.f32 0.0, %v5499
        %5501 = vmatmul.f32.gmra.mxu0 %v5390
        %v5502 = vpop.f32.mrf.mxu0
        %v5503 = vadd.f32 0.0, %v5502
        %5504 = vmatmul.f32.gmra.mxu0 %v5393
        %v5505 = vpop.f32.mrf.mxu0
        %v5506 = vadd.f32 0.0, %v5505
        %5507 = vmatmul.f32.gmra.mxu0 %v5396
        %v5508 = vpop.f32.mrf.mxu0
        %v5509 = vadd.f32 0.0, %v5508
        %5510 = vmatmul.f32.gmra.mxu0 %v5399
        %v5511 = vpop.f32.mrf.mxu0
        %v5512 = vadd.f32 0.0, %v5511
        %5513 = vmatmul.f32.gmra.mxu0 %v5402
        %v5514 = vpop.f32.mrf.mxu0
        %v5515 = vadd.f32 0.0, %v5514
        %5516 = vmatmul.f32.gmra.mxu0 %v5405
        %v5517 = vpop.f32.mrf.mxu0
        %v5518 = vadd.f32 0.0, %v5517
        %5519 = vmatmul.f32.gmra.mxu0 %v5408
        %v5520 = vpop.f32.mrf.mxu0
        %v5521 = vadd.f32 0.0, %v5520
        %5522 = vmatmul.f32.gmra.mxu0 %v5411
        %v5523 = vpop.f32.mrf.mxu0
        %v5524 = vadd.f32 0.0, %v5523
        %5525 = vmatmul.f32.gmra.mxu0 %v5414
        %v5526 = vpop.f32.mrf.mxu0
        %v5527 = vadd.f32 0.0, %v5526
        %5528 = vmatmul.f32.gmra.mxu0 %v5417
        %v5529 = vpop.f32.mrf.mxu0
        %v5530 = vadd.f32 0.0, %v5529
        %5531 = vmatmul.f32.gmra.mxu0 %v5420
        %v5532 = vpop.f32.mrf.mxu0
        %v5533 = vadd.f32 0.0, %v5532
        %5534 = vmatmul.f32.gmra.mxu0 %v5423
        %v5535 = vpop.f32.mrf.mxu0
        %v5536 = vadd.f32 0.0, %v5535
        %5537 = vmatmul.f32.gmra.mxu0 %v5426
        %v5538 = vpop.f32.mrf.mxu0
        %v5539 = vadd.f32 0.0, %v5538
        %5540 = vmatmul.f32.gmra.mxu0 %v5429
        %v5541 = vpop.f32.mrf.mxu0
        %v5542 = vadd.f32 0.0, %v5541
        %5543 = vmatmul.f32.gmra.mxu0 %v5432
        %v5544 = vpop.f32.mrf.mxu0
        %v5545 = vadd.f32 0.0, %v5544
        %5546 = vmatmul.f32.gmra.mxu0 %v5435
        %v5547 = vpop.f32.mrf.mxu0
        %v5548 = vadd.f32 0.0, %v5547
        %5549 = vmatmul.f32.gmra.mxu0 %v5438
        %v5550 = vpop.f32.mrf.mxu0
        %v5551 = vadd.f32 0.0, %v5550
        %5552 = vmatmul.f32.gmra.mxu0 %v5441
        %v5553 = vpop.f32.mrf.mxu0
        %v5554 = vadd.f32 0.0, %v5553
        %5555 = vmatmul.f32.gmra.mxu0 %v5444
        %v5556 = vpop.f32.mrf.mxu0
        %v5557 = vadd.f32 0.0, %v5556
        %5558 = vmatmul.f32.gmra.mxu0 %v5447
        %v5559 = vpop.f32.mrf.mxu0
        %v5560 = vadd.f32 0.0, %v5559
        %5561 = vmatmul.f32.gmra.mxu0 %v5450
        %v5562 = vpop.f32.mrf.mxu0
        %v5563 = vadd.f32 0.0, %v5562
        %5564 = vmatmul.f32.gmra.mxu0 %v5453
        %v5565 = vpop.f32.mrf.mxu0
        %v5566 = vadd.f32 0.0, %v5565
        %5567 = vdwg.mxu0
        %v5568 = vadd.f32 %v5261, %v5473
        %v5569 = vadd.f32 %v5262, %v5476
        %v5570 = vadd.f32 %v5263, %v5479
        %v5571 = vadd.f32 %v5264, %v5482
        %v5572 = vadd.f32 %v5265, %v5485
        %v5573 = vadd.f32 %v5266, %v5488
        %v5574 = vadd.f32 %v5267, %v5491
        %v5575 = vadd.f32 %v5268, %v5494
        %v5576 = vadd.f32 %v5269, %v5497
        %v5577 = vadd.f32 %v5270, %v5500
        %v5578 = vadd.f32 %v5271, %v5503
        %v5579 = vadd.f32 %v5272, %v5506
        %v5580 = vadd.f32 %v5273, %v5509
        %v5581 = vadd.f32 %v5274, %v5512
        %v5582 = vadd.f32 %v5275, %v5515
        %v5583 = vadd.f32 %v5276, %v5518
        %v5584 = vadd.f32 %v5277, %v5521
        %v5585 = vadd.f32 %v5278, %v5524
        %v5586 = vadd.f32 %v5279, %v5527
        %v5587 = vadd.f32 %v5280, %v5530
        %v5588 = vadd.f32 %v5281, %v5533
        %v5589 = vadd.f32 %v5282, %v5536
        %v5590 = vadd.f32 %v5283, %v5539
        %v5591 = vadd.f32 %v5284, %v5542
        %v5592 = vadd.f32 %v5285, %v5545
        %v5593 = vadd.f32 %v5286, %v5548
        %v5594 = vadd.f32 %v5287, %v5551
        %v5595 = vadd.f32 %v5288, %v5554
        %v5596 = vadd.f32 %v5289, %v5557
        %v5597 = vadd.f32 %v5290, %v5560
        %v5598 = vadd.f32 %v5291, %v5563
        %v5599 = vadd.f32 %v5292, %v5566
        %v5600 = vld [vmem:[#allocation2 + $0x21] sm:$0xff]
        %v5601 = vld [vmem:[#allocation2 + $0x29] sm:$0xff]
        %v5602 = vld [vmem:[#allocation2 + $0x31] sm:$0xff]
        %v5603 = vld [vmem:[#allocation2 + $0x39] sm:$0xff]
        %v5604 = vld [vmem:[#allocation2 + $0x41] sm:$0xff]
        %v5605 = vld [vmem:[#allocation2 + $0x49] sm:$0xff]
        %v5606 = vld [vmem:[#allocation2 + $0x51] sm:$0xff]
        %v5607 = vld [vmem:[#allocation2 + $0x59] sm:$0xff]
        %v5608 = vld [vmem:[#allocation2 + $0x61] sm:$0xff]
        %v5609 = vld [vmem:[#allocation2 + $0x69] sm:$0xff]
        %v5610 = vld [vmem:[#allocation2 + $0x71] sm:$0xff]
        %v5611 = vld [vmem:[#allocation2 + $0x79] sm:$0xff]
        %v5612 = vld [vmem:[#allocation2 + $0x81] sm:$0xff]
        %v5613 = vld [vmem:[#allocation2 + $0x89] sm:$0xff]
        %v5614 = vld [vmem:[#allocation2 + $0x91] sm:$0xff]
        %v5615 = vld [vmem:[#allocation2 + $0x99] sm:$0xff]
        %v5616 = vld [vmem:[#allocation2 + $0xa1] sm:$0xff]
        %v5617 = vld [vmem:[#allocation2 + $0xa9] sm:$0xff]
        %v5618 = vld [vmem:[#allocation2 + $0xb1] sm:$0xff]
        %v5619 = vld [vmem:[#allocation2 + $0xb9] sm:$0xff]
        %v5620 = vld [vmem:[#allocation2 + $0xc1] sm:$0xff]
        %v5621 = vld [vmem:[#allocation2 + $0xc9] sm:$0xff]
        %v5622 = vld [vmem:[#allocation2 + $0xd1] sm:$0xff]
        %v5623 = vld [vmem:[#allocation2 + $0xd9] sm:$0xff]
        %v5624 = vld [vmem:[#allocation2 + $0xe1] sm:$0xff]
        %v5625 = vld [vmem:[#allocation2 + $0xe9] sm:$0xff]
        %v5626 = vld [vmem:[#allocation2 + $0xf1] sm:$0xff]
        %v5627 = vld [vmem:[#allocation2 + $0xf9] sm:$0xff]
        %v5628 = vld [vmem:[#allocation2 + $0x101] sm:$0xff]
        %v5629 = vld [vmem:[#allocation2 + $0x109] sm:$0xff]
        %v5630 = vld [vmem:[#allocation2 + $0x111] sm:$0xff]
        %v5631 = vld [vmem:[#allocation2 + $0x119] sm:$0xff]
        %s5632 = scalar_lea.vmem %s5, 56
        %v5633 = vld [vmem:[%s5632] sm:$0xff]
        %v5635 = vsel %vm3509, %v5600, 0
        %v5638 = vsel %vm3509, %v5601, 0
        %v5641 = vsel %vm3509, %v5602, 0
        %v5644 = vsel %vm3509, %v5603, 0
        %v5647 = vsel %vm3509, %v5604, 0
        %v5650 = vsel %vm3509, %v5605, 0
        %v5653 = vsel %vm3509, %v5606, 0
        %v5656 = vsel %vm3509, %v5607, 0
        %v5659 = vsel %vm3509, %v5608, 0
        %v5662 = vsel %vm3509, %v5609, 0
        %v5665 = vsel %vm3509, %v5610, 0
        %v5668 = vsel %vm3509, %v5611, 0
        %v5671 = vsel %vm3509, %v5612, 0
        %v5674 = vsel %vm3509, %v5613, 0
        %v5677 = vsel %vm3509, %v5614, 0
        %v5680 = vsel %vm3509, %v5615, 0
        %v5683 = vsel %vm3509, %v5616, 0
        %v5686 = vsel %vm3509, %v5617, 0
        %v5689 = vsel %vm3509, %v5618, 0
        %v5692 = vsel %vm3509, %v5619, 0
        %v5695 = vsel %vm3509, %v5620, 0
        %v5698 = vsel %vm3509, %v5621, 0
        %v5701 = vsel %vm3509, %v5622, 0
        %v5704 = vsel %vm3509, %v5623, 0
        %v5707 = vsel %vm3509, %v5624, 0
        %v5710 = vsel %vm3509, %v5625, 0
        %v5713 = vsel %vm3509, %v5626, 0
        %v5716 = vsel %vm3509, %v5627, 0
        %v5719 = vsel %vm3509, %v5628, 0
        %v5722 = vsel %vm3509, %v5629, 0
        %v5725 = vsel %vm3509, %v5630, 0
        %v5728 = vsel %vm3509, %v5631, 0
        %5730 = vmatpush.msra.mxu0 0.0
        %5731 = vmatpush.msra.mxu0 0.0
        %5732 = vmatpush.msra.mxu0 0.0
        %5733 = vmatpush.msra.mxu0 0.0
        %5734 = vmatpush.msra.mxu0 0.0
        %5735 = vmatpush.msra.mxu0 0.0
        %5736 = vmatpush.msra.mxu0 0.0
        %5737 = vmatpush.msra.mxu0 0.0
        %5738 = vmatpush.msra.mxu0 0.0
        %5739 = vmatpush.msra.mxu0 0.0
        %5740 = vmatpush.msra.mxu0 0.0
        %5741 = vmatpush.msra.mxu0 0.0
        %5742 = vmatpush.msra.mxu0 0.0
        %5743 = vmatpush.msra.mxu0 0.0
        %5744 = vmatpush.msra.mxu0 0.0
        %5745 = vmatpush.msra.mxu0 %v5633
        %5746 = vmatmul.f32.gmra.mxu0 %v5635
        %v5747 = vpop.f32.mrf.mxu0
        %v5748 = vadd.f32 0.0, %v5747
        %5749 = vmatmul.f32.gmra.mxu0 %v5638
        %v5750 = vpop.f32.mrf.mxu0
        %v5751 = vadd.f32 0.0, %v5750
        %5752 = vmatmul.f32.gmra.mxu0 %v5641
        %v5753 = vpop.f32.mrf.mxu0
        %v5754 = vadd.f32 0.0, %v5753
        %5755 = vmatmul.f32.gmra.mxu0 %v5644
        %v5756 = vpop.f32.mrf.mxu0
        %v5757 = vadd.f32 0.0, %v5756
        %5758 = vmatmul.f32.gmra.mxu0 %v5647
        %v5759 = vpop.f32.mrf.mxu0
        %v5760 = vadd.f32 0.0, %v5759
        %5761 = vmatmul.f32.gmra.mxu0 %v5650
        %v5762 = vpop.f32.mrf.mxu0
        %v5763 = vadd.f32 0.0, %v5762
        %5764 = vmatmul.f32.gmra.mxu0 %v5653
        %v5765 = vpop.f32.mrf.mxu0
        %v5766 = vadd.f32 0.0, %v5765
        %5767 = vmatmul.f32.gmra.mxu0 %v5656
        %v5768 = vpop.f32.mrf.mxu0
        %v5769 = vadd.f32 0.0, %v5768
        %5770 = vmatmul.f32.gmra.mxu0 %v5659
        %v5771 = vpop.f32.mrf.mxu0
        %v5772 = vadd.f32 0.0, %v5771
        %5773 = vmatmul.f32.gmra.mxu0 %v5662
        %v5774 = vpop.f32.mrf.mxu0
        %v5775 = vadd.f32 0.0, %v5774
        %5776 = vmatmul.f32.gmra.mxu0 %v5665
        %v5777 = vpop.f32.mrf.mxu0
        %v5778 = vadd.f32 0.0, %v5777
        %5779 = vmatmul.f32.gmra.mxu0 %v5668
        %v5780 = vpop.f32.mrf.mxu0
        %v5781 = vadd.f32 0.0, %v5780
        %5782 = vmatmul.f32.gmra.mxu0 %v5671
        %v5783 = vpop.f32.mrf.mxu0
        %v5784 = vadd.f32 0.0, %v5783
        %5785 = vmatmul.f32.gmra.mxu0 %v5674
        %v5786 = vpop.f32.mrf.mxu0
        %v5787 = vadd.f32 0.0, %v5786
        %5788 = vmatmul.f32.gmra.mxu0 %v5677
        %v5789 = vpop.f32.mrf.mxu0
        %v5790 = vadd.f32 0.0, %v5789
        %5791 = vmatmul.f32.gmra.mxu0 %v5680
        %v5792 = vpop.f32.mrf.mxu0
        %v5793 = vadd.f32 0.0, %v5792
        %5794 = vmatmul.f32.gmra.mxu0 %v5683
        %v5795 = vpop.f32.mrf.mxu0
        %v5796 = vadd.f32 0.0, %v5795
        %5797 = vmatmul.f32.gmra.mxu0 %v5686
        %v5798 = vpop.f32.mrf.mxu0
        %v5799 = vadd.f32 0.0, %v5798
        %5800 = vmatmul.f32.gmra.mxu0 %v5689
        %v5801 = vpop.f32.mrf.mxu0
        %v5802 = vadd.f32 0.0, %v5801
        %5803 = vmatmul.f32.gmra.mxu0 %v5692
        %v5804 = vpop.f32.mrf.mxu0
        %v5805 = vadd.f32 0.0, %v5804
        %5806 = vmatmul.f32.gmra.mxu0 %v5695
        %v5807 = vpop.f32.mrf.mxu0
        %v5808 = vadd.f32 0.0, %v5807
        %5809 = vmatmul.f32.gmra.mxu0 %v5698
        %v5810 = vpop.f32.mrf.mxu0
        %v5811 = vadd.f32 0.0, %v5810
        %5812 = vmatmul.f32.gmra.mxu0 %v5701
        %v5813 = vpop.f32.mrf.mxu0
        %v5814 = vadd.f32 0.0, %v5813
        %5815 = vmatmul.f32.gmra.mxu0 %v5704
        %v5816 = vpop.f32.mrf.mxu0
        %v5817 = vadd.f32 0.0, %v5816
        %5818 = vmatmul.f32.gmra.mxu0 %v5707
        %v5819 = vpop.f32.mrf.mxu0
        %v5820 = vadd.f32 0.0, %v5819
        %5821 = vmatmul.f32.gmra.mxu0 %v5710
        %v5822 = vpop.f32.mrf.mxu0
        %v5823 = vadd.f32 0.0, %v5822
        %5824 = vmatmul.f32.gmra.mxu0 %v5713
        %v5825 = vpop.f32.mrf.mxu0
        %v5826 = vadd.f32 0.0, %v5825
        %5827 = vmatmul.f32.gmra.mxu0 %v5716
        %v5828 = vpop.f32.mrf.mxu0
        %v5829 = vadd.f32 0.0, %v5828
        %5830 = vmatmul.f32.gmra.mxu0 %v5719
        %v5831 = vpop.f32.mrf.mxu0
        %v5832 = vadd.f32 0.0, %v5831
        %5833 = vmatmul.f32.gmra.mxu0 %v5722
        %v5834 = vpop.f32.mrf.mxu0
        %v5835 = vadd.f32 0.0, %v5834
        %5836 = vmatmul.f32.gmra.mxu0 %v5725
        %v5837 = vpop.f32.mrf.mxu0
        %v5838 = vadd.f32 0.0, %v5837
        %5839 = vmatmul.f32.gmra.mxu0 %v5728
        %v5840 = vpop.f32.mrf.mxu0
        %v5841 = vadd.f32 0.0, %v5840
        %5842 = vdwg.mxu0
        %v5843 = vadd.f32 %v5568, %v5748
        %v5844 = vadd.f32 %v5569, %v5751
        %v5845 = vadd.f32 %v5570, %v5754
        %v5846 = vadd.f32 %v5571, %v5757
        %v5847 = vadd.f32 %v5572, %v5760
        %v5848 = vadd.f32 %v5573, %v5763
        %v5849 = vadd.f32 %v5574, %v5766
        %v5850 = vadd.f32 %v5575, %v5769
        %v5851 = vadd.f32 %v5576, %v5772
        %v5852 = vadd.f32 %v5577, %v5775
        %v5853 = vadd.f32 %v5578, %v5778
        %v5854 = vadd.f32 %v5579, %v5781
        %v5855 = vadd.f32 %v5580, %v5784
        %v5856 = vadd.f32 %v5581, %v5787
        %v5857 = vadd.f32 %v5582, %v5790
        %v5858 = vadd.f32 %v5583, %v5793
        %v5859 = vadd.f32 %v5584, %v5796
        %v5860 = vadd.f32 %v5585, %v5799
        %v5861 = vadd.f32 %v5586, %v5802
        %v5862 = vadd.f32 %v5587, %v5805
        %v5863 = vadd.f32 %v5588, %v5808
        %v5864 = vadd.f32 %v5589, %v5811
        %v5865 = vadd.f32 %v5590, %v5814
        %v5866 = vadd.f32 %v5591, %v5817
        %v5867 = vadd.f32 %v5592, %v5820
        %v5868 = vadd.f32 %v5593, %v5823
        %v5869 = vadd.f32 %v5594, %v5826
        %v5870 = vadd.f32 %v5595, %v5829
        %v5871 = vadd.f32 %v5596, %v5832
        %v5872 = vadd.f32 %v5597, %v5835
        %v5873 = vadd.f32 %v5598, %v5838
        %v5874 = vadd.f32 %v5599, %v5841
        %v5875 = vld [vmem:[#allocation2 + $0x22] sm:$0xff]
        %v5876 = vld [vmem:[#allocation2 + $0x2a] sm:$0xff]
        %v5877 = vld [vmem:[#allocation2 + $0x32] sm:$0xff]
        %v5878 = vld [vmem:[#allocation2 + $0x3a] sm:$0xff]
        %v5879 = vld [vmem:[#allocation2 + $0x42] sm:$0xff]
        %v5880 = vld [vmem:[#allocation2 + $0x4a] sm:$0xff]
        %v5881 = vld [vmem:[#allocation2 + $0x52] sm:$0xff]
        %v5882 = vld [vmem:[#allocation2 + $0x5a] sm:$0xff]
        %v5883 = vld [vmem:[#allocation2 + $0x62] sm:$0xff]
        %v5884 = vld [vmem:[#allocation2 + $0x6a] sm:$0xff]
        %v5885 = vld [vmem:[#allocation2 + $0x72] sm:$0xff]
        %v5886 = vld [vmem:[#allocation2 + $0x7a] sm:$0xff]
        %v5887 = vld [vmem:[#allocation2 + $0x82] sm:$0xff]
        %v5888 = vld [vmem:[#allocation2 + $0x8a] sm:$0xff]
        %v5889 = vld [vmem:[#allocation2 + $0x92] sm:$0xff]
        %v5890 = vld [vmem:[#allocation2 + $0x9a] sm:$0xff]
        %v5891 = vld [vmem:[#allocation2 + $0xa2] sm:$0xff]
        %v5892 = vld [vmem:[#allocation2 + $0xaa] sm:$0xff]
        %v5893 = vld [vmem:[#allocation2 + $0xb2] sm:$0xff]
        %v5894 = vld [vmem:[#allocation2 + $0xba] sm:$0xff]
        %v5895 = vld [vmem:[#allocation2 + $0xc2] sm:$0xff]
        %v5896 = vld [vmem:[#allocation2 + $0xca] sm:$0xff]
        %v5897 = vld [vmem:[#allocation2 + $0xd2] sm:$0xff]
        %v5898 = vld [vmem:[#allocation2 + $0xda] sm:$0xff]
        %v5899 = vld [vmem:[#allocation2 + $0xe2] sm:$0xff]
        %v5900 = vld [vmem:[#allocation2 + $0xea] sm:$0xff]
        %v5901 = vld [vmem:[#allocation2 + $0xf2] sm:$0xff]
        %v5902 = vld [vmem:[#allocation2 + $0xfa] sm:$0xff]
        %v5903 = vld [vmem:[#allocation2 + $0x102] sm:$0xff]
        %v5904 = vld [vmem:[#allocation2 + $0x10a] sm:$0xff]
        %v5905 = vld [vmem:[#allocation2 + $0x112] sm:$0xff]
        %v5906 = vld [vmem:[#allocation2 + $0x11a] sm:$0xff]
        %v5907 = vmul.f32 %v5875, %v1210
        %v5908 = vmul.f32 %v5876, %v1215
        %v5909 = vmul.f32 %v5877, %v1220
        %v5910 = vmul.f32 %v5878, %v1225
        %v5911 = vmul.f32 %v5879, %v1230
        %v5912 = vmul.f32 %v5880, %v1235
        %v5913 = vmul.f32 %v5881, %v1240
        %v5914 = vmul.f32 %v5882, %v1245
        %v5915 = vmul.f32 %v5883, %v1250
        %v5916 = vmul.f32 %v5884, %v1255
        %v5917 = vmul.f32 %v5885, %v1260
        %v5918 = vmul.f32 %v5886, %v1265
        %v5919 = vmul.f32 %v5887, %v1270
        %v5920 = vmul.f32 %v5888, %v1275
        %v5921 = vmul.f32 %v5889, %v1280
        %v5922 = vmul.f32 %v5890, %v1285
        %v5923 = vmul.f32 %v5891, %v1290
        %v5924 = vmul.f32 %v5892, %v1295
        %v5925 = vmul.f32 %v5893, %v1300
        %v5926 = vmul.f32 %v5894, %v1305
        %v5927 = vmul.f32 %v5895, %v1310
        %v5928 = vmul.f32 %v5896, %v1315
        %v5929 = vmul.f32 %v5897, %v1320
        %v5930 = vmul.f32 %v5898, %v1325
        %v5931 = vmul.f32 %v5899, %v1330
        %v5932 = vmul.f32 %v5900, %v1335
        %v5933 = vmul.f32 %v5901, %v1340
        %v5934 = vmul.f32 %v5902, %v1345
        %v5935 = vmul.f32 %v5903, %v1350
        %v5936 = vmul.f32 %v5904, %v1355
        %v5937 = vmul.f32 %v5905, %v1360
        %v5938 = vmul.f32 %v5906, %v1365
        %s5939 = scalar_lea.vmem %s5, 64
        %v5940 = vld [vmem:[%s5939] sm:$0xff]
        %v5942 = vsel %vm3509, %v5907, 0
        %v5945 = vsel %vm3509, %v5908, 0
        %v5948 = vsel %vm3509, %v5909, 0
        %v5951 = vsel %vm3509, %v5910, 0
        %v5954 = vsel %vm3509, %v5911, 0
        %v5957 = vsel %vm3509, %v5912, 0
        %v5960 = vsel %vm3509, %v5913, 0
        %v5963 = vsel %vm3509, %v5914, 0
        %v5966 = vsel %vm3509, %v5915, 0
        %v5969 = vsel %vm3509, %v5916, 0
        %v5972 = vsel %vm3509, %v5917, 0
        %v5975 = vsel %vm3509, %v5918, 0
        %v5978 = vsel %vm3509, %v5919, 0
        %v5981 = vsel %vm3509, %v5920, 0
        %v5984 = vsel %vm3509, %v5921, 0
        %v5987 = vsel %vm3509, %v5922, 0
        %v5990 = vsel %vm3509, %v5923, 0
        %v5993 = vsel %vm3509, %v5924, 0
        %v5996 = vsel %vm3509, %v5925, 0
        %v5999 = vsel %vm3509, %v5926, 0
        %v6002 = vsel %vm3509, %v5927, 0
        %v6005 = vsel %vm3509, %v5928, 0
        %v6008 = vsel %vm3509, %v5929, 0
        %v6011 = vsel %vm3509, %v5930, 0
        %v6014 = vsel %vm3509, %v5931, 0
        %v6017 = vsel %vm3509, %v5932, 0
        %v6020 = vsel %vm3509, %v5933, 0
        %v6023 = vsel %vm3509, %v5934, 0
        %v6026 = vsel %vm3509, %v5935, 0
        %v6029 = vsel %vm3509, %v5936, 0
        %v6032 = vsel %vm3509, %v5937, 0
        %v6035 = vsel %vm3509, %v5938, 0
        %6037 = vmatpush.msra.mxu0 0.0
        %6038 = vmatpush.msra.mxu0 0.0
        %6039 = vmatpush.msra.mxu0 0.0
        %6040 = vmatpush.msra.mxu0 0.0
        %6041 = vmatpush.msra.mxu0 0.0
        %6042 = vmatpush.msra.mxu0 0.0
        %6043 = vmatpush.msra.mxu0 0.0
        %6044 = vmatpush.msra.mxu0 0.0
        %6045 = vmatpush.msra.mxu0 0.0
        %6046 = vmatpush.msra.mxu0 0.0
        %6047 = vmatpush.msra.mxu0 0.0
        %6048 = vmatpush.msra.mxu0 0.0
        %6049 = vmatpush.msra.mxu0 0.0
        %6050 = vmatpush.msra.mxu0 0.0
        %6051 = vmatpush.msra.mxu0 0.0
        %6052 = vmatpush.msra.mxu0 %v5940
        %6053 = vmatmul.f32.gmra.mxu0 %v5942
        %v6054 = vpop.f32.mrf.mxu0
        %v6055 = vadd.f32 0.0, %v6054
        %6056 = vmatmul.f32.gmra.mxu0 %v5945
        %v6057 = vpop.f32.mrf.mxu0
        %v6058 = vadd.f32 0.0, %v6057
        %6059 = vmatmul.f32.gmra.mxu0 %v5948
        %v6060 = vpop.f32.mrf.mxu0
        %v6061 = vadd.f32 0.0, %v6060
        %6062 = vmatmul.f32.gmra.mxu0 %v5951
        %v6063 = vpop.f32.mrf.mxu0
        %v6064 = vadd.f32 0.0, %v6063
        %6065 = vmatmul.f32.gmra.mxu0 %v5954
        %v6066 = vpop.f32.mrf.mxu0
        %v6067 = vadd.f32 0.0, %v6066
        %6068 = vmatmul.f32.gmra.mxu0 %v5957
        %v6069 = vpop.f32.mrf.mxu0
        %v6070 = vadd.f32 0.0, %v6069
        %6071 = vmatmul.f32.gmra.mxu0 %v5960
        %v6072 = vpop.f32.mrf.mxu0
        %v6073 = vadd.f32 0.0, %v6072
        %6074 = vmatmul.f32.gmra.mxu0 %v5963
        %v6075 = vpop.f32.mrf.mxu0
        %v6076 = vadd.f32 0.0, %v6075
        %6077 = vmatmul.f32.gmra.mxu0 %v5966
        %v6078 = vpop.f32.mrf.mxu0
        %v6079 = vadd.f32 0.0, %v6078
        %6080 = vmatmul.f32.gmra.mxu0 %v5969
        %v6081 = vpop.f32.mrf.mxu0
        %v6082 = vadd.f32 0.0, %v6081
        %6083 = vmatmul.f32.gmra.mxu0 %v5972
        %v6084 = vpop.f32.mrf.mxu0
        %v6085 = vadd.f32 0.0, %v6084
        %6086 = vmatmul.f32.gmra.mxu0 %v5975
        %v6087 = vpop.f32.mrf.mxu0
        %v6088 = vadd.f32 0.0, %v6087
        %6089 = vmatmul.f32.gmra.mxu0 %v5978
        %v6090 = vpop.f32.mrf.mxu0
        %v6091 = vadd.f32 0.0, %v6090
        %6092 = vmatmul.f32.gmra.mxu0 %v5981
        %v6093 = vpop.f32.mrf.mxu0
        %v6094 = vadd.f32 0.0, %v6093
        %6095 = vmatmul.f32.gmra.mxu0 %v5984
        %v6096 = vpop.f32.mrf.mxu0
        %v6097 = vadd.f32 0.0, %v6096
        %6098 = vmatmul.f32.gmra.mxu0 %v5987
        %v6099 = vpop.f32.mrf.mxu0
        %v6100 = vadd.f32 0.0, %v6099
        %6101 = vmatmul.f32.gmra.mxu0 %v5990
        %v6102 = vpop.f32.mrf.mxu0
        %v6103 = vadd.f32 0.0, %v6102
        %6104 = vmatmul.f32.gmra.mxu0 %v5993
        %v6105 = vpop.f32.mrf.mxu0
        %v6106 = vadd.f32 0.0, %v6105
        %6107 = vmatmul.f32.gmra.mxu0 %v5996
        %v6108 = vpop.f32.mrf.mxu0
        %v6109 = vadd.f32 0.0, %v6108
        %6110 = vmatmul.f32.gmra.mxu0 %v5999
        %v6111 = vpop.f32.mrf.mxu0
        %v6112 = vadd.f32 0.0, %v6111
        %6113 = vmatmul.f32.gmra.mxu0 %v6002
        %v6114 = vpop.f32.mrf.mxu0
        %v6115 = vadd.f32 0.0, %v6114
        %6116 = vmatmul.f32.gmra.mxu0 %v6005
        %v6117 = vpop.f32.mrf.mxu0
        %v6118 = vadd.f32 0.0, %v6117
        %6119 = vmatmul.f32.gmra.mxu0 %v6008
        %v6120 = vpop.f32.mrf.mxu0
        %v6121 = vadd.f32 0.0, %v6120
        %6122 = vmatmul.f32.gmra.mxu0 %v6011
        %v6123 = vpop.f32.mrf.mxu0
        %v6124 = vadd.f32 0.0, %v6123
        %6125 = vmatmul.f32.gmra.mxu0 %v6014
        %v6126 = vpop.f32.mrf.mxu0
        %v6127 = vadd.f32 0.0, %v6126
        %6128 = vmatmul.f32.gmra.mxu0 %v6017
        %v6129 = vpop.f32.mrf.mxu0
        %v6130 = vadd.f32 0.0, %v6129
        %6131 = vmatmul.f32.gmra.mxu0 %v6020
        %v6132 = vpop.f32.mrf.mxu0
        %v6133 = vadd.f32 0.0, %v6132
        %6134 = vmatmul.f32.gmra.mxu0 %v6023
        %v6135 = vpop.f32.mrf.mxu0
        %v6136 = vadd.f32 0.0, %v6135
        %6137 = vmatmul.f32.gmra.mxu0 %v6026
        %v6138 = vpop.f32.mrf.mxu0
        %v6139 = vadd.f32 0.0, %v6138
        %6140 = vmatmul.f32.gmra.mxu0 %v6029
        %v6141 = vpop.f32.mrf.mxu0
        %v6142 = vadd.f32 0.0, %v6141
        %6143 = vmatmul.f32.gmra.mxu0 %v6032
        %v6144 = vpop.f32.mrf.mxu0
        %v6145 = vadd.f32 0.0, %v6144
        %6146 = vmatmul.f32.gmra.mxu0 %v6035
        %v6147 = vpop.f32.mrf.mxu0
        %v6148 = vadd.f32 0.0, %v6147
        %6149 = vdwg.mxu0
        %v6150 = vadd.f32 %v5843, %v6055
        %v6151 = vadd.f32 %v5844, %v6058
        %v6152 = vadd.f32 %v5845, %v6061
        %v6153 = vadd.f32 %v5846, %v6064
        %v6154 = vadd.f32 %v5847, %v6067
        %v6155 = vadd.f32 %v5848, %v6070
        %v6156 = vadd.f32 %v5849, %v6073
        %v6157 = vadd.f32 %v5850, %v6076
        %v6158 = vadd.f32 %v5851, %v6079
        %v6159 = vadd.f32 %v5852, %v6082
        %v6160 = vadd.f32 %v5853, %v6085
        %v6161 = vadd.f32 %v5854, %v6088
        %v6162 = vadd.f32 %v5855, %v6091
        %v6163 = vadd.f32 %v5856, %v6094
        %v6164 = vadd.f32 %v5857, %v6097
        %v6165 = vadd.f32 %v5858, %v6100
        %v6166 = vadd.f32 %v5859, %v6103
        %v6167 = vadd.f32 %v5860, %v6106
        %v6168 = vadd.f32 %v5861, %v6109
        %v6169 = vadd.f32 %v5862, %v6112
        %v6170 = vadd.f32 %v5863, %v6115
        %v6171 = vadd.f32 %v5864, %v6118
        %v6172 = vadd.f32 %v5865, %v6121
        %v6173 = vadd.f32 %v5866, %v6124
        %v6174 = vadd.f32 %v5867, %v6127
        %v6175 = vadd.f32 %v5868, %v6130
        %v6176 = vadd.f32 %v5869, %v6133
        %v6177 = vadd.f32 %v5870, %v6136
        %v6178 = vadd.f32 %v5871, %v6139
        %v6179 = vadd.f32 %v5872, %v6142
        %v6180 = vadd.f32 %v5873, %v6145
        %v6181 = vadd.f32 %v5874, %v6148
        %v6182 = vld [vmem:[#allocation4] sm:$0x1]
        %v6184 = vperm.slane %v6182, 0
        %v6186 = vadd.f32 %v6150, %v6184
        %v6187 = vadd.f32 %v6151, %v6184
        %v6188 = vadd.f32 %v6152, %v6184
        %v6189 = vadd.f32 %v6153, %v6184
        %v6190 = vadd.f32 %v6154, %v6184
        %v6191 = vadd.f32 %v6155, %v6184
        %v6192 = vadd.f32 %v6156, %v6184
        %v6193 = vadd.f32 %v6157, %v6184
        %v6194 = vadd.f32 %v6158, %v6184
        %v6195 = vadd.f32 %v6159, %v6184
        %v6196 = vadd.f32 %v6160, %v6184
        %v6197 = vadd.f32 %v6161, %v6184
        %v6198 = vadd.f32 %v6162, %v6184
        %v6199 = vadd.f32 %v6163, %v6184
        %v6200 = vadd.f32 %v6164, %v6184
        %v6201 = vadd.f32 %v6165, %v6184
        %v6202 = vadd.f32 %v6166, %v6184
        %v6203 = vadd.f32 %v6167, %v6184
        %v6204 = vadd.f32 %v6168, %v6184
        %v6205 = vadd.f32 %v6169, %v6184
        %v6206 = vadd.f32 %v6170, %v6184
        %v6207 = vadd.f32 %v6171, %v6184
        %v6208 = vadd.f32 %v6172, %v6184
        %v6209 = vadd.f32 %v6173, %v6184
        %v6210 = vadd.f32 %v6174, %v6184
        %v6211 = vadd.f32 %v6175, %v6184
        %v6212 = vadd.f32 %v6176, %v6184
        %v6213 = vadd.f32 %v6177, %v6184
        %v6214 = vadd.f32 %v6178, %v6184
        %v6215 = vadd.f32 %v6179, %v6184
        %v6216 = vadd.f32 %v6180, %v6184
        %v6217 = vadd.f32 %v6181, %v6184
        %vm6218 = vcmask 7168
        %6219 = vst.msk [vmem:[%s425] sm:$0xff] %vm6218, %v6186
        %6220 = vst.msk [vmem:[%s425 + $0x8] sm:$0xff] %vm6218, %v6187
        %6221 = vst.msk [vmem:[%s425 + $0x10] sm:$0xff] %vm6218, %v6188
        %6222 = vst.msk [vmem:[%s425 + $0x18] sm:$0xff] %vm6218, %v6189
        %6223 = vst.msk [vmem:[%s425 + $0x20] sm:$0xff] %vm6218, %v6190
        %6224 = vst.msk [vmem:[%s425 + $0x28] sm:$0xff] %vm6218, %v6191
        %6225 = vst.msk [vmem:[%s425 + $0x30] sm:$0xff] %vm6218, %v6192
        %6226 = vst.msk [vmem:[%s425 + $0x38] sm:$0xff] %vm6218, %v6193
        %6227 = vst.msk [vmem:[%s425 + $0x40] sm:$0xff] %vm6218, %v6194
        %6228 = vst.msk [vmem:[%s425 + $0x48] sm:$0xff] %vm6218, %v6195
        %6229 = vst.msk [vmem:[%s425 + $0x50] sm:$0xff] %vm6218, %v6196
        %6230 = vst.msk [vmem:[%s425 + $0x58] sm:$0xff] %vm6218, %v6197
        %6231 = vst.msk [vmem:[%s425 + $0x60] sm:$0xff] %vm6218, %v6198
        %6232 = vst.msk [vmem:[%s425 + $0x68] sm:$0xff] %vm6218, %v6199
        %6233 = vst.msk [vmem:[%s425 + $0x70] sm:$0xff] %vm6218, %v6200
        %6234 = vst.msk [vmem:[%s425 + $0x78] sm:$0xff] %vm6218, %v6201
        %6235 = vst.msk [vmem:[%s425 + $0x80] sm:$0xff] %vm6218, %v6202
        %6236 = vst.msk [vmem:[%s425 + $0x88] sm:$0xff] %vm6218, %v6203
        %6237 = vst.msk [vmem:[%s425 + $0x90] sm:$0xff] %vm6218, %v6204
        %6238 = vst.msk [vmem:[%s425 + $0x98] sm:$0xff] %vm6218, %v6205
        %6239 = vst.msk [vmem:[%s425 + $0xa0] sm:$0xff] %vm6218, %v6206
        %6240 = vst.msk [vmem:[%s425 + $0xa8] sm:$0xff] %vm6218, %v6207
        %6241 = vst.msk [vmem:[%s425 + $0xb0] sm:$0xff] %vm6218, %v6208
        %6242 = vst.msk [vmem:[%s425 + $0xb8] sm:$0xff] %vm6218, %v6209
        %6243 = vst.msk [vmem:[%s425 + $0xc0] sm:$0xff] %vm6218, %v6210
        %6244 = vst.msk [vmem:[%s425 + $0xc8] sm:$0xff] %vm6218, %v6211
        %6245 = vst.msk [vmem:[%s425 + $0xd0] sm:$0xff] %vm6218, %v6212
        %6246 = vst.msk [vmem:[%s425 + $0xd8] sm:$0xff] %vm6218, %v6213
        %6247 = vst.msk [vmem:[%s425 + $0xe0] sm:$0xff] %vm6218, %v6214
        %6248 = vst.msk [vmem:[%s425 + $0xe8] sm:$0xff] %vm6218, %v6215
        %6249 = vst.msk [vmem:[%s425 + $0xf0] sm:$0xff] %vm6218, %v6216
        %6250 = vst.msk [vmem:[%s425 + $0xf8] sm:$0xff] %vm6218, %v6217
        %6251 = vst.msk [vmem:[#allocation3] sm:$0xff] %vm6218, 0.0
        %6252 = vst.msk [vmem:[#allocation3 + $0x8] sm:$0xff] %vm6218, 0.0
        %6253 = vst.msk [vmem:[#allocation3 + $0x10] sm:$0xff] %vm6218, 0.0
        %6254 = vst.msk [vmem:[#allocation3 + $0x18] sm:$0xff] %vm6218, 0.0
        %6255 = vst.msk [vmem:[#allocation3 + $0x20] sm:$0xff] %vm6218, 0.0
        %6256 = vst.msk [vmem:[#allocation3 + $0x28] sm:$0xff] %vm6218, 0.0
        %6257 = vst.msk [vmem:[#allocation3 + $0x30] sm:$0xff] %vm6218, 0.0
        %6258 = vst.msk [vmem:[#allocation3 + $0x38] sm:$0xff] %vm6218, 0.0
        %6259 = vst.msk [vmem:[#allocation3 + $0x40] sm:$0xff] %vm6218, 0.0
        %6260 = vst.msk [vmem:[#allocation3 + $0x48] sm:$0xff] %vm6218, 0.0
        %6261 = vst.msk [vmem:[#allocation3 + $0x50] sm:$0xff] %vm6218, 0.0
        %6262 = vst.msk [vmem:[#allocation3 + $0x58] sm:$0xff] %vm6218, 0.0
        %6263 = vst.msk [vmem:[#allocation3 + $0x60] sm:$0xff] %vm6218, 0.0
        %6264 = vst.msk [vmem:[#allocation3 + $0x68] sm:$0xff] %vm6218, 0.0
        %6265 = vst.msk [vmem:[#allocation3 + $0x70] sm:$0xff] %vm6218, 0.0
        %6266 = vst.msk [vmem:[#allocation3 + $0x78] sm:$0xff] %vm6218, 0.0
        %6267 = vst.msk [vmem:[#allocation3 + $0x80] sm:$0xff] %vm6218, 0.0
        %6268 = vst.msk [vmem:[#allocation3 + $0x88] sm:$0xff] %vm6218, 0.0
        %6269 = vst.msk [vmem:[#allocation3 + $0x90] sm:$0xff] %vm6218, 0.0
        %6270 = vst.msk [vmem:[#allocation3 + $0x98] sm:$0xff] %vm6218, 0.0
        %6271 = vst.msk [vmem:[#allocation3 + $0xa0] sm:$0xff] %vm6218, 0.0
        %6272 = vst.msk [vmem:[#allocation3 + $0xa8] sm:$0xff] %vm6218, 0.0
        %6273 = vst.msk [vmem:[#allocation3 + $0xb0] sm:$0xff] %vm6218, 0.0
        %6274 = vst.msk [vmem:[#allocation3 + $0xb8] sm:$0xff] %vm6218, 0.0
        %6275 = vst.msk [vmem:[#allocation3 + $0xc0] sm:$0xff] %vm6218, 0.0
        %6276 = vst.msk [vmem:[#allocation3 + $0xc8] sm:$0xff] %vm6218, 0.0
        %6277 = vst.msk [vmem:[#allocation3 + $0xd0] sm:$0xff] %vm6218, 0.0
        %6278 = vst.msk [vmem:[#allocation3 + $0xd8] sm:$0xff] %vm6218, 0.0
        %6279 = vst.msk [vmem:[#allocation3 + $0xe0] sm:$0xff] %vm6218, 0.0
        %6280 = vst.msk [vmem:[#allocation3 + $0xe8] sm:$0xff] %vm6218, 0.0
        %6281 = vst.msk [vmem:[#allocation3 + $0xf0] sm:$0xff] %vm6218, 0.0
        %6282 = vst.msk [vmem:[#allocation3 + $0xf8] sm:$0xff] %vm6218, 0.0
        %6283 = vst.msk [vmem:[#allocation3 + $0x100] sm:$0xff] %vm6218, 0.0
        %6284 = vst.msk [vmem:[#allocation3 + $0x108] sm:$0xff] %vm6218, 0.0
        %6285 = vst.msk [vmem:[#allocation3 + $0x110] sm:$0xff] %vm6218, 0.0
        %6286 = vst.msk [vmem:[#allocation3 + $0x118] sm:$0xff] %vm6218, 0.0
        %vm6287 = vcmask 1024
        %6288 = vst.msk [vmem:[#allocation3 + $0x120] sm:$0x3] %vm6287, 0.0
        %6289 = vst.msk [vmem:[#allocation3 + $0x11] sm:$0xff] %vm6218, %v6186
        %6290 = vst.msk [vmem:[#allocation3 + $0x19] sm:$0xff] %vm6218, %v6187
        %6291 = vst.msk [vmem:[#allocation3 + $0x21] sm:$0xff] %vm6218, %v6188
        %6292 = vst.msk [vmem:[#allocation3 + $0x29] sm:$0xff] %vm6218, %v6189
        %6293 = vst.msk [vmem:[#allocation3 + $0x31] sm:$0xff] %vm6218, %v6190
        %6294 = vst.msk [vmem:[#allocation3 + $0x39] sm:$0xff] %vm6218, %v6191
        %6295 = vst.msk [vmem:[#allocation3 + $0x41] sm:$0xff] %vm6218, %v6192
        %6296 = vst.msk [vmem:[#allocation3 + $0x49] sm:$0xff] %vm6218, %v6193
        %6297 = vst.msk [vmem:[#allocation3 + $0x51] sm:$0xff] %vm6218, %v6194
        %6298 = vst.msk [vmem:[#allocation3 + $0x59] sm:$0xff] %vm6218, %v6195
        %6299 = vst.msk [vmem:[#allocation3 + $0x61] sm:$0xff] %vm6218, %v6196
        %6300 = vst.msk [vmem:[#allocation3 + $0x69] sm:$0xff] %vm6218, %v6197
        %6301 = vst.msk [vmem:[#allocation3 + $0x71] sm:$0xff] %vm6218, %v6198
        %6302 = vst.msk [vmem:[#allocation3 + $0x79] sm:$0xff] %vm6218, %v6199
        %6303 = vst.msk [vmem:[#allocation3 + $0x81] sm:$0xff] %vm6218, %v6200
        %6304 = vst.msk [vmem:[#allocation3 + $0x89] sm:$0xff] %vm6218, %v6201
        %6305 = vst.msk [vmem:[#allocation3 + $0x91] sm:$0xff] %vm6218, %v6202
        %6306 = vst.msk [vmem:[#allocation3 + $0x99] sm:$0xff] %vm6218, %v6203
        %6307 = vst.msk [vmem:[#allocation3 + $0xa1] sm:$0xff] %vm6218, %v6204
        %6308 = vst.msk [vmem:[#allocation3 + $0xa9] sm:$0xff] %vm6218, %v6205
        %6309 = vst.msk [vmem:[#allocation3 + $0xb1] sm:$0xff] %vm6218, %v6206
        %6310 = vst.msk [vmem:[#allocation3 + $0xb9] sm:$0xff] %vm6218, %v6207
        %6311 = vst.msk [vmem:[#allocation3 + $0xc1] sm:$0xff] %vm6218, %v6208
        %6312 = vst.msk [vmem:[#allocation3 + $0xc9] sm:$0xff] %vm6218, %v6209
        %6313 = vst.msk [vmem:[#allocation3 + $0xd1] sm:$0xff] %vm6218, %v6210
        %6314 = vst.msk [vmem:[#allocation3 + $0xd9] sm:$0xff] %vm6218, %v6211
        %6315 = vst.msk [vmem:[#allocation3 + $0xe1] sm:$0xff] %vm6218, %v6212
        %6316 = vst.msk [vmem:[#allocation3 + $0xe9] sm:$0xff] %vm6218, %v6213
        %6317 = vst.msk [vmem:[#allocation3 + $0xf1] sm:$0xff] %vm6218, %v6214
        %6318 = vst.msk [vmem:[#allocation3 + $0xf9] sm:$0xff] %vm6218, %v6215
        %6319 = vst.msk [vmem:[#allocation3 + $0x101] sm:$0xff] %vm6218, %v6216
        %6320 = vst.msk [vmem:[#allocation3 + $0x109] sm:$0xff] %vm6218, %v6217
        %v6321 = vld [vmem:[#allocation3] sm:$0xff]
        %v6322 = vld [vmem:[#allocation3 + $0x8] sm:$0xff]
        %v6323 = vld [vmem:[#allocation3 + $0x10] sm:$0xff]
        %v6324 = vld [vmem:[#allocation3 + $0x18] sm:$0xff]
        %v6325 = vld [vmem:[#allocation3 + $0x20] sm:$0xff]
        %v6326 = vld [vmem:[#allocation3 + $0x28] sm:$0xff]
        %v6327 = vld [vmem:[#allocation3 + $0x30] sm:$0xff]
        %v6328 = vld [vmem:[#allocation3 + $0x38] sm:$0xff]
        %v6329 = vld [vmem:[#allocation3 + $0x40] sm:$0xff]
        %v6330 = vld [vmem:[#allocation3 + $0x48] sm:$0xff]
        %v6331 = vld [vmem:[#allocation3 + $0x50] sm:$0xff]
        %v6332 = vld [vmem:[#allocation3 + $0x58] sm:$0xff]
        %v6333 = vld [vmem:[#allocation3 + $0x60] sm:$0xff]
        %v6334 = vld [vmem:[#allocation3 + $0x68] sm:$0xff]
        %v6335 = vld [vmem:[#allocation3 + $0x70] sm:$0xff]
        %v6336 = vld [vmem:[#allocation3 + $0x78] sm:$0xff]
        %v6337 = vld [vmem:[#allocation3 + $0x80] sm:$0xff]
        %v6338 = vld [vmem:[#allocation3 + $0x88] sm:$0xff]
        %v6339 = vld [vmem:[#allocation3 + $0x90] sm:$0xff]
        %v6340 = vld [vmem:[#allocation3 + $0x98] sm:$0xff]
        %v6341 = vld [vmem:[#allocation3 + $0xa0] sm:$0xff]
        %v6342 = vld [vmem:[#allocation3 + $0xa8] sm:$0xff]
        %v6343 = vld [vmem:[#allocation3 + $0xb0] sm:$0xff]
        %v6344 = vld [vmem:[#allocation3 + $0xb8] sm:$0xff]
        %v6345 = vld [vmem:[#allocation3 + $0xc0] sm:$0xff]
        %v6346 = vld [vmem:[#allocation3 + $0xc8] sm:$0xff]
        %v6347 = vld [vmem:[#allocation3 + $0xd0] sm:$0xff]
        %v6348 = vld [vmem:[#allocation3 + $0xd8] sm:$0xff]
        %v6349 = vld [vmem:[#allocation3 + $0xe0] sm:$0xff]
        %v6350 = vld [vmem:[#allocation3 + $0xe8] sm:$0xff]
        %v6351 = vld [vmem:[#allocation3 + $0xf0] sm:$0xff]
        %v6352 = vld [vmem:[#allocation3 + $0xf8] sm:$0xff]
        %v6353 = vmul.f32 %v6321, %v426
        %v6354 = vmul.f32 %v6322, %v427
        %v6355 = vmul.f32 %v6323, %v428
        %v6356 = vmul.f32 %v6324, %v429
        %v6357 = vmul.f32 %v6325, %v430
        %v6358 = vmul.f32 %v6326, %v431
        %v6359 = vmul.f32 %v6327, %v432
        %v6360 = vmul.f32 %v6328, %v433
        %v6361 = vmul.f32 %v6329, %v434
        %v6362 = vmul.f32 %v6330, %v435
        %v6363 = vmul.f32 %v6331, %v436
        %v6364 = vmul.f32 %v6332, %v437
        %v6365 = vmul.f32 %v6333, %v438
        %v6366 = vmul.f32 %v6334, %v439
        %v6367 = vmul.f32 %v6335, %v440
        %v6368 = vmul.f32 %v6336, %v441
        %v6369 = vmul.f32 %v6337, %v442
        %v6370 = vmul.f32 %v6338, %v443
        %v6371 = vmul.f32 %v6339, %v444
        %v6372 = vmul.f32 %v6340, %v445
        %v6373 = vmul.f32 %v6341, %v446
        %v6374 = vmul.f32 %v6342, %v447
        %v6375 = vmul.f32 %v6343, %v448
        %v6376 = vmul.f32 %v6344, %v449
        %v6377 = vmul.f32 %v6345, %v450
        %v6378 = vmul.f32 %v6346, %v451
        %v6379 = vmul.f32 %v6347, %v452
        %v6380 = vmul.f32 %v6348, %v453
        %v6381 = vmul.f32 %v6349, %v454
        %v6382 = vmul.f32 %v6350, %v455
        %v6383 = vmul.f32 %v6351, %v456
        %v6384 = vmul.f32 %v6352, %v457
        %v6385 = vld [vmem:[%s7] sm:$0x1]
        %6387 = vset.pattern.permute.xlu0 0
        %6388 = vperm.xlu0 %6387, %v6353
        %v6389 = vpop.permute.xlu0 %6388
        %6392 = vset.pattern.permute.xlu0 0
        %6393 = vperm.xlu0 %6392, %v6354
        %v6394 = vpop.permute.xlu0 %6393
        %6397 = vset.pattern.permute.xlu0 0
        %6398 = vperm.xlu0 %6397, %v6355
        %v6399 = vpop.permute.xlu0 %6398
        %6402 = vset.pattern.permute.xlu0 0
        %6403 = vperm.xlu0 %6402, %v6356
        %v6404 = vpop.permute.xlu0 %6403
        %6407 = vset.pattern.permute.xlu0 0
        %6408 = vperm.xlu0 %6407, %v6357
        %v6409 = vpop.permute.xlu0 %6408
        %6412 = vset.pattern.permute.xlu0 0
        %6413 = vperm.xlu0 %6412, %v6358
        %v6414 = vpop.permute.xlu0 %6413
        %6417 = vset.pattern.permute.xlu0 0
        %6418 = vperm.xlu0 %6417, %v6359
        %v6419 = vpop.permute.xlu0 %6418
        %6422 = vset.pattern.permute.xlu0 0
        %6423 = vperm.xlu0 %6422, %v6360
        %v6424 = vpop.permute.xlu0 %6423
        %6427 = vset.pattern.permute.xlu0 0
        %6428 = vperm.xlu0 %6427, %v6361
        %v6429 = vpop.permute.xlu0 %6428
        %6432 = vset.pattern.permute.xlu0 0
        %6433 = vperm.xlu0 %6432, %v6362
        %v6434 = vpop.permute.xlu0 %6433
        %6437 = vset.pattern.permute.xlu0 0
        %6438 = vperm.xlu0 %6437, %v6363
        %v6439 = vpop.permute.xlu0 %6438
        %6442 = vset.pattern.permute.xlu0 0
        %6443 = vperm.xlu0 %6442, %v6364
        %v6444 = vpop.permute.xlu0 %6443
        %6447 = vset.pattern.permute.xlu0 0
        %6448 = vperm.xlu0 %6447, %v6365
        %v6449 = vpop.permute.xlu0 %6448
        %6452 = vset.pattern.permute.xlu0 0
        %6453 = vperm.xlu0 %6452, %v6366
        %v6454 = vpop.permute.xlu0 %6453
        %6457 = vset.pattern.permute.xlu0 0
        %6458 = vperm.xlu0 %6457, %v6367
        %v6459 = vpop.permute.xlu0 %6458
        %6462 = vset.pattern.permute.xlu0 0
        %6463 = vperm.xlu0 %6462, %v6368
        %v6464 = vpop.permute.xlu0 %6463
        %6467 = vset.pattern.permute.xlu0 0
        %6468 = vperm.xlu0 %6467, %v6369
        %v6469 = vpop.permute.xlu0 %6468
        %6472 = vset.pattern.permute.xlu0 0
        %6473 = vperm.xlu0 %6472, %v6370
        %v6474 = vpop.permute.xlu0 %6473
        %6477 = vset.pattern.permute.xlu0 0
        %6478 = vperm.xlu0 %6477, %v6371
        %v6479 = vpop.permute.xlu0 %6478
        %6482 = vset.pattern.permute.xlu0 0
        %6483 = vperm.xlu0 %6482, %v6372
        %v6484 = vpop.permute.xlu0 %6483
        %6487 = vset.pattern.permute.xlu0 0
        %6488 = vperm.xlu0 %6487, %v6373
        %v6489 = vpop.permute.xlu0 %6488
        %6492 = vset.pattern.permute.xlu0 0
        %6493 = vperm.xlu0 %6492, %v6374
        %v6494 = vpop.permute.xlu0 %6493
        %6497 = vset.pattern.permute.xlu0 0
        %6498 = vperm.xlu0 %6497, %v6375
        %v6499 = vpop.permute.xlu0 %6498
        %6502 = vset.pattern.permute.xlu0 0
        %6503 = vperm.xlu0 %6502, %v6376
        %v6504 = vpop.permute.xlu0 %6503
        %6507 = vset.pattern.permute.xlu0 0
        %6508 = vperm.xlu0 %6507, %v6377
        %v6509 = vpop.permute.xlu0 %6508
        %6512 = vset.pattern.permute.xlu0 0
        %6513 = vperm.xlu0 %6512, %v6378
        %v6514 = vpop.permute.xlu0 %6513
        %6517 = vset.pattern.permute.xlu0 0
        %6518 = vperm.xlu0 %6517, %v6379
        %v6519 = vpop.permute.xlu0 %6518
        %6522 = vset.pattern.permute.xlu0 0
        %6523 = vperm.xlu0 %6522, %v6380
        %v6524 = vpop.permute.xlu0 %6523
        %6527 = vset.pattern.permute.xlu0 0
        %6528 = vperm.xlu0 %6527, %v6381
        %v6529 = vpop.permute.xlu0 %6528
        %6532 = vset.pattern.permute.xlu0 0
        %6533 = vperm.xlu0 %6532, %v6382
        %v6534 = vpop.permute.xlu0 %6533
        %6537 = vset.pattern.permute.xlu0 0
        %6538 = vperm.xlu0 %6537, %v6383
        %v6539 = vpop.permute.xlu0 %6538
        %6542 = vset.pattern.permute.xlu0 0
        %6543 = vperm.xlu0 %6542, %v6384
        %v6544 = vpop.permute.xlu0 %6543
        %v6547 = vperm.slane %v6385, 0
        %v6549 = vmul.f32 %v6389, %v6547
        %v6550 = vmul.f32 %v6394, %v6547
        %v6551 = vmul.f32 %v6399, %v6547
        %v6552 = vmul.f32 %v6404, %v6547
        %v6553 = vmul.f32 %v6409, %v6547
        %v6554 = vmul.f32 %v6414, %v6547
        %v6555 = vmul.f32 %v6419, %v6547
        %v6556 = vmul.f32 %v6424, %v6547
        %v6557 = vmul.f32 %v6429, %v6547
        %v6558 = vmul.f32 %v6434, %v6547
        %v6559 = vmul.f32 %v6439, %v6547
        %v6560 = vmul.f32 %v6444, %v6547
        %v6561 = vmul.f32 %v6449, %v6547
        %v6562 = vmul.f32 %v6454, %v6547
        %v6563 = vmul.f32 %v6459, %v6547
        %v6564 = vmul.f32 %v6464, %v6547
        %v6565 = vmul.f32 %v6469, %v6547
        %v6566 = vmul.f32 %v6474, %v6547
        %v6567 = vmul.f32 %v6479, %v6547
        %v6568 = vmul.f32 %v6484, %v6547
        %v6569 = vmul.f32 %v6489, %v6547
        %v6570 = vmul.f32 %v6494, %v6547
        %v6571 = vmul.f32 %v6499, %v6547
        %v6572 = vmul.f32 %v6504, %v6547
        %v6573 = vmul.f32 %v6509, %v6547
        %v6574 = vmul.f32 %v6514, %v6547
        %v6575 = vmul.f32 %v6519, %v6547
        %v6576 = vmul.f32 %v6524, %v6547
        %v6577 = vmul.f32 %v6529, %v6547
        %v6578 = vmul.f32 %v6534, %v6547
        %v6579 = vmul.f32 %v6539, %v6547
        %v6580 = vmul.f32 %v6544, %v6547
        %v6581 = vadd.f32 %v6549, 0.0
        %v6582 = vadd.f32 %v6550, 0.0
        %v6583 = vadd.f32 %v6551, 0.0
        %v6584 = vadd.f32 %v6552, 0.0
        %v6585 = vadd.f32 %v6553, 0.0
        %v6586 = vadd.f32 %v6554, 0.0
        %v6587 = vadd.f32 %v6555, 0.0
        %v6588 = vadd.f32 %v6556, 0.0
        %v6589 = vadd.f32 %v6557, 0.0
        %v6590 = vadd.f32 %v6558, 0.0
        %v6591 = vadd.f32 %v6559, 0.0
        %v6592 = vadd.f32 %v6560, 0.0
        %v6593 = vadd.f32 %v6561, 0.0
        %v6594 = vadd.f32 %v6562, 0.0
        %v6595 = vadd.f32 %v6563, 0.0
        %v6596 = vadd.f32 %v6564, 0.0
        %v6597 = vadd.f32 %v6565, 0.0
        %v6598 = vadd.f32 %v6566, 0.0
        %v6599 = vadd.f32 %v6567, 0.0
        %v6600 = vadd.f32 %v6568, 0.0
        %v6601 = vadd.f32 %v6569, 0.0
        %v6602 = vadd.f32 %v6570, 0.0
        %v6603 = vadd.f32 %v6571, 0.0
        %v6604 = vadd.f32 %v6572, 0.0
        %v6605 = vadd.f32 %v6573, 0.0
        %v6606 = vadd.f32 %v6574, 0.0
        %v6607 = vadd.f32 %v6575, 0.0
        %v6608 = vadd.f32 %v6576, 0.0
        %v6609 = vadd.f32 %v6577, 0.0
        %v6610 = vadd.f32 %v6578, 0.0
        %v6611 = vadd.f32 %v6579, 0.0
        %v6612 = vadd.f32 %v6580, 0.0
        %v6613 = vld [vmem:[#allocation3 + $0x1] sm:$0xff]
        %v6614 = vld [vmem:[#allocation3 + $0x9] sm:$0xff]
        %v6615 = vld [vmem:[#allocation3 + $0x11] sm:$0xff]
        %v6616 = vld [vmem:[#allocation3 + $0x19] sm:$0xff]
        %v6617 = vld [vmem:[#allocation3 + $0x21] sm:$0xff]
        %v6618 = vld [vmem:[#allocation3 + $0x29] sm:$0xff]
        %v6619 = vld [vmem:[#allocation3 + $0x31] sm:$0xff]
        %v6620 = vld [vmem:[#allocation3 + $0x39] sm:$0xff]
        %v6621 = vld [vmem:[#allocation3 + $0x41] sm:$0xff]
        %v6622 = vld [vmem:[#allocation3 + $0x49] sm:$0xff]
        %v6623 = vld [vmem:[#allocation3 + $0x51] sm:$0xff]
        %v6624 = vld [vmem:[#allocation3 + $0x59] sm:$0xff]
        %v6625 = vld [vmem:[#allocation3 + $0x61] sm:$0xff]
        %v6626 = vld [vmem:[#allocation3 + $0x69] sm:$0xff]
        %v6627 = vld [vmem:[#allocation3 + $0x71] sm:$0xff]
        %v6628 = vld [vmem:[#allocation3 + $0x79] sm:$0xff]
        %v6629 = vld [vmem:[#allocation3 + $0x81] sm:$0xff]
        %v6630 = vld [vmem:[#allocation3 + $0x89] sm:$0xff]
        %v6631 = vld [vmem:[#allocation3 + $0x91] sm:$0xff]
        %v6632 = vld [vmem:[#allocation3 + $0x99] sm:$0xff]
        %v6633 = vld [vmem:[#allocation3 + $0xa1] sm:$0xff]
        %v6634 = vld [vmem:[#allocation3 + $0xa9] sm:$0xff]
        %v6635 = vld [vmem:[#allocation3 + $0xb1] sm:$0xff]
        %v6636 = vld [vmem:[#allocation3 + $0xb9] sm:$0xff]
        %v6637 = vld [vmem:[#allocation3 + $0xc1] sm:$0xff]
        %v6638 = vld [vmem:[#allocation3 + $0xc9] sm:$0xff]
        %v6639 = vld [vmem:[#allocation3 + $0xd1] sm:$0xff]
        %v6640 = vld [vmem:[#allocation3 + $0xd9] sm:$0xff]
        %v6641 = vld [vmem:[#allocation3 + $0xe1] sm:$0xff]
        %v6642 = vld [vmem:[#allocation3 + $0xe9] sm:$0xff]
        %v6643 = vld [vmem:[#allocation3 + $0xf1] sm:$0xff]
        %v6644 = vld [vmem:[#allocation3 + $0xf9] sm:$0xff]
        %s6645 = scalar_lea.vmem %s7, 1
        %v6646 = vld [vmem:[%s6645] sm:$0x1]
        %6648 = vset.pattern.permute.xlu0 0
        %6649 = vperm.xlu0 %6648, %v6613
        %v6650 = vpop.permute.xlu0 %6649
        %6653 = vset.pattern.permute.xlu0 0
        %6654 = vperm.xlu0 %6653, %v6614
        %v6655 = vpop.permute.xlu0 %6654
        %6658 = vset.pattern.permute.xlu0 0
        %6659 = vperm.xlu0 %6658, %v6615
        %v6660 = vpop.permute.xlu0 %6659
        %6663 = vset.pattern.permute.xlu0 0
        %6664 = vperm.xlu0 %6663, %v6616
        %v6665 = vpop.permute.xlu0 %6664
        %6668 = vset.pattern.permute.xlu0 0
        %6669 = vperm.xlu0 %6668, %v6617
        %v6670 = vpop.permute.xlu0 %6669
        %6673 = vset.pattern.permute.xlu0 0
        %6674 = vperm.xlu0 %6673, %v6618
        %v6675 = vpop.permute.xlu0 %6674
        %6678 = vset.pattern.permute.xlu0 0
        %6679 = vperm.xlu0 %6678, %v6619
        %v6680 = vpop.permute.xlu0 %6679
        %6683 = vset.pattern.permute.xlu0 0
        %6684 = vperm.xlu0 %6683, %v6620
        %v6685 = vpop.permute.xlu0 %6684
        %6688 = vset.pattern.permute.xlu0 0
        %6689 = vperm.xlu0 %6688, %v6621
        %v6690 = vpop.permute.xlu0 %6689
        %6693 = vset.pattern.permute.xlu0 0
        %6694 = vperm.xlu0 %6693, %v6622
        %v6695 = vpop.permute.xlu0 %6694
        %6698 = vset.pattern.permute.xlu0 0
        %6699 = vperm.xlu0 %6698, %v6623
        %v6700 = vpop.permute.xlu0 %6699
        %6703 = vset.pattern.permute.xlu0 0
        %6704 = vperm.xlu0 %6703, %v6624
        %v6705 = vpop.permute.xlu0 %6704
        %6708 = vset.pattern.permute.xlu0 0
        %6709 = vperm.xlu0 %6708, %v6625
        %v6710 = vpop.permute.xlu0 %6709
        %6713 = vset.pattern.permute.xlu0 0
        %6714 = vperm.xlu0 %6713, %v6626
        %v6715 = vpop.permute.xlu0 %6714
        %6718 = vset.pattern.permute.xlu0 0
        %6719 = vperm.xlu0 %6718, %v6627
        %v6720 = vpop.permute.xlu0 %6719
        %6723 = vset.pattern.permute.xlu0 0
        %6724 = vperm.xlu0 %6723, %v6628
        %v6725 = vpop.permute.xlu0 %6724
        %6728 = vset.pattern.permute.xlu0 0
        %6729 = vperm.xlu0 %6728, %v6629
        %v6730 = vpop.permute.xlu0 %6729
        %6733 = vset.pattern.permute.xlu0 0
        %6734 = vperm.xlu0 %6733, %v6630
        %v6735 = vpop.permute.xlu0 %6734
        %6738 = vset.pattern.permute.xlu0 0
        %6739 = vperm.xlu0 %6738, %v6631
        %v6740 = vpop.permute.xlu0 %6739
        %6743 = vset.pattern.permute.xlu0 0
        %6744 = vperm.xlu0 %6743, %v6632
        %v6745 = vpop.permute.xlu0 %6744
        %6748 = vset.pattern.permute.xlu0 0
        %6749 = vperm.xlu0 %6748, %v6633
        %v6750 = vpop.permute.xlu0 %6749
        %6753 = vset.pattern.permute.xlu0 0
        %6754 = vperm.xlu0 %6753, %v6634
        %v6755 = vpop.permute.xlu0 %6754
        %6758 = vset.pattern.permute.xlu0 0
        %6759 = vperm.xlu0 %6758, %v6635
        %v6760 = vpop.permute.xlu0 %6759
        %6763 = vset.pattern.permute.xlu0 0
        %6764 = vperm.xlu0 %6763, %v6636
        %v6765 = vpop.permute.xlu0 %6764
        %6768 = vset.pattern.permute.xlu0 0
        %6769 = vperm.xlu0 %6768, %v6637
        %v6770 = vpop.permute.xlu0 %6769
        %6773 = vset.pattern.permute.xlu0 0
        %6774 = vperm.xlu0 %6773, %v6638
        %v6775 = vpop.permute.xlu0 %6774
        %6778 = vset.pattern.permute.xlu0 0
        %6779 = vperm.xlu0 %6778, %v6639
        %v6780 = vpop.permute.xlu0 %6779
        %6783 = vset.pattern.permute.xlu0 0
        %6784 = vperm.xlu0 %6783, %v6640
        %v6785 = vpop.permute.xlu0 %6784
        %6788 = vset.pattern.permute.xlu0 0
        %6789 = vperm.xlu0 %6788, %v6641
        %v6790 = vpop.permute.xlu0 %6789
        %6793 = vset.pattern.permute.xlu0 0
        %6794 = vperm.xlu0 %6793, %v6642
        %v6795 = vpop.permute.xlu0 %6794
        %6798 = vset.pattern.permute.xlu0 0
        %6799 = vperm.xlu0 %6798, %v6643
        %v6800 = vpop.permute.xlu0 %6799
        %6803 = vset.pattern.permute.xlu0 0
        %6804 = vperm.xlu0 %6803, %v6644
        %v6805 = vpop.permute.xlu0 %6804
        %v6808 = vperm.slane %v6646, 0
        %v6810 = vmul.f32 %v6650, %v6808
        %v6811 = vmul.f32 %v6655, %v6808
        %v6812 = vmul.f32 %v6660, %v6808
        %v6813 = vmul.f32 %v6665, %v6808
        %v6814 = vmul.f32 %v6670, %v6808
        %v6815 = vmul.f32 %v6675, %v6808
        %v6816 = vmul.f32 %v6680, %v6808
        %v6817 = vmul.f32 %v6685, %v6808
        %v6818 = vmul.f32 %v6690, %v6808
        %v6819 = vmul.f32 %v6695, %v6808
        %v6820 = vmul.f32 %v6700, %v6808
        %v6821 = vmul.f32 %v6705, %v6808
        %v6822 = vmul.f32 %v6710, %v6808
        %v6823 = vmul.f32 %v6715, %v6808
        %v6824 = vmul.f32 %v6720, %v6808
        %v6825 = vmul.f32 %v6725, %v6808
        %v6826 = vmul.f32 %v6730, %v6808
        %v6827 = vmul.f32 %v6735, %v6808
        %v6828 = vmul.f32 %v6740, %v6808
        %v6829 = vmul.f32 %v6745, %v6808
        %v6830 = vmul.f32 %v6750, %v6808
        %v6831 = vmul.f32 %v6755, %v6808
        %v6832 = vmul.f32 %v6760, %v6808
        %v6833 = vmul.f32 %v6765, %v6808
        %v6834 = vmul.f32 %v6770, %v6808
        %v6835 = vmul.f32 %v6775, %v6808
        %v6836 = vmul.f32 %v6780, %v6808
        %v6837 = vmul.f32 %v6785, %v6808
        %v6838 = vmul.f32 %v6790, %v6808
        %v6839 = vmul.f32 %v6795, %v6808
        %v6840 = vmul.f32 %v6800, %v6808
        %v6841 = vmul.f32 %v6805, %v6808
        %v6842 = vadd.f32 %v6581, %v6810
        %v6843 = vadd.f32 %v6582, %v6811
        %v6844 = vadd.f32 %v6583, %v6812
        %v6845 = vadd.f32 %v6584, %v6813
        %v6846 = vadd.f32 %v6585, %v6814
        %v6847 = vadd.f32 %v6586, %v6815
        %v6848 = vadd.f32 %v6587, %v6816
        %v6849 = vadd.f32 %v6588, %v6817
        %v6850 = vadd.f32 %v6589, %v6818
        %v6851 = vadd.f32 %v6590, %v6819
        %v6852 = vadd.f32 %v6591, %v6820
        %v6853 = vadd.f32 %v6592, %v6821
        %v6854 = vadd.f32 %v6593, %v6822
        %v6855 = vadd.f32 %v6594, %v6823
        %v6856 = vadd.f32 %v6595, %v6824
        %v6857 = vadd.f32 %v6596, %v6825
        %v6858 = vadd.f32 %v6597, %v6826
        %v6859 = vadd.f32 %v6598, %v6827
        %v6860 = vadd.f32 %v6599, %v6828
        %v6861 = vadd.f32 %v6600, %v6829
        %v6862 = vadd.f32 %v6601, %v6830
        %v6863 = vadd.f32 %v6602, %v6831
        %v6864 = vadd.f32 %v6603, %v6832
        %v6865 = vadd.f32 %v6604, %v6833
        %v6866 = vadd.f32 %v6605, %v6834
        %v6867 = vadd.f32 %v6606, %v6835
        %v6868 = vadd.f32 %v6607, %v6836
        %v6869 = vadd.f32 %v6608, %v6837
        %v6870 = vadd.f32 %v6609, %v6838
        %v6871 = vadd.f32 %v6610, %v6839
        %v6872 = vadd.f32 %v6611, %v6840
        %v6873 = vadd.f32 %v6612, %v6841
        %v6874 = vld [vmem:[#allocation3 + $0x2] sm:$0xff]
        %v6875 = vld [vmem:[#allocation3 + $0xa] sm:$0xff]
        %v6876 = vld [vmem:[#allocation3 + $0x12] sm:$0xff]
        %v6877 = vld [vmem:[#allocation3 + $0x1a] sm:$0xff]
        %v6878 = vld [vmem:[#allocation3 + $0x22] sm:$0xff]
        %v6879 = vld [vmem:[#allocation3 + $0x2a] sm:$0xff]
        %v6880 = vld [vmem:[#allocation3 + $0x32] sm:$0xff]
        %v6881 = vld [vmem:[#allocation3 + $0x3a] sm:$0xff]
        %v6882 = vld [vmem:[#allocation3 + $0x42] sm:$0xff]
        %v6883 = vld [vmem:[#allocation3 + $0x4a] sm:$0xff]
        %v6884 = vld [vmem:[#allocation3 + $0x52] sm:$0xff]
        %v6885 = vld [vmem:[#allocation3 + $0x5a] sm:$0xff]
        %v6886 = vld [vmem:[#allocation3 + $0x62] sm:$0xff]
        %v6887 = vld [vmem:[#allocation3 + $0x6a] sm:$0xff]
        %v6888 = vld [vmem:[#allocation3 + $0x72] sm:$0xff]
        %v6889 = vld [vmem:[#allocation3 + $0x7a] sm:$0xff]
        %v6890 = vld [vmem:[#allocation3 + $0x82] sm:$0xff]
        %v6891 = vld [vmem:[#allocation3 + $0x8a] sm:$0xff]
        %v6892 = vld [vmem:[#allocation3 + $0x92] sm:$0xff]
        %v6893 = vld [vmem:[#allocation3 + $0x9a] sm:$0xff]
        %v6894 = vld [vmem:[#allocation3 + $0xa2] sm:$0xff]
        %v6895 = vld [vmem:[#allocation3 + $0xaa] sm:$0xff]
        %v6896 = vld [vmem:[#allocation3 + $0xb2] sm:$0xff]
        %v6897 = vld [vmem:[#allocation3 + $0xba] sm:$0xff]
        %v6898 = vld [vmem:[#allocation3 + $0xc2] sm:$0xff]
        %v6899 = vld [vmem:[#allocation3 + $0xca] sm:$0xff]
        %v6900 = vld [vmem:[#allocation3 + $0xd2] sm:$0xff]
        %v6901 = vld [vmem:[#allocation3 + $0xda] sm:$0xff]
        %v6902 = vld [vmem:[#allocation3 + $0xe2] sm:$0xff]
        %v6903 = vld [vmem:[#allocation3 + $0xea] sm:$0xff]
        %v6904 = vld [vmem:[#allocation3 + $0xf2] sm:$0xff]
        %v6905 = vld [vmem:[#allocation3 + $0xfa] sm:$0xff]
        %v6906 = vmul.f32 %v6874, %v458
        %v6907 = vmul.f32 %v6875, %v459
        %v6908 = vmul.f32 %v6876, %v460
        %v6909 = vmul.f32 %v6877, %v461
        %v6910 = vmul.f32 %v6878, %v462
        %v6911 = vmul.f32 %v6879, %v463
        %v6912 = vmul.f32 %v6880, %v464
        %v6913 = vmul.f32 %v6881, %v465
        %v6914 = vmul.f32 %v6882, %v466
        %v6915 = vmul.f32 %v6883, %v467
        %v6916 = vmul.f32 %v6884, %v468
        %v6917 = vmul.f32 %v6885, %v469
        %v6918 = vmul.f32 %v6886, %v470
        %v6919 = vmul.f32 %v6887, %v471
        %v6920 = vmul.f32 %v6888, %v472
        %v6921 = vmul.f32 %v6889, %v473
        %v6922 = vmul.f32 %v6890, %v474
        %v6923 = vmul.f32 %v6891, %v475
        %v6924 = vmul.f32 %v6892, %v476
        %v6925 = vmul.f32 %v6893, %v477
        %v6926 = vmul.f32 %v6894, %v478
        %v6927 = vmul.f32 %v6895, %v479
        %v6928 = vmul.f32 %v6896, %v480
        %v6929 = vmul.f32 %v6897, %v481
        %v6930 = vmul.f32 %v6898, %v482
        %v6931 = vmul.f32 %v6899, %v483
        %v6932 = vmul.f32 %v6900, %v484
        %v6933 = vmul.f32 %v6901, %v485
        %v6934 = vmul.f32 %v6902, %v486
        %v6935 = vmul.f32 %v6903, %v487
        %v6936 = vmul.f32 %v6904, %v488
        %v6937 = vmul.f32 %v6905, %v489
        %s6938 = scalar_lea.vmem %s7, 2
        %v6939 = vld [vmem:[%s6938] sm:$0x1]
        %6941 = vset.pattern.permute.xlu0 0
        %6942 = vperm.xlu0 %6941, %v6906
        %v6943 = vpop.permute.xlu0 %6942
        %6946 = vset.pattern.permute.xlu0 0
        %6947 = vperm.xlu0 %6946, %v6907
        %v6948 = vpop.permute.xlu0 %6947
        %6951 = vset.pattern.permute.xlu0 0
        %6952 = vperm.xlu0 %6951, %v6908
        %v6953 = vpop.permute.xlu0 %6952
        %6956 = vset.pattern.permute.xlu0 0
        %6957 = vperm.xlu0 %6956, %v6909
        %v6958 = vpop.permute.xlu0 %6957
        %6961 = vset.pattern.permute.xlu0 0
        %6962 = vperm.xlu0 %6961, %v6910
        %v6963 = vpop.permute.xlu0 %6962
        %6966 = vset.pattern.permute.xlu0 0
        %6967 = vperm.xlu0 %6966, %v6911
        %v6968 = vpop.permute.xlu0 %6967
        %6971 = vset.pattern.permute.xlu0 0
        %6972 = vperm.xlu0 %6971, %v6912
        %v6973 = vpop.permute.xlu0 %6972
        %6976 = vset.pattern.permute.xlu0 0
        %6977 = vperm.xlu0 %6976, %v6913
        %v6978 = vpop.permute.xlu0 %6977
        %6981 = vset.pattern.permute.xlu0 0
        %6982 = vperm.xlu0 %6981, %v6914
        %v6983 = vpop.permute.xlu0 %6982
        %6986 = vset.pattern.permute.xlu0 0
        %6987 = vperm.xlu0 %6986, %v6915
        %v6988 = vpop.permute.xlu0 %6987
        %6991 = vset.pattern.permute.xlu0 0
        %6992 = vperm.xlu0 %6991, %v6916
        %v6993 = vpop.permute.xlu0 %6992
        %6996 = vset.pattern.permute.xlu0 0
        %6997 = vperm.xlu0 %6996, %v6917
        %v6998 = vpop.permute.xlu0 %6997
        %7001 = vset.pattern.permute.xlu0 0
        %7002 = vperm.xlu0 %7001, %v6918
        %v7003 = vpop.permute.xlu0 %7002
        %7006 = vset.pattern.permute.xlu0 0
        %7007 = vperm.xlu0 %7006, %v6919
        %v7008 = vpop.permute.xlu0 %7007
        %7011 = vset.pattern.permute.xlu0 0
        %7012 = vperm.xlu0 %7011, %v6920
        %v7013 = vpop.permute.xlu0 %7012
        %7016 = vset.pattern.permute.xlu0 0
        %7017 = vperm.xlu0 %7016, %v6921
        %v7018 = vpop.permute.xlu0 %7017
        %7021 = vset.pattern.permute.xlu0 0
        %7022 = vperm.xlu0 %7021, %v6922
        %v7023 = vpop.permute.xlu0 %7022
        %7026 = vset.pattern.permute.xlu0 0
        %7027 = vperm.xlu0 %7026, %v6923
        %v7028 = vpop.permute.xlu0 %7027
        %7031 = vset.pattern.permute.xlu0 0
        %7032 = vperm.xlu0 %7031, %v6924
        %v7033 = vpop.permute.xlu0 %7032
        %7036 = vset.pattern.permute.xlu0 0
        %7037 = vperm.xlu0 %7036, %v6925
        %v7038 = vpop.permute.xlu0 %7037
        %7041 = vset.pattern.permute.xlu0 0
        %7042 = vperm.xlu0 %7041, %v6926
        %v7043 = vpop.permute.xlu0 %7042
        %7046 = vset.pattern.permute.xlu0 0
        %7047 = vperm.xlu0 %7046, %v6927
        %v7048 = vpop.permute.xlu0 %7047
        %7051 = vset.pattern.permute.xlu0 0
        %7052 = vperm.xlu0 %7051, %v6928
        %v7053 = vpop.permute.xlu0 %7052
        %7056 = vset.pattern.permute.xlu0 0
        %7057 = vperm.xlu0 %7056, %v6929
        %v7058 = vpop.permute.xlu0 %7057
        %7061 = vset.pattern.permute.xlu0 0
        %7062 = vperm.xlu0 %7061, %v6930
        %v7063 = vpop.permute.xlu0 %7062
        %7066 = vset.pattern.permute.xlu0 0
        %7067 = vperm.xlu0 %7066, %v6931
        %v7068 = vpop.permute.xlu0 %7067
        %7071 = vset.pattern.permute.xlu0 0
        %7072 = vperm.xlu0 %7071, %v6932
        %v7073 = vpop.permute.xlu0 %7072
        %7076 = vset.pattern.permute.xlu0 0
        %7077 = vperm.xlu0 %7076, %v6933
        %v7078 = vpop.permute.xlu0 %7077
        %7081 = vset.pattern.permute.xlu0 0
        %7082 = vperm.xlu0 %7081, %v6934
        %v7083 = vpop.permute.xlu0 %7082
        %7086 = vset.pattern.permute.xlu0 0
        %7087 = vperm.xlu0 %7086, %v6935
        %v7088 = vpop.permute.xlu0 %7087
        %7091 = vset.pattern.permute.xlu0 0
        %7092 = vperm.xlu0 %7091, %v6936
        %v7093 = vpop.permute.xlu0 %7092
        %7096 = vset.pattern.permute.xlu0 0
        %7097 = vperm.xlu0 %7096, %v6937
        %v7098 = vpop.permute.xlu0 %7097
        %v7101 = vperm.slane %v6939, 0
        %v7103 = vmul.f32 %v6943, %v7101
        %v7104 = vmul.f32 %v6948, %v7101
        %v7105 = vmul.f32 %v6953, %v7101
        %v7106 = vmul.f32 %v6958, %v7101
        %v7107 = vmul.f32 %v6963, %v7101
        %v7108 = vmul.f32 %v6968, %v7101
        %v7109 = vmul.f32 %v6973, %v7101
        %v7110 = vmul.f32 %v6978, %v7101
        %v7111 = vmul.f32 %v6983, %v7101
        %v7112 = vmul.f32 %v6988, %v7101
        %v7113 = vmul.f32 %v6993, %v7101
        %v7114 = vmul.f32 %v6998, %v7101
        %v7115 = vmul.f32 %v7003, %v7101
        %v7116 = vmul.f32 %v7008, %v7101
        %v7117 = vmul.f32 %v7013, %v7101
        %v7118 = vmul.f32 %v7018, %v7101
        %v7119 = vmul.f32 %v7023, %v7101
        %v7120 = vmul.f32 %v7028, %v7101
        %v7121 = vmul.f32 %v7033, %v7101
        %v7122 = vmul.f32 %v7038, %v7101
        %v7123 = vmul.f32 %v7043, %v7101
        %v7124 = vmul.f32 %v7048, %v7101
        %v7125 = vmul.f32 %v7053, %v7101
        %v7126 = vmul.f32 %v7058, %v7101
        %v7127 = vmul.f32 %v7063, %v7101
        %v7128 = vmul.f32 %v7068, %v7101
        %v7129 = vmul.f32 %v7073, %v7101
        %v7130 = vmul.f32 %v7078, %v7101
        %v7131 = vmul.f32 %v7083, %v7101
        %v7132 = vmul.f32 %v7088, %v7101
        %v7133 = vmul.f32 %v7093, %v7101
        %v7134 = vmul.f32 %v7098, %v7101
        %v7135 = vadd.f32 %v6842, %v7103
        %v7136 = vadd.f32 %v6843, %v7104
        %v7137 = vadd.f32 %v6844, %v7105
        %v7138 = vadd.f32 %v6845, %v7106
        %v7139 = vadd.f32 %v6846, %v7107
        %v7140 = vadd.f32 %v6847, %v7108
        %v7141 = vadd.f32 %v6848, %v7109
        %v7142 = vadd.f32 %v6849, %v7110
        %v7143 = vadd.f32 %v6850, %v7111
        %v7144 = vadd.f32 %v6851, %v7112
        %v7145 = vadd.f32 %v6852, %v7113
        %v7146 = vadd.f32 %v6853, %v7114
        %v7147 = vadd.f32 %v6854, %v7115
        %v7148 = vadd.f32 %v6855, %v7116
        %v7149 = vadd.f32 %v6856, %v7117
        %v7150 = vadd.f32 %v6857, %v7118
        %v7151 = vadd.f32 %v6858, %v7119
        %v7152 = vadd.f32 %v6859, %v7120
        %v7153 = vadd.f32 %v6860, %v7121
        %v7154 = vadd.f32 %v6861, %v7122
        %v7155 = vadd.f32 %v6862, %v7123
        %v7156 = vadd.f32 %v6863, %v7124
        %v7157 = vadd.f32 %v6864, %v7125
        %v7158 = vadd.f32 %v6865, %v7126
        %v7159 = vadd.f32 %v6866, %v7127
        %v7160 = vadd.f32 %v6867, %v7128
        %v7161 = vadd.f32 %v6868, %v7129
        %v7162 = vadd.f32 %v6869, %v7130
        %v7163 = vadd.f32 %v6870, %v7131
        %v7164 = vadd.f32 %v6871, %v7132
        %v7165 = vadd.f32 %v6872, %v7133
        %v7166 = vadd.f32 %v6873, %v7134
        %v7167 = vld [vmem:[#allocation3 + $0x10] sm:$0xff]
        %v7168 = vld [vmem:[#allocation3 + $0x18] sm:$0xff]
        %v7169 = vld [vmem:[#allocation3 + $0x20] sm:$0xff]
        %v7170 = vld [vmem:[#allocation3 + $0x28] sm:$0xff]
        %v7171 = vld [vmem:[#allocation3 + $0x30] sm:$0xff]
        %v7172 = vld [vmem:[#allocation3 + $0x38] sm:$0xff]
        %v7173 = vld [vmem:[#allocation3 + $0x40] sm:$0xff]
        %v7174 = vld [vmem:[#allocation3 + $0x48] sm:$0xff]
        %v7175 = vld [vmem:[#allocation3 + $0x50] sm:$0xff]
        %v7176 = vld [vmem:[#allocation3 + $0x58] sm:$0xff]
        %v7177 = vld [vmem:[#allocation3 + $0x60] sm:$0xff]
        %v7178 = vld [vmem:[#allocation3 + $0x68] sm:$0xff]
        %v7179 = vld [vmem:[#allocation3 + $0x70] sm:$0xff]
        %v7180 = vld [vmem:[#allocation3 + $0x78] sm:$0xff]
        %v7181 = vld [vmem:[#allocation3 + $0x80] sm:$0xff]
        %v7182 = vld [vmem:[#allocation3 + $0x88] sm:$0xff]
        %v7183 = vld [vmem:[#allocation3 + $0x90] sm:$0xff]
        %v7184 = vld [vmem:[#allocation3 + $0x98] sm:$0xff]
        %v7185 = vld [vmem:[#allocation3 + $0xa0] sm:$0xff]
        %v7186 = vld [vmem:[#allocation3 + $0xa8] sm:$0xff]
        %v7187 = vld [vmem:[#allocation3 + $0xb0] sm:$0xff]
        %v7188 = vld [vmem:[#allocation3 + $0xb8] sm:$0xff]
        %v7189 = vld [vmem:[#allocation3 + $0xc0] sm:$0xff]
        %v7190 = vld [vmem:[#allocation3 + $0xc8] sm:$0xff]
        %v7191 = vld [vmem:[#allocation3 + $0xd0] sm:$0xff]
        %v7192 = vld [vmem:[#allocation3 + $0xd8] sm:$0xff]
        %v7193 = vld [vmem:[#allocation3 + $0xe0] sm:$0xff]
        %v7194 = vld [vmem:[#allocation3 + $0xe8] sm:$0xff]
        %v7195 = vld [vmem:[#allocation3 + $0xf0] sm:$0xff]
        %v7196 = vld [vmem:[#allocation3 + $0xf8] sm:$0xff]
        %v7197 = vld [vmem:[#allocation3 + $0x100] sm:$0xff]
        %v7198 = vld [vmem:[#allocation3 + $0x108] sm:$0xff]
        %v7199 = vmul.f32 %v7167, %v426
        %v7200 = vmul.f32 %v7168, %v427
        %v7201 = vmul.f32 %v7169, %v428
        %v7202 = vmul.f32 %v7170, %v429
        %v7203 = vmul.f32 %v7171, %v430
        %v7204 = vmul.f32 %v7172, %v431
        %v7205 = vmul.f32 %v7173, %v432
        %v7206 = vmul.f32 %v7174, %v433
        %v7207 = vmul.f32 %v7175, %v434
        %v7208 = vmul.f32 %v7176, %v435
        %v7209 = vmul.f32 %v7177, %v436
        %v7210 = vmul.f32 %v7178, %v437
        %v7211 = vmul.f32 %v7179, %v438
        %v7212 = vmul.f32 %v7180, %v439
        %v7213 = vmul.f32 %v7181, %v440
        %v7214 = vmul.f32 %v7182, %v441
        %v7215 = vmul.f32 %v7183, %v442
        %v7216 = vmul.f32 %v7184, %v443
        %v7217 = vmul.f32 %v7185, %v444
        %v7218 = vmul.f32 %v7186, %v445
        %v7219 = vmul.f32 %v7187, %v446
        %v7220 = vmul.f32 %v7188, %v447
        %v7221 = vmul.f32 %v7189, %v448
        %v7222 = vmul.f32 %v7190, %v449
        %v7223 = vmul.f32 %v7191, %v450
        %v7224 = vmul.f32 %v7192, %v451
        %v7225 = vmul.f32 %v7193, %v452
        %v7226 = vmul.f32 %v7194, %v453
        %v7227 = vmul.f32 %v7195, %v454
        %v7228 = vmul.f32 %v7196, %v455
        %v7229 = vmul.f32 %v7197, %v456
        %v7230 = vmul.f32 %v7198, %v457
        %s7231 = scalar_lea.vmem %s7, 3
        %v7232 = vld [vmem:[%s7231] sm:$0x1]
        %7234 = vset.pattern.permute.xlu0 0
        %7235 = vperm.xlu0 %7234, %v7199
        %v7236 = vpop.permute.xlu0 %7235
        %7239 = vset.pattern.permute.xlu0 0
        %7240 = vperm.xlu0 %7239, %v7200
        %v7241 = vpop.permute.xlu0 %7240
        %7244 = vset.pattern.permute.xlu0 0
        %7245 = vperm.xlu0 %7244, %v7201
        %v7246 = vpop.permute.xlu0 %7245
        %7249 = vset.pattern.permute.xlu0 0
        %7250 = vperm.xlu0 %7249, %v7202
        %v7251 = vpop.permute.xlu0 %7250
        %7254 = vset.pattern.permute.xlu0 0
        %7255 = vperm.xlu0 %7254, %v7203
        %v7256 = vpop.permute.xlu0 %7255
        %7259 = vset.pattern.permute.xlu0 0
        %7260 = vperm.xlu0 %7259, %v7204
        %v7261 = vpop.permute.xlu0 %7260
        %7264 = vset.pattern.permute.xlu0 0
        %7265 = vperm.xlu0 %7264, %v7205
        %v7266 = vpop.permute.xlu0 %7265
        %7269 = vset.pattern.permute.xlu0 0
        %7270 = vperm.xlu0 %7269, %v7206
        %v7271 = vpop.permute.xlu0 %7270
        %7274 = vset.pattern.permute.xlu0 0
        %7275 = vperm.xlu0 %7274, %v7207
        %v7276 = vpop.permute.xlu0 %7275
        %7279 = vset.pattern.permute.xlu0 0
        %7280 = vperm.xlu0 %7279, %v7208
        %v7281 = vpop.permute.xlu0 %7280
        %7284 = vset.pattern.permute.xlu0 0
        %7285 = vperm.xlu0 %7284, %v7209
        %v7286 = vpop.permute.xlu0 %7285
        %7289 = vset.pattern.permute.xlu0 0
        %7290 = vperm.xlu0 %7289, %v7210
        %v7291 = vpop.permute.xlu0 %7290
        %7294 = vset.pattern.permute.xlu0 0
        %7295 = vperm.xlu0 %7294, %v7211
        %v7296 = vpop.permute.xlu0 %7295
        %7299 = vset.pattern.permute.xlu0 0
        %7300 = vperm.xlu0 %7299, %v7212
        %v7301 = vpop.permute.xlu0 %7300
        %7304 = vset.pattern.permute.xlu0 0
        %7305 = vperm.xlu0 %7304, %v7213
        %v7306 = vpop.permute.xlu0 %7305
        %7309 = vset.pattern.permute.xlu0 0
        %7310 = vperm.xlu0 %7309, %v7214
        %v7311 = vpop.permute.xlu0 %7310
        %7314 = vset.pattern.permute.xlu0 0
        %7315 = vperm.xlu0 %7314, %v7215
        %v7316 = vpop.permute.xlu0 %7315
        %7319 = vset.pattern.permute.xlu0 0
        %7320 = vperm.xlu0 %7319, %v7216
        %v7321 = vpop.permute.xlu0 %7320
        %7324 = vset.pattern.permute.xlu0 0
        %7325 = vperm.xlu0 %7324, %v7217
        %v7326 = vpop.permute.xlu0 %7325
        %7329 = vset.pattern.permute.xlu0 0
        %7330 = vperm.xlu0 %7329, %v7218
        %v7331 = vpop.permute.xlu0 %7330
        %7334 = vset.pattern.permute.xlu0 0
        %7335 = vperm.xlu0 %7334, %v7219
        %v7336 = vpop.permute.xlu0 %7335
        %7339 = vset.pattern.permute.xlu0 0
        %7340 = vperm.xlu0 %7339, %v7220
        %v7341 = vpop.permute.xlu0 %7340
        %7344 = vset.pattern.permute.xlu0 0
        %7345 = vperm.xlu0 %7344, %v7221
        %v7346 = vpop.permute.xlu0 %7345
        %7349 = vset.pattern.permute.xlu0 0
        %7350 = vperm.xlu0 %7349, %v7222
        %v7351 = vpop.permute.xlu0 %7350
        %7354 = vset.pattern.permute.xlu0 0
        %7355 = vperm.xlu0 %7354, %v7223
        %v7356 = vpop.permute.xlu0 %7355
        %7359 = vset.pattern.permute.xlu0 0
        %7360 = vperm.xlu0 %7359, %v7224
        %v7361 = vpop.permute.xlu0 %7360
        %7364 = vset.pattern.permute.xlu0 0
        %7365 = vperm.xlu0 %7364, %v7225
        %v7366 = vpop.permute.xlu0 %7365
        %7369 = vset.pattern.permute.xlu0 0
        %7370 = vperm.xlu0 %7369, %v7226
        %v7371 = vpop.permute.xlu0 %7370
        %7374 = vset.pattern.permute.xlu0 0
        %7375 = vperm.xlu0 %7374, %v7227
        %v7376 = vpop.permute.xlu0 %7375
        %7379 = vset.pattern.permute.xlu0 0
        %7380 = vperm.xlu0 %7379, %v7228
        %v7381 = vpop.permute.xlu0 %7380
        %7384 = vset.pattern.permute.xlu0 0
        %7385 = vperm.xlu0 %7384, %v7229
        %v7386 = vpop.permute.xlu0 %7385
        %7389 = vset.pattern.permute.xlu0 0
        %7390 = vperm.xlu0 %7389, %v7230
        %v7391 = vpop.permute.xlu0 %7390
        %v7394 = vperm.slane %v7232, 0
        %v7396 = vmul.f32 %v7236, %v7394
        %v7397 = vmul.f32 %v7241, %v7394
        %v7398 = vmul.f32 %v7246, %v7394
        %v7399 = vmul.f32 %v7251, %v7394
        %v7400 = vmul.f32 %v7256, %v7394
        %v7401 = vmul.f32 %v7261, %v7394
        %v7402 = vmul.f32 %v7266, %v7394
        %v7403 = vmul.f32 %v7271, %v7394
        %v7404 = vmul.f32 %v7276, %v7394
        %v7405 = vmul.f32 %v7281, %v7394
        %v7406 = vmul.f32 %v7286, %v7394
        %v7407 = vmul.f32 %v7291, %v7394
        %v7408 = vmul.f32 %v7296, %v7394
        %v7409 = vmul.f32 %v7301, %v7394
        %v7410 = vmul.f32 %v7306, %v7394
        %v7411 = vmul.f32 %v7311, %v7394
        %v7412 = vmul.f32 %v7316, %v7394
        %v7413 = vmul.f32 %v7321, %v7394
        %v7414 = vmul.f32 %v7326, %v7394
        %v7415 = vmul.f32 %v7331, %v7394
        %v7416 = vmul.f32 %v7336, %v7394
        %v7417 = vmul.f32 %v7341, %v7394
        %v7418 = vmul.f32 %v7346, %v7394
        %v7419 = vmul.f32 %v7351, %v7394
        %v7420 = vmul.f32 %v7356, %v7394
        %v7421 = vmul.f32 %v7361, %v7394
        %v7422 = vmul.f32 %v7366, %v7394
        %v7423 = vmul.f32 %v7371, %v7394
        %v7424 = vmul.f32 %v7376, %v7394
        %v7425 = vmul.f32 %v7381, %v7394
        %v7426 = vmul.f32 %v7386, %v7394
        %v7427 = vmul.f32 %v7391, %v7394
        %v7428 = vadd.f32 %v7135, %v7396
        %v7429 = vadd.f32 %v7136, %v7397
        %v7430 = vadd.f32 %v7137, %v7398
        %v7431 = vadd.f32 %v7138, %v7399
        %v7432 = vadd.f32 %v7139, %v7400
        %v7433 = vadd.f32 %v7140, %v7401
        %v7434 = vadd.f32 %v7141, %v7402
        %v7435 = vadd.f32 %v7142, %v7403
        %v7436 = vadd.f32 %v7143, %v7404
        %v7437 = vadd.f32 %v7144, %v7405
        %v7438 = vadd.f32 %v7145, %v7406
        %v7439 = vadd.f32 %v7146, %v7407
        %v7440 = vadd.f32 %v7147, %v7408
        %v7441 = vadd.f32 %v7148, %v7409
        %v7442 = vadd.f32 %v7149, %v7410
        %v7443 = vadd.f32 %v7150, %v7411
        %v7444 = vadd.f32 %v7151, %v7412
        %v7445 = vadd.f32 %v7152, %v7413
        %v7446 = vadd.f32 %v7153, %v7414
        %v7447 = vadd.f32 %v7154, %v7415
        %v7448 = vadd.f32 %v7155, %v7416
        %v7449 = vadd.f32 %v7156, %v7417
        %v7450 = vadd.f32 %v7157, %v7418
        %v7451 = vadd.f32 %v7158, %v7419
        %v7452 = vadd.f32 %v7159, %v7420
        %v7453 = vadd.f32 %v7160, %v7421
        %v7454 = vadd.f32 %v7161, %v7422
        %v7455 = vadd.f32 %v7162, %v7423
        %v7456 = vadd.f32 %v7163, %v7424
        %v7457 = vadd.f32 %v7164, %v7425
        %v7458 = vadd.f32 %v7165, %v7426
        %v7459 = vadd.f32 %v7166, %v7427
        %v7460 = vld [vmem:[#allocation3 + $0x11] sm:$0xff]
        %v7461 = vld [vmem:[#allocation3 + $0x19] sm:$0xff]
        %v7462 = vld [vmem:[#allocation3 + $0x21] sm:$0xff]
        %v7463 = vld [vmem:[#allocation3 + $0x29] sm:$0xff]
        %v7464 = vld [vmem:[#allocation3 + $0x31] sm:$0xff]
        %v7465 = vld [vmem:[#allocation3 + $0x39] sm:$0xff]
        %v7466 = vld [vmem:[#allocation3 + $0x41] sm:$0xff]
        %v7467 = vld [vmem:[#allocation3 + $0x49] sm:$0xff]
        %v7468 = vld [vmem:[#allocation3 + $0x51] sm:$0xff]
        %v7469 = vld [vmem:[#allocation3 + $0x59] sm:$0xff]
        %v7470 = vld [vmem:[#allocation3 + $0x61] sm:$0xff]
        %v7471 = vld [vmem:[#allocation3 + $0x69] sm:$0xff]
        %v7472 = vld [vmem:[#allocation3 + $0x71] sm:$0xff]
        %v7473 = vld [vmem:[#allocation3 + $0x79] sm:$0xff]
        %v7474 = vld [vmem:[#allocation3 + $0x81] sm:$0xff]
        %v7475 = vld [vmem:[#allocation3 + $0x89] sm:$0xff]
        %v7476 = vld [vmem:[#allocation3 + $0x91] sm:$0xff]
        %v7477 = vld [vmem:[#allocation3 + $0x99] sm:$0xff]
        %v7478 = vld [vmem:[#allocation3 + $0xa1] sm:$0xff]
        %v7479 = vld [vmem:[#allocation3 + $0xa9] sm:$0xff]
        %v7480 = vld [vmem:[#allocation3 + $0xb1] sm:$0xff]
        %v7481 = vld [vmem:[#allocation3 + $0xb9] sm:$0xff]
        %v7482 = vld [vmem:[#allocation3 + $0xc1] sm:$0xff]
        %v7483 = vld [vmem:[#allocation3 + $0xc9] sm:$0xff]
        %v7484 = vld [vmem:[#allocation3 + $0xd1] sm:$0xff]
        %v7485 = vld [vmem:[#allocation3 + $0xd9] sm:$0xff]
        %v7486 = vld [vmem:[#allocation3 + $0xe1] sm:$0xff]
        %v7487 = vld [vmem:[#allocation3 + $0xe9] sm:$0xff]
        %v7488 = vld [vmem:[#allocation3 + $0xf1] sm:$0xff]
        %v7489 = vld [vmem:[#allocation3 + $0xf9] sm:$0xff]
        %v7490 = vld [vmem:[#allocation3 + $0x101] sm:$0xff]
        %v7491 = vld [vmem:[#allocation3 + $0x109] sm:$0xff]
        %s7492 = scalar_lea.vmem %s7, 4
        %v7493 = vld [vmem:[%s7492] sm:$0x1]
        %7495 = vset.pattern.permute.xlu0 0
        %7496 = vperm.xlu0 %7495, %v7460
        %v7497 = vpop.permute.xlu0 %7496
        %7500 = vset.pattern.permute.xlu0 0
        %7501 = vperm.xlu0 %7500, %v7461
        %v7502 = vpop.permute.xlu0 %7501
        %7505 = vset.pattern.permute.xlu0 0
        %7506 = vperm.xlu0 %7505, %v7462
        %v7507 = vpop.permute.xlu0 %7506
        %7510 = vset.pattern.permute.xlu0 0
        %7511 = vperm.xlu0 %7510, %v7463
        %v7512 = vpop.permute.xlu0 %7511
        %7515 = vset.pattern.permute.xlu0 0
        %7516 = vperm.xlu0 %7515, %v7464
        %v7517 = vpop.permute.xlu0 %7516
        %7520 = vset.pattern.permute.xlu0 0
        %7521 = vperm.xlu0 %7520, %v7465
        %v7522 = vpop.permute.xlu0 %7521
        %7525 = vset.pattern.permute.xlu0 0
        %7526 = vperm.xlu0 %7525, %v7466
        %v7527 = vpop.permute.xlu0 %7526
        %7530 = vset.pattern.permute.xlu0 0
        %7531 = vperm.xlu0 %7530, %v7467
        %v7532 = vpop.permute.xlu0 %7531
        %7535 = vset.pattern.permute.xlu0 0
        %7536 = vperm.xlu0 %7535, %v7468
        %v7537 = vpop.permute.xlu0 %7536
        %7540 = vset.pattern.permute.xlu0 0
        %7541 = vperm.xlu0 %7540, %v7469
        %v7542 = vpop.permute.xlu0 %7541
        %7545 = vset.pattern.permute.xlu0 0
        %7546 = vperm.xlu0 %7545, %v7470
        %v7547 = vpop.permute.xlu0 %7546
        %7550 = vset.pattern.permute.xlu0 0
        %7551 = vperm.xlu0 %7550, %v7471
        %v7552 = vpop.permute.xlu0 %7551
        %7555 = vset.pattern.permute.xlu0 0
        %7556 = vperm.xlu0 %7555, %v7472
        %v7557 = vpop.permute.xlu0 %7556
        %7560 = vset.pattern.permute.xlu0 0
        %7561 = vperm.xlu0 %7560, %v7473
        %v7562 = vpop.permute.xlu0 %7561
        %7565 = vset.pattern.permute.xlu0 0
        %7566 = vperm.xlu0 %7565, %v7474
        %v7567 = vpop.permute.xlu0 %7566
        %7570 = vset.pattern.permute.xlu0 0
        %7571 = vperm.xlu0 %7570, %v7475
        %v7572 = vpop.permute.xlu0 %7571
        %7575 = vset.pattern.permute.xlu0 0
        %7576 = vperm.xlu0 %7575, %v7476
        %v7577 = vpop.permute.xlu0 %7576
        %7580 = vset.pattern.permute.xlu0 0
        %7581 = vperm.xlu0 %7580, %v7477
        %v7582 = vpop.permute.xlu0 %7581
        %7585 = vset.pattern.permute.xlu0 0
        %7586 = vperm.xlu0 %7585, %v7478
        %v7587 = vpop.permute.xlu0 %7586
        %7590 = vset.pattern.permute.xlu0 0
        %7591 = vperm.xlu0 %7590, %v7479
        %v7592 = vpop.permute.xlu0 %7591
        %7595 = vset.pattern.permute.xlu0 0
        %7596 = vperm.xlu0 %7595, %v7480
        %v7597 = vpop.permute.xlu0 %7596
        %7600 = vset.pattern.permute.xlu0 0
        %7601 = vperm.xlu0 %7600, %v7481
        %v7602 = vpop.permute.xlu0 %7601
        %7605 = vset.pattern.permute.xlu0 0
        %7606 = vperm.xlu0 %7605, %v7482
        %v7607 = vpop.permute.xlu0 %7606
        %7610 = vset.pattern.permute.xlu0 0
        %7611 = vperm.xlu0 %7610, %v7483
        %v7612 = vpop.permute.xlu0 %7611
        %7615 = vset.pattern.permute.xlu0 0
        %7616 = vperm.xlu0 %7615, %v7484
        %v7617 = vpop.permute.xlu0 %7616
        %7620 = vset.pattern.permute.xlu0 0
        %7621 = vperm.xlu0 %7620, %v7485
        %v7622 = vpop.permute.xlu0 %7621
        %7625 = vset.pattern.permute.xlu0 0
        %7626 = vperm.xlu0 %7625, %v7486
        %v7627 = vpop.permute.xlu0 %7626
        %7630 = vset.pattern.permute.xlu0 0
        %7631 = vperm.xlu0 %7630, %v7487
        %v7632 = vpop.permute.xlu0 %7631
        %7635 = vset.pattern.permute.xlu0 0
        %7636 = vperm.xlu0 %7635, %v7488
        %v7637 = vpop.permute.xlu0 %7636
        %7640 = vset.pattern.permute.xlu0 0
        %7641 = vperm.xlu0 %7640, %v7489
        %v7642 = vpop.permute.xlu0 %7641
        %7645 = vset.pattern.permute.xlu0 0
        %7646 = vperm.xlu0 %7645, %v7490
        %v7647 = vpop.permute.xlu0 %7646
        %7650 = vset.pattern.permute.xlu0 0
        %7651 = vperm.xlu0 %7650, %v7491
        %v7652 = vpop.permute.xlu0 %7651
        %v7655 = vperm.slane %v7493, 0
        %v7657 = vmul.f32 %v7497, %v7655
        %v7658 = vmul.f32 %v7502, %v7655
        %v7659 = vmul.f32 %v7507, %v7655
        %v7660 = vmul.f32 %v7512, %v7655
        %v7661 = vmul.f32 %v7517, %v7655
        %v7662 = vmul.f32 %v7522, %v7655
        %v7663 = vmul.f32 %v7527, %v7655
        %v7664 = vmul.f32 %v7532, %v7655
        %v7665 = vmul.f32 %v7537, %v7655
        %v7666 = vmul.f32 %v7542, %v7655
        %v7667 = vmul.f32 %v7547, %v7655
        %v7668 = vmul.f32 %v7552, %v7655
        %v7669 = vmul.f32 %v7557, %v7655
        %v7670 = vmul.f32 %v7562, %v7655
        %v7671 = vmul.f32 %v7567, %v7655
        %v7672 = vmul.f32 %v7572, %v7655
        %v7673 = vmul.f32 %v7577, %v7655
        %v7674 = vmul.f32 %v7582, %v7655
        %v7675 = vmul.f32 %v7587, %v7655
        %v7676 = vmul.f32 %v7592, %v7655
        %v7677 = vmul.f32 %v7597, %v7655
        %v7678 = vmul.f32 %v7602, %v7655
        %v7679 = vmul.f32 %v7607, %v7655
        %v7680 = vmul.f32 %v7612, %v7655
        %v7681 = vmul.f32 %v7617, %v7655
        %v7682 = vmul.f32 %v7622, %v7655
        %v7683 = vmul.f32 %v7627, %v7655
        %v7684 = vmul.f32 %v7632, %v7655
        %v7685 = vmul.f32 %v7637, %v7655
        %v7686 = vmul.f32 %v7642, %v7655
        %v7687 = vmul.f32 %v7647, %v7655
        %v7688 = vmul.f32 %v7652, %v7655
        %v7689 = vadd.f32 %v7428, %v7657
        %v7690 = vadd.f32 %v7429, %v7658
        %v7691 = vadd.f32 %v7430, %v7659
        %v7692 = vadd.f32 %v7431, %v7660
        %v7693 = vadd.f32 %v7432, %v7661
        %v7694 = vadd.f32 %v7433, %v7662
        %v7695 = vadd.f32 %v7434, %v7663
        %v7696 = vadd.f32 %v7435, %v7664
        %v7697 = vadd.f32 %v7436, %v7665
        %v7698 = vadd.f32 %v7437, %v7666
        %v7699 = vadd.f32 %v7438, %v7667
        %v7700 = vadd.f32 %v7439, %v7668
        %v7701 = vadd.f32 %v7440, %v7669
        %v7702 = vadd.f32 %v7441, %v7670
        %v7703 = vadd.f32 %v7442, %v7671
        %v7704 = vadd.f32 %v7443, %v7672
        %v7705 = vadd.f32 %v7444, %v7673
        %v7706 = vadd.f32 %v7445, %v7674
        %v7707 = vadd.f32 %v7446, %v7675
        %v7708 = vadd.f32 %v7447, %v7676
        %v7709 = vadd.f32 %v7448, %v7677
        %v7710 = vadd.f32 %v7449, %v7678
        %v7711 = vadd.f32 %v7450, %v7679
        %v7712 = vadd.f32 %v7451, %v7680
        %v7713 = vadd.f32 %v7452, %v7681
        %v7714 = vadd.f32 %v7453, %v7682
        %v7715 = vadd.f32 %v7454, %v7683
        %v7716 = vadd.f32 %v7455, %v7684
        %v7717 = vadd.f32 %v7456, %v7685
        %v7718 = vadd.f32 %v7457, %v7686
        %v7719 = vadd.f32 %v7458, %v7687
        %v7720 = vadd.f32 %v7459, %v7688
        %v7721 = vld [vmem:[#allocation3 + $0x12] sm:$0xff]
        %v7722 = vld [vmem:[#allocation3 + $0x1a] sm:$0xff]
        %v7723 = vld [vmem:[#allocation3 + $0x22] sm:$0xff]
        %v7724 = vld [vmem:[#allocation3 + $0x2a] sm:$0xff]
        %v7725 = vld [vmem:[#allocation3 + $0x32] sm:$0xff]
        %v7726 = vld [vmem:[#allocation3 + $0x3a] sm:$0xff]
        %v7727 = vld [vmem:[#allocation3 + $0x42] sm:$0xff]
        %v7728 = vld [vmem:[#allocation3 + $0x4a] sm:$0xff]
        %v7729 = vld [vmem:[#allocation3 + $0x52] sm:$0xff]
        %v7730 = vld [vmem:[#allocation3 + $0x5a] sm:$0xff]
        %v7731 = vld [vmem:[#allocation3 + $0x62] sm:$0xff]
        %v7732 = vld [vmem:[#allocation3 + $0x6a] sm:$0xff]
        %v7733 = vld [vmem:[#allocation3 + $0x72] sm:$0xff]
        %v7734 = vld [vmem:[#allocation3 + $0x7a] sm:$0xff]
        %v7735 = vld [vmem:[#allocation3 + $0x82] sm:$0xff]
        %v7736 = vld [vmem:[#allocation3 + $0x8a] sm:$0xff]
        %v7737 = vld [vmem:[#allocation3 + $0x92] sm:$0xff]
        %v7738 = vld [vmem:[#allocation3 + $0x9a] sm:$0xff]
        %v7739 = vld [vmem:[#allocation3 + $0xa2] sm:$0xff]
        %v7740 = vld [vmem:[#allocation3 + $0xaa] sm:$0xff]
        %v7741 = vld [vmem:[#allocation3 + $0xb2] sm:$0xff]
        %v7742 = vld [vmem:[#allocation3 + $0xba] sm:$0xff]
        %v7743 = vld [vmem:[#allocation3 + $0xc2] sm:$0xff]
        %v7744 = vld [vmem:[#allocation3 + $0xca] sm:$0xff]
        %v7745 = vld [vmem:[#allocation3 + $0xd2] sm:$0xff]
        %v7746 = vld [vmem:[#allocation3 + $0xda] sm:$0xff]
        %v7747 = vld [vmem:[#allocation3 + $0xe2] sm:$0xff]
        %v7748 = vld [vmem:[#allocation3 + $0xea] sm:$0xff]
        %v7749 = vld [vmem:[#allocation3 + $0xf2] sm:$0xff]
        %v7750 = vld [vmem:[#allocation3 + $0xfa] sm:$0xff]
        %v7751 = vld [vmem:[#allocation3 + $0x102] sm:$0xff]
        %v7752 = vld [vmem:[#allocation3 + $0x10a] sm:$0xff]
        %v7753 = vmul.f32 %v7721, %v458
        %v7754 = vmul.f32 %v7722, %v459
        %v7755 = vmul.f32 %v7723, %v460
        %v7756 = vmul.f32 %v7724, %v461
        %v7757 = vmul.f32 %v7725, %v462
        %v7758 = vmul.f32 %v7726, %v463
        %v7759 = vmul.f32 %v7727, %v464
        %v7760 = vmul.f32 %v7728, %v465
        %v7761 = vmul.f32 %v7729, %v466
        %v7762 = vmul.f32 %v7730, %v467
        %v7763 = vmul.f32 %v7731, %v468
        %v7764 = vmul.f32 %v7732, %v469
        %v7765 = vmul.f32 %v7733, %v470
        %v7766 = vmul.f32 %v7734, %v471
        %v7767 = vmul.f32 %v7735, %v472
        %v7768 = vmul.f32 %v7736, %v473
        %v7769 = vmul.f32 %v7737, %v474
        %v7770 = vmul.f32 %v7738, %v475
        %v7771 = vmul.f32 %v7739, %v476
        %v7772 = vmul.f32 %v7740, %v477
        %v7773 = vmul.f32 %v7741, %v478
        %v7774 = vmul.f32 %v7742, %v479
        %v7775 = vmul.f32 %v7743, %v480
        %v7776 = vmul.f32 %v7744, %v481
        %v7777 = vmul.f32 %v7745, %v482
        %v7778 = vmul.f32 %v7746, %v483
        %v7779 = vmul.f32 %v7747, %v484
        %v7780 = vmul.f32 %v7748, %v485
        %v7781 = vmul.f32 %v7749, %v486
        %v7782 = vmul.f32 %v7750, %v487
        %v7783 = vmul.f32 %v7751, %v488
        %v7784 = vmul.f32 %v7752, %v489
        %s7785 = scalar_lea.vmem %s7, 5
        %v7786 = vld [vmem:[%s7785] sm:$0x1]
        %7788 = vset.pattern.permute.xlu0 0
        %7789 = vperm.xlu0 %7788, %v7753
        %v7790 = vpop.permute.xlu0 %7789
        %7793 = vset.pattern.permute.xlu0 0
        %7794 = vperm.xlu0 %7793, %v7754
        %v7795 = vpop.permute.xlu0 %7794
        %7798 = vset.pattern.permute.xlu0 0
        %7799 = vperm.xlu0 %7798, %v7755
        %v7800 = vpop.permute.xlu0 %7799
        %7803 = vset.pattern.permute.xlu0 0
        %7804 = vperm.xlu0 %7803, %v7756
        %v7805 = vpop.permute.xlu0 %7804
        %7808 = vset.pattern.permute.xlu0 0
        %7809 = vperm.xlu0 %7808, %v7757
        %v7810 = vpop.permute.xlu0 %7809
        %7813 = vset.pattern.permute.xlu0 0
        %7814 = vperm.xlu0 %7813, %v7758
        %v7815 = vpop.permute.xlu0 %7814
        %7818 = vset.pattern.permute.xlu0 0
        %7819 = vperm.xlu0 %7818, %v7759
        %v7820 = vpop.permute.xlu0 %7819
        %7823 = vset.pattern.permute.xlu0 0
        %7824 = vperm.xlu0 %7823, %v7760
        %v7825 = vpop.permute.xlu0 %7824
        %7828 = vset.pattern.permute.xlu0 0
        %7829 = vperm.xlu0 %7828, %v7761
        %v7830 = vpop.permute.xlu0 %7829
        %7833 = vset.pattern.permute.xlu0 0
        %7834 = vperm.xlu0 %7833, %v7762
        %v7835 = vpop.permute.xlu0 %7834
        %7838 = vset.pattern.permute.xlu0 0
        %7839 = vperm.xlu0 %7838, %v7763
        %v7840 = vpop.permute.xlu0 %7839
        %7843 = vset.pattern.permute.xlu0 0
        %7844 = vperm.xlu0 %7843, %v7764
        %v7845 = vpop.permute.xlu0 %7844
        %7848 = vset.pattern.permute.xlu0 0
        %7849 = vperm.xlu0 %7848, %v7765
        %v7850 = vpop.permute.xlu0 %7849
        %7853 = vset.pattern.permute.xlu0 0
        %7854 = vperm.xlu0 %7853, %v7766
        %v7855 = vpop.permute.xlu0 %7854
        %7858 = vset.pattern.permute.xlu0 0
        %7859 = vperm.xlu0 %7858, %v7767
        %v7860 = vpop.permute.xlu0 %7859
        %7863 = vset.pattern.permute.xlu0 0
        %7864 = vperm.xlu0 %7863, %v7768
        %v7865 = vpop.permute.xlu0 %7864
        %7868 = vset.pattern.permute.xlu0 0
        %7869 = vperm.xlu0 %7868, %v7769
        %v7870 = vpop.permute.xlu0 %7869
        %7873 = vset.pattern.permute.xlu0 0
        %7874 = vperm.xlu0 %7873, %v7770
        %v7875 = vpop.permute.xlu0 %7874
        %7878 = vset.pattern.permute.xlu0 0
        %7879 = vperm.xlu0 %7878, %v7771
        %v7880 = vpop.permute.xlu0 %7879
        %7883 = vset.pattern.permute.xlu0 0
        %7884 = vperm.xlu0 %7883, %v7772
        %v7885 = vpop.permute.xlu0 %7884
        %7888 = vset.pattern.permute.xlu0 0
        %7889 = vperm.xlu0 %7888, %v7773
        %v7890 = vpop.permute.xlu0 %7889
        %7893 = vset.pattern.permute.xlu0 0
        %7894 = vperm.xlu0 %7893, %v7774
        %v7895 = vpop.permute.xlu0 %7894
        %7898 = vset.pattern.permute.xlu0 0
        %7899 = vperm.xlu0 %7898, %v7775
        %v7900 = vpop.permute.xlu0 %7899
        %7903 = vset.pattern.permute.xlu0 0
        %7904 = vperm.xlu0 %7903, %v7776
        %v7905 = vpop.permute.xlu0 %7904
        %7908 = vset.pattern.permute.xlu0 0
        %7909 = vperm.xlu0 %7908, %v7777
        %v7910 = vpop.permute.xlu0 %7909
        %7913 = vset.pattern.permute.xlu0 0
        %7914 = vperm.xlu0 %7913, %v7778
        %v7915 = vpop.permute.xlu0 %7914
        %7918 = vset.pattern.permute.xlu0 0
        %7919 = vperm.xlu0 %7918, %v7779
        %v7920 = vpop.permute.xlu0 %7919
        %7923 = vset.pattern.permute.xlu0 0
        %7924 = vperm.xlu0 %7923, %v7780
        %v7925 = vpop.permute.xlu0 %7924
        %7928 = vset.pattern.permute.xlu0 0
        %7929 = vperm.xlu0 %7928, %v7781
        %v7930 = vpop.permute.xlu0 %7929
        %7933 = vset.pattern.permute.xlu0 0
        %7934 = vperm.xlu0 %7933, %v7782
        %v7935 = vpop.permute.xlu0 %7934
        %7938 = vset.pattern.permute.xlu0 0
        %7939 = vperm.xlu0 %7938, %v7783
        %v7940 = vpop.permute.xlu0 %7939
        %7943 = vset.pattern.permute.xlu0 0
        %7944 = vperm.xlu0 %7943, %v7784
        %v7945 = vpop.permute.xlu0 %7944
        %v7948 = vperm.slane %v7786, 0
        %v7950 = vmul.f32 %v7790, %v7948
        %v7951 = vmul.f32 %v7795, %v7948
        %v7952 = vmul.f32 %v7800, %v7948
        %v7953 = vmul.f32 %v7805, %v7948
        %v7954 = vmul.f32 %v7810, %v7948
        %v7955 = vmul.f32 %v7815, %v7948
        %v7956 = vmul.f32 %v7820, %v7948
        %v7957 = vmul.f32 %v7825, %v7948
        %v7958 = vmul.f32 %v7830, %v7948
        %v7959 = vmul.f32 %v7835, %v7948
        %v7960 = vmul.f32 %v7840, %v7948
        %v7961 = vmul.f32 %v7845, %v7948
        %v7962 = vmul.f32 %v7850, %v7948
        %v7963 = vmul.f32 %v7855, %v7948
        %v7964 = vmul.f32 %v7860, %v7948
        %v7965 = vmul.f32 %v7865, %v7948
        %v7966 = vmul.f32 %v7870, %v7948
        %v7967 = vmul.f32 %v7875, %v7948
        %v7968 = vmul.f32 %v7880, %v7948
        %v7969 = vmul.f32 %v7885, %v7948
        %v7970 = vmul.f32 %v7890, %v7948
        %v7971 = vmul.f32 %v7895, %v7948
        %v7972 = vmul.f32 %v7900, %v7948
        %v7973 = vmul.f32 %v7905, %v7948
        %v7974 = vmul.f32 %v7910, %v7948
        %v7975 = vmul.f32 %v7915, %v7948
        %v7976 = vmul.f32 %v7920, %v7948
        %v7977 = vmul.f32 %v7925, %v7948
        %v7978 = vmul.f32 %v7930, %v7948
        %v7979 = vmul.f32 %v7935, %v7948
        %v7980 = vmul.f32 %v7940, %v7948
        %v7981 = vmul.f32 %v7945, %v7948
        %v7982 = vadd.f32 %v7689, %v7950
        %v7983 = vadd.f32 %v7690, %v7951
        %v7984 = vadd.f32 %v7691, %v7952
        %v7985 = vadd.f32 %v7692, %v7953
        %v7986 = vadd.f32 %v7693, %v7954
        %v7987 = vadd.f32 %v7694, %v7955
        %v7988 = vadd.f32 %v7695, %v7956
        %v7989 = vadd.f32 %v7696, %v7957
        %v7990 = vadd.f32 %v7697, %v7958
        %v7991 = vadd.f32 %v7698, %v7959
        %v7992 = vadd.f32 %v7699, %v7960
        %v7993 = vadd.f32 %v7700, %v7961
        %v7994 = vadd.f32 %v7701, %v7962
        %v7995 = vadd.f32 %v7702, %v7963
        %v7996 = vadd.f32 %v7703, %v7964
        %v7997 = vadd.f32 %v7704, %v7965
        %v7998 = vadd.f32 %v7705, %v7966
        %v7999 = vadd.f32 %v7706, %v7967
        %v8000 = vadd.f32 %v7707, %v7968
        %v8001 = vadd.f32 %v7708, %v7969
        %v8002 = vadd.f32 %v7709, %v7970
        %v8003 = vadd.f32 %v7710, %v7971
        %v8004 = vadd.f32 %v7711, %v7972
        %v8005 = vadd.f32 %v7712, %v7973
        %v8006 = vadd.f32 %v7713, %v7974
        %v8007 = vadd.f32 %v7714, %v7975
        %v8008 = vadd.f32 %v7715, %v7976
        %v8009 = vadd.f32 %v7716, %v7977
        %v8010 = vadd.f32 %v7717, %v7978
        %v8011 = vadd.f32 %v7718, %v7979
        %v8012 = vadd.f32 %v7719, %v7980
        %v8013 = vadd.f32 %v7720, %v7981
        %v8014 = vld [vmem:[#allocation3 + $0x20] sm:$0xff]
        %v8015 = vld [vmem:[#allocation3 + $0x28] sm:$0xff]
        %v8016 = vld [vmem:[#allocation3 + $0x30] sm:$0xff]
        %v8017 = vld [vmem:[#allocation3 + $0x38] sm:$0xff]
        %v8018 = vld [vmem:[#allocation3 + $0x40] sm:$0xff]
        %v8019 = vld [vmem:[#allocation3 + $0x48] sm:$0xff]
        %v8020 = vld [vmem:[#allocation3 + $0x50] sm:$0xff]
        %v8021 = vld [vmem:[#allocation3 + $0x58] sm:$0xff]
        %v8022 = vld [vmem:[#allocation3 + $0x60] sm:$0xff]
        %v8023 = vld [vmem:[#allocation3 + $0x68] sm:$0xff]
        %v8024 = vld [vmem:[#allocation3 + $0x70] sm:$0xff]
        %v8025 = vld [vmem:[#allocation3 + $0x78] sm:$0xff]
        %v8026 = vld [vmem:[#allocation3 + $0x80] sm:$0xff]
        %v8027 = vld [vmem:[#allocation3 + $0x88] sm:$0xff]
        %v8028 = vld [vmem:[#allocation3 + $0x90] sm:$0xff]
        %v8029 = vld [vmem:[#allocation3 + $0x98] sm:$0xff]
        %v8030 = vld [vmem:[#allocation3 + $0xa0] sm:$0xff]
        %v8031 = vld [vmem:[#allocation3 + $0xa8] sm:$0xff]
        %v8032 = vld [vmem:[#allocation3 + $0xb0] sm:$0xff]
        %v8033 = vld [vmem:[#allocation3 + $0xb8] sm:$0xff]
        %v8034 = vld [vmem:[#allocation3 + $0xc0] sm:$0xff]
        %v8035 = vld [vmem:[#allocation3 + $0xc8] sm:$0xff]
        %v8036 = vld [vmem:[#allocation3 + $0xd0] sm:$0xff]
        %v8037 = vld [vmem:[#allocation3 + $0xd8] sm:$0xff]
        %v8038 = vld [vmem:[#allocation3 + $0xe0] sm:$0xff]
        %v8039 = vld [vmem:[#allocation3 + $0xe8] sm:$0xff]
        %v8040 = vld [vmem:[#allocation3 + $0xf0] sm:$0xff]
        %v8041 = vld [vmem:[#allocation3 + $0xf8] sm:$0xff]
        %v8042 = vld [vmem:[#allocation3 + $0x100] sm:$0xff]
        %v8043 = vld [vmem:[#allocation3 + $0x108] sm:$0xff]
        %v8044 = vld [vmem:[#allocation3 + $0x110] sm:$0xff]
        %v8045 = vld [vmem:[#allocation3 + $0x118] sm:$0xff]
        %v8046 = vmul.f32 %v8014, %v426
        %v8047 = vmul.f32 %v8015, %v427
        %v8048 = vmul.f32 %v8016, %v428
        %v8049 = vmul.f32 %v8017, %v429
        %v8050 = vmul.f32 %v8018, %v430
        %v8051 = vmul.f32 %v8019, %v431
        %v8052 = vmul.f32 %v8020, %v432
        %v8053 = vmul.f32 %v8021, %v433
        %v8054 = vmul.f32 %v8022, %v434
        %v8055 = vmul.f32 %v8023, %v435
        %v8056 = vmul.f32 %v8024, %v436
        %v8057 = vmul.f32 %v8025, %v437
        %v8058 = vmul.f32 %v8026, %v438
        %v8059 = vmul.f32 %v8027, %v439
        %v8060 = vmul.f32 %v8028, %v440
        %v8061 = vmul.f32 %v8029, %v441
        %v8062 = vmul.f32 %v8030, %v442
        %v8063 = vmul.f32 %v8031, %v443
        %v8064 = vmul.f32 %v8032, %v444
        %v8065 = vmul.f32 %v8033, %v445
        %v8066 = vmul.f32 %v8034, %v446
        %v8067 = vmul.f32 %v8035, %v447
        %v8068 = vmul.f32 %v8036, %v448
        %v8069 = vmul.f32 %v8037, %v449
        %v8070 = vmul.f32 %v8038, %v450
        %v8071 = vmul.f32 %v8039, %v451
        %v8072 = vmul.f32 %v8040, %v452
        %v8073 = vmul.f32 %v8041, %v453
        %v8074 = vmul.f32 %v8042, %v454
        %v8075 = vmul.f32 %v8043, %v455
        %v8076 = vmul.f32 %v8044, %v456
        %v8077 = vmul.f32 %v8045, %v457
        %s8078 = scalar_lea.vmem %s7, 6
        %v8079 = vld [vmem:[%s8078] sm:$0x1]
        %8081 = vset.pattern.permute.xlu0 0
        %8082 = vperm.xlu0 %8081, %v8046
        %v8083 = vpop.permute.xlu0 %8082
        %8086 = vset.pattern.permute.xlu0 0
        %8087 = vperm.xlu0 %8086, %v8047
        %v8088 = vpop.permute.xlu0 %8087
        %8091 = vset.pattern.permute.xlu0 0
        %8092 = vperm.xlu0 %8091, %v8048
        %v8093 = vpop.permute.xlu0 %8092
        %8096 = vset.pattern.permute.xlu0 0
        %8097 = vperm.xlu0 %8096, %v8049
        %v8098 = vpop.permute.xlu0 %8097
        %8101 = vset.pattern.permute.xlu0 0
        %8102 = vperm.xlu0 %8101, %v8050
        %v8103 = vpop.permute.xlu0 %8102
        %8106 = vset.pattern.permute.xlu0 0
        %8107 = vperm.xlu0 %8106, %v8051
        %v8108 = vpop.permute.xlu0 %8107
        %8111 = vset.pattern.permute.xlu0 0
        %8112 = vperm.xlu0 %8111, %v8052
        %v8113 = vpop.permute.xlu0 %8112
        %8116 = vset.pattern.permute.xlu0 0
        %8117 = vperm.xlu0 %8116, %v8053
        %v8118 = vpop.permute.xlu0 %8117
        %8121 = vset.pattern.permute.xlu0 0
        %8122 = vperm.xlu0 %8121, %v8054
        %v8123 = vpop.permute.xlu0 %8122
        %8126 = vset.pattern.permute.xlu0 0
        %8127 = vperm.xlu0 %8126, %v8055
        %v8128 = vpop.permute.xlu0 %8127
        %8131 = vset.pattern.permute.xlu0 0
        %8132 = vperm.xlu0 %8131, %v8056
        %v8133 = vpop.permute.xlu0 %8132
        %8136 = vset.pattern.permute.xlu0 0
        %8137 = vperm.xlu0 %8136, %v8057
        %v8138 = vpop.permute.xlu0 %8137
        %8141 = vset.pattern.permute.xlu0 0
        %8142 = vperm.xlu0 %8141, %v8058
        %v8143 = vpop.permute.xlu0 %8142
        %8146 = vset.pattern.permute.xlu0 0
        %8147 = vperm.xlu0 %8146, %v8059
        %v8148 = vpop.permute.xlu0 %8147
        %8151 = vset.pattern.permute.xlu0 0
        %8152 = vperm.xlu0 %8151, %v8060
        %v8153 = vpop.permute.xlu0 %8152
        %8156 = vset.pattern.permute.xlu0 0
        %8157 = vperm.xlu0 %8156, %v8061
        %v8158 = vpop.permute.xlu0 %8157
        %8161 = vset.pattern.permute.xlu0 0
        %8162 = vperm.xlu0 %8161, %v8062
        %v8163 = vpop.permute.xlu0 %8162
        %8166 = vset.pattern.permute.xlu0 0
        %8167 = vperm.xlu0 %8166, %v8063
        %v8168 = vpop.permute.xlu0 %8167
        %8171 = vset.pattern.permute.xlu0 0
        %8172 = vperm.xlu0 %8171, %v8064
        %v8173 = vpop.permute.xlu0 %8172
        %8176 = vset.pattern.permute.xlu0 0
        %8177 = vperm.xlu0 %8176, %v8065
        %v8178 = vpop.permute.xlu0 %8177
        %8181 = vset.pattern.permute.xlu0 0
        %8182 = vperm.xlu0 %8181, %v8066
        %v8183 = vpop.permute.xlu0 %8182
        %8186 = vset.pattern.permute.xlu0 0
        %8187 = vperm.xlu0 %8186, %v8067
        %v8188 = vpop.permute.xlu0 %8187
        %8191 = vset.pattern.permute.xlu0 0
        %8192 = vperm.xlu0 %8191, %v8068
        %v8193 = vpop.permute.xlu0 %8192
        %8196 = vset.pattern.permute.xlu0 0
        %8197 = vperm.xlu0 %8196, %v8069
        %v8198 = vpop.permute.xlu0 %8197
        %8201 = vset.pattern.permute.xlu0 0
        %8202 = vperm.xlu0 %8201, %v8070
        %v8203 = vpop.permute.xlu0 %8202
        %8206 = vset.pattern.permute.xlu0 0
        %8207 = vperm.xlu0 %8206, %v8071
        %v8208 = vpop.permute.xlu0 %8207
        %8211 = vset.pattern.permute.xlu0 0
        %8212 = vperm.xlu0 %8211, %v8072
        %v8213 = vpop.permute.xlu0 %8212
        %8216 = vset.pattern.permute.xlu0 0
        %8217 = vperm.xlu0 %8216, %v8073
        %v8218 = vpop.permute.xlu0 %8217
        %8221 = vset.pattern.permute.xlu0 0
        %8222 = vperm.xlu0 %8221, %v8074
        %v8223 = vpop.permute.xlu0 %8222
        %8226 = vset.pattern.permute.xlu0 0
        %8227 = vperm.xlu0 %8226, %v8075
        %v8228 = vpop.permute.xlu0 %8227
        %8231 = vset.pattern.permute.xlu0 0
        %8232 = vperm.xlu0 %8231, %v8076
        %v8233 = vpop.permute.xlu0 %8232
        %8236 = vset.pattern.permute.xlu0 0
        %8237 = vperm.xlu0 %8236, %v8077
        %v8238 = vpop.permute.xlu0 %8237
        %v8241 = vperm.slane %v8079, 0
        %v8243 = vmul.f32 %v8083, %v8241
        %v8244 = vmul.f32 %v8088, %v8241
        %v8245 = vmul.f32 %v8093, %v8241
        %v8246 = vmul.f32 %v8098, %v8241
        %v8247 = vmul.f32 %v8103, %v8241
        %v8248 = vmul.f32 %v8108, %v8241
        %v8249 = vmul.f32 %v8113, %v8241
        %v8250 = vmul.f32 %v8118, %v8241
        %v8251 = vmul.f32 %v8123, %v8241
        %v8252 = vmul.f32 %v8128, %v8241
        %v8253 = vmul.f32 %v8133, %v8241
        %v8254 = vmul.f32 %v8138, %v8241
        %v8255 = vmul.f32 %v8143, %v8241
        %v8256 = vmul.f32 %v8148, %v8241
        %v8257 = vmul.f32 %v8153, %v8241
        %v8258 = vmul.f32 %v8158, %v8241
        %v8259 = vmul.f32 %v8163, %v8241
        %v8260 = vmul.f32 %v8168, %v8241
        %v8261 = vmul.f32 %v8173, %v8241
        %v8262 = vmul.f32 %v8178, %v8241
        %v8263 = vmul.f32 %v8183, %v8241
        %v8264 = vmul.f32 %v8188, %v8241
        %v8265 = vmul.f32 %v8193, %v8241
        %v8266 = vmul.f32 %v8198, %v8241
        %v8267 = vmul.f32 %v8203, %v8241
        %v8268 = vmul.f32 %v8208, %v8241
        %v8269 = vmul.f32 %v8213, %v8241
        %v8270 = vmul.f32 %v8218, %v8241
        %v8271 = vmul.f32 %v8223, %v8241
        %v8272 = vmul.f32 %v8228, %v8241
        %v8273 = vmul.f32 %v8233, %v8241
        %v8274 = vmul.f32 %v8238, %v8241
        %v8275 = vadd.f32 %v7982, %v8243
        %v8276 = vadd.f32 %v7983, %v8244
        %v8277 = vadd.f32 %v7984, %v8245
        %v8278 = vadd.f32 %v7985, %v8246
        %v8279 = vadd.f32 %v7986, %v8247
        %v8280 = vadd.f32 %v7987, %v8248
        %v8281 = vadd.f32 %v7988, %v8249
        %v8282 = vadd.f32 %v7989, %v8250
        %v8283 = vadd.f32 %v7990, %v8251
        %v8284 = vadd.f32 %v7991, %v8252
        %v8285 = vadd.f32 %v7992, %v8253
        %v8286 = vadd.f32 %v7993, %v8254
        %v8287 = vadd.f32 %v7994, %v8255
        %v8288 = vadd.f32 %v7995, %v8256
        %v8289 = vadd.f32 %v7996, %v8257
        %v8290 = vadd.f32 %v7997, %v8258
        %v8291 = vadd.f32 %v7998, %v8259
        %v8292 = vadd.f32 %v7999, %v8260
        %v8293 = vadd.f32 %v8000, %v8261
        %v8294 = vadd.f32 %v8001, %v8262
        %v8295 = vadd.f32 %v8002, %v8263
        %v8296 = vadd.f32 %v8003, %v8264
        %v8297 = vadd.f32 %v8004, %v8265
        %v8298 = vadd.f32 %v8005, %v8266
        %v8299 = vadd.f32 %v8006, %v8267
        %v8300 = vadd.f32 %v8007, %v8268
        %v8301 = vadd.f32 %v8008, %v8269
        %v8302 = vadd.f32 %v8009, %v8270
        %v8303 = vadd.f32 %v8010, %v8271
        %v8304 = vadd.f32 %v8011, %v8272
        %v8305 = vadd.f32 %v8012, %v8273
        %v8306 = vadd.f32 %v8013, %v8274
        %v8307 = vld [vmem:[#allocation3 + $0x21] sm:$0xff]
        %v8308 = vld [vmem:[#allocation3 + $0x29] sm:$0xff]
        %v8309 = vld [vmem:[#allocation3 + $0x31] sm:$0xff]
        %v8310 = vld [vmem:[#allocation3 + $0x39] sm:$0xff]
        %v8311 = vld [vmem:[#allocation3 + $0x41] sm:$0xff]
        %v8312 = vld [vmem:[#allocation3 + $0x49] sm:$0xff]
        %v8313 = vld [vmem:[#allocation3 + $0x51] sm:$0xff]
        %v8314 = vld [vmem:[#allocation3 + $0x59] sm:$0xff]
        %v8315 = vld [vmem:[#allocation3 + $0x61] sm:$0xff]
        %v8316 = vld [vmem:[#allocation3 + $0x69] sm:$0xff]
        %v8317 = vld [vmem:[#allocation3 + $0x71] sm:$0xff]
        %v8318 = vld [vmem:[#allocation3 + $0x79] sm:$0xff]
        %v8319 = vld [vmem:[#allocation3 + $0x81] sm:$0xff]
        %v8320 = vld [vmem:[#allocation3 + $0x89] sm:$0xff]
        %v8321 = vld [vmem:[#allocation3 + $0x91] sm:$0xff]
        %v8322 = vld [vmem:[#allocation3 + $0x99] sm:$0xff]
        %v8323 = vld [vmem:[#allocation3 + $0xa1] sm:$0xff]
        %v8324 = vld [vmem:[#allocation3 + $0xa9] sm:$0xff]
        %v8325 = vld [vmem:[#allocation3 + $0xb1] sm:$0xff]
        %v8326 = vld [vmem:[#allocation3 + $0xb9] sm:$0xff]
        %v8327 = vld [vmem:[#allocation3 + $0xc1] sm:$0xff]
        %v8328 = vld [vmem:[#allocation3 + $0xc9] sm:$0xff]
        %v8329 = vld [vmem:[#allocation3 + $0xd1] sm:$0xff]
        %v8330 = vld [vmem:[#allocation3 + $0xd9] sm:$0xff]
        %v8331 = vld [vmem:[#allocation3 + $0xe1] sm:$0xff]
        %v8332 = vld [vmem:[#allocation3 + $0xe9] sm:$0xff]
        %v8333 = vld [vmem:[#allocation3 + $0xf1] sm:$0xff]
        %v8334 = vld [vmem:[#allocation3 + $0xf9] sm:$0xff]
        %v8335 = vld [vmem:[#allocation3 + $0x101] sm:$0xff]
        %v8336 = vld [vmem:[#allocation3 + $0x109] sm:$0xff]
        %v8337 = vld [vmem:[#allocation3 + $0x111] sm:$0xff]
        %v8338 = vld [vmem:[#allocation3 + $0x119] sm:$0xff]
        %s8339 = scalar_lea.vmem %s7, 7
        %v8340 = vld [vmem:[%s8339] sm:$0x1]
        %8342 = vset.pattern.permute.xlu0 0
        %8343 = vperm.xlu0 %8342, %v8307
        %v8344 = vpop.permute.xlu0 %8343
        %8347 = vset.pattern.permute.xlu0 0
        %8348 = vperm.xlu0 %8347, %v8308
        %v8349 = vpop.permute.xlu0 %8348
        %8352 = vset.pattern.permute.xlu0 0
        %8353 = vperm.xlu0 %8352, %v8309
        %v8354 = vpop.permute.xlu0 %8353
        %8357 = vset.pattern.permute.xlu0 0
        %8358 = vperm.xlu0 %8357, %v8310
        %v8359 = vpop.permute.xlu0 %8358
        %8362 = vset.pattern.permute.xlu0 0
        %8363 = vperm.xlu0 %8362, %v8311
        %v8364 = vpop.permute.xlu0 %8363
        %8367 = vset.pattern.permute.xlu0 0
        %8368 = vperm.xlu0 %8367, %v8312
        %v8369 = vpop.permute.xlu0 %8368
        %8372 = vset.pattern.permute.xlu0 0
        %8373 = vperm.xlu0 %8372, %v8313
        %v8374 = vpop.permute.xlu0 %8373
        %8377 = vset.pattern.permute.xlu0 0
        %8378 = vperm.xlu0 %8377, %v8314
        %v8379 = vpop.permute.xlu0 %8378
        %8382 = vset.pattern.permute.xlu0 0
        %8383 = vperm.xlu0 %8382, %v8315
        %v8384 = vpop.permute.xlu0 %8383
        %8387 = vset.pattern.permute.xlu0 0
        %8388 = vperm.xlu0 %8387, %v8316
        %v8389 = vpop.permute.xlu0 %8388
        %8392 = vset.pattern.permute.xlu0 0
        %8393 = vperm.xlu0 %8392, %v8317
        %v8394 = vpop.permute.xlu0 %8393
        %8397 = vset.pattern.permute.xlu0 0
        %8398 = vperm.xlu0 %8397, %v8318
        %v8399 = vpop.permute.xlu0 %8398
        %8402 = vset.pattern.permute.xlu0 0
        %8403 = vperm.xlu0 %8402, %v8319
        %v8404 = vpop.permute.xlu0 %8403
        %8407 = vset.pattern.permute.xlu0 0
        %8408 = vperm.xlu0 %8407, %v8320
        %v8409 = vpop.permute.xlu0 %8408
        %8412 = vset.pattern.permute.xlu0 0
        %8413 = vperm.xlu0 %8412, %v8321
        %v8414 = vpop.permute.xlu0 %8413
        %8417 = vset.pattern.permute.xlu0 0
        %8418 = vperm.xlu0 %8417, %v8322
        %v8419 = vpop.permute.xlu0 %8418
        %8422 = vset.pattern.permute.xlu0 0
        %8423 = vperm.xlu0 %8422, %v8323
        %v8424 = vpop.permute.xlu0 %8423
        %8427 = vset.pattern.permute.xlu0 0
        %8428 = vperm.xlu0 %8427, %v8324
        %v8429 = vpop.permute.xlu0 %8428
        %8432 = vset.pattern.permute.xlu0 0
        %8433 = vperm.xlu0 %8432, %v8325
        %v8434 = vpop.permute.xlu0 %8433
        %8437 = vset.pattern.permute.xlu0 0
        %8438 = vperm.xlu0 %8437, %v8326
        %v8439 = vpop.permute.xlu0 %8438
        %8442 = vset.pattern.permute.xlu0 0
        %8443 = vperm.xlu0 %8442, %v8327
        %v8444 = vpop.permute.xlu0 %8443
        %8447 = vset.pattern.permute.xlu0 0
        %8448 = vperm.xlu0 %8447, %v8328
        %v8449 = vpop.permute.xlu0 %8448
        %8452 = vset.pattern.permute.xlu0 0
        %8453 = vperm.xlu0 %8452, %v8329
        %v8454 = vpop.permute.xlu0 %8453
        %8457 = vset.pattern.permute.xlu0 0
        %8458 = vperm.xlu0 %8457, %v8330
        %v8459 = vpop.permute.xlu0 %8458
        %8462 = vset.pattern.permute.xlu0 0
        %8463 = vperm.xlu0 %8462, %v8331
        %v8464 = vpop.permute.xlu0 %8463
        %8467 = vset.pattern.permute.xlu0 0
        %8468 = vperm.xlu0 %8467, %v8332
        %v8469 = vpop.permute.xlu0 %8468
        %8472 = vset.pattern.permute.xlu0 0
        %8473 = vperm.xlu0 %8472, %v8333
        %v8474 = vpop.permute.xlu0 %8473
        %8477 = vset.pattern.permute.xlu0 0
        %8478 = vperm.xlu0 %8477, %v8334
        %v8479 = vpop.permute.xlu0 %8478
        %8482 = vset.pattern.permute.xlu0 0
        %8483 = vperm.xlu0 %8482, %v8335
        %v8484 = vpop.permute.xlu0 %8483
        %8487 = vset.pattern.permute.xlu0 0
        %8488 = vperm.xlu0 %8487, %v8336
        %v8489 = vpop.permute.xlu0 %8488
        %8492 = vset.pattern.permute.xlu0 0
        %8493 = vperm.xlu0 %8492, %v8337
        %v8494 = vpop.permute.xlu0 %8493
        %8497 = vset.pattern.permute.xlu0 0
        %8498 = vperm.xlu0 %8497, %v8338
        %v8499 = vpop.permute.xlu0 %8498
        %v8502 = vperm.slane %v8340, 0
        %v8504 = vmul.f32 %v8344, %v8502
        %v8505 = vmul.f32 %v8349, %v8502
        %v8506 = vmul.f32 %v8354, %v8502
        %v8507 = vmul.f32 %v8359, %v8502
        %v8508 = vmul.f32 %v8364, %v8502
        %v8509 = vmul.f32 %v8369, %v8502
        %v8510 = vmul.f32 %v8374, %v8502
        %v8511 = vmul.f32 %v8379, %v8502
        %v8512 = vmul.f32 %v8384, %v8502
        %v8513 = vmul.f32 %v8389, %v8502
        %v8514 = vmul.f32 %v8394, %v8502
        %v8515 = vmul.f32 %v8399, %v8502
        %v8516 = vmul.f32 %v8404, %v8502
        %v8517 = vmul.f32 %v8409, %v8502
        %v8518 = vmul.f32 %v8414, %v8502
        %v8519 = vmul.f32 %v8419, %v8502
        %v8520 = vmul.f32 %v8424, %v8502
        %v8521 = vmul.f32 %v8429, %v8502
        %v8522 = vmul.f32 %v8434, %v8502
        %v8523 = vmul.f32 %v8439, %v8502
        %v8524 = vmul.f32 %v8444, %v8502
        %v8525 = vmul.f32 %v8449, %v8502
        %v8526 = vmul.f32 %v8454, %v8502
        %v8527 = vmul.f32 %v8459, %v8502
        %v8528 = vmul.f32 %v8464, %v8502
        %v8529 = vmul.f32 %v8469, %v8502
        %v8530 = vmul.f32 %v8474, %v8502
        %v8531 = vmul.f32 %v8479, %v8502
        %v8532 = vmul.f32 %v8484, %v8502
        %v8533 = vmul.f32 %v8489, %v8502
        %v8534 = vmul.f32 %v8494, %v8502
        %v8535 = vmul.f32 %v8499, %v8502
        %v8536 = vadd.f32 %v8275, %v8504
        %v8537 = vadd.f32 %v8276, %v8505
        %v8538 = vadd.f32 %v8277, %v8506
        %v8539 = vadd.f32 %v8278, %v8507
        %v8540 = vadd.f32 %v8279, %v8508
        %v8541 = vadd.f32 %v8280, %v8509
        %v8542 = vadd.f32 %v8281, %v8510
        %v8543 = vadd.f32 %v8282, %v8511
        %v8544 = vadd.f32 %v8283, %v8512
        %v8545 = vadd.f32 %v8284, %v8513
        %v8546 = vadd.f32 %v8285, %v8514
        %v8547 = vadd.f32 %v8286, %v8515
        %v8548 = vadd.f32 %v8287, %v8516
        %v8549 = vadd.f32 %v8288, %v8517
        %v8550 = vadd.f32 %v8289, %v8518
        %v8551 = vadd.f32 %v8290, %v8519
        %v8552 = vadd.f32 %v8291, %v8520
        %v8553 = vadd.f32 %v8292, %v8521
        %v8554 = vadd.f32 %v8293, %v8522
        %v8555 = vadd.f32 %v8294, %v8523
        %v8556 = vadd.f32 %v8295, %v8524
        %v8557 = vadd.f32 %v8296, %v8525
        %v8558 = vadd.f32 %v8297, %v8526
        %v8559 = vadd.f32 %v8298, %v8527
        %v8560 = vadd.f32 %v8299, %v8528
        %v8561 = vadd.f32 %v8300, %v8529
        %v8562 = vadd.f32 %v8301, %v8530
        %v8563 = vadd.f32 %v8302, %v8531
        %v8564 = vadd.f32 %v8303, %v8532
        %v8565 = vadd.f32 %v8304, %v8533
        %v8566 = vadd.f32 %v8305, %v8534
        %v8567 = vadd.f32 %v8306, %v8535
        %v8568 = vld [vmem:[#allocation3 + $0x22] sm:$0xff]
        %v8569 = vld [vmem:[#allocation3 + $0x2a] sm:$0xff]
        %v8570 = vld [vmem:[#allocation3 + $0x32] sm:$0xff]
        %v8571 = vld [vmem:[#allocation3 + $0x3a] sm:$0xff]
        %v8572 = vld [vmem:[#allocation3 + $0x42] sm:$0xff]
        %v8573 = vld [vmem:[#allocation3 + $0x4a] sm:$0xff]
        %v8574 = vld [vmem:[#allocation3 + $0x52] sm:$0xff]
        %v8575 = vld [vmem:[#allocation3 + $0x5a] sm:$0xff]
        %v8576 = vld [vmem:[#allocation3 + $0x62] sm:$0xff]
        %v8577 = vld [vmem:[#allocation3 + $0x6a] sm:$0xff]
        %v8578 = vld [vmem:[#allocation3 + $0x72] sm:$0xff]
        %v8579 = vld [vmem:[#allocation3 + $0x7a] sm:$0xff]
        %v8580 = vld [vmem:[#allocation3 + $0x82] sm:$0xff]
        %v8581 = vld [vmem:[#allocation3 + $0x8a] sm:$0xff]
        %v8582 = vld [vmem:[#allocation3 + $0x92] sm:$0xff]
        %v8583 = vld [vmem:[#allocation3 + $0x9a] sm:$0xff]
        %v8584 = vld [vmem:[#allocation3 + $0xa2] sm:$0xff]
        %v8585 = vld [vmem:[#allocation3 + $0xaa] sm:$0xff]
        %v8586 = vld [vmem:[#allocation3 + $0xb2] sm:$0xff]
        %v8587 = vld [vmem:[#allocation3 + $0xba] sm:$0xff]
        %v8588 = vld [vmem:[#allocation3 + $0xc2] sm:$0xff]
        %v8589 = vld [vmem:[#allocation3 + $0xca] sm:$0xff]
        %v8590 = vld [vmem:[#allocation3 + $0xd2] sm:$0xff]
        %v8591 = vld [vmem:[#allocation3 + $0xda] sm:$0xff]
        %v8592 = vld [vmem:[#allocation3 + $0xe2] sm:$0xff]
        %v8593 = vld [vmem:[#allocation3 + $0xea] sm:$0xff]
        %v8594 = vld [vmem:[#allocation3 + $0xf2] sm:$0xff]
        %v8595 = vld [vmem:[#allocation3 + $0xfa] sm:$0xff]
        %v8596 = vld [vmem:[#allocation3 + $0x102] sm:$0xff]
        %v8597 = vld [vmem:[#allocation3 + $0x10a] sm:$0xff]
        %v8598 = vld [vmem:[#allocation3 + $0x112] sm:$0xff]
        %v8599 = vld [vmem:[#allocation3 + $0x11a] sm:$0xff]
        %v8600 = vmul.f32 %v8568, %v458
        %v8601 = vmul.f32 %v8569, %v459
        %v8602 = vmul.f32 %v8570, %v460
        %v8603 = vmul.f32 %v8571, %v461
        %v8604 = vmul.f32 %v8572, %v462
        %v8605 = vmul.f32 %v8573, %v463
        %v8606 = vmul.f32 %v8574, %v464
        %v8607 = vmul.f32 %v8575, %v465
        %v8608 = vmul.f32 %v8576, %v466
        %v8609 = vmul.f32 %v8577, %v467
        %v8610 = vmul.f32 %v8578, %v468
        %v8611 = vmul.f32 %v8579, %v469
        %v8612 = vmul.f32 %v8580, %v470
        %v8613 = vmul.f32 %v8581, %v471
        %v8614 = vmul.f32 %v8582, %v472
        %v8615 = vmul.f32 %v8583, %v473
        %v8616 = vmul.f32 %v8584, %v474
        %v8617 = vmul.f32 %v8585, %v475
        %v8618 = vmul.f32 %v8586, %v476
        %v8619 = vmul.f32 %v8587, %v477
        %v8620 = vmul.f32 %v8588, %v478
        %v8621 = vmul.f32 %v8589, %v479
        %v8622 = vmul.f32 %v8590, %v480
        %v8623 = vmul.f32 %v8591, %v481
        %v8624 = vmul.f32 %v8592, %v482
        %v8625 = vmul.f32 %v8593, %v483
        %v8626 = vmul.f32 %v8594, %v484
        %v8627 = vmul.f32 %v8595, %v485
        %v8628 = vmul.f32 %v8596, %v486
        %v8629 = vmul.f32 %v8597, %v487
        %v8630 = vmul.f32 %v8598, %v488
        %v8631 = vmul.f32 %v8599, %v489
        %s8632 = scalar_lea.vmem %s7, 8
        %v8633 = vld [vmem:[%s8632] sm:$0x1]
        %8635 = vset.pattern.permute.xlu0 0
        %8636 = vperm.xlu0 %8635, %v8600
        %v8637 = vpop.permute.xlu0 %8636
        %8640 = vset.pattern.permute.xlu0 0
        %8641 = vperm.xlu0 %8640, %v8601
        %v8642 = vpop.permute.xlu0 %8641
        %8645 = vset.pattern.permute.xlu0 0
        %8646 = vperm.xlu0 %8645, %v8602
        %v8647 = vpop.permute.xlu0 %8646
        %8650 = vset.pattern.permute.xlu0 0
        %8651 = vperm.xlu0 %8650, %v8603
        %v8652 = vpop.permute.xlu0 %8651
        %8655 = vset.pattern.permute.xlu0 0
        %8656 = vperm.xlu0 %8655, %v8604
        %v8657 = vpop.permute.xlu0 %8656
        %8660 = vset.pattern.permute.xlu0 0
        %8661 = vperm.xlu0 %8660, %v8605
        %v8662 = vpop.permute.xlu0 %8661
        %8665 = vset.pattern.permute.xlu0 0
        %8666 = vperm.xlu0 %8665, %v8606
        %v8667 = vpop.permute.xlu0 %8666
        %8670 = vset.pattern.permute.xlu0 0
        %8671 = vperm.xlu0 %8670, %v8607
        %v8672 = vpop.permute.xlu0 %8671
        %8675 = vset.pattern.permute.xlu0 0
        %8676 = vperm.xlu0 %8675, %v8608
        %v8677 = vpop.permute.xlu0 %8676
        %8680 = vset.pattern.permute.xlu0 0
        %8681 = vperm.xlu0 %8680, %v8609
        %v8682 = vpop.permute.xlu0 %8681
        %8685 = vset.pattern.permute.xlu0 0
        %8686 = vperm.xlu0 %8685, %v8610
        %v8687 = vpop.permute.xlu0 %8686
        %8690 = vset.pattern.permute.xlu0 0
        %8691 = vperm.xlu0 %8690, %v8611
        %v8692 = vpop.permute.xlu0 %8691
        %8695 = vset.pattern.permute.xlu0 0
        %8696 = vperm.xlu0 %8695, %v8612
        %v8697 = vpop.permute.xlu0 %8696
        %8700 = vset.pattern.permute.xlu0 0
        %8701 = vperm.xlu0 %8700, %v8613
        %v8702 = vpop.permute.xlu0 %8701
        %8705 = vset.pattern.permute.xlu0 0
        %8706 = vperm.xlu0 %8705, %v8614
        %v8707 = vpop.permute.xlu0 %8706
        %8710 = vset.pattern.permute.xlu0 0
        %8711 = vperm.xlu0 %8710, %v8615
        %v8712 = vpop.permute.xlu0 %8711
        %8715 = vset.pattern.permute.xlu0 0
        %8716 = vperm.xlu0 %8715, %v8616
        %v8717 = vpop.permute.xlu0 %8716
        %8720 = vset.pattern.permute.xlu0 0
        %8721 = vperm.xlu0 %8720, %v8617
        %v8722 = vpop.permute.xlu0 %8721
        %8725 = vset.pattern.permute.xlu0 0
        %8726 = vperm.xlu0 %8725, %v8618
        %v8727 = vpop.permute.xlu0 %8726
        %8730 = vset.pattern.permute.xlu0 0
        %8731 = vperm.xlu0 %8730, %v8619
        %v8732 = vpop.permute.xlu0 %8731
        %8735 = vset.pattern.permute.xlu0 0
        %8736 = vperm.xlu0 %8735, %v8620
        %v8737 = vpop.permute.xlu0 %8736
        %8740 = vset.pattern.permute.xlu0 0
        %8741 = vperm.xlu0 %8740, %v8621
        %v8742 = vpop.permute.xlu0 %8741
        %8745 = vset.pattern.permute.xlu0 0
        %8746 = vperm.xlu0 %8745, %v8622
        %v8747 = vpop.permute.xlu0 %8746
        %8750 = vset.pattern.permute.xlu0 0
        %8751 = vperm.xlu0 %8750, %v8623
        %v8752 = vpop.permute.xlu0 %8751
        %8755 = vset.pattern.permute.xlu0 0
        %8756 = vperm.xlu0 %8755, %v8624
        %v8757 = vpop.permute.xlu0 %8756
        %8760 = vset.pattern.permute.xlu0 0
        %8761 = vperm.xlu0 %8760, %v8625
        %v8762 = vpop.permute.xlu0 %8761
        %8765 = vset.pattern.permute.xlu0 0
        %8766 = vperm.xlu0 %8765, %v8626
        %v8767 = vpop.permute.xlu0 %8766
        %8770 = vset.pattern.permute.xlu0 0
        %8771 = vperm.xlu0 %8770, %v8627
        %v8772 = vpop.permute.xlu0 %8771
        %8775 = vset.pattern.permute.xlu0 0
        %8776 = vperm.xlu0 %8775, %v8628
        %v8777 = vpop.permute.xlu0 %8776
        %8780 = vset.pattern.permute.xlu0 0
        %8781 = vperm.xlu0 %8780, %v8629
        %v8782 = vpop.permute.xlu0 %8781
        %8785 = vset.pattern.permute.xlu0 0
        %8786 = vperm.xlu0 %8785, %v8630
        %v8787 = vpop.permute.xlu0 %8786
        %8790 = vset.pattern.permute.xlu0 0
        %8791 = vperm.xlu0 %8790, %v8631
        %v8792 = vpop.permute.xlu0 %8791
        %v8795 = vperm.slane %v8633, 0
        %v8797 = vmul.f32 %v8637, %v8795
        %v8798 = vmul.f32 %v8642, %v8795
        %v8799 = vmul.f32 %v8647, %v8795
        %v8800 = vmul.f32 %v8652, %v8795
        %v8801 = vmul.f32 %v8657, %v8795
        %v8802 = vmul.f32 %v8662, %v8795
        %v8803 = vmul.f32 %v8667, %v8795
        %v8804 = vmul.f32 %v8672, %v8795
        %v8805 = vmul.f32 %v8677, %v8795
        %v8806 = vmul.f32 %v8682, %v8795
        %v8807 = vmul.f32 %v8687, %v8795
        %v8808 = vmul.f32 %v8692, %v8795
        %v8809 = vmul.f32 %v8697, %v8795
        %v8810 = vmul.f32 %v8702, %v8795
        %v8811 = vmul.f32 %v8707, %v8795
        %v8812 = vmul.f32 %v8712, %v8795
        %v8813 = vmul.f32 %v8717, %v8795
        %v8814 = vmul.f32 %v8722, %v8795
        %v8815 = vmul.f32 %v8727, %v8795
        %v8816 = vmul.f32 %v8732, %v8795
        %v8817 = vmul.f32 %v8737, %v8795
        %v8818 = vmul.f32 %v8742, %v8795
        %v8819 = vmul.f32 %v8747, %v8795
        %v8820 = vmul.f32 %v8752, %v8795
        %v8821 = vmul.f32 %v8757, %v8795
        %v8822 = vmul.f32 %v8762, %v8795
        %v8823 = vmul.f32 %v8767, %v8795
        %v8824 = vmul.f32 %v8772, %v8795
        %v8825 = vmul.f32 %v8777, %v8795
        %v8826 = vmul.f32 %v8782, %v8795
        %v8827 = vmul.f32 %v8787, %v8795
        %v8828 = vmul.f32 %v8792, %v8795
        %v8829 = vadd.f32 %v8536, %v8797
        %v8830 = vadd.f32 %v8537, %v8798
        %v8831 = vadd.f32 %v8538, %v8799
        %v8832 = vadd.f32 %v8539, %v8800
        %v8833 = vadd.f32 %v8540, %v8801
        %v8834 = vadd.f32 %v8541, %v8802
        %v8835 = vadd.f32 %v8542, %v8803
        %v8836 = vadd.f32 %v8543, %v8804
        %v8837 = vadd.f32 %v8544, %v8805
        %v8838 = vadd.f32 %v8545, %v8806
        %v8839 = vadd.f32 %v8546, %v8807
        %v8840 = vadd.f32 %v8547, %v8808
        %v8841 = vadd.f32 %v8548, %v8809
        %v8842 = vadd.f32 %v8549, %v8810
        %v8843 = vadd.f32 %v8550, %v8811
        %v8844 = vadd.f32 %v8551, %v8812
        %v8845 = vadd.f32 %v8552, %v8813
        %v8846 = vadd.f32 %v8553, %v8814
        %v8847 = vadd.f32 %v8554, %v8815
        %v8848 = vadd.f32 %v8555, %v8816
        %v8849 = vadd.f32 %v8556, %v8817
        %v8850 = vadd.f32 %v8557, %v8818
        %v8851 = vadd.f32 %v8558, %v8819
        %v8852 = vadd.f32 %v8559, %v8820
        %v8853 = vadd.f32 %v8560, %v8821
        %v8854 = vadd.f32 %v8561, %v8822
        %v8855 = vadd.f32 %v8562, %v8823
        %v8856 = vadd.f32 %v8563, %v8824
        %v8857 = vadd.f32 %v8564, %v8825
        %v8858 = vadd.f32 %v8565, %v8826
        %v8859 = vadd.f32 %v8566, %v8827
        %v8860 = vadd.f32 %v8567, %v8828
        %v8861 = vld [vmem:[%s8] sm:$0x1]
        %v8863 = vperm.slane %v8861, 0
        %v8865 = vadd.f32 %v8829, %v8863
        %v8866 = vadd.f32 %v8830, %v8863
        %v8867 = vadd.f32 %v8831, %v8863
        %v8868 = vadd.f32 %v8832, %v8863
        %v8869 = vadd.f32 %v8833, %v8863
        %v8870 = vadd.f32 %v8834, %v8863
        %v8871 = vadd.f32 %v8835, %v8863
        %v8872 = vadd.f32 %v8836, %v8863
        %v8873 = vadd.f32 %v8837, %v8863
        %v8874 = vadd.f32 %v8838, %v8863
        %v8875 = vadd.f32 %v8839, %v8863
        %v8876 = vadd.f32 %v8840, %v8863
        %v8877 = vadd.f32 %v8841, %v8863
        %v8878 = vadd.f32 %v8842, %v8863
        %v8879 = vadd.f32 %v8843, %v8863
        %v8880 = vadd.f32 %v8844, %v8863
        %v8881 = vadd.f32 %v8845, %v8863
        %v8882 = vadd.f32 %v8846, %v8863
        %v8883 = vadd.f32 %v8847, %v8863
        %v8884 = vadd.f32 %v8848, %v8863
        %v8885 = vadd.f32 %v8849, %v8863
        %v8886 = vadd.f32 %v8850, %v8863
        %v8887 = vadd.f32 %v8851, %v8863
        %v8888 = vadd.f32 %v8852, %v8863
        %v8889 = vadd.f32 %v8853, %v8863
        %v8890 = vadd.f32 %v8854, %v8863
        %v8891 = vadd.f32 %v8855, %v8863
        %v8892 = vadd.f32 %v8856, %v8863
        %v8893 = vadd.f32 %v8857, %v8863
        %v8894 = vadd.f32 %v8858, %v8863
        %v8895 = vadd.f32 %v8859, %v8863
        %v8896 = vadd.f32 %v8860, %v8863
        %v8897 = vmax.f32 %v8865, 0.0
        %v8898 = vmax.f32 %v8866, 0.0
        %v8899 = vmax.f32 %v8867, 0.0
        %v8900 = vmax.f32 %v8868, 0.0
        %v8901 = vmax.f32 %v8869, 0.0
        %v8902 = vmax.f32 %v8870, 0.0
        %v8903 = vmax.f32 %v8871, 0.0
        %v8904 = vmax.f32 %v8872, 0.0
        %v8905 = vmax.f32 %v8873, 0.0
        %v8906 = vmax.f32 %v8874, 0.0
        %v8907 = vmax.f32 %v8875, 0.0
        %v8908 = vmax.f32 %v8876, 0.0
        %v8909 = vmax.f32 %v8877, 0.0
        %v8910 = vmax.f32 %v8878, 0.0
        %v8911 = vmax.f32 %v8879, 0.0
        %v8912 = vmax.f32 %v8880, 0.0
        %v8913 = vmax.f32 %v8881, 0.0
        %v8914 = vmax.f32 %v8882, 0.0
        %v8915 = vmax.f32 %v8883, 0.0
        %v8916 = vmax.f32 %v8884, 0.0
        %v8917 = vmax.f32 %v8885, 0.0
        %v8918 = vmax.f32 %v8886, 0.0
        %v8919 = vmax.f32 %v8887, 0.0
        %v8920 = vmax.f32 %v8888, 0.0
        %v8921 = vmax.f32 %v8889, 0.0
        %v8922 = vmax.f32 %v8890, 0.0
        %v8923 = vmax.f32 %v8891, 0.0
        %v8924 = vmax.f32 %v8892, 0.0
        %v8925 = vmax.f32 %v8893, 0.0
        %v8926 = vmax.f32 %v8894, 0.0
        %v8927 = vmax.f32 %v8895, 0.0
        %v8928 = vmax.f32 %v8896, 0.0
        %v8929 = vsel %vm3509, %v8897, 0.0
        %v8930 = vsel %vm3509, %v8898, 0.0
        %v8931 = vadd.f32 %v8929, %v8930
        %v8932 = vsel %vm3509, %v8899, 0.0
        %v8933 = vadd.f32 %v8931, %v8932
        %v8934 = vsel %vm3509, %v8900, 0.0
        %v8935 = vadd.f32 %v8933, %v8934
        %v8936 = vsel %vm3509, %v8901, 0.0
        %v8937 = vadd.f32 %v8935, %v8936
        %v8938 = vsel %vm3509, %v8902, 0.0
        %v8939 = vadd.f32 %v8937, %v8938
        %v8940 = vsel %vm3509, %v8903, 0.0
        %v8941 = vadd.f32 %v8939, %v8940
        %v8942 = vsel %vm3509, %v8904, 0.0
        %v8943 = vadd.f32 %v8941, %v8942
        %v8944 = vsel %vm3509, %v8905, 0.0
        %v8945 = vadd.f32 %v8943, %v8944
        %v8946 = vsel %vm3509, %v8906, 0.0
        %v8947 = vadd.f32 %v8945, %v8946
        %v8948 = vsel %vm3509, %v8907, 0.0
        %v8949 = vadd.f32 %v8947, %v8948
        %v8950 = vsel %vm3509, %v8908, 0.0
        %v8951 = vadd.f32 %v8949, %v8950
        %v8952 = vsel %vm3509, %v8909, 0.0
        %v8953 = vadd.f32 %v8951, %v8952
        %v8954 = vsel %vm3509, %v8910, 0.0
        %v8955 = vadd.f32 %v8953, %v8954
        %v8956 = vsel %vm3509, %v8911, 0.0
        %v8957 = vadd.f32 %v8955, %v8956
        %v8958 = vsel %vm3509, %v8912, 0.0
        %v8959 = vadd.f32 %v8957, %v8958
        %v8960 = vsel %vm3509, %v8913, 0.0
        %v8961 = vadd.f32 %v8959, %v8960
        %v8962 = vsel %vm3509, %v8914, 0.0
        %v8963 = vadd.f32 %v8961, %v8962
        %v8964 = vsel %vm3509, %v8915, 0.0
        %v8965 = vadd.f32 %v8963, %v8964
        %v8966 = vsel %vm3509, %v8916, 0.0
        %v8967 = vadd.f32 %v8965, %v8966
        %v8968 = vsel %vm3509, %v8917, 0.0
        %v8969 = vadd.f32 %v8967, %v8968
        %v8970 = vsel %vm3509, %v8918, 0.0
        %v8971 = vadd.f32 %v8969, %v8970
        %v8972 = vsel %vm3509, %v8919, 0.0
        %v8973 = vadd.f32 %v8971, %v8972
        %v8974 = vsel %vm3509, %v8920, 0.0
        %v8975 = vadd.f32 %v8973, %v8974
        %v8976 = vsel %vm3509, %v8921, 0.0
        %v8977 = vadd.f32 %v8975, %v8976
        %v8978 = vsel %vm3509, %v8922, 0.0
        %v8979 = vadd.f32 %v8977, %v8978
        %v8980 = vsel %vm3509, %v8923, 0.0
        %v8981 = vadd.f32 %v8979, %v8980
        %v8982 = vsel %vm3509, %v8924, 0.0
        %v8983 = vadd.f32 %v8981, %v8982
        %v8984 = vsel %vm3509, %v8925, 0.0
        %v8985 = vadd.f32 %v8983, %v8984
        %v8986 = vsel %vm3509, %v8926, 0.0
        %v8987 = vadd.f32 %v8985, %v8986
        %v8988 = vsel %vm3509, %v8927, 0.0
        %v8989 = vadd.f32 %v8987, %v8988
        %v8990 = vsel %vm3509, %v8928, 0.0
        %v8991 = vadd.f32 %v8989, %v8990
        %v8992 = vrot.slane %v8991, 4
        %v8993 = vadd.f32 %v8991, %v8992
        %v8994 = vrot.slane %v8993, 2
        %v8995 = vadd.f32 %v8993, %v8994
        %v8996 = vrot.slane %v8995, 1
        %v8997 = vadd.f32 %v8995, %v8996
        %v8998 = vmul.f32 %v8997, 0.00390625
        %v8999 = vld [vmem:[%s9] sm:$0xff]
        %v9000 = vld [vmem:[%s10] sm:$0x1]
        %v9002 = vsel %vm3509, %v8998, 0
        %9004 = vmatpush.msra.mxu0 0.0
        %9005 = vmatpush.msra.mxu0 0.0
        %9006 = vmatpush.msra.mxu0 0.0
        %9007 = vmatpush.msra.mxu0 0.0
        %9008 = vmatpush.msra.mxu0 0.0
        %9009 = vmatpush.msra.mxu0 0.0
        %9010 = vmatpush.msra.mxu0 0.0
        %9011 = vmatpush.msra.mxu0 0.0
        %9012 = vmatpush.msra.mxu0 0.0
        %9013 = vmatpush.msra.mxu0 0.0
        %9014 = vmatpush.msra.mxu0 0.0
        %9015 = vmatpush.msra.mxu0 0.0
        %9016 = vmatpush.msra.mxu0 0.0
        %9017 = vmatpush.msra.mxu0 0.0
        %9018 = vmatpush.msra.mxu0 0.0
        %9019 = vmatpush.msra.mxu0 %v8999
        %9020 = vmatmul.f32.gmra.mxu0 %v9002
        %v9021 = vpop.f32.mrf.mxu0
        %v9022 = vadd.f32 %v9000, %v9021
        %9023 = vdwg.mxu0
        %vm9024 = vcmask 24576
        %9025 = vst.msk [vmem:[%s415] sm:$0x1] %vm9024, %v9022
        %p9026 = scmp.lt.s32.totalorder %s29, 1
        %s9027 = scalar_select %p9026, %s29, 1
        %s9028 = smul.addr %s9027, 32
        %s9029 = smul.addr %s9028, 8
        %s9030 = scalar_lea.vmem %s11, %s9029
        %s9031 = sand.u32 %s299, 1
        %s9032 = scalar_lea.sflag [#allocation6], %s9031
        %s9033 = sand.u32 %s299, 1
        %s9034 = scalar_lea.vmem [#allocation5], %s9033
        // Predicated region
        $region65: #{topology_net_forward.2} parent=63 // pred_check
          %p9035 = pneg %p283
        $region66: #{topology_net_forward.2} parent=63 // pred_check_branch
          %9037 = sbr.rel (%p9035) target = $region68
        $region67: #{topology_net_forward.2} parent=63 // pred_region
          _
        $region68: #{topology_net_forward.2} parent=63 // pred_fallthru
          _
        // Predicated region
        $region69: #{topology_net_forward.2} parent=63 // pred_check
          %p9038 = pneg %p309
        $region70: #{topology_net_forward.2} parent=63 // pred_check_branch
          %9040 = sbr.rel (%p9038) target = $region72
        $region71: #{topology_net_forward.2} parent=63 // pred_region
          %9042 = vsyncadd %s9032, 0
          %s9043 = scalar_lea.hbm %s12, %s29
          %s9045 = sshll.u32 %s9034, 4
          %s9046 = int_to_ptr.vmem [resolvable:$true] %s9045
          %s9047 = sshll.u32 %s9043, 4
          %s9048 = int_to_ptr.hbm [resolvable:$true] %s9047
          %9050 = dma.vmem_to_hbm [thread:$0]  %s9046, 16, %s9048, %s9032
        $region72: #{topology_net_forward.2} parent=63 // pred_fallthru
          _
      $region64: #{topology_net_forward.2} parent=5 // pred_fallthru
        _
      %p9051 = scmp.le.s32.totalorder 2, %s24
      // Predicated region
      $region73: #{topology_net_forward.2} parent=5 // pred_check
        %p9052 = pneg %p9051
      $region74: #{topology_net_forward.2} parent=5 // pred_check_branch
        %9054 = sbr.rel (%p9052) target = $region76
      $region75: #{topology_net_forward.2} parent=5 // pred_region
        %s9055 = ssub.s32 %s24, 2
        // Predicated region
        $region77: #{topology_net_forward.2} parent=75 // pred_check
          %p9056 = pneg %p289
        $region78: #{topology_net_forward.2} parent=75 // pred_check_branch
          %9058 = sbr.rel (%p9056) target = $region80
        $region79: #{topology_net_forward.2} parent=75 // pred_region
          %p9059 = scmp.lt.s32.totalorder %s30, 1
          %s9060 = scalar_select %p9059, %s30, 1
          %s9061 = smul.addr %s9060, 32
          %s9062 = smul.addr %s9061, 8
          %s9063 = scalar_lea.vmem %s11, %s9062
        $region80: #{topology_net_forward.2} parent=75 // pred_fallthru
          _
        // Predicated region
        $region81: #{topology_net_forward.2} parent=75 // pred_check
          %p9064 = pneg %p315
        $region82: #{topology_net_forward.2} parent=75 // pred_check_branch
          %9066 = sbr.rel (%p9064) target = $region84
        $region83: #{topology_net_forward.2} parent=75 // pred_region
          %s9067 = sand.u32 %s300, 1
          %s9068 = scalar_lea.sflag [#allocation6], %s9067
          %s9069 = sand.u32 %s300, 1
          %s9070 = scalar_lea.vmem [#allocation5], %s9069
          %9072 = dma.done %s9068, 16
        $region84: #{topology_net_forward.2} parent=75 // pred_fallthru
          _
      $region76: #{topology_net_forward.2} parent=5 // pred_fallthru
        _
    $region6: #{topology_net_forward.2} parent=1 // loop_footer
      %s28 = sadd.s32 1, %s24
    $region7: #{topology_net_forward.2} parent=1 // loop_footer_branch
      %23 = sbr.rel target = $region3
    $region8: #{topology_net_forward.2} parent=1 // loop_exit
      _
    %9073 = vsyncpa [#allocation6], 1
    %s9074 = scalar_lea.sflag [#allocation6], 1
    %9075 = vsyncpa %s9074, 1

</llo_original>
